<compile_context>
chip_gen: v6e
topology: v6e:2x2x1
jax: 0.10.0
libtpu: 0.0.40
codegen_flags: <defaults>
</compile_context>

<pallas_src>
import functools
import math

import jax
import jax.numpy as jnp
from jax import lax
from jax.experimental import pallas as pl
from jax.experimental.pallas import tpu as pltpu

SCALE = math.sqrt(0.5)
LANE = 128


def _round_up(n, m):
    return ((n + m - 1) // m) * m


# ----------------------------- fused kernel --------------------------------

def _seq2seq_kernel(
    # batched activations (B_TILE sequences per grid step)
    src_emb_ref, trg_emb_ref,
    # packed weight slabs
    w_e2h_ref, b_e2h_ref,      # (3,E,H) bf16 / (3,1,H) f32: [enc_e2h, dec_e2h, attn_e2h]
    w_h2e_ref, b_h2e_ref,      # (3,H,E) bf16 / (3,1,E) f32: [enc_h2e, dec_h2e, attn_h2e]
    conv_w_ref, conv_b_ref,    # (n_enc+n_dec,k,H,2H) bf16 / (n_enc+n_dec,1,2H) f32
    head_w_ref, head_b_ref,    # (2,E,HEADW) bf16 / (2,1,HEADW) f32: [intent_fc, fc_out]
    # outputs (lane-dense)
    intent_ref, slot_ref, attn_ref,
    # VMEM scratch (zero-padded conv inputs, 8-row aligned write offset)
    enc_xpad, dec_xpad,
    *, k, n_enc, n_dec):
    f32 = jnp.float32
    bf16 = jnp.bfloat16

    bt, src_len, emb = src_emb_ref.shape
    trg_len = trg_emb_ref.shape[1]
    hid = w_e2h_ref.shape[2]
    headw = slot_ref.shape[-1]
    ls_pad = attn_ref.shape[-1]
    pad = (k - 1) // 2

    def mm(a, w):
        # MXU matmul: bf16 operands, f32 accumulate.
        return jnp.dot(a.astype(bf16), w, preferred_element_type=f32)

    def conv_glu(x2, xpad_ref, length, start, layer):
        # x2: (bt*length, H) f32.  Store into the zero-padded scratch at the
        # sublane-aligned offset 8, then one fused (H, 2H) MXU push per tap
        # (GLU value||gate halves fused) accumulated in f32.
        xpad_ref[:, 8:8 + length, :] = x2.reshape(bt, length, hid)
        xp = xpad_ref[...]
        acc = conv_b_ref[layer]                               # (1, 2H), broadcasts
        for t in range(k):                                    # k small static taps
            sl = xp[:, start + t:start + t + length, :].reshape(bt * length, hid)
            acc = acc + mm(sl, conv_w_ref[layer, t])
        return acc[:, :hid] * jax.nn.sigmoid(acc[:, hid:])    # GLU (f32, VPU/EUP)

    # ------------------------------ encoder --------------------------------
    emb_s = src_emb_ref[...].reshape(bt * src_len, emb)       # (bt*Ls, E)
    x = mm(emb_s, w_e2h_ref[0]) + b_e2h_ref[0]                # (bt*Ls, H)

    enc_xpad[...] = jnp.zeros(enc_xpad.shape, enc_xpad.dtype)
    for l in range(n_enc):                                    # static unroll (shallow)
        conved = conv_glu(x, enc_xpad, src_len, 8 - pad, l)   # "same" padding
        x = (conved + x) * SCALE

    enc_conved = mm(x, w_h2e_ref[0]) + b_h2e_ref[0]           # (bt*Ls, E)
    enc_combined = (enc_conved + emb_s) * SCALE

    pooled = jnp.mean(enc_combined.reshape(bt, src_len, emb), axis=1)   # (bt, E)
    intent = mm(pooled, head_w_ref[0]) + head_b_ref[0]        # (bt, HEADW) lane-dense
    intent_ref[...] = intent[:, None, :]

    # ------------------------------ decoder --------------------------------
    emb_t = trg_emb_ref[...].reshape(bt * trg_len, emb)       # (bt*Lt, E)
    y = mm(emb_t, w_e2h_ref[1]) + b_e2h_ref[1]                # (bt*Lt, H)

    enc_conved3 = enc_conved.reshape(bt, src_len, emb)
    enc_comb3 = enc_combined.reshape(bt, src_len, emb)

    dec_xpad[...] = jnp.zeros(dec_xpad.shape, dec_xpad.dtype)
    attn = None
    for l in range(n_dec):                                    # static unroll (shallow)
        conved = conv_glu(y, dec_xpad, trg_len, 8 - (k - 1), n_enc + l)   # causal

        # attention block (attn linears shared across decoder layers)
        conved_emb = mm(conved, w_h2e_ref[2]) + b_h2e_ref[2]  # (bt*Lt, E)
        combined = (conved_emb + emb_t) * SCALE
        energy = jnp.einsum("bte,bse->bts",
                            combined.reshape(bt, trg_len, emb), enc_conved3,
                            preferred_element_type=f32)       # f32: softmax-sensitive
        m = jnp.max(energy, axis=-1, keepdims=True)
        e = jnp.exp(energy - m)
        attn = e * pl.reciprocal(jnp.sum(e, axis=-1, keepdims=True), approx=True)
        attended = jnp.einsum("bts,bse->bte", attn.astype(bf16),
                              enc_comb3.astype(bf16),
                              preferred_element_type=f32)     # (bt, Lt, E)
        attended = mm(attended.reshape(bt * trg_len, emb), w_e2h_ref[2]) + b_e2h_ref[2]
        conved = (conved + attended) * SCALE

        y = (conved + y) * SCALE                              # residual

    dec_out = mm(y, w_h2e_ref[1]) + b_h2e_ref[1]              # (bt*Lt, E)
    slot = mm(dec_out, head_w_ref[1]) + head_b_ref[1]         # (bt*Lt, HEADW)
    slot_ref[...] = slot.reshape(bt, trg_len, headw)

    # lane-dense attention store (pad key dim to a 128 multiple; wrapper slices it off)
    if ls_pad > src_len:
        attn = jnp.concatenate(
            [attn, jnp.zeros((bt, trg_len, ls_pad - src_len), f32)], axis=-1)
    attn_ref[...] = attn


# ------------------------------- Parameters --------------------------------

def init_params(key, *, src_vocab, slot_vocab, n_intent, emb, hid, k,
                n_enc_layers, n_dec_layers, max_len):
    keys = iter(jax.random.split(key, 64))

    def dense(kin, kout):
        return (jax.random.normal(next(keys), (kin, kout), jnp.float32) * 0.1,
                jnp.zeros((kout,), jnp.float32))

    def conv(cin, cout2):
        # per-tap matrices (k, C_in, 2*C_out) — NLC port of Conv1d weights.
        return (jax.random.normal(next(keys), (k, cin, cout2), jnp.float32) * 0.1,
                jnp.zeros((cout2,), jnp.float32))

    return {
        "kernel_size": k,
        "enc_tok_emb": jax.random.normal(next(keys), (src_vocab, emb), jnp.float32) * 0.1,
        "enc_pos_emb": jax.random.normal(next(keys), (max_len, emb), jnp.float32) * 0.1,
        "enc_emb2hid": dense(emb, hid),
        "enc_hid2emb": dense(hid, emb),
        "enc_convs": [conv(hid, 2 * hid) for _ in range(n_enc_layers)],
        "intent_fc": dense(emb, n_intent),
        "dec_tok_emb": jax.random.normal(next(keys), (slot_vocab, emb), jnp.float32) * 0.1,
        "dec_pos_emb": jax.random.normal(next(keys), (max_len, emb), jnp.float32) * 0.1,
        "dec_emb2hid": dense(emb, hid),
        "dec_hid2emb": dense(hid, emb),
        "attn_hid2emb": dense(hid, emb),
        "attn_emb2hid": dense(emb, hid),
        "dec_convs": [conv(hid, 2 * hid) for _ in range(n_dec_layers)],
        "fc_out": dense(emb, slot_vocab),
    }


def pack_params(p):
    """Repack raw params into kernel-ready bf16 slabs (once, outside the hot path)."""
    bf16 = jnp.bfloat16
    f32 = jnp.float32

    def stack_dense(names):
        w = jnp.stack([p[n][0] for n in names]).astype(bf16)
        b = jnp.stack([p[n][1][None, :] for n in names]).astype(f32)
        return w, b

    w_e2h, b_e2h = stack_dense(["enc_emb2hid", "dec_emb2hid", "attn_emb2hid"])
    w_h2e, b_h2e = stack_dense(["enc_hid2emb", "dec_hid2emb", "attn_hid2emb"])

    # Fused-GLU conv weights: each tap keeps value||gate in one (H, 2H) matrix.
    conv_w = jnp.stack([w for w, _ in p["enc_convs"]] +
                       [w for w, _ in p["dec_convs"]]).astype(bf16)
    conv_b = jnp.stack([b[None, :] for _, b in p["enc_convs"]] +
                       [b[None, :] for _, b in p["dec_convs"]]).astype(f32)

    n_intent = p["intent_fc"][0].shape[1]
    slot_vocab = p["fc_out"][0].shape[1]
    headw = _round_up(max(n_intent, slot_vocab), LANE)

    def pad_head(wb):
        w, b = wb
        return (jnp.pad(w, ((0, 0), (0, headw - w.shape[1]))),
                jnp.pad(b, ((0, headw - b.shape[0]),)))

    int_w, int_b = pad_head(p["intent_fc"])
    fc_w, fc_b = pad_head(p["fc_out"])
    head_w = jnp.stack([int_w, fc_w]).astype(bf16)            # (2, E, HEADW)
    head_b = jnp.stack([int_b[None, :], fc_b[None, :]]).astype(f32)

    return {
        "k": p["kernel_size"],
        "n_enc": len(p["enc_convs"]), "n_dec": len(p["dec_convs"]),
        "n_intent": n_intent, "slot_vocab": slot_vocab, "headw": headw,
        "emb": p["enc_emb2hid"][0].shape[0], "hid": p["enc_emb2hid"][0].shape[1],
        "enc_tok_emb": p["enc_tok_emb"], "enc_pos_emb": p["enc_pos_emb"],
        "dec_tok_emb": p["dec_tok_emb"], "dec_pos_emb": p["dec_pos_emb"],
        "w_e2h": w_e2h, "b_e2h": b_e2h,
        "w_h2e": w_h2e, "b_h2e": b_h2e,
        "conv_w": conv_w, "conv_b": conv_b,
        "head_w": head_w, "head_b": head_b,
    }


# ------------------------------ Model forward -------------------------------

def seq2seq_forward(packed, src, trg, *, b_tile=8):
    B, Ls = src.shape
    _, Lt = trg.shape
    k = packed["k"]
    n_enc, n_dec = packed["n_enc"], packed["n_dec"]
    emb, hid, headw = packed["emb"], packed["hid"], packed["headw"]
    assert k % 2 == 1 and k - 1 <= 8
    b_tile = min(b_tile, B)
    assert B % b_tile == 0, "batch must be divisible by the batch tile"

    # Embedding gathers stay in plain JAX (glue).
    src_emb = (jnp.take(packed["enc_tok_emb"], src, axis=0)
               + packed["enc_pos_emb"][None, :Ls, :]).astype(jnp.float32)   # (B, Ls, E)
    trg_emb = (jnp.take(packed["dec_tok_emb"], trg, axis=0)
               + packed["dec_pos_emb"][None, :Lt, :]).astype(jnp.float32)   # (B, Lt, E)

    ls_pad = _round_up(Ls, LANE)

    weights = [packed["w_e2h"], packed["b_e2h"], packed["w_h2e"], packed["b_h2e"],
               packed["conv_w"], packed["conv_b"], packed["head_w"], packed["head_b"]]

    def act_spec(L, C):
        return pl.BlockSpec((b_tile, L, C), lambda b: (b, 0, 0))

    def w_spec(arr):
        # Grid-invariant weight slab: constant index map, Pallas fetches it once.
        nd = arr.ndim
        return pl.BlockSpec(arr.shape, lambda b, _nd=nd: (0,) * _nd)

    kern = functools.partial(_seq2seq_kernel, k=k, n_enc=n_enc, n_dec=n_dec)

    intent_p, slot_p, attn_p = pl.pallas_call(
        kern,
        out_shape=(
            jax.ShapeDtypeStruct((B, 1, headw), jnp.float32),    # intent (lane-padded)
            jax.ShapeDtypeStruct((B, Lt, headw), jnp.float32),   # slots  (lane-padded)
            jax.ShapeDtypeStruct((B, Lt, ls_pad), jnp.float32),  # attention (lane-padded)
        ),
        grid=(B // b_tile,),
        in_specs=[act_spec(Ls, emb), act_spec(Lt, emb)] + [w_spec(w) for w in weights],
        out_specs=(
            pl.BlockSpec((b_tile, 1, headw), lambda b: (b, 0, 0)),
            pl.BlockSpec((b_tile, Lt, headw), lambda b: (b, 0, 0)),
            pl.BlockSpec((b_tile, Lt, ls_pad), lambda b: (b, 0, 0)),
        ),
        scratch_shapes=[
            pltpu.VMEM((b_tile, 8 + Ls + (k - 1), hid), jnp.float32),  # encoder "same" pad
            pltpu.VMEM((b_tile, 8 + Lt, hid), jnp.float32),            # decoder causal pad
        ],
        compiler_params=pltpu.CompilerParams(
            dimension_semantics=("parallel",)),                 # megacore sharding
    )(src_emb, trg_emb, *weights)

    intent = intent_p[:, 0, :packed["n_intent"]]
    slot = slot_p[:, :, :packed["slot_vocab"]]
    attention = attn_p[:, :, :Ls]
    return intent, slot, attention


# ---------------------- pure-JAX reference (for checking) -------------------

def _reference_forward(p, src, trg):
    k = p["kernel_size"]
    pad = (k - 1) // 2
    HP = lax.Precision.HIGHEST
    q = lambda w: w.astype(jnp.bfloat16).astype(jnp.float32)   # kernel stores weights in bf16

    def dense(x, wb):
        w, b = wb
        return jnp.einsum("...i,ij->...j", x, q(w), precision=HP) + b

    def conv_glu_ref(x, w_taps, bias, causal):
        B, L, _ = x.shape
        if causal:
            xp = jnp.pad(x, ((0, 0), (k - 1, 0), (0, 0)))
        else:
            xp = jnp.pad(x, ((0, 0), (pad, pad), (0, 0)))
        acc = bias
        for t in range(k):
            acc = acc + jnp.einsum("blc,co->blo", xp[:, t:t + L, :], q(w_taps[t]),
                                   precision=HP)
        hid = w_taps.shape[-1] // 2
        return acc[..., :hid] * jax.nn.sigmoid(acc[..., hid:])

    B, Ls = src.shape
    _, Lt = trg.shape
    emb_s = jnp.take(p["enc_tok_emb"], src, axis=0) + p["enc_pos_emb"][None, :Ls, :]
    x = dense(emb_s, p["enc_emb2hid"])
    for w, b in p["enc_convs"]:
        x = (conv_glu_ref(x, w, b, causal=False) + x) * SCALE
    enc_conved = dense(x, p["enc_hid2emb"])
    enc_combined = (enc_conved + emb_s) * SCALE
    intent = dense(jnp.mean(enc_combined, axis=1), p["intent_fc"])

    emb_t = jnp.take(p["dec_tok_emb"], trg, axis=0) + p["dec_pos_emb"][None, :Lt, :]
    y = dense(emb_t, p["dec_emb2hid"])
    attn = None
    for w, b in p["dec_convs"]:
        conved = conv_glu_ref(y, w, b, causal=True)
        conved_emb = dense(conved, p["attn_hid2emb"])
        combined = (conved_emb + emb_t) * SCALE
        energy = jnp.einsum("bte,bse->bts", combined, enc_conved, precision=HP)
        attn = jax.nn.softmax(energy, axis=-1)
        attended = jnp.einsum("bts,bse->bte", attn, enc_combined, precision=HP)
        attended = dense(attended, p["attn_emb2hid"])
        conved = (conved + attended) * SCALE
        y = (conved + y) * SCALE
    dec_out = dense(y, p["dec_hid2emb"])
    slot = dense(dec_out, p["fc_out"])
    return intent, slot, attn


# ---------------------------------- Main ------------------------------------

if __name__ == "__main__":
    # TRG_LEN is the decoder input length (== trg_len - 1 in the PyTorch spec).
    B, SRC_LEN, TRG_LEN = 16, 16, 8
    B_TILE = 8
    EMB, HID, K = 32, 32, 3
    SRC_VOCAB, SLOT_VOCAB, N_INTENT = 20, 12, 5
    N_ENC_LAYERS, N_DEC_LAYERS, MAX_LEN = 2, 2, 50

    key = jax.random.PRNGKey(0)
    k_param, k_src, k_trg = jax.random.split(key, 3)

    params = init_params(
        k_param, src_vocab=SRC_VOCAB, slot_vocab=SLOT_VOCAB, n_intent=N_INTENT,
        emb=EMB, hid=HID, k=K, n_enc_layers=N_ENC_LAYERS,
        n_dec_layers=N_DEC_LAYERS, max_len=MAX_LEN,
    )
    packed = pack_params(params)

    src = jax.random.randint(k_src, (B, SRC_LEN), 0, SRC_VOCAB, dtype=jnp.int32)
    trg = jax.random.randint(k_trg, (B, TRG_LEN), 0, SLOT_VOCAB, dtype=jnp.int32)

    intent_output, slot_output, attention = seq2seq_forward(packed, src, trg,
                                                            b_tile=B_TILE)
    jax.block_until_ready((intent_output, slot_output, attention))

    assert intent_output.shape == (B, N_INTENT)
    assert slot_output.shape == (B, TRG_LEN, SLOT_VOCAB)
    assert attention.shape == (B, TRG_LEN, SRC_LEN)

    # Correctness vs. a plain-JAX reference with bf16-rounded weights.  The
    # tolerance is loose because the kernel runs bf16 matmul operands and an
    # approximate softmax reciprocal; it still catches wiring/indexing bugs.
    ref_intent, ref_slot, ref_attn = _reference_forward(params, src, trg)
    assert bool(jnp.allclose(intent_output, ref_intent, rtol=2e-2, atol=1e-2))
    assert bool(jnp.allclose(slot_output, ref_slot, rtol=2e-2, atol=1e-2))
    assert bool(jnp.allclose(attention, ref_attn, rtol=2e-2, atol=1e-2))

    print("KERNEL_OK")
</pallas_src>

<mosaic_0001>
module attributes {stable_mosaic.version = 11 : i64} {
  func.func @_seq2seq_kernel(%arg0: i32, %arg1: memref<8x16x32xf32, #tpu.memory_space<vmem>>, %arg2: memref<8x8x32xf32, #tpu.memory_space<vmem>>, %arg3: memref<3x32x32xbf16, #tpu.memory_space<vmem>>, %arg4: memref<3x1x32xf32, #tpu.memory_space<vmem>>, %arg5: memref<3x32x32xbf16, #tpu.memory_space<vmem>>, %arg6: memref<3x1x32xf32, #tpu.memory_space<vmem>>, %arg7: memref<4x3x32x64xbf16, #tpu.memory_space<vmem>>, %arg8: memref<4x1x64xf32, #tpu.memory_space<vmem>>, %arg9: memref<2x32x128xbf16, #tpu.memory_space<vmem>>, %arg10: memref<2x1x128xf32, #tpu.memory_space<vmem>>, %arg11: memref<8x1x128xf32, #tpu.memory_space<vmem>>, %arg12: memref<8x8x128xf32, #tpu.memory_space<vmem>>, %arg13: memref<8x8x128xf32, #tpu.memory_space<vmem>>, %arg14: memref<8x26x32xf32, #tpu.memory_space<vmem>>, %arg15: memref<8x16x32xf32, #tpu.memory_space<vmem>>) attributes {dimension_semantics = [#tpu.dimension_semantics<parallel>], iteration_bounds = array<i64: 2>, scalar_prefetch = 0 : i64, scratch_operands = 2 : i64, tpu.core_type = #tpu.core_type<tc>, window_params = [{transform_indices = @transform_0, window_bounds = array<i64: 8, 16, 32>}, {transform_indices = @transform_1, window_bounds = array<i64: 8, 8, 32>}, {pipeline_mode = #tpu.pipeline_mode<synchronous>, transform_indices = @transform_2, window_bounds = array<i64: 3, 32, 32>}, {pipeline_mode = #tpu.pipeline_mode<synchronous>, transform_indices = @transform_3, window_bounds = array<i64: 3, 1, 32>}, {pipeline_mode = #tpu.pipeline_mode<synchronous>, transform_indices = @transform_4, window_bounds = array<i64: 3, 32, 32>}, {pipeline_mode = #tpu.pipeline_mode<synchronous>, transform_indices = @transform_5, window_bounds = array<i64: 3, 1, 32>}, {pipeline_mode = #tpu.pipeline_mode<synchronous>, transform_indices = @transform_6, window_bounds = array<i64: 4, 3, 32, 64>}, {pipeline_mode = #tpu.pipeline_mode<synchronous>, transform_indices = @transform_7, window_bounds = array<i64: 4, 1, 64>}, {pipeline_mode = #tpu.pipeline_mode<synchronous>, transform_indices = @transform_8, window_bounds = array<i64: 2, 32, 128>}, {pipeline_mode = #tpu.pipeline_mode<synchronous>, transform_indices = @transform_9, window_bounds = array<i64: 2, 1, 128>}, {transform_indices = @transform_10, window_bounds = array<i64: 8, 1, 128>}, {transform_indices = @transform_11, window_bounds = array<i64: 8, 8, 128>}, {transform_indices = @transform_12, window_bounds = array<i64: 8, 8, 128>}]} {
    %c0 = arith.constant 0 : index
    %c0_0 = arith.constant 0 : index
    %c0_1 = arith.constant 0 : index
    %0 = vector.load %arg1[%c0, %c0_0, %c0_1] : memref<8x16x32xf32, #tpu.memory_space<vmem>>, vector<8x16x32xf32>
    %1 = vector.shape_cast %0 : vector<8x16x32xf32> to vector<128x32xf32>
    %c0_2 = arith.constant 0 : index
    %c0_3 = arith.constant 0 : index
    %c0_4 = arith.constant 0 : index
    %2 = vector.load %arg3[%c0_2, %c0_3, %c0_4] : memref<3x32x32xbf16, #tpu.memory_space<vmem>>, vector<1x32x32xbf16>
    %3 = vector.shape_cast %2 : vector<1x32x32xbf16> to vector<32x32xbf16>
    %4 = arith.truncf %1 : vector<128x32xf32> to vector<128x32xbf16>
    %cst = arith.constant dense<0.000000e+00> : vector<128x32xf32>
    %5 = tpu.matmul %4, %3, %cst {dimension_numbers = #tpu.dot_dimension_numbers<[1], [0], [0], [1], [0, 0, 1, 1], [], []>} : vector<128x32xbf16>, vector<32x32xbf16>, vector<128x32xf32> -> vector<128x32xf32>
    %c0_5 = arith.constant 0 : index
    %c0_6 = arith.constant 0 : index
    %c0_7 = arith.constant 0 : index
    %6 = vector.load %arg4[%c0_5, %c0_6, %c0_7] : memref<3x1x32xf32, #tpu.memory_space<vmem>>, vector<1x1x32xf32>
    %7 = vector.shape_cast %6 : vector<1x1x32xf32> to vector<1x32xf32>
    %8 = vector.broadcast %7 : vector<1x32xf32> to vector<128x32xf32>
    %9 = arith.addf %5, %8 : vector<128x32xf32>
    %cst_8 = arith.constant 0.000000e+00 : f32
    %10 = vector.broadcast %cst_8 : f32 to vector<8x26x32xf32>
    %c0_9 = arith.constant 0 : index
    %c0_10 = arith.constant 0 : index
    %c0_11 = arith.constant 0 : index
    %11 = vector.load %arg14[%c0_9, %c0_10, %c0_11] : memref<8x26x32xf32, #tpu.memory_space<vmem>>, vector<8x26x32xf32>
    tpu.vector_store %arg14[%c0_9, %c0_10, %c0_11], %10 {strides = array<i32>} : memref<8x26x32xf32, #tpu.memory_space<vmem>>, vector<8x26x32xf32>,
    %12 = vector.shape_cast %9 : vector<128x32xf32> to vector<8x16x32xf32>
    %c0_12 = arith.constant 0 : index
    %c8 = arith.constant 8 : index
    %c0_13 = arith.constant 0 : index
    %13 = vector.load %arg14[%c0_12, %c8, %c0_13] : memref<8x26x32xf32, #tpu.memory_space<vmem>>, vector<8x16x32xf32>
    tpu.vector_store %arg14[%c0_12, %c8, %c0_13], %12 {strides = array<i32>} : memref<8x26x32xf32, #tpu.memory_space<vmem>>, vector<8x16x32xf32>,
    %c0_14 = arith.constant 0 : index
    %c0_15 = arith.constant 0 : index
    %c0_16 = arith.constant 0 : index
    %14 = vector.load %arg14[%c0_14, %c0_15, %c0_16] : memref<8x26x32xf32, #tpu.memory_space<vmem>>, vector<8x26x32xf32>
    %c0_17 = arith.constant 0 : index
    %c0_18 = arith.constant 0 : index
    %c0_19 = arith.constant 0 : index
    %15 = vector.load %arg8[%c0_17, %c0_18, %c0_19] : memref<4x1x64xf32, #tpu.memory_space<vmem>>, vector<1x1x64xf32>
    %16 = vector.shape_cast %15 : vector<1x1x64xf32> to vector<1x64xf32>
    %17 = vector.extract_strided_slice %14 {offsets = [0, 7, 0], sizes = [8, 16, 32], strides = [1, 1, 1]} : vector<8x26x32xf32> to vector<8x16x32xf32>
    %18 = vector.shape_cast %17 : vector<8x16x32xf32> to vector<128x32xf32>
    %c0_20 = arith.constant 0 : index
    %c0_21 = arith.constant 0 : index
    %c0_22 = arith.constant 0 : index
    %c0_23 = arith.constant 0 : index
    %19 = vector.load %arg7[%c0_20, %c0_21, %c0_22, %c0_23] : memref<4x3x32x64xbf16, #tpu.memory_space<vmem>>, vector<1x1x32x64xbf16>
    %20 = vector.shape_cast %19 : vector<1x1x32x64xbf16> to vector<32x64xbf16>
    %21 = arith.truncf %18 : vector<128x32xf32> to vector<128x32xbf16>
    %cst_24 = arith.constant dense<0.000000e+00> : vector<128x64xf32>
    %22 = tpu.matmul %21, %20, %cst_24 {dimension_numbers = #tpu.dot_dimension_numbers<[1], [0], [0], [1], [0, 0, 1, 1], [], []>} : vector<128x32xbf16>, vector<32x64xbf16>, vector<128x64xf32> -> vector<128x64xf32>
    %23 = vector.broadcast %16 : vector<1x64xf32> to vector<128x64xf32>
    %24 = arith.addf %23, %22 : vector<128x64xf32>
    %25 = vector.extract_strided_slice %14 {offsets = [0, 8, 0], sizes = [8, 16, 32], strides = [1, 1, 1]} : vector<8x26x32xf32> to vector<8x16x32xf32>
    %26 = vector.shape_cast %25 : vector<8x16x32xf32> to vector<128x32xf32>
    %c0_25 = arith.constant 0 : index
    %c1 = arith.constant 1 : index
    %c0_26 = arith.constant 0 : index
    %c0_27 = arith.constant 0 : index
    %27 = vector.load %arg7[%c0_25, %c1, %c0_26, %c0_27] : memref<4x3x32x64xbf16, #tpu.memory_space<vmem>>, vector<1x1x32x64xbf16>
    %28 = vector.shape_cast %27 : vector<1x1x32x64xbf16> to vector<32x64xbf16>
    %29 = arith.truncf %26 : vector<128x32xf32> to vector<128x32xbf16>
    %cst_28 = arith.constant dense<0.000000e+00> : vector<128x64xf32>
    %30 = tpu.matmul %29, %28, %cst_28 {dimension_numbers = #tpu.dot_dimension_numbers<[1], [0], [0], [1], [0, 0, 1, 1], [], []>} : vector<128x32xbf16>, vector<32x64xbf16>, vector<128x64xf32> -> vector<128x64xf32>
    %31 = arith.addf %24, %30 : vector<128x64xf32>
    %32 = vector.extract_strided_slice %14 {offsets = [0, 9, 0], sizes = [8, 16, 32], strides = [1, 1, 1]} : vector<8x26x32xf32> to vector<8x16x32xf32>
    %33 = vector.shape_cast %32 : vector<8x16x32xf32> to vector<128x32xf32>
    %c0_29 = arith.constant 0 : index
    %c2 = arith.constant 2 : index
    %c0_30 = arith.constant 0 : index
    %c0_31 = arith.constant 0 : index
    %34 = vector.load %arg7[%c0_29, %c2, %c0_30, %c0_31] : memref<4x3x32x64xbf16, #tpu.memory_space<vmem>>, vector<1x1x32x64xbf16>
    %35 = vector.shape_cast %34 : vector<1x1x32x64xbf16> to vector<32x64xbf16>
    %36 = arith.truncf %33 : vector<128x32xf32> to vector<128x32xbf16>
    %cst_32 = arith.constant dense<0.000000e+00> : vector<128x64xf32>
    %37 = tpu.matmul %36, %35, %cst_32 {dimension_numbers = #tpu.dot_dimension_numbers<[1], [0], [0], [1], [0, 0, 1, 1], [], []>} : vector<128x32xbf16>, vector<32x64xbf16>, vector<128x64xf32> -> vector<128x64xf32>
    %38 = arith.addf %31, %37 : vector<128x64xf32>
    %39 = vector.extract_strided_slice %38 {offsets = [0, 0], sizes = [128, 32], strides = [1, 1]} : vector<128x64xf32> to vector<128x32xf32>
    %40 = vector.extract_strided_slice %38 {offsets = [0, 32], sizes = [128, 32], strides = [1, 1]} : vector<128x64xf32> to vector<128x32xf32>
    %41 = arith.negf %40 : vector<128x32xf32>
    %42 = math.exp %41 : vector<128x32xf32>
    %cst_33 = arith.constant 1.000000e+00 : f32
    %43 = vector.broadcast %cst_33 : f32 to vector<128x32xf32>
    %44 = arith.addf %43, %42 : vector<128x32xf32>
    %45 = arith.divf %43, %44 : vector<128x32xf32>
    %46 = arith.mulf %39, %45 : vector<128x32xf32>
    %47 = arith.addf %46, %9 : vector<128x32xf32>
    %cst_34 = arith.constant 0.707106769 : f32
    %48 = vector.broadcast %cst_34 : f32 to vector<128x32xf32>
    %49 = arith.mulf %47, %48 : vector<128x32xf32>
    %50 = vector.shape_cast %49 : vector<128x32xf32> to vector<8x16x32xf32>
    %c0_35 = arith.constant 0 : index
    %c8_36 = arith.constant 8 : index
    %c0_37 = arith.constant 0 : index
    %51 = vector.load %arg14[%c0_35, %c8_36, %c0_37] : memref<8x26x32xf32, #tpu.memory_space<vmem>>, vector<8x16x32xf32>
    tpu.vector_store %arg14[%c0_35, %c8_36, %c0_37], %50 {strides = array<i32>} : memref<8x26x32xf32, #tpu.memory_space<vmem>>, vector<8x16x32xf32>,
    %c0_38 = arith.constant 0 : index
    %c0_39 = arith.constant 0 : index
    %c0_40 = arith.constant 0 : index
    %52 = vector.load %arg14[%c0_38, %c0_39, %c0_40] : memref<8x26x32xf32, #tpu.memory_space<vmem>>, vector<8x26x32xf32>
    %c1_41 = arith.constant 1 : index
    %c0_42 = arith.constant 0 : index
    %c0_43 = arith.constant 0 : index
    %53 = vector.load %arg8[%c1_41, %c0_42, %c0_43] : memref<4x1x64xf32, #tpu.memory_space<vmem>>, vector<1x1x64xf32>
    %54 = vector.shape_cast %53 : vector<1x1x64xf32> to vector<1x64xf32>
    %55 = vector.extract_strided_slice %52 {offsets = [0, 7, 0], sizes = [8, 16, 32], strides = [1, 1, 1]} : vector<8x26x32xf32> to vector<8x16x32xf32>
    %56 = vector.shape_cast %55 : vector<8x16x32xf32> to vector<128x32xf32>
    %c1_44 = arith.constant 1 : index
    %c0_45 = arith.constant 0 : index
    %c0_46 = arith.constant 0 : index
    %c0_47 = arith.constant 0 : index
    %57 = vector.load %arg7[%c1_44, %c0_45, %c0_46, %c0_47] : memref<4x3x32x64xbf16, #tpu.memory_space<vmem>>, vector<1x1x32x64xbf16>
    %58 = vector.shape_cast %57 : vector<1x1x32x64xbf16> to vector<32x64xbf16>
    %59 = arith.truncf %56 : vector<128x32xf32> to vector<128x32xbf16>
    %cst_48 = arith.constant dense<0.000000e+00> : vector<128x64xf32>
    %60 = tpu.matmul %59, %58, %cst_48 {dimension_numbers = #tpu.dot_dimension_numbers<[1], [0], [0], [1], [0, 0, 1, 1], [], []>} : vector<128x32xbf16>, vector<32x64xbf16>, vector<128x64xf32> -> vector<128x64xf32>
    %61 = vector.broadcast %54 : vector<1x64xf32> to vector<128x64xf32>
    %62 = arith.addf %61, %60 : vector<128x64xf32>
    %63 = vector.extract_strided_slice %52 {offsets = [0, 8, 0], sizes = [8, 16, 32], strides = [1, 1, 1]} : vector<8x26x32xf32> to vector<8x16x32xf32>
    %64 = vector.shape_cast %63 : vector<8x16x32xf32> to vector<128x32xf32>
    %c1_49 = arith.constant 1 : index
    %c1_50 = arith.constant 1 : index
    %c0_51 = arith.constant 0 : index
    %c0_52 = arith.constant 0 : index
    %65 = vector.load %arg7[%c1_49, %c1_50, %c0_51, %c0_52] : memref<4x3x32x64xbf16, #tpu.memory_space<vmem>>, vector<1x1x32x64xbf16>
    %66 = vector.shape_cast %65 : vector<1x1x32x64xbf16> to vector<32x64xbf16>
    %67 = arith.truncf %64 : vector<128x32xf32> to vector<128x32xbf16>
    %cst_53 = arith.constant dense<0.000000e+00> : vector<128x64xf32>
    %68 = tpu.matmul %67, %66, %cst_53 {dimension_numbers = #tpu.dot_dimension_numbers<[1], [0], [0], [1], [0, 0, 1, 1], [], []>} : vector<128x32xbf16>, vector<32x64xbf16>, vector<128x64xf32> -> vector<128x64xf32>
    %69 = arith.addf %62, %68 : vector<128x64xf32>
    %70 = vector.extract_strided_slice %52 {offsets = [0, 9, 0], sizes = [8, 16, 32], strides = [1, 1, 1]} : vector<8x26x32xf32> to vector<8x16x32xf32>
    %71 = vector.shape_cast %70 : vector<8x16x32xf32> to vector<128x32xf32>
    %c1_54 = arith.constant 1 : index
    %c2_55 = arith.constant 2 : index
    %c0_56 = arith.constant 0 : index
    %c0_57 = arith.constant 0 : index
    %72 = vector.load %arg7[%c1_54, %c2_55, %c0_56, %c0_57] : memref<4x3x32x64xbf16, #tpu.memory_space<vmem>>, vector<1x1x32x64xbf16>
    %73 = vector.shape_cast %72 : vector<1x1x32x64xbf16> to vector<32x64xbf16>
    %74 = arith.truncf %71 : vector<128x32xf32> to vector<128x32xbf16>
    %cst_58 = arith.constant dense<0.000000e+00> : vector<128x64xf32>
    %75 = tpu.matmul %74, %73, %cst_58 {dimension_numbers = #tpu.dot_dimension_numbers<[1], [0], [0], [1], [0, 0, 1, 1], [], []>} : vector<128x32xbf16>, vector<32x64xbf16>, vector<128x64xf32> -> vector<128x64xf32>
    %76 = arith.addf %69, %75 : vector<128x64xf32>
    %77 = vector.extract_strided_slice %76 {offsets = [0, 0], sizes = [128, 32], strides = [1, 1]} : vector<128x64xf32> to vector<128x32xf32>
    %78 = vector.extract_strided_slice %76 {offsets = [0, 32], sizes = [128, 32], strides = [1, 1]} : vector<128x64xf32> to vector<128x32xf32>
    %79 = arith.negf %78 : vector<128x32xf32>
    %80 = math.exp %79 : vector<128x32xf32>
    %cst_59 = arith.constant 1.000000e+00 : f32
    %81 = vector.broadcast %cst_59 : f32 to vector<128x32xf32>
    %82 = arith.addf %81, %80 : vector<128x32xf32>
    %83 = arith.divf %81, %82 : vector<128x32xf32>
    %84 = arith.mulf %77, %83 : vector<128x32xf32>
    %85 = arith.addf %84, %49 : vector<128x32xf32>
    %cst_60 = arith.constant 0.707106769 : f32
    %86 = vector.broadcast %cst_60 : f32 to vector<128x32xf32>
    %87 = arith.mulf %85, %86 : vector<128x32xf32>
    %c0_61 = arith.constant 0 : index
    %c0_62 = arith.constant 0 : index
    %c0_63 = arith.constant 0 : index
    %88 = vector.load %arg5[%c0_61, %c0_62, %c0_63] : memref<3x32x32xbf16, #tpu.memory_space<vmem>>, vector<1x32x32xbf16>
    %89 = vector.shape_cast %88 : vector<1x32x32xbf16> to vector<32x32xbf16>
    %90 = arith.truncf %87 : vector<128x32xf32> to vector<128x32xbf16>
    %cst_64 = arith.constant dense<0.000000e+00> : vector<128x32xf32>
    %91 = tpu.matmul %90, %89, %cst_64 {dimension_numbers = #tpu.dot_dimension_numbers<[1], [0], [0], [1], [0, 0, 1, 1], [], []>} : vector<128x32xbf16>, vector<32x32xbf16>, vector<128x32xf32> -> vector<128x32xf32>
    %c0_65 = arith.constant 0 : index
    %c0_66 = arith.constant 0 : index
    %c0_67 = arith.constant 0 : index
    %92 = vector.load %arg6[%c0_65, %c0_66, %c0_67] : memref<3x1x32xf32, #tpu.memory_space<vmem>>, vector<1x1x32xf32>
    %93 = vector.shape_cast %92 : vector<1x1x32xf32> to vector<1x32xf32>
    %94 = vector.broadcast %93 : vector<1x32xf32> to vector<128x32xf32>
    %95 = arith.addf %91, %94 : vector<128x32xf32>
    %96 = arith.addf %95, %1 : vector<128x32xf32>
    %cst_68 = arith.constant 0.707106769 : f32
    %97 = vector.broadcast %cst_68 : f32 to vector<128x32xf32>
    %98 = arith.mulf %96, %97 : vector<128x32xf32>
    %99 = vector.shape_cast %98 : vector<128x32xf32> to vector<8x16x32xf32>
    %cst_69 = arith.constant dense<0.000000e+00> : vector<8x32xf32>
    %100 = vector.multi_reduction <add>, %99, %cst_69 [1] : vector<8x16x32xf32> to vector<8x32xf32>
    %cst_70 = arith.constant 1.600000e+01 : f32
    %101 = vector.broadcast %cst_70 : f32 to vector<8x32xf32>
    %102 = arith.divf %100, %101 : vector<8x32xf32>
    %c0_71 = arith.constant 0 : index
    %c0_72 = arith.constant 0 : index
    %c0_73 = arith.constant 0 : index
    %103 = vector.load %arg9[%c0_71, %c0_72, %c0_73] : memref<2x32x128xbf16, #tpu.memory_space<vmem>>, vector<1x32x128xbf16>
    %104 = vector.shape_cast %103 : vector<1x32x128xbf16> to vector<32x128xbf16>
    %105 = arith.truncf %102 : vector<8x32xf32> to vector<8x32xbf16>
    %cst_74 = arith.constant dense<0.000000e+00> : vector<8x128xf32>
    %106 = tpu.matmul %105, %104, %cst_74 {dimension_numbers = #tpu.dot_dimension_numbers<[1], [0], [0], [1], [0, 0, 1, 1], [], []>} : vector<8x32xbf16>, vector<32x128xbf16>, vector<8x128xf32> -> vector<8x128xf32>
    %c0_75 = arith.constant 0 : index
    %c0_76 = arith.constant 0 : index
    %c0_77 = arith.constant 0 : index
    %107 = vector.load %arg10[%c0_75, %c0_76, %c0_77] : memref<2x1x128xf32, #tpu.memory_space<vmem>>, vector<1x1x128xf32>
    %108 = vector.shape_cast %107 : vector<1x1x128xf32> to vector<1x128xf32>
    %109 = vector.broadcast %108 : vector<1x128xf32> to vector<8x128xf32>
    %110 = arith.addf %106, %109 : vector<8x128xf32>
    %111 = vector.shape_cast %110 : vector<8x128xf32> to vector<8x1x128xf32>
    %c0_78 = arith.constant 0 : index
    %c0_79 = arith.constant 0 : index
    %c0_80 = arith.constant 0 : index
    %112 = vector.load %arg11[%c0_78, %c0_79, %c0_80] : memref<8x1x128xf32, #tpu.memory_space<vmem>>, vector<8x1x128xf32>
    tpu.vector_store %arg11[%c0_78, %c0_79, %c0_80], %111 {strides = array<i32>} : memref<8x1x128xf32, #tpu.memory_space<vmem>>, vector<8x1x128xf32>,
    %c0_81 = arith.constant 0 : index
    %c0_82 = arith.constant 0 : index
    %c0_83 = arith.constant 0 : index
    %113 = vector.load %arg2[%c0_81, %c0_82, %c0_83] : memref<8x8x32xf32, #tpu.memory_space<vmem>>, vector<8x8x32xf32>
    %114 = vector.shape_cast %113 : vector<8x8x32xf32> to vector<64x32xf32>
    %c1_84 = arith.constant 1 : index
    %c0_85 = arith.constant 0 : index
    %c0_86 = arith.constant 0 : index
    %115 = vector.load %arg3[%c1_84, %c0_85, %c0_86] : memref<3x32x32xbf16, #tpu.memory_space<vmem>>, vector<1x32x32xbf16>
    %116 = vector.shape_cast %115 : vector<1x32x32xbf16> to vector<32x32xbf16>
    %117 = arith.truncf %114 : vector<64x32xf32> to vector<64x32xbf16>
    %cst_87 = arith.constant dense<0.000000e+00> : vector<64x32xf32>
    %118 = tpu.matmul %117, %116, %cst_87 {dimension_numbers = #tpu.dot_dimension_numbers<[1], [0], [0], [1], [0, 0, 1, 1], [], []>} : vector<64x32xbf16>, vector<32x32xbf16>, vector<64x32xf32> -> vector<64x32xf32>
    %c1_88 = arith.constant 1 : index
    %c0_89 = arith.constant 0 : index
    %c0_90 = arith.constant 0 : index
    %119 = vector.load %arg4[%c1_88, %c0_89, %c0_90] : memref<3x1x32xf32, #tpu.memory_space<vmem>>, vector<1x1x32xf32>
    %120 = vector.shape_cast %119 : vector<1x1x32xf32> to vector<1x32xf32>
    %121 = vector.broadcast %120 : vector<1x32xf32> to vector<64x32xf32>
    %122 = arith.addf %118, %121 : vector<64x32xf32>
    %123 = vector.shape_cast %95 : vector<128x32xf32> to vector<8x16x32xf32>
    %124 = vector.shape_cast %98 : vector<128x32xf32> to vector<8x16x32xf32>
    %cst_91 = arith.constant 0.000000e+00 : f32
    %125 = vector.broadcast %cst_91 : f32 to vector<8x16x32xf32>
    %c0_92 = arith.constant 0 : index
    %c0_93 = arith.constant 0 : index
    %c0_94 = arith.constant 0 : index
    %126 = vector.load %arg15[%c0_92, %c0_93, %c0_94] : memref<8x16x32xf32, #tpu.memory_space<vmem>>, vector<8x16x32xf32>
    tpu.vector_store %arg15[%c0_92, %c0_93, %c0_94], %125 {strides = array<i32>} : memref<8x16x32xf32, #tpu.memory_space<vmem>>, vector<8x16x32xf32>,
    %127 = vector.shape_cast %122 : vector<64x32xf32> to vector<8x8x32xf32>
    %c0_95 = arith.constant 0 : index
    %c8_96 = arith.constant 8 : index
    %c0_97 = arith.constant 0 : index
    %128 = vector.load %arg15[%c0_95, %c8_96, %c0_97] : memref<8x16x32xf32, #tpu.memory_space<vmem>>, vector<8x8x32xf32>
    tpu.vector_store %arg15[%c0_95, %c8_96, %c0_97], %127 {strides = array<i32>} : memref<8x16x32xf32, #tpu.memory_space<vmem>>, vector<8x8x32xf32>,
    %c0_98 = arith.constant 0 : index
    %c0_99 = arith.constant 0 : index
    %c0_100 = arith.constant 0 : index
    %129 = vector.load %arg15[%c0_98, %c0_99, %c0_100] : memref<8x16x32xf32, #tpu.memory_space<vmem>>, vector<8x16x32xf32>
    %c2_101 = arith.constant 2 : index
    %c0_102 = arith.constant 0 : index
    %c0_103 = arith.constant 0 : index
    %130 = vector.load %arg8[%c2_101, %c0_102, %c0_103] : memref<4x1x64xf32, #tpu.memory_space<vmem>>, vector<1x1x64xf32>
    %131 = vector.shape_cast %130 : vector<1x1x64xf32> to vector<1x64xf32>
    %132 = vector.extract_strided_slice %129 {offsets = [0, 6, 0], sizes = [8, 8, 32], strides = [1, 1, 1]} : vector<8x16x32xf32> to vector<8x8x32xf32>
    %133 = vector.shape_cast %132 : vector<8x8x32xf32> to vector<64x32xf32>
    %c2_104 = arith.constant 2 : index
    %c0_105 = arith.constant 0 : index
    %c0_106 = arith.constant 0 : index
    %c0_107 = arith.constant 0 : index
    %134 = vector.load %arg7[%c2_104, %c0_105, %c0_106, %c0_107] : memref<4x3x32x64xbf16, #tpu.memory_space<vmem>>, vector<1x1x32x64xbf16>
    %135 = vector.shape_cast %134 : vector<1x1x32x64xbf16> to vector<32x64xbf16>
    %136 = arith.truncf %133 : vector<64x32xf32> to vector<64x32xbf16>
    %cst_108 = arith.constant dense<0.000000e+00> : vector<64x64xf32>
    %137 = tpu.matmul %136, %135, %cst_108 {dimension_numbers = #tpu.dot_dimension_numbers<[1], [0], [0], [1], [0, 0, 1, 1], [], []>} : vector<64x32xbf16>, vector<32x64xbf16>, vector<64x64xf32> -> vector<64x64xf32>
    %138 = vector.broadcast %131 : vector<1x64xf32> to vector<64x64xf32>
    %139 = arith.addf %138, %137 : vector<64x64xf32>
    %140 = vector.extract_strided_slice %129 {offsets = [0, 7, 0], sizes = [8, 8, 32], strides = [1, 1, 1]} : vector<8x16x32xf32> to vector<8x8x32xf32>
    %141 = vector.shape_cast %140 : vector<8x8x32xf32> to vector<64x32xf32>
    %c2_109 = arith.constant 2 : index
    %c1_110 = arith.constant 1 : index
    %c0_111 = arith.constant 0 : index
    %c0_112 = arith.constant 0 : index
    %142 = vector.load %arg7[%c2_109, %c1_110, %c0_111, %c0_112] : memref<4x3x32x64xbf16, #tpu.memory_space<vmem>>, vector<1x1x32x64xbf16>
    %143 = vector.shape_cast %142 : vector<1x1x32x64xbf16> to vector<32x64xbf16>
    %144 = arith.truncf %141 : vector<64x32xf32> to vector<64x32xbf16>
    %cst_113 = arith.constant dense<0.000000e+00> : vector<64x64xf32>
    %145 = tpu.matmul %144, %143, %cst_113 {dimension_numbers = #tpu.dot_dimension_numbers<[1], [0], [0], [1], [0, 0, 1, 1], [], []>} : vector<64x32xbf16>, vector<32x64xbf16>, vector<64x64xf32> -> vector<64x64xf32>
    %146 = arith.addf %139, %145 : vector<64x64xf32>
    %147 = vector.extract_strided_slice %129 {offsets = [0, 8, 0], sizes = [8, 8, 32], strides = [1, 1, 1]} : vector<8x16x32xf32> to vector<8x8x32xf32>
    %148 = vector.shape_cast %147 : vector<8x8x32xf32> to vector<64x32xf32>
    %c2_114 = arith.constant 2 : index
    %c2_115 = arith.constant 2 : index
    %c0_116 = arith.constant 0 : index
    %c0_117 = arith.constant 0 : index
    %149 = vector.load %arg7[%c2_114, %c2_115, %c0_116, %c0_117] : memref<4x3x32x64xbf16, #tpu.memory_space<vmem>>, vector<1x1x32x64xbf16>
    %150 = vector.shape_cast %149 : vector<1x1x32x64xbf16> to vector<32x64xbf16>
    %151 = arith.truncf %148 : vector<64x32xf32> to vector<64x32xbf16>
    %cst_118 = arith.constant dense<0.000000e+00> : vector<64x64xf32>
    %152 = tpu.matmul %151, %150, %cst_118 {dimension_numbers = #tpu.dot_dimension_numbers<[1], [0], [0], [1], [0, 0, 1, 1], [], []>} : vector<64x32xbf16>, vector<32x64xbf16>, vector<64x64xf32> -> vector<64x64xf32>
    %153 = arith.addf %146, %152 : vector<64x64xf32>
    %154 = vector.extract_strided_slice %153 {offsets = [0, 0], sizes = [64, 32], strides = [1, 1]} : vector<64x64xf32> to vector<64x32xf32>
    %155 = vector.extract_strided_slice %153 {offsets = [0, 32], sizes = [64, 32], strides = [1, 1]} : vector<64x64xf32> to vector<64x32xf32>
    %156 = arith.negf %155 : vector<64x32xf32>
    %157 = math.exp %156 : vector<64x32xf32>
    %cst_119 = arith.constant 1.000000e+00 : f32
    %158 = vector.broadcast %cst_119 : f32 to vector<64x32xf32>
    %159 = arith.addf %158, %157 : vector<64x32xf32>
    %160 = arith.divf %158, %159 : vector<64x32xf32>
    %161 = arith.mulf %154, %160 : vector<64x32xf32>
    %c2_120 = arith.constant 2 : index
    %c0_121 = arith.constant 0 : index
    %c0_122 = arith.constant 0 : index
    %162 = vector.load %arg5[%c2_120, %c0_121, %c0_122] : memref<3x32x32xbf16, #tpu.memory_space<vmem>>, vector<1x32x32xbf16>
    %163 = vector.shape_cast %162 : vector<1x32x32xbf16> to vector<32x32xbf16>
    %164 = arith.truncf %161 : vector<64x32xf32> to vector<64x32xbf16>
    %cst_123 = arith.constant dense<0.000000e+00> : vector<64x32xf32>
    %165 = tpu.matmul %164, %163, %cst_123 {dimension_numbers = #tpu.dot_dimension_numbers<[1], [0], [0], [1], [0, 0, 1, 1], [], []>} : vector<64x32xbf16>, vector<32x32xbf16>, vector<64x32xf32> -> vector<64x32xf32>
    %c2_124 = arith.constant 2 : index
    %c0_125 = arith.constant 0 : index
    %c0_126 = arith.constant 0 : index
    %166 = vector.load %arg6[%c2_124, %c0_125, %c0_126] : memref<3x1x32xf32, #tpu.memory_space<vmem>>, vector<1x1x32xf32>
    %167 = vector.shape_cast %166 : vector<1x1x32xf32> to vector<1x32xf32>
    %168 = vector.broadcast %167 : vector<1x32xf32> to vector<64x32xf32>
    %169 = arith.addf %165, %168 : vector<64x32xf32>
    %170 = arith.addf %169, %114 : vector<64x32xf32>
    %cst_127 = arith.constant 0.707106769 : f32
    %171 = vector.broadcast %cst_127 : f32 to vector<64x32xf32>
    %172 = arith.mulf %170, %171 : vector<64x32xf32>
    %173 = vector.shape_cast %172 : vector<64x32xf32> to vector<8x8x32xf32>
    "tpu.trace_start"() <{level = 10 : i32, message = "bte,bse->bts"}> : () -> ()
    %cst_128 = arith.constant dense<0.000000e+00> : vector<8x8x16xf32>
    %174 = tpu.matmul %173, %123, %cst_128 {dimension_numbers = #tpu.dot_dimension_numbers<[2], [2], [1], [1], [0, 0, 0, 1, 1, 1], [0], [0]>} : vector<8x8x32xf32>, vector<8x16x32xf32>, vector<8x8x16xf32> -> vector<8x8x16xf32>
    "tpu.trace_stop"() : () -> ()
    %cst_129 = arith.constant dense<0xFF800000> : vector<8x8xf32>
    %175 = vector.multi_reduction <maximumf>, %174, %cst_129 [2] : vector<8x8x16xf32> to vector<8x8xf32>
    %176 = vector.shape_cast %175 : vector<8x8xf32> to vector<8x8x1xf32>
    %177 = vector.broadcast %176 : vector<8x8x1xf32> to vector<8x8x16xf32>
    %178 = arith.subf %174, %177 : vector<8x8x16xf32>
    %179 = math.exp %178 : vector<8x8x16xf32>
    %cst_130 = arith.constant dense<0.000000e+00> : vector<8x8xf32>
    %180 = vector.multi_reduction <add>, %179, %cst_130 [2] : vector<8x8x16xf32> to vector<8x8xf32>
    %181 = vector.shape_cast %180 : vector<8x8xf32> to vector<8x8x1xf32>
    %182 = tpu.reciprocal %181 {approx = true} : vector<8x8x1xf32> -> vector<8x8x1xf32>
    %183 = vector.broadcast %182 : vector<8x8x1xf32> to vector<8x8x16xf32>
    %184 = arith.mulf %179, %183 : vector<8x8x16xf32>
    %185 = arith.truncf %184 : vector<8x8x16xf32> to vector<8x8x16xbf16>
    %186 = arith.truncf %124 : vector<8x16x32xf32> to vector<8x16x32xbf16>
    "tpu.trace_start"() <{level = 10 : i32, message = "bts,bse->bte"}> : () -> ()
    %cst_131 = arith.constant dense<0.000000e+00> : vector<8x8x32xf32>
    %187 = tpu.matmul %185, %186, %cst_131 {dimension_numbers = #tpu.dot_dimension_numbers<[2], [1], [1], [2], [0, 0, 0, 1, 1, 2], [0], [0]>} : vector<8x8x16xbf16>, vector<8x16x32xbf16>, vector<8x8x32xf32> -> vector<8x8x32xf32>
    "tpu.trace_stop"() : () -> ()
    %188 = vector.shape_cast %187 : vector<8x8x32xf32> to vector<64x32xf32>
    %c2_132 = arith.constant 2 : index
    %c0_133 = arith.constant 0 : index
    %c0_134 = arith.constant 0 : index
    %189 = vector.load %arg3[%c2_132, %c0_133, %c0_134] : memref<3x32x32xbf16, #tpu.memory_space<vmem>>, vector<1x32x32xbf16>
    %190 = vector.shape_cast %189 : vector<1x32x32xbf16> to vector<32x32xbf16>
    %191 = arith.truncf %188 : vector<64x32xf32> to vector<64x32xbf16>
    %cst_135 = arith.constant dense<0.000000e+00> : vector<64x32xf32>
    %192 = tpu.matmul %191, %190, %cst_135 {dimension_numbers = #tpu.dot_dimension_numbers<[1], [0], [0], [1], [0, 0, 1, 1], [], []>} : vector<64x32xbf16>, vector<32x32xbf16>, vector<64x32xf32> -> vector<64x32xf32>
    %c2_136 = arith.constant 2 : index
    %c0_137 = arith.constant 0 : index
    %c0_138 = arith.constant 0 : index
    %193 = vector.load %arg4[%c2_136, %c0_137, %c0_138] : memref<3x1x32xf32, #tpu.memory_space<vmem>>, vector<1x1x32xf32>
    %194 = vector.shape_cast %193 : vector<1x1x32xf32> to vector<1x32xf32>
    %195 = vector.broadcast %194 : vector<1x32xf32> to vector<64x32xf32>
    %196 = arith.addf %192, %195 : vector<64x32xf32>
    %197 = arith.addf %161, %196 : vector<64x32xf32>
    %cst_139 = arith.constant 0.707106769 : f32
    %198 = vector.broadcast %cst_139 : f32 to vector<64x32xf32>
    %199 = arith.mulf %197, %198 : vector<64x32xf32>
    %200 = arith.addf %199, %122 : vector<64x32xf32>
    %cst_140 = arith.constant 0.707106769 : f32
    %201 = vector.broadcast %cst_140 : f32 to vector<64x32xf32>
    %202 = arith.mulf %200, %201 : vector<64x32xf32>
    %203 = vector.shape_cast %202 : vector<64x32xf32> to vector<8x8x32xf32>
    %c0_141 = arith.constant 0 : index
    %c8_142 = arith.constant 8 : index
    %c0_143 = arith.constant 0 : index
    %204 = vector.load %arg15[%c0_141, %c8_142, %c0_143] : memref<8x16x32xf32, #tpu.memory_space<vmem>>, vector<8x8x32xf32>
    tpu.vector_store %arg15[%c0_141, %c8_142, %c0_143], %203 {strides = array<i32>} : memref<8x16x32xf32, #tpu.memory_space<vmem>>, vector<8x8x32xf32>,
    %c0_144 = arith.constant 0 : index
    %c0_145 = arith.constant 0 : index
    %c0_146 = arith.constant 0 : index
    %205 = vector.load %arg15[%c0_144, %c0_145, %c0_146] : memref<8x16x32xf32, #tpu.memory_space<vmem>>, vector<8x16x32xf32>
    %c3 = arith.constant 3 : index
    %c0_147 = arith.constant 0 : index
    %c0_148 = arith.constant 0 : index
    %206 = vector.load %arg8[%c3, %c0_147, %c0_148] : memref<4x1x64xf32, #tpu.memory_space<vmem>>, vector<1x1x64xf32>
    %207 = vector.shape_cast %206 : vector<1x1x64xf32> to vector<1x64xf32>
    %208 = vector.extract_strided_slice %205 {offsets = [0, 6, 0], sizes = [8, 8, 32], strides = [1, 1, 1]} : vector<8x16x32xf32> to vector<8x8x32xf32>
    %209 = vector.shape_cast %208 : vector<8x8x32xf32> to vector<64x32xf32>
    %c3_149 = arith.constant 3 : index
    %c0_150 = arith.constant 0 : index
    %c0_151 = arith.constant 0 : index
    %c0_152 = arith.constant 0 : index
    %210 = vector.load %arg7[%c3_149, %c0_150, %c0_151, %c0_152] : memref<4x3x32x64xbf16, #tpu.memory_space<vmem>>, vector<1x1x32x64xbf16>
    %211 = vector.shape_cast %210 : vector<1x1x32x64xbf16> to vector<32x64xbf16>
    %212 = arith.truncf %209 : vector<64x32xf32> to vector<64x32xbf16>
    %cst_153 = arith.constant dense<0.000000e+00> : vector<64x64xf32>
    %213 = tpu.matmul %212, %211, %cst_153 {dimension_numbers = #tpu.dot_dimension_numbers<[1], [0], [0], [1], [0, 0, 1, 1], [], []>} : vector<64x32xbf16>, vector<32x64xbf16>, vector<64x64xf32> -> vector<64x64xf32>
    %214 = vector.broadcast %207 : vector<1x64xf32> to vector<64x64xf32>
    %215 = arith.addf %214, %213 : vector<64x64xf32>
    %216 = vector.extract_strided_slice %205 {offsets = [0, 7, 0], sizes = [8, 8, 32], strides = [1, 1, 1]} : vector<8x16x32xf32> to vector<8x8x32xf32>
    %217 = vector.shape_cast %216 : vector<8x8x32xf32> to vector<64x32xf32>
    %c3_154 = arith.constant 3 : index
    %c1_155 = arith.constant 1 : index
    %c0_156 = arith.constant 0 : index
    %c0_157 = arith.constant 0 : index
    %218 = vector.load %arg7[%c3_154, %c1_155, %c0_156, %c0_157] : memref<4x3x32x64xbf16, #tpu.memory_space<vmem>>, vector<1x1x32x64xbf16>
    %219 = vector.shape_cast %218 : vector<1x1x32x64xbf16> to vector<32x64xbf16>
    %220 = arith.truncf %217 : vector<64x32xf32> to vector<64x32xbf16>
    %cst_158 = arith.constant dense<0.000000e+00> : vector<64x64xf32>
    %221 = tpu.matmul %220, %219, %cst_158 {dimension_numbers = #tpu.dot_dimension_numbers<[1], [0], [0], [1], [0, 0, 1, 1], [], []>} : vector<64x32xbf16>, vector<32x64xbf16>, vector<64x64xf32> -> vector<64x64xf32>
    %222 = arith.addf %215, %221 : vector<64x64xf32>
    %223 = vector.extract_strided_slice %205 {offsets = [0, 8, 0], sizes = [8, 8, 32], strides = [1, 1, 1]} : vector<8x16x32xf32> to vector<8x8x32xf32>
    %224 = vector.shape_cast %223 : vector<8x8x32xf32> to vector<64x32xf32>
    %c3_159 = arith.constant 3 : index
    %c2_160 = arith.constant 2 : index
    %c0_161 = arith.constant 0 : index
    %c0_162 = arith.constant 0 : index
    %225 = vector.load %arg7[%c3_159, %c2_160, %c0_161, %c0_162] : memref<4x3x32x64xbf16, #tpu.memory_space<vmem>>, vector<1x1x32x64xbf16>
    %226 = vector.shape_cast %225 : vector<1x1x32x64xbf16> to vector<32x64xbf16>
    %227 = arith.truncf %224 : vector<64x32xf32> to vector<64x32xbf16>
    %cst_163 = arith.constant dense<0.000000e+00> : vector<64x64xf32>
    %228 = tpu.matmul %227, %226, %cst_163 {dimension_numbers = #tpu.dot_dimension_numbers<[1], [0], [0], [1], [0, 0, 1, 1], [], []>} : vector<64x32xbf16>, vector<32x64xbf16>, vector<64x64xf32> -> vector<64x64xf32>
    %229 = arith.addf %222, %228 : vector<64x64xf32>
    %230 = vector.extract_strided_slice %229 {offsets = [0, 0], sizes = [64, 32], strides = [1, 1]} : vector<64x64xf32> to vector<64x32xf32>
    %231 = vector.extract_strided_slice %229 {offsets = [0, 32], sizes = [64, 32], strides = [1, 1]} : vector<64x64xf32> to vector<64x32xf32>
    %232 = arith.negf %231 : vector<64x32xf32>
    %233 = math.exp %232 : vector<64x32xf32>
    %cst_164 = arith.constant 1.000000e+00 : f32
    %234 = vector.broadcast %cst_164 : f32 to vector<64x32xf32>
    %235 = arith.addf %234, %233 : vector<64x32xf32>
    %236 = arith.divf %234, %235 : vector<64x32xf32>
    %237 = arith.mulf %230, %236 : vector<64x32xf32>
    %c2_165 = arith.constant 2 : index
    %c0_166 = arith.constant 0 : index
    %c0_167 = arith.constant 0 : index
    %238 = vector.load %arg5[%c2_165, %c0_166, %c0_167] : memref<3x32x32xbf16, #tpu.memory_space<vmem>>, vector<1x32x32xbf16>
    %239 = vector.shape_cast %238 : vector<1x32x32xbf16> to vector<32x32xbf16>
    %240 = arith.truncf %237 : vector<64x32xf32> to vector<64x32xbf16>
    %cst_168 = arith.constant dense<0.000000e+00> : vector<64x32xf32>
    %241 = tpu.matmul %240, %239, %cst_168 {dimension_numbers = #tpu.dot_dimension_numbers<[1], [0], [0], [1], [0, 0, 1, 1], [], []>} : vector<64x32xbf16>, vector<32x32xbf16>, vector<64x32xf32> -> vector<64x32xf32>
    %c2_169 = arith.constant 2 : index
    %c0_170 = arith.constant 0 : index
    %c0_171 = arith.constant 0 : index
    %242 = vector.load %arg6[%c2_169, %c0_170, %c0_171] : memref<3x1x32xf32, #tpu.memory_space<vmem>>, vector<1x1x32xf32>
    %243 = vector.shape_cast %242 : vector<1x1x32xf32> to vector<1x32xf32>
    %244 = vector.broadcast %243 : vector<1x32xf32> to vector<64x32xf32>
    %245 = arith.addf %241, %244 : vector<64x32xf32>
    %246 = arith.addf %245, %114 : vector<64x32xf32>
    %cst_172 = arith.constant 0.707106769 : f32
    %247 = vector.broadcast %cst_172 : f32 to vector<64x32xf32>
    %248 = arith.mulf %246, %247 : vector<64x32xf32>
    %249 = vector.shape_cast %248 : vector<64x32xf32> to vector<8x8x32xf32>
    "tpu.trace_start"() <{level = 10 : i32, message = "bte,bse->bts"}> : () -> ()
    %cst_173 = arith.constant dense<0.000000e+00> : vector<8x8x16xf32>
    %250 = tpu.matmul %249, %123, %cst_173 {dimension_numbers = #tpu.dot_dimension_numbers<[2], [2], [1], [1], [0, 0, 0, 1, 1, 1], [0], [0]>} : vector<8x8x32xf32>, vector<8x16x32xf32>, vector<8x8x16xf32> -> vector<8x8x16xf32>
    "tpu.trace_stop"() : () -> ()
    %cst_174 = arith.constant dense<0xFF800000> : vector<8x8xf32>
    %251 = vector.multi_reduction <maximumf>, %250, %cst_174 [2] : vector<8x8x16xf32> to vector<8x8xf32>
    %252 = vector.shape_cast %251 : vector<8x8xf32> to vector<8x8x1xf32>
    %253 = vector.broadcast %252 : vector<8x8x1xf32> to vector<8x8x16xf32>
    %254 = arith.subf %250, %253 : vector<8x8x16xf32>
    %255 = math.exp %254 : vector<8x8x16xf32>
    %cst_175 = arith.constant dense<0.000000e+00> : vector<8x8xf32>
    %256 = vector.multi_reduction <add>, %255, %cst_175 [2] : vector<8x8x16xf32> to vector<8x8xf32>
    %257 = vector.shape_cast %256 : vector<8x8xf32> to vector<8x8x1xf32>
    %258 = tpu.reciprocal %257 {approx = true} : vector<8x8x1xf32> -> vector<8x8x1xf32>
    %259 = vector.broadcast %258 : vector<8x8x1xf32> to vector<8x8x16xf32>
    %260 = arith.mulf %255, %259 : vector<8x8x16xf32>
    %261 = arith.truncf %260 : vector<8x8x16xf32> to vector<8x8x16xbf16>
    %262 = arith.truncf %124 : vector<8x16x32xf32> to vector<8x16x32xbf16>
    "tpu.trace_start"() <{level = 10 : i32, message = "bts,bse->bte"}> : () -> ()
    %cst_176 = arith.constant dense<0.000000e+00> : vector<8x8x32xf32>
    %263 = tpu.matmul %261, %262, %cst_176 {dimension_numbers = #tpu.dot_dimension_numbers<[2], [1], [1], [2], [0, 0, 0, 1, 1, 2], [0], [0]>} : vector<8x8x16xbf16>, vector<8x16x32xbf16>, vector<8x8x32xf32> -> vector<8x8x32xf32>
    "tpu.trace_stop"() : () -> ()
    %264 = vector.shape_cast %263 : vector<8x8x32xf32> to vector<64x32xf32>
    %c2_177 = arith.constant 2 : index
    %c0_178 = arith.constant 0 : index
    %c0_179 = arith.constant 0 : index
    %265 = vector.load %arg3[%c2_177, %c0_178, %c0_179] : memref<3x32x32xbf16, #tpu.memory_space<vmem>>, vector<1x32x32xbf16>
    %266 = vector.shape_cast %265 : vector<1x32x32xbf16> to vector<32x32xbf16>
    %267 = arith.truncf %264 : vector<64x32xf32> to vector<64x32xbf16>
    %cst_180 = arith.constant dense<0.000000e+00> : vector<64x32xf32>
    %268 = tpu.matmul %267, %266, %cst_180 {dimension_numbers = #tpu.dot_dimension_numbers<[1], [0], [0], [1], [0, 0, 1, 1], [], []>} : vector<64x32xbf16>, vector<32x32xbf16>, vector<64x32xf32> -> vector<64x32xf32>
    %c2_181 = arith.constant 2 : index
    %c0_182 = arith.constant 0 : index
    %c0_183 = arith.constant 0 : index
    %269 = vector.load %arg4[%c2_181, %c0_182, %c0_183] : memref<3x1x32xf32, #tpu.memory_space<vmem>>, vector<1x1x32xf32>
    %270 = vector.shape_cast %269 : vector<1x1x32xf32> to vector<1x32xf32>
    %271 = vector.broadcast %270 : vector<1x32xf32> to vector<64x32xf32>
    %272 = arith.addf %268, %271 : vector<64x32xf32>
    %273 = arith.addf %237, %272 : vector<64x32xf32>
    %cst_184 = arith.constant 0.707106769 : f32
    %274 = vector.broadcast %cst_184 : f32 to vector<64x32xf32>
    %275 = arith.mulf %273, %274 : vector<64x32xf32>
    %276 = arith.addf %275, %202 : vector<64x32xf32>
    %cst_185 = arith.constant 0.707106769 : f32
    %277 = vector.broadcast %cst_185 : f32 to vector<64x32xf32>
    %278 = arith.mulf %276, %277 : vector<64x32xf32>
    %c1_186 = arith.constant 1 : index
    %c0_187 = arith.constant 0 : index
    %c0_188 = arith.constant 0 : index
    %279 = vector.load %arg5[%c1_186, %c0_187, %c0_188] : memref<3x32x32xbf16, #tpu.memory_space<vmem>>, vector<1x32x32xbf16>
    %280 = vector.shape_cast %279 : vector<1x32x32xbf16> to vector<32x32xbf16>
    %281 = arith.truncf %278 : vector<64x32xf32> to vector<64x32xbf16>
    %cst_189 = arith.constant dense<0.000000e+00> : vector<64x32xf32>
    %282 = tpu.matmul %281, %280, %cst_189 {dimension_numbers = #tpu.dot_dimension_numbers<[1], [0], [0], [1], [0, 0, 1, 1], [], []>} : vector<64x32xbf16>, vector<32x32xbf16>, vector<64x32xf32> -> vector<64x32xf32>
    %c1_190 = arith.constant 1 : index
    %c0_191 = arith.constant 0 : index
    %c0_192 = arith.constant 0 : index
    %283 = vector.load %arg6[%c1_190, %c0_191, %c0_192] : memref<3x1x32xf32, #tpu.memory_space<vmem>>, vector<1x1x32xf32>
    %284 = vector.shape_cast %283 : vector<1x1x32xf32> to vector<1x32xf32>
    %285 = vector.broadcast %284 : vector<1x32xf32> to vector<64x32xf32>
    %286 = arith.addf %282, %285 : vector<64x32xf32>
    %c1_193 = arith.constant 1 : index
    %c0_194 = arith.constant 0 : index
    %c0_195 = arith.constant 0 : index
    %287 = vector.load %arg9[%c1_193, %c0_194, %c0_195] : memref<2x32x128xbf16, #tpu.memory_space<vmem>>, vector<1x32x128xbf16>
    %288 = vector.shape_cast %287 : vector<1x32x128xbf16> to vector<32x128xbf16>
    %289 = arith.truncf %286 : vector<64x32xf32> to vector<64x32xbf16>
    %cst_196 = arith.constant dense<0.000000e+00> : vector<64x128xf32>
    %290 = tpu.matmul %289, %288, %cst_196 {dimension_numbers = #tpu.dot_dimension_numbers<[1], [0], [0], [1], [0, 0, 1, 1], [], []>} : vector<64x32xbf16>, vector<32x128xbf16>, vector<64x128xf32> -> vector<64x128xf32>
    %c1_197 = arith.constant 1 : index
    %c0_198 = arith.constant 0 : index
    %c0_199 = arith.constant 0 : index
    %291 = vector.load %arg10[%c1_197, %c0_198, %c0_199] : memref<2x1x128xf32, #tpu.memory_space<vmem>>, vector<1x1x128xf32>
    %292 = vector.shape_cast %291 : vector<1x1x128xf32> to vector<1x128xf32>
    %293 = vector.broadcast %292 : vector<1x128xf32> to vector<64x128xf32>
    %294 = arith.addf %290, %293 : vector<64x128xf32>
    %295 = vector.shape_cast %294 : vector<64x128xf32> to vector<8x8x128xf32>
    %c0_200 = arith.constant 0 : index
    %c0_201 = arith.constant 0 : index
    %c0_202 = arith.constant 0 : index
    %296 = vector.load %arg12[%c0_200, %c0_201, %c0_202] : memref<8x8x128xf32, #tpu.memory_space<vmem>>, vector<8x8x128xf32>
    tpu.vector_store %arg12[%c0_200, %c0_201, %c0_202], %295 {strides = array<i32>} : memref<8x8x128xf32, #tpu.memory_space<vmem>>, vector<8x8x128xf32>,
    %cst_203 = arith.constant 0.000000e+00 : f32
    %297 = vector.broadcast %cst_203 : f32 to vector<8x8x112xf32>
    %298 = tpu.concatenate %260, %297 in 2 : vector<8x8x16xf32>, vector<8x8x112xf32> -> vector<8x8x128xf32>
    %c0_204 = arith.constant 0 : index
    %c0_205 = arith.constant 0 : index
    %c0_206 = arith.constant 0 : index
    %299 = vector.load %arg13[%c0_204, %c0_205, %c0_206] : memref<8x8x128xf32, #tpu.memory_space<vmem>>, vector<8x8x128xf32>
    tpu.vector_store %arg13[%c0_204, %c0_205, %c0_206], %298 {strides = array<i32>} : memref<8x8x128xf32, #tpu.memory_space<vmem>>, vector<8x8x128xf32>,
    return
  }
  func.func @transform_0(%arg0: i32) -> (i32, i32, i32) {
    %c0_i32 = arith.constant 0 : i32
    %c0_i32_0 = arith.constant 0 : i32
    %c0_i32_1 = arith.constant 0 : i32
    return %arg0, %c0_i32, %c0_i32_0 : i32, i32, i32
  }
  func.func @transform_1(%arg0: i32) -> (i32, i32, i32) {
    %c0_i32 = arith.constant 0 : i32
    %c0_i32_0 = arith.constant 0 : i32
    %c0_i32_1 = arith.constant 0 : i32
    return %arg0, %c0_i32, %c0_i32_0 : i32, i32, i32
  }
  func.func @transform_2(%arg0: i32) -> (i32, i32, i32) {
    %c0_i32 = arith.constant 0 : i32
    %c0_i32_0 = arith.constant 0 : i32
    %c0_i32_1 = arith.constant 0 : i32
    %c0_i32_2 = arith.constant 0 : i32
    return %c0_i32, %c0_i32_0, %c0_i32_1 : i32, i32, i32
  }
  func.func @transform_3(%arg0: i32) -> (i32, i32, i32) {
    %c0_i32 = arith.constant 0 : i32
    %c0_i32_0 = arith.constant 0 : i32
    %c0_i32_1 = arith.constant 0 : i32
    %c0_i32_2 = arith.constant 0 : i32
    return %c0_i32, %c0_i32_0, %c0_i32_1 : i32, i32, i32
  }
  func.func @transform_4(%arg0: i32) -> (i32, i32, i32) {
    %c0_i32 = arith.constant 0 : i32
    %c0_i32_0 = arith.constant 0 : i32
    %c0_i32_1 = arith.constant 0 : i32
    %c0_i32_2 = arith.constant 0 : i32
    return %c0_i32, %c0_i32_0, %c0_i32_1 : i32, i32, i32
  }
  func.func @transform_5(%arg0: i32) -> (i32, i32, i32) {
    %c0_i32 = arith.constant 0 : i32
    %c0_i32_0 = arith.constant 0 : i32
    %c0_i32_1 = arith.constant 0 : i32
    %c0_i32_2 = arith.constant 0 : i32
    return %c0_i32, %c0_i32_0, %c0_i32_1 : i32, i32, i32
  }
  func.func @transform_6(%arg0: i32) -> (i32, i32, i32, i32) {
    %c0_i32 = arith.constant 0 : i32
    %c0_i32_0 = arith.constant 0 : i32
    %c0_i32_1 = arith.constant 0 : i32
    %c0_i32_2 = arith.constant 0 : i32
    %c0_i32_3 = arith.constant 0 : i32
    return %c0_i32, %c0_i32_0, %c0_i32_1, %c0_i32_2 : i32, i32, i32, i32
  }
  func.func @transform_7(%arg0: i32) -> (i32, i32, i32) {
    %c0_i32 = arith.constant 0 : i32
    %c0_i32_0 = arith.constant 0 : i32
    %c0_i32_1 = arith.constant 0 : i32
    %c0_i32_2 = arith.constant 0 : i32
    return %c0_i32, %c0_i32_0, %c0_i32_1 : i32, i32, i32
  }
  func.func @transform_8(%arg0: i32) -> (i32, i32, i32) {
    %c0_i32 = arith.constant 0 : i32
    %c0_i32_0 = arith.constant 0 : i32
    %c0_i32_1 = arith.constant 0 : i32
    %c0_i32_2 = arith.constant 0 : i32
    return %c0_i32, %c0_i32_0, %c0_i32_1 : i32, i32, i32
  }
  func.func @transform_9(%arg0: i32) -> (i32, i32, i32) {
    %c0_i32 = arith.constant 0 : i32
    %c0_i32_0 = arith.constant 0 : i32
    %c0_i32_1 = arith.constant 0 : i32
    %c0_i32_2 = arith.constant 0 : i32
    return %c0_i32, %c0_i32_0, %c0_i32_1 : i32, i32, i32
  }
  func.func @transform_10(%arg0: i32) -> (i32, i32, i32) {
    %c0_i32 = arith.constant 0 : i32
    %c0_i32_0 = arith.constant 0 : i32
    %c0_i32_1 = arith.constant 0 : i32
    return %arg0, %c0_i32, %c0_i32_0 : i32, i32, i32
  }
  func.func @transform_11(%arg0: i32) -> (i32, i32, i32) {
    %c0_i32 = arith.constant 0 : i32
    %c0_i32_0 = arith.constant 0 : i32
    %c0_i32_1 = arith.constant 0 : i32
    return %arg0, %c0_i32, %c0_i32_0 : i32, i32, i32
  }
  func.func @transform_12(%arg0: i32) -> (i32, i32, i32) {
    %c0_i32 = arith.constant 0 : i32
    %c0_i32_0 = arith.constant 0 : i32
    %c0_i32_1 = arith.constant 0 : i32
    return %arg0, %c0_i32, %c0_i32_0 : i32, i32, i32
  }
}

</mosaic_0001>

<llo_original>
// kernel: tpu_custom_call.1
$region0: #{tpu_custom_call.1}
  #allocation0 [shape = 'u32[]', space=smem, size = 0x4, offset = 0x4, fixed_abs, tag = 'smem constant byte address 0x4 - core index']
  #allocation1 [shape = 'u32[144,128]{1,0:T(1,128)}', space=vmem, size = 0x12000, scoped, tag = 'internal scratch']
  #allocation2 [shape = 'f32[8,26,32]{2,1,0:T(8,128)}', space=vmem, size = 0x20000, scoped, tag = 'scratch operand']
  #allocation3 [shape = 'f32[8,16,32]{2,1,0:T(8,128)}', space=vmem, size = 0x10000, scoped, tag = 'scratch operand']
  %s0 = inlined_call_operand.hbm [shape: f32[16,16,32], index: 0, kind: input, shape index: {}]
  %s1 = inlined_call_operand.hbm [shape: f32[16,8,32], index: 1, kind: input, shape index: {}]
  %s2 = inlined_call_operand.hbm [shape: bf16[3,32,32], index: 2, kind: input, shape index: {}]
  %s3 = inlined_call_operand.vmem [shape: f32[3,1,32], index: 3, kind: input, shape index: {}]
  %s4 = inlined_call_operand.hbm [shape: bf16[3,32,32], index: 4, kind: input, shape index: {}]
  %s5 = inlined_call_operand.hbm [shape: f32[3,1,32], index: 5, kind: input, shape index: {}]
  %s6 = inlined_call_operand.hbm [shape: bf16[4,3,32,64], index: 6, kind: input, shape index: {}]
  %s7 = inlined_call_operand.vmem [shape: f32[4,1,64], index: 7, kind: input, shape index: {}]
  %s8 = inlined_call_operand.hbm [shape: bf16[2,32,128], index: 8, kind: input, shape index: {}]
  %s9 = inlined_call_operand.vmem [shape: f32[2,1,128], index: 9, kind: input, shape index: {}]
  %s10 = inlined_call_operand.hbm [shape: f32[16,1,128], index: 10, kind: output, shape index: {0}]
  %s11 = inlined_call_operand.hbm [shape: f32[16,8,128], index: 11, kind: output, shape index: {1}]
  %s12 = inlined_call_operand.hbm [shape: f32[16,8,128], index: 12, kind: output, shape index: {2}]
  %13 = xla_tuple %s10, %s11, %s12
  %s14 = sld [smem:[#allocation0]]
  $region117: #{tpu_custom_call.1} parent=0
    _
  %s16 = ssub.s32 1, %s14
  %s17 = scalar_select 0, %s16, %s14
  $region1: #{tpu_custom_call.1} parent=0
    #allocation4 [shape = 'u8[131072]{0}', space=vmem, size = 0x20000, scoped, tag = 'input window, operand 0']
    #allocation5 [shape = 's32[2]{0}', space=sflag, size = 0x8, scoped, tag = 'scoped memory for tpu_custom_call.1']
    #allocation6 [shape = 's32[2]{0}', space=sflag, size = 0x8, scoped, tag = 'scoped memory for tpu_custom_call.1']
    #allocation7 [shape = 'u8[65536]{0}', space=vmem, size = 0x10000, scoped, tag = 'input window, operand 1']
    #allocation8 [shape = 's32[2]{0}', space=sflag, size = 0x8, scoped, tag = 'scoped memory for tpu_custom_call.1']
    #allocation9 [shape = 'u8[24576]{0}', space=vmem, size = 0x6000, scoped, tag = 'input window, operand 2, single buffered']
    #allocation10 [shape = 'u8[24576]{0}', space=vmem, size = 0x6000, scoped, tag = 'input window, operand 4, single buffered']
    #allocation11 [shape = 's32[1]{0}', space=sflag, size = 0x4, scoped, tag = 'scoped memory for tpu_custom_call.1']
    #allocation12 [shape = 'u8[1536]{0}', space=vmem, size = 0x800, scoped, tag = 'input window, operand 5, single buffered']
    #allocation13 [shape = 'u8[98304]{0}', space=vmem, size = 0x18000, scoped, tag = 'input window, operand 6, single buffered']
    #allocation14 [shape = 's32[1]{0}', space=sflag, size = 0x4, scoped, tag = 'scoped memory for tpu_custom_call.1']
    #allocation15 [shape = 'u8[16384]{0}', space=vmem, size = 0x4000, scoped, tag = 'input window, operand 8, single buffered']
    #allocation16 [shape = 'u8[8192]{0}', space=vmem, size = 0x2000, scoped, tag = 'output window, operand 0']
    #allocation17 [shape = 'u8[65536]{0}', space=vmem, size = 0x10000, scoped, tag = 'output window, operand 1']
    #allocation18 [shape = 's32[2]{0}', space=sflag, size = 0x8, scoped, tag = 'scoped memory for tpu_custom_call.1']
    #allocation19 [shape = 'u8[65536]{0}', space=vmem, size = 0x10000, scoped, tag = 'output window, operand 2']
    %18 = vsyncpa [#allocation5], 0
    %s19 = scalar_lea.sflag [#allocation5], 1
    %20 = vsyncpa %s19, 0
    %21 = vsyncpa [#allocation8], 0
    %s22 = scalar_lea.sflag [#allocation8], 1
    %23 = vsyncpa %s22, 0
    %24 = vsyncpa [#allocation11], 0
    %25 = vsyncpa [#allocation14], 0
    %26 = vsyncpa [#allocation6], 0
    %s27 = scalar_lea.sflag [#allocation6], 1
    %28 = vsyncpa %s27, 0
    %29 = vsyncpa [#allocation18], 0
    %s30 = scalar_lea.sflag [#allocation18], 1
    %31 = vsyncpa %s30, 0
    loop: start=0, step=1, limit=4
    $region2: #{tpu_custom_call.1} parent=1 // loop_pre_header
      _
    $region3: #{tpu_custom_call.1} parent=1 // loop_header
      %s33 = sphi 0, %s37
      %p34 = scmp.ge.s32.totalorder %s33, 4
      %s43 = sphi 0, %s45
      %s46 = sphi 0, %s43
      %s47 = sphi 0, %s46
      %s63 = sphi 0, %s47
      %s69 = sphi 0, %s71
      %s72 = sphi 0, %s69
      %s73 = sphi 0, %s72
      %s89 = sphi 0, %s73
      %s93 = sphi 0, %s93
      %s95 = sphi 0, %s93
      %s96 = sphi 0, %s95
      %s110 = sphi 0, %s96
      %s114 = sphi 0, %s114
      %s116 = sphi 0, %s114
      %s117 = sphi 0, %s116
      %s131 = sphi 0, %s117
      %s135 = sphi 0, %s135
      %s137 = sphi 0, %s135
      %s138 = sphi 0, %s137
      %s152 = sphi 0, %s138
      %s156 = sphi 0, %s156
      %s158 = sphi 0, %s156
      %s159 = sphi 0, %s158
      %s173 = sphi 0, %s159
      %s177 = sphi 0, %s177
      %s179 = sphi 0, %s177
      %s180 = sphi 0, %s179
      %s194 = sphi 0, %s180
      %s198 = sphi 0, %s198
      %s200 = sphi 0, %s198
      %s201 = sphi 0, %s200
      %s215 = sphi 0, %s201
      %s219 = sphi 0, %s219
      %s221 = sphi 0, %s219
      %s222 = sphi 0, %s221
      %s236 = sphi 0, %s222
      %s240 = sphi 0, %s240
      %s242 = sphi 0, %s240
      %s243 = sphi 0, %s242
      %s257 = sphi 0, %s243
      %s263 = sphi 0, %s265
      %s266 = sphi 0, %s263
      %s267 = sphi 0, %s266
      %s283 = sphi 0, %s267
      %s289 = sphi 0, %s291
      %s292 = sphi 0, %s289
      %s293 = sphi 0, %s292
      %s309 = sphi 0, %s293
      %s315 = sphi 0, %s317
      %s318 = sphi 0, %s315
      %s319 = sphi 0, %s318
      %s335 = sphi 0, %s319
    $region4: #{tpu_custom_call.1} parent=1 // loop_header_branch
      %36 = sbr.rel (%p34) target = $region8
    $region5: #{tpu_custom_call.1} parent=1 // loop_body
      %s38 = ssub.s32 %s33, 1
      %s39 = ssub.s32 %s33, 2
      %s40 = sadd.s32 %s33, 1
      %s41 = ssub.s32 %s33, %s40
      %p42 = scmp.eq.s32.totalorder %s41, 0
      %s44 = sadd.s32 %s43, 1
      %s45 = scalar_select %p42, %s43, %s44
      %p48 = pneg %p42
      %p49 = scmp.eq.s32.totalorder %s33, 1
      %p50 = por %p48, %p49
      %p51 = scmp.ne.s32.totalorder %s43, %s46
      %p52 = scmp.eq.s32.totalorder %s33, 0
      %p53 = por %p51, %p52
      %p54 = scmp.ne.s32.totalorder %s43, %s46
      %p55 = scmp.eq.s32.totalorder %s38, 1
      %p56 = por %p54, %p55
      %p57 = scmp.ne.s32.totalorder %s46, %s47
      %p58 = scmp.eq.s32.totalorder %s38, 0
      %p59 = por %p57, %p58
      %p60 = scmp.ne.s32.totalorder %s46, %s47
      %p61 = scmp.eq.s32.totalorder %s39, 1
      %p62 = por %p60, %p61
      %p64 = scmp.ne.s32.totalorder %s47, %s63
      %p65 = scmp.eq.s32.totalorder %s39, 0
      %p66 = por %p64, %p65
      %s67 = ssub.s32 %s33, %s40
      %p68 = scmp.eq.s32.totalorder %s67, 0
      %s70 = sadd.s32 %s69, 1
      %s71 = scalar_select %p68, %s69, %s70
      %p74 = pneg %p68
      %p75 = scmp.eq.s32.totalorder %s33, 1
      %p76 = por %p74, %p75
      %p77 = scmp.ne.s32.totalorder %s69, %s72
      %p78 = scmp.eq.s32.totalorder %s33, 0
      %p79 = por %p77, %p78
      %p80 = scmp.ne.s32.totalorder %s69, %s72
      %p81 = scmp.eq.s32.totalorder %s38, 1
      %p82 = por %p80, %p81
      %p83 = scmp.ne.s32.totalorder %s72, %s73
      %p84 = scmp.eq.s32.totalorder %s38, 0
      %p85 = por %p83, %p84
      %p86 = scmp.ne.s32.totalorder %s72, %s73
      %p87 = scmp.eq.s32.totalorder %s39, 1
      %p88 = por %p86, %p87
      %p90 = scmp.ne.s32.totalorder %s73, %s89
      %p91 = scmp.eq.s32.totalorder %s39, 0
      %p92 = por %p90, %p91
      %s94 = sadd.s32 %s93, 1
      %p97 = scmp.eq.s32.totalorder %s33, 1
      %p98 = scmp.ne.s32.totalorder %s93, %s95
      %p99 = scmp.eq.s32.totalorder %s33, 0
      %p100 = por %p98, %p99
      %p101 = scmp.ne.s32.totalorder %s93, %s95
      %p102 = scmp.eq.s32.totalorder %s38, 1
      %p103 = por %p101, %p102
      %p104 = scmp.ne.s32.totalorder %s95, %s96
      %p105 = scmp.eq.s32.totalorder %s38, 0
      %p106 = por %p104, %p105
      %p107 = scmp.ne.s32.totalorder %s95, %s96
      %p108 = scmp.eq.s32.totalorder %s39, 1
      %p109 = por %p107, %p108
      %p111 = scmp.ne.s32.totalorder %s96, %s110
      %p112 = scmp.eq.s32.totalorder %s39, 0
      %p113 = por %p111, %p112
      %s115 = sadd.s32 %s114, 1
      %p118 = scmp.eq.s32.totalorder %s33, 1
      %p119 = scmp.ne.s32.totalorder %s114, %s116
      %p120 = scmp.eq.s32.totalorder %s33, 0
      %p121 = por %p119, %p120
      %p122 = scmp.ne.s32.totalorder %s114, %s116
      %p123 = scmp.eq.s32.totalorder %s38, 1
      %p124 = por %p122, %p123
      %p125 = scmp.ne.s32.totalorder %s116, %s117
      %p126 = scmp.eq.s32.totalorder %s38, 0
      %p127 = por %p125, %p126
      %p128 = scmp.ne.s32.totalorder %s116, %s117
      %p129 = scmp.eq.s32.totalorder %s39, 1
      %p130 = por %p128, %p129
      %p132 = scmp.ne.s32.totalorder %s117, %s131
      %p133 = scmp.eq.s32.totalorder %s39, 0
      %p134 = por %p132, %p133
      %s136 = sadd.s32 %s135, 1
      %p139 = scmp.eq.s32.totalorder %s33, 1
      %p140 = scmp.ne.s32.totalorder %s135, %s137
      %p141 = scmp.eq.s32.totalorder %s33, 0
      %p142 = por %p140, %p141
      %p143 = scmp.ne.s32.totalorder %s135, %s137
      %p144 = scmp.eq.s32.totalorder %s38, 1
      %p145 = por %p143, %p144
      %p146 = scmp.ne.s32.totalorder %s137, %s138
      %p147 = scmp.eq.s32.totalorder %s38, 0
      %p148 = por %p146, %p147
      %p149 = scmp.ne.s32.totalorder %s137, %s138
      %p150 = scmp.eq.s32.totalorder %s39, 1
      %p151 = por %p149, %p150
      %p153 = scmp.ne.s32.totalorder %s138, %s152
      %p154 = scmp.eq.s32.totalorder %s39, 0
      %p155 = por %p153, %p154
      %s157 = sadd.s32 %s156, 1
      %p160 = scmp.eq.s32.totalorder %s33, 1
      %p161 = scmp.ne.s32.totalorder %s156, %s158
      %p162 = scmp.eq.s32.totalorder %s33, 0
      %p163 = por %p161, %p162
      %p164 = scmp.ne.s32.totalorder %s156, %s158
      %p165 = scmp.eq.s32.totalorder %s38, 1
      %p166 = por %p164, %p165
      %p167 = scmp.ne.s32.totalorder %s158, %s159
      %p168 = scmp.eq.s32.totalorder %s38, 0
      %p169 = por %p167, %p168
      %p170 = scmp.ne.s32.totalorder %s158, %s159
      %p171 = scmp.eq.s32.totalorder %s39, 1
      %p172 = por %p170, %p171
      %p174 = scmp.ne.s32.totalorder %s159, %s173
      %p175 = scmp.eq.s32.totalorder %s39, 0
      %p176 = por %p174, %p175
      %s178 = sadd.s32 %s177, 1
      %p181 = scmp.eq.s32.totalorder %s33, 1
      %p182 = scmp.ne.s32.totalorder %s177, %s179
      %p183 = scmp.eq.s32.totalorder %s33, 0
      %p184 = por %p182, %p183
      %p185 = scmp.ne.s32.totalorder %s177, %s179
      %p186 = scmp.eq.s32.totalorder %s38, 1
      %p187 = por %p185, %p186
      %p188 = scmp.ne.s32.totalorder %s179, %s180
      %p189 = scmp.eq.s32.totalorder %s38, 0
      %p190 = por %p188, %p189
      %p191 = scmp.ne.s32.totalorder %s179, %s180
      %p192 = scmp.eq.s32.totalorder %s39, 1
      %p193 = por %p191, %p192
      %p195 = scmp.ne.s32.totalorder %s180, %s194
      %p196 = scmp.eq.s32.totalorder %s39, 0
      %p197 = por %p195, %p196
      %s199 = sadd.s32 %s198, 1
      %p202 = scmp.eq.s32.totalorder %s33, 1
      %p203 = scmp.ne.s32.totalorder %s198, %s200
      %p204 = scmp.eq.s32.totalorder %s33, 0
      %p205 = por %p203, %p204
      %p206 = scmp.ne.s32.totalorder %s198, %s200
      %p207 = scmp.eq.s32.totalorder %s38, 1
      %p208 = por %p206, %p207
      %p209 = scmp.ne.s32.totalorder %s200, %s201
      %p210 = scmp.eq.s32.totalorder %s38, 0
      %p211 = por %p209, %p210
      %p212 = scmp.ne.s32.totalorder %s200, %s201
      %p213 = scmp.eq.s32.totalorder %s39, 1
      %p214 = por %p212, %p213
      %p216 = scmp.ne.s32.totalorder %s201, %s215
      %p217 = scmp.eq.s32.totalorder %s39, 0
      %p218 = por %p216, %p217
      %s220 = sadd.s32 %s219, 1
      %p223 = scmp.eq.s32.totalorder %s33, 1
      %p224 = scmp.ne.s32.totalorder %s219, %s221
      %p225 = scmp.eq.s32.totalorder %s33, 0
      %p226 = por %p224, %p225
      %p227 = scmp.ne.s32.totalorder %s219, %s221
      %p228 = scmp.eq.s32.totalorder %s38, 1
      %p229 = por %p227, %p228
      %p230 = scmp.ne.s32.totalorder %s221, %s222
      %p231 = scmp.eq.s32.totalorder %s38, 0
      %p232 = por %p230, %p231
      %p233 = scmp.ne.s32.totalorder %s221, %s222
      %p234 = scmp.eq.s32.totalorder %s39, 1
      %p235 = por %p233, %p234
      %p237 = scmp.ne.s32.totalorder %s222, %s236
      %p238 = scmp.eq.s32.totalorder %s39, 0
      %p239 = por %p237, %p238
      %s241 = sadd.s32 %s240, 1
      %p244 = scmp.eq.s32.totalorder %s33, 1
      %p245 = scmp.ne.s32.totalorder %s240, %s242
      %p246 = scmp.eq.s32.totalorder %s33, 0
      %p247 = por %p245, %p246
      %p248 = scmp.ne.s32.totalorder %s240, %s242
      %p249 = scmp.eq.s32.totalorder %s38, 1
      %p250 = por %p248, %p249
      %p251 = scmp.ne.s32.totalorder %s242, %s243
      %p252 = scmp.eq.s32.totalorder %s38, 0
      %p253 = por %p251, %p252
      %p254 = scmp.ne.s32.totalorder %s242, %s243
      %p255 = scmp.eq.s32.totalorder %s39, 1
      %p256 = por %p254, %p255
      %p258 = scmp.ne.s32.totalorder %s243, %s257
      %p259 = scmp.eq.s32.totalorder %s39, 0
      %p260 = por %p258, %p259
      %s261 = ssub.s32 %s33, %s40
      %p262 = scmp.eq.s32.totalorder %s261, 0
      %s264 = sadd.s32 %s263, 1
      %s265 = scalar_select %p262, %s263, %s264
      %p268 = pneg %p262
      %p269 = scmp.eq.s32.totalorder %s33, 1
      %p270 = por %p268, %p269
      %p271 = scmp.ne.s32.totalorder %s263, %s266
      %p272 = scmp.eq.s32.totalorder %s33, 0
      %p273 = por %p271, %p272
      %p274 = scmp.ne.s32.totalorder %s263, %s266
      %p275 = scmp.eq.s32.totalorder %s38, 1
      %p276 = por %p274, %p275
      %p277 = scmp.ne.s32.totalorder %s266, %s267
      %p278 = scmp.eq.s32.totalorder %s38, 0
      %p279 = por %p277, %p278
      %p280 = scmp.ne.s32.totalorder %s266, %s267
      %p281 = scmp.eq.s32.totalorder %s39, 1
      %p282 = por %p280, %p281
      %p284 = scmp.ne.s32.totalorder %s267, %s283
      %p285 = scmp.eq.s32.totalorder %s39, 0
      %p286 = por %p284, %p285
      %s287 = ssub.s32 %s33, %s40
      %p288 = scmp.eq.s32.totalorder %s287, 0
      %s290 = sadd.s32 %s289, 1
      %s291 = scalar_select %p288, %s289, %s290
      %p294 = pneg %p288
      %p295 = scmp.eq.s32.totalorder %s33, 1
      %p296 = por %p294, %p295
      %p297 = scmp.ne.s32.totalorder %s289, %s292
      %p298 = scmp.eq.s32.totalorder %s33, 0
      %p299 = por %p297, %p298
      %p300 = scmp.ne.s32.totalorder %s289, %s292
      %p301 = scmp.eq.s32.totalorder %s38, 1
      %p302 = por %p300, %p301
      %p303 = scmp.ne.s32.totalorder %s292, %s293
      %p304 = scmp.eq.s32.totalorder %s38, 0
      %p305 = por %p303, %p304
      %p306 = scmp.ne.s32.totalorder %s292, %s293
      %p307 = scmp.eq.s32.totalorder %s39, 1
      %p308 = por %p306, %p307
      %p310 = scmp.ne.s32.totalorder %s293, %s309
      %p311 = scmp.eq.s32.totalorder %s39, 0
      %p312 = por %p310, %p311
      %s313 = ssub.s32 %s33, %s40
      %p314 = scmp.eq.s32.totalorder %s313, 0
      %s316 = sadd.s32 %s315, 1
      %s317 = scalar_select %p314, %s315, %s316
      %p320 = pneg %p314
      %p321 = scmp.eq.s32.totalorder %s33, 1
      %p322 = por %p320, %p321
      %p323 = scmp.ne.s32.totalorder %s315, %s318
      %p324 = scmp.eq.s32.totalorder %s33, 0
      %p325 = por %p323, %p324
      %p326 = scmp.ne.s32.totalorder %s315, %s318
      %p327 = scmp.eq.s32.totalorder %s38, 1
      %p328 = por %p326, %p327
      %p329 = scmp.ne.s32.totalorder %s318, %s319
      %p330 = scmp.eq.s32.totalorder %s38, 0
      %p331 = por %p329, %p330
      %p332 = scmp.ne.s32.totalorder %s318, %s319
      %p333 = scmp.eq.s32.totalorder %s39, 1
      %p334 = por %p332, %p333
      %p336 = scmp.ne.s32.totalorder %s319, %s335
      %p337 = scmp.eq.s32.totalorder %s39, 0
      %p338 = por %p336, %p337
      %p339 = scmp.le.s32.totalorder 1, %s33
      %p340 = scmp.lt.s32.totalorder %s33, 3
      %p341 = pnand %p339, %p340
      %p342 = pneg %p341
      // Predicated region
      $region9: #{tpu_custom_call.1} parent=5 // pred_check
        _
      $region10: #{tpu_custom_call.1} parent=5 // pred_check_branch
        %344 = sbr.rel (%p341) target = $region12
      $region11: #{tpu_custom_call.1} parent=5 // pred_region
        %s345 = ssub.s32 %s33, 1
        // Predicated region
        $region13: #{tpu_custom_call.1} parent=11 // pred_check
          %p346 = pneg %p106
        $region14: #{tpu_custom_call.1} parent=11 // pred_check_branch
          %348 = sbr.rel (%p346) target = $region16
        $region15: #{tpu_custom_call.1} parent=11 // pred_region
          %s350 = ssub.s32 768, 768
          %351 = vsyncadd [#allocation8], %s350
          %s352 = sshll.u32 [#allocation9], 4
          %s353 = int_to_ptr.vmem [resolvable:$true] %s352
          %358 = dma.hbm_to_vmem [thread:$0]  %s2, 768, %s353, [#allocation8], 64, 64, 4
        $region16: #{tpu_custom_call.1} parent=11 // pred_fallthru
          _
        // Predicated region
        $region17: #{tpu_custom_call.1} parent=11 // pred_check
          %p359 = pneg %p127
        $region18: #{tpu_custom_call.1} parent=11 // pred_check_branch
          %361 = sbr.rel (%p359) target = $region20
        $region19: #{tpu_custom_call.1} parent=11 // pred_region
          _
        $region20: #{tpu_custom_call.1} parent=11 // pred_fallthru
          _
        // Predicated region
        $region21: #{tpu_custom_call.1} parent=11 // pred_check
          %p362 = pneg %p148
        $region22: #{tpu_custom_call.1} parent=11 // pred_check_branch
          %364 = sbr.rel (%p362) target = $region24
        $region23: #{tpu_custom_call.1} parent=11 // pred_region
          %s366 = ssub.s32 768, 768
          %367 = vsyncadd [#allocation11], %s366
          %s368 = sshll.u32 [#allocation10], 4
          %s369 = int_to_ptr.vmem [resolvable:$true] %s368
          %374 = dma.hbm_to_vmem [thread:$0]  %s4, 768, %s369, [#allocation11], 64, 64, 4
        $region24: #{tpu_custom_call.1} parent=11 // pred_fallthru
          _
        // Predicated region
        $region25: #{tpu_custom_call.1} parent=11 // pred_check
          %p375 = pneg %p169
        $region26: #{tpu_custom_call.1} parent=11 // pred_check_branch
          %377 = sbr.rel (%p375) target = $region28
        $region27: #{tpu_custom_call.1} parent=11 // pred_region
          %s379 = ssub.s32 48, 48
          %380 = vsyncadd [#allocation11], %s379
          %s381 = sshll.u32 [#allocation12], 4
          %s382 = int_to_ptr.vmem [resolvable:$true] %s381
          %387 = dma.hbm_to_vmem [thread:$0]  %s5, 48, %s382, [#allocation11], 16, 16, 1
        $region28: #{tpu_custom_call.1} parent=11 // pred_fallthru
          _
        // Predicated region
        $region29: #{tpu_custom_call.1} parent=11 // pred_check
          %p388 = pneg %p190
        $region30: #{tpu_custom_call.1} parent=11 // pred_check_branch
          %390 = sbr.rel (%p388) target = $region32
        $region31: #{tpu_custom_call.1} parent=11 // pred_region
          %s392 = ssub.s32 3072, 3072
          %393 = vsyncadd [#allocation14], %s392
          %s394 = sshll.u32 [#allocation13], 4
          %s395 = int_to_ptr.vmem [resolvable:$true] %s394
          %400 = dma.hbm_to_vmem [thread:$0]  %s6, 3072, %s395, [#allocation14], 64, 64, 4
        $region32: #{tpu_custom_call.1} parent=11 // pred_fallthru
          _
        // Predicated region
        $region33: #{tpu_custom_call.1} parent=11 // pred_check
          %p401 = pneg %p211
        $region34: #{tpu_custom_call.1} parent=11 // pred_check_branch
          %403 = sbr.rel (%p401) target = $region36
        $region35: #{tpu_custom_call.1} parent=11 // pred_region
          _
        $region36: #{tpu_custom_call.1} parent=11 // pred_fallthru
          _
        // Predicated region
        $region37: #{tpu_custom_call.1} parent=11 // pred_check
          %p404 = pneg %p232
        $region38: #{tpu_custom_call.1} parent=11 // pred_check_branch
          %406 = sbr.rel (%p404) target = $region40
        $region39: #{tpu_custom_call.1} parent=11 // pred_region
          %s408 = ssub.s32 512, 512
          %409 = vsyncadd [#allocation14], %s408
          %s410 = sshll.u32 [#allocation15], 4
          %s411 = int_to_ptr.vmem [resolvable:$true] %s410
          %416 = dma.hbm_to_vmem [thread:$0]  %s8, 512, %s411, [#allocation14], 64, 64, 4
        $region40: #{tpu_custom_call.1} parent=11 // pred_fallthru
          _
        // Predicated region
        $region41: #{tpu_custom_call.1} parent=11 // pred_check
          %p417 = pneg %p253
        $region42: #{tpu_custom_call.1} parent=11 // pred_check_branch
          %419 = sbr.rel (%p417) target = $region44
        $region43: #{tpu_custom_call.1} parent=11 // pred_region
          _
        $region44: #{tpu_custom_call.1} parent=11 // pred_fallthru
          _
      $region12: #{tpu_custom_call.1} parent=5 // pred_fallthru
        _
      %p420 = scmp.lt.s32.totalorder %s33, 2
      // Predicated region
      $region45: #{tpu_custom_call.1} parent=5 // pred_check
        %p421 = pneg %p420
      $region46: #{tpu_custom_call.1} parent=5 // pred_check_branch
        %423 = sbr.rel (%p421) target = $region48
      $region47: #{tpu_custom_call.1} parent=5 // pred_region
        // Predicated region
        $region49: #{tpu_custom_call.1} parent=47 // pred_check
          %p424 = pneg %p53
        $region50: #{tpu_custom_call.1} parent=47 // pred_check_branch
          %426 = sbr.rel (%p424) target = $region52
        $region51: #{tpu_custom_call.1} parent=47 // pred_region
          %s427 = sand.u32 %s43, 1
          %s428 = scalar_lea.sflag [#allocation5], %s427
          %s429 = sand.u32 %s43, 1
          %s430 = smul.addr %s429, 128
          %s431 = scalar_lea.vmem [#allocation4], %s430
          %s432 = smul.u32 8, %s33
          %s434 = ssub.s32 2048, 2048
          %435 = vsyncadd %s428, %s434
          %s436 = smul.addr %s432, 2
          %s437 = smul.addr %s436, 128
          %s438 = scalar_lea.hbm %s0, %s437
          %s439 = sshll.u32 %s431, 4
          %s440 = int_to_ptr.vmem [resolvable:$true] %s439
          %445 = dma.hbm_to_vmem [thread:$0]  %s438, 2048, %s440, %s428, 128, 128, 8
        $region52: #{tpu_custom_call.1} parent=47 // pred_fallthru
          _
        // Predicated region
        $region53: #{tpu_custom_call.1} parent=47 // pred_check
          %p446 = pneg %p79
        $region54: #{tpu_custom_call.1} parent=47 // pred_check_branch
          %448 = sbr.rel (%p446) target = $region56
        $region55: #{tpu_custom_call.1} parent=47 // pred_region
          %s449 = sand.u32 %s33, 1
          %s450 = scalar_lea.sflag [#allocation8], %s449
          %s451 = sand.u32 %s69, 1
          %s452 = smul.addr %s451, 64
          %s453 = scalar_lea.vmem [#allocation7], %s452
          %s454 = smul.u32 8, %s33
          %s456 = ssub.s32 1024, 1024
          %457 = vsyncadd %s450, %s456
          %s458 = smul.addr %s454, 128
          %s459 = scalar_lea.hbm %s1, %s458
          %s460 = sshll.u32 %s453, 4
          %s461 = int_to_ptr.vmem [resolvable:$true] %s460
          %466 = dma.hbm_to_vmem [thread:$0]  %s459, 1024, %s461, %s450, 128, 128, 8
        $region56: #{tpu_custom_call.1} parent=47 // pred_fallthru
          _
      $region48: #{tpu_custom_call.1} parent=5 // pred_fallthru
        _
      %p467 = scmp.le.s32.totalorder 1, %s33
      %p468 = scmp.lt.s32.totalorder %s33, 3
      %p469 = pnand %p467, %p468
      %p470 = pneg %p469
      // Predicated region
      $region57: #{tpu_custom_call.1} parent=5 // pred_check
        _
      $region58: #{tpu_custom_call.1} parent=5 // pred_check_branch
        %472 = sbr.rel (%p469) target = $region60
      $region59: #{tpu_custom_call.1} parent=5 // pred_region
        %s473 = ssub.s32 %s33, 1
        %s474 = sand.u32 %s46, 1
        %s475 = scalar_lea.sflag [#allocation5], %s474
        %s476 = sand.u32 %s46, 1
        %s477 = smul.addr %s476, 128
        %s478 = scalar_lea.vmem [#allocation4], %s477
        // Predicated region
        $region61: #{tpu_custom_call.1} parent=59 // pred_check
          %p479 = pneg %p59
        $region62: #{tpu_custom_call.1} parent=59 // pred_check_branch
          %481 = sbr.rel (%p479) target = $region64
        $region63: #{tpu_custom_call.1} parent=59 // pred_region
          %482 = dma.done %s475, 2048
        $region64: #{tpu_custom_call.1} parent=59 // pred_fallthru
          _
        %s483 = sand.u32 %s38, 1
        %s484 = scalar_lea.sflag [#allocation8], %s483
        %s485 = sand.u32 %s72, 1
        %s486 = smul.addr %s485, 64
        %s487 = scalar_lea.vmem [#allocation7], %s486
        // Predicated region
        $region65: #{tpu_custom_call.1} parent=59 // pred_check
          %p488 = pneg %p85
        $region66: #{tpu_custom_call.1} parent=59 // pred_check_branch
          %490 = sbr.rel (%p488) target = $region68
        $region67: #{tpu_custom_call.1} parent=59 // pred_region
          %491 = dma.done %s484, 1024
        $region68: #{tpu_custom_call.1} parent=59 // pred_fallthru
          _
        // Predicated region
        $region69: #{tpu_custom_call.1} parent=59 // pred_check
          %p492 = pneg %p106
        $region70: #{tpu_custom_call.1} parent=59 // pred_check_branch
          %494 = sbr.rel (%p492) target = $region72
        $region71: #{tpu_custom_call.1} parent=59 // pred_region
          %495 = dma.done [#allocation8], 768
        $region72: #{tpu_custom_call.1} parent=59 // pred_fallthru
          _
        // Predicated region
        $region73: #{tpu_custom_call.1} parent=59 // pred_check
          %p496 = pneg %p148
        $region74: #{tpu_custom_call.1} parent=59 // pred_check_branch
          %498 = sbr.rel (%p496) target = $region76
        $region75: #{tpu_custom_call.1} parent=59 // pred_region
          %499 = dma.done [#allocation11], 768
        $region76: #{tpu_custom_call.1} parent=59 // pred_fallthru
          _
        // Predicated region
        $region77: #{tpu_custom_call.1} parent=59 // pred_check
          %p500 = pneg %p169
        $region78: #{tpu_custom_call.1} parent=59 // pred_check_branch
          %502 = sbr.rel (%p500) target = $region80
        $region79: #{tpu_custom_call.1} parent=59 // pred_region
          %503 = dma.done [#allocation11], 48
        $region80: #{tpu_custom_call.1} parent=59 // pred_fallthru
          _
        // Predicated region
        $region81: #{tpu_custom_call.1} parent=59 // pred_check
          %p504 = pneg %p190
        $region82: #{tpu_custom_call.1} parent=59 // pred_check_branch
          %506 = sbr.rel (%p504) target = $region84
        $region83: #{tpu_custom_call.1} parent=59 // pred_region
          %507 = dma.done [#allocation14], 3072
        $region84: #{tpu_custom_call.1} parent=59 // pred_fallthru
          _
        // Predicated region
        $region85: #{tpu_custom_call.1} parent=59 // pred_check
          %p508 = pneg %p232
        $region86: #{tpu_custom_call.1} parent=59 // pred_check_branch
          %510 = sbr.rel (%p508) target = $region88
        $region87: #{tpu_custom_call.1} parent=59 // pred_region
          %511 = dma.done [#allocation14], 512
        $region88: #{tpu_custom_call.1} parent=59 // pred_fallthru
          _
        %s512 = sand.u32 %s46, 1
        %s513 = scalar_lea.sflag [#allocation5], %s512
        %s514 = sand.u32 %s46, 1
        %s515 = smul.addr %s514, 128
        %s516 = scalar_lea.vmem [#allocation4], %s515
        %p517 = pneg %p59
        %p518 = pneg %p56
        %s519 = sand.u32 %s38, 1
        %s520 = scalar_lea.sflag [#allocation8], %s519
        %s521 = sand.u32 %s72, 1
        %s522 = smul.addr %s521, 64
        %s523 = scalar_lea.vmem [#allocation7], %s522
        %p524 = pneg %p85
        %p525 = pneg %p82
        %p526 = pneg %p106
        %p527 = pneg %p103
        %p528 = pneg %p127
        %p529 = pneg %p124
        %p530 = pneg %p148
        %p531 = pneg %p145
        %p532 = pneg %p169
        %p533 = pneg %p166
        %p534 = pneg %p190
        %p535 = pneg %p187
        %p536 = pneg %p211
        %p537 = pneg %p208
        %p538 = pneg %p232
        %p539 = pneg %p229
        %p540 = pneg %p253
        %p541 = pneg %p250
        %p542 = pneg %p279
        %p543 = pneg %p276
        %s544 = sand.u32 %s266, 1
        %s545 = scalar_lea.sflag [#allocation6], %s544
        %s546 = sand.u32 %s266, 1
        %s547 = smul.addr %s546, 8
        %s548 = scalar_lea.vmem [#allocation16], %s547
        %p549 = pneg %p305
        %p550 = pneg %p302
        %s551 = sand.u32 %s38, 1
        %s552 = scalar_lea.sflag [#allocation18], %s551
        %s553 = sand.u32 %s292, 1
        %s554 = smul.addr %s553, 64
        %s555 = scalar_lea.vmem [#allocation17], %s554
        %p556 = pneg %p331
        %p557 = pneg %p328
        %s558 = sand.u32 %s38, 1
        %s559 = scalar_lea.sflag [#allocation18], %s558
        %s560 = sand.u32 %s318, 1
        %s561 = smul.addr %s560, 64
        %s562 = scalar_lea.vmem [#allocation19], %s561
        %s563 = smul.u32 8, %s38
        %s564 = smul.u32 8, %s38
        %s565 = smul.u32 8, %s38
        %s566 = smul.u32 8, %s38
        %s567 = smul.u32 8, %s38
        %v569 = vld [vmem:[%s478] sm:$0xff]
        %v570 = vld [vmem:[%s478 + $0x8] sm:$0xff]
        %v571 = vld [vmem:[%s478 + $0x10] sm:$0xff]
        %v572 = vld [vmem:[%s478 + $0x18] sm:$0xff]
        %v573 = vld [vmem:[%s478 + $0x20] sm:$0xff]
        %v574 = vld [vmem:[%s478 + $0x28] sm:$0xff]
        %v575 = vld [vmem:[%s478 + $0x30] sm:$0xff]
        %v576 = vld [vmem:[%s478 + $0x38] sm:$0xff]
        %v577 = vld [vmem:[%s478 + $0x40] sm:$0xff]
        %v578 = vld [vmem:[%s478 + $0x48] sm:$0xff]
        %v579 = vld [vmem:[%s478 + $0x50] sm:$0xff]
        %v580 = vld [vmem:[%s478 + $0x58] sm:$0xff]
        %v581 = vld [vmem:[%s478 + $0x60] sm:$0xff]
        %v582 = vld [vmem:[%s478 + $0x68] sm:$0xff]
        %v583 = vld [vmem:[%s478 + $0x70] sm:$0xff]
        %v584 = vld [vmem:[%s478 + $0x78] sm:$0xff]
        %v585 = vld [vmem:[#allocation9] sm:$0xf]
        %v586 = vld [vmem:[#allocation9 + $0x4] sm:$0xf]
        %v587 = vld [vmem:[#allocation9 + $0x8] sm:$0xf]
        %v588 = vld [vmem:[#allocation9 + $0xc] sm:$0xf]
        %v589 = vpack.c.bf16 %v570, %v569
        %v590 = vpack.c.bf16 %v572, %v571
        %v591 = vpack.c.bf16 %v574, %v573
        %v592 = vpack.c.bf16 %v576, %v575
        %v593 = vpack.c.bf16 %v578, %v577
        %v594 = vpack.c.bf16 %v580, %v579
        %v595 = vpack.c.bf16 %v582, %v581
        %v596 = vpack.c.bf16 %v584, %v583
        %v597 = vld [vmem:[%s3] sm:$0x1]
        %v599 = vlaneseq
        %v600 = vshrl.u32 %v599, 7
        %v601 = vsub.s32 0, %v600
        %v602 = vrot.slane %v597, %v601
        %v608 = vunpack.c.l.b16 %v585
        %v609 = vunpack.c.l.b16 %v586
        %v610 = vunpack.c.l.b16 %v587
        %v611 = vunpack.c.l.b16 %v588
        %v612 = vpack.c.b16 %v609, %v608
        %v613 = vpack.c.b16 %v611, %v610
        %vm616 = vcmask 261120
        %v618 = vsel %vm616, %v589, 0
        %v621 = vsel %vm616, %v590, 0
        %v624 = vsel %vm616, %v591, 0
        %v627 = vsel %vm616, %v592, 0
        %v630 = vsel %vm616, %v593, 0
        %v633 = vsel %vm616, %v594, 0
        %v636 = vsel %vm616, %v595, 0
        %v639 = vsel %vm616, %v596, 0
        %641 = vmatprep.subr.bf16.mxu0 0
        %642 = vmatpush1.bf16.msra.mxu0 0
        %643 = vmatprep.subr.bf16.mxu0 0
        %644 = vmatpush1.bf16.msra.mxu0 0
        %645 = vmatprep.subr.bf16.mxu0 0
        %646 = vmatpush1.bf16.msra.mxu0 0
        %647 = vmatprep.subr.bf16.mxu0 0
        %648 = vmatpush1.bf16.msra.mxu0 0
        %649 = vmatprep.subr.bf16.mxu0 0
        %650 = vmatpush1.bf16.msra.mxu0 0
        %651 = vmatprep.subr.bf16.mxu0 0
        %652 = vmatpush1.bf16.msra.mxu0 0
        %653 = vmatprep.subr.bf16.mxu0 0
        %654 = vmatpush1.bf16.msra.mxu0 %v613
        %655 = vmatprep.subr.bf16.mxu0 0
        %656 = vmatpush1.bf16.msra.mxu0 %v612
        %657 = vmatprep.subr.bf16.mxu0 0
        %658 = vmatpush2.bf16.msra.mxu0 0
        %659 = vmatprep.subr.bf16.mxu0 0
        %660 = vmatpush2.bf16.msra.mxu0 0
        %661 = vmatprep.subr.bf16.mxu0 0
        %662 = vmatpush2.bf16.msra.mxu0 0
        %663 = vmatprep.subr.bf16.mxu0 0
        %664 = vmatpush2.bf16.msra.mxu0 0
        %665 = vmatprep.subr.bf16.mxu0 0
        %666 = vmatpush2.bf16.msra.mxu0 0
        %667 = vmatprep.subr.bf16.mxu0 0
        %668 = vmatpush2.bf16.msra.mxu0 0
        %669 = vmatprep.subr.bf16.mxu0 0
        %670 = vmatpush2.bf16.msra.mxu0 0
        %671 = vmatprep.subr.bf16.mxu0 0
        %672 = vmatpush2.bf16.msra.mxu0 0
        %673 = vmatprep.mubr.bf16.mxu0 0
        %674 = vmatmul.mubr.bf16.gmra.mxu0 %v618
        %v675 = vpop.f32.mrf.mxu0
        %v676 = vadd.f32 %v602, %v675
        %v677 = vpop.f32.mrf.mxu0
        %v678 = vpop.f32.mrf.mxu0
        %v679 = vadd.f32 %v602, %v678
        %v680 = vpop.f32.mrf.mxu0
        %681 = vmatprep.mubr.bf16.mxu0 0
        %682 = vmatmul.mubr.bf16.gmra.mxu0 %v621
        %v683 = vpop.f32.mrf.mxu0
        %v684 = vadd.f32 %v602, %v683
        %v685 = vpop.f32.mrf.mxu0
        %v686 = vpop.f32.mrf.mxu0
        %v687 = vadd.f32 %v602, %v686
        %v688 = vpop.f32.mrf.mxu0
        %689 = vmatprep.mubr.bf16.mxu0 0
        %690 = vmatmul.mubr.bf16.gmra.mxu0 %v624
        %v691 = vpop.f32.mrf.mxu0
        %v692 = vadd.f32 %v602, %v691
        %v693 = vpop.f32.mrf.mxu0
        %v694 = vpop.f32.mrf.mxu0
        %v695 = vadd.f32 %v602, %v694
        %v696 = vpop.f32.mrf.mxu0
        %697 = vmatprep.mubr.bf16.mxu0 0
        %698 = vmatmul.mubr.bf16.gmra.mxu0 %v627
        %v699 = vpop.f32.mrf.mxu0
        %v700 = vadd.f32 %v602, %v699
        %v701 = vpop.f32.mrf.mxu0
        %v702 = vpop.f32.mrf.mxu0
        %v703 = vadd.f32 %v602, %v702
        %v704 = vpop.f32.mrf.mxu0
        %705 = vmatprep.mubr.bf16.mxu0 0
        %706 = vmatmul.mubr.bf16.gmra.mxu0 %v630
        %v707 = vpop.f32.mrf.mxu0
        %v708 = vadd.f32 %v602, %v707
        %v709 = vpop.f32.mrf.mxu0
        %v710 = vpop.f32.mrf.mxu0
        %v711 = vadd.f32 %v602, %v710
        %v712 = vpop.f32.mrf.mxu0
        %713 = vmatprep.mubr.bf16.mxu0 0
        %714 = vmatmul.mubr.bf16.gmra.mxu0 %v633
        %v715 = vpop.f32.mrf.mxu0
        %v716 = vadd.f32 %v602, %v715
        %v717 = vpop.f32.mrf.mxu0
        %v718 = vpop.f32.mrf.mxu0
        %v719 = vadd.f32 %v602, %v718
        %v720 = vpop.f32.mrf.mxu0
        %721 = vmatprep.mubr.bf16.mxu0 0
        %722 = vmatmul.mubr.bf16.gmra.mxu0 %v636
        %v723 = vpop.f32.mrf.mxu0
        %v724 = vadd.f32 %v602, %v723
        %v725 = vpop.f32.mrf.mxu0
        %v726 = vpop.f32.mrf.mxu0
        %v727 = vadd.f32 %v602, %v726
        %v728 = vpop.f32.mrf.mxu0
        %729 = vmatprep.mubr.bf16.mxu0 0
        %730 = vmatmul.mubr.bf16.gmra.mxu0 %v639
        %v731 = vpop.f32.mrf.mxu0
        %v732 = vadd.f32 %v602, %v731
        %v733 = vpop.f32.mrf.mxu0
        %v734 = vpop.f32.mrf.mxu0
        %v735 = vadd.f32 %v602, %v734
        %v736 = vpop.f32.mrf.mxu0
        %737 = vdwg.mxu0
        %738 = vst.msk [vmem:[#allocation2] sm:$0xff] %vm616, 0.0
        %739 = vst.msk [vmem:[#allocation2 + $0x8] sm:$0xff] %vm616, 0.0
        %740 = vst.msk [vmem:[#allocation2 + $0x10] sm:$0xff] %vm616, 0.0
        %vm741 = vcmask 254976
        %742 = vst.msk [vmem:[#allocation2 + $0x18] sm:$0x3] %vm741, 0.0
        %743 = vst.msk [vmem:[#allocation2 + $0x20] sm:$0xff] %vm616, 0.0
        %744 = vst.msk [vmem:[#allocation2 + $0x28] sm:$0xff] %vm616, 0.0
        %745 = vst.msk [vmem:[#allocation2 + $0x30] sm:$0xff] %vm616, 0.0
        %746 = vst.msk [vmem:[#allocation2 + $0x38] sm:$0x3] %vm741, 0.0
        %747 = vst.msk [vmem:[#allocation2 + $0x40] sm:$0xff] %vm616, 0.0
        %748 = vst.msk [vmem:[#allocation2 + $0x48] sm:$0xff] %vm616, 0.0
        %749 = vst.msk [vmem:[#allocation2 + $0x50] sm:$0xff] %vm616, 0.0
        %750 = vst.msk [vmem:[#allocation2 + $0x58] sm:$0x3] %vm741, 0.0
        %751 = vst.msk [vmem:[#allocation2 + $0x60] sm:$0xff] %vm616, 0.0
        %752 = vst.msk [vmem:[#allocation2 + $0x68] sm:$0xff] %vm616, 0.0
        %753 = vst.msk [vmem:[#allocation2 + $0x70] sm:$0xff] %vm616, 0.0
        %754 = vst.msk [vmem:[#allocation2 + $0x78] sm:$0x3] %vm741, 0.0
        %755 = vst.msk [vmem:[#allocation2 + $0x80] sm:$0xff] %vm616, 0.0
        %756 = vst.msk [vmem:[#allocation2 + $0x88] sm:$0xff] %vm616, 0.0
        %757 = vst.msk [vmem:[#allocation2 + $0x90] sm:$0xff] %vm616, 0.0
        %758 = vst.msk [vmem:[#allocation2 + $0x98] sm:$0x3] %vm741, 0.0
        %759 = vst.msk [vmem:[#allocation2 + $0xa0] sm:$0xff] %vm616, 0.0
        %760 = vst.msk [vmem:[#allocation2 + $0xa8] sm:$0xff] %vm616, 0.0
        %761 = vst.msk [vmem:[#allocation2 + $0xb0] sm:$0xff] %vm616, 0.0
        %762 = vst.msk [vmem:[#allocation2 + $0xb8] sm:$0x3] %vm741, 0.0
        %763 = vst.msk [vmem:[#allocation2 + $0xc0] sm:$0xff] %vm616, 0.0
        %764 = vst.msk [vmem:[#allocation2 + $0xc8] sm:$0xff] %vm616, 0.0
        %765 = vst.msk [vmem:[#allocation2 + $0xd0] sm:$0xff] %vm616, 0.0
        %766 = vst.msk [vmem:[#allocation2 + $0xd8] sm:$0x3] %vm741, 0.0
        %767 = vst.msk [vmem:[#allocation2 + $0xe0] sm:$0xff] %vm616, 0.0
        %768 = vst.msk [vmem:[#allocation2 + $0xe8] sm:$0xff] %vm616, 0.0
        %769 = vst.msk [vmem:[#allocation2 + $0xf0] sm:$0xff] %vm616, 0.0
        %770 = vst.msk [vmem:[#allocation2 + $0xf8] sm:$0x3] %vm741, 0.0
        %771 = vst.msk [vmem:[#allocation2 + $0x8] sm:$0xff] %vm616, %v676
        %772 = vst.msk [vmem:[#allocation2 + $0x10] sm:$0xff] %vm616, %v679
        %773 = vst.msk [vmem:[#allocation2 + $0x28] sm:$0xff] %vm616, %v684
        %774 = vst.msk [vmem:[#allocation2 + $0x30] sm:$0xff] %vm616, %v687
        %775 = vst.msk [vmem:[#allocation2 + $0x48] sm:$0xff] %vm616, %v692
        %776 = vst.msk [vmem:[#allocation2 + $0x50] sm:$0xff] %vm616, %v695
        %777 = vst.msk [vmem:[#allocation2 + $0x68] sm:$0xff] %vm616, %v700
        %778 = vst.msk [vmem:[#allocation2 + $0x70] sm:$0xff] %vm616, %v703
        %779 = vst.msk [vmem:[#allocation2 + $0x88] sm:$0xff] %vm616, %v708
        %780 = vst.msk [vmem:[#allocation2 + $0x90] sm:$0xff] %vm616, %v711
        %781 = vst.msk [vmem:[#allocation2 + $0xa8] sm:$0xff] %vm616, %v716
        %782 = vst.msk [vmem:[#allocation2 + $0xb0] sm:$0xff] %vm616, %v719
        %783 = vst.msk [vmem:[#allocation2 + $0xc8] sm:$0xff] %vm616, %v724
        %784 = vst.msk [vmem:[#allocation2 + $0xd0] sm:$0xff] %vm616, %v727
        %785 = vst.msk [vmem:[#allocation2 + $0xe8] sm:$0xff] %vm616, %v732
        %786 = vst.msk [vmem:[#allocation2 + $0xf0] sm:$0xff] %vm616, %v735
        %v787 = vld [vmem:[#allocation2] sm:$0xff]
        %v788 = vld [vmem:[#allocation2 + $0x8] sm:$0xff]
        %v789 = vld [vmem:[#allocation2 + $0x10] sm:$0xff]
        %v790 = vld [vmem:[#allocation2 + $0x18] sm:$0x3]
        %v791 = vld [vmem:[#allocation2 + $0x20] sm:$0xff]
        %v792 = vld [vmem:[#allocation2 + $0x28] sm:$0xff]
        %v793 = vld [vmem:[#allocation2 + $0x30] sm:$0xff]
        %v794 = vld [vmem:[#allocation2 + $0x38] sm:$0x3]
        %v795 = vld [vmem:[#allocation2 + $0x40] sm:$0xff]
        %v796 = vld [vmem:[#allocation2 + $0x48] sm:$0xff]
        %v797 = vld [vmem:[#allocation2 + $0x50] sm:$0xff]
        %v798 = vld [vmem:[#allocation2 + $0x58] sm:$0x3]
        %v799 = vld [vmem:[#allocation2 + $0x60] sm:$0xff]
        %v800 = vld [vmem:[#allocation2 + $0x68] sm:$0xff]
        %v801 = vld [vmem:[#allocation2 + $0x70] sm:$0xff]
        %v802 = vld [vmem:[#allocation2 + $0x78] sm:$0x3]
        %v803 = vld [vmem:[#allocation2 + $0x80] sm:$0xff]
        %v804 = vld [vmem:[#allocation2 + $0x88] sm:$0xff]
        %v805 = vld [vmem:[#allocation2 + $0x90] sm:$0xff]
        %v806 = vld [vmem:[#allocation2 + $0x98] sm:$0x3]
        %v807 = vld [vmem:[#allocation2 + $0xa0] sm:$0xff]
        %v808 = vld [vmem:[#allocation2 + $0xa8] sm:$0xff]
        %v809 = vld [vmem:[#allocation2 + $0xb0] sm:$0xff]
        %v810 = vld [vmem:[#allocation2 + $0xb8] sm:$0x3]
        %v811 = vld [vmem:[#allocation2 + $0xc0] sm:$0xff]
        %v812 = vld [vmem:[#allocation2 + $0xc8] sm:$0xff]
        %v813 = vld [vmem:[#allocation2 + $0xd0] sm:$0xff]
        %v814 = vld [vmem:[#allocation2 + $0xd8] sm:$0x3]
        %v815 = vld [vmem:[#allocation2 + $0xe0] sm:$0xff]
        %v816 = vld [vmem:[#allocation2 + $0xe8] sm:$0xff]
        %v817 = vld [vmem:[#allocation2 + $0xf0] sm:$0xff]
        %v818 = vld [vmem:[#allocation2 + $0xf8] sm:$0x3]
        %v819 = vld [vmem:[%s7] sm:$0x1]
        %vm844 = vcmask 1040384
        %v845 = vrot.slane %v787, 7
        %v846 = vrot.slane %v788, 7
        %v847 = vsel %vm844, %v845, %v846
        %v848 = vrot.slane %v789, 7
        %v849 = vsel %vm844, %v846, %v848
        %v850 = vrot.slane %v791, 7
        %v851 = vrot.slane %v792, 7
        %v852 = vsel %vm844, %v850, %v851
        %v853 = vrot.slane %v793, 7
        %v854 = vsel %vm844, %v851, %v853
        %v855 = vrot.slane %v795, 7
        %v856 = vrot.slane %v796, 7
        %v857 = vsel %vm844, %v855, %v856
        %v858 = vrot.slane %v797, 7
        %v859 = vsel %vm844, %v856, %v858
        %v860 = vrot.slane %v799, 7
        %v861 = vrot.slane %v800, 7
        %v862 = vsel %vm844, %v860, %v861
        %v863 = vrot.slane %v801, 7
        %v864 = vsel %vm844, %v861, %v863
        %v865 = vrot.slane %v803, 7
        %v866 = vrot.slane %v804, 7
        %v867 = vsel %vm844, %v865, %v866
        %v868 = vrot.slane %v805, 7
        %v869 = vsel %vm844, %v866, %v868
        %v870 = vrot.slane %v807, 7
        %v871 = vrot.slane %v808, 7
        %v872 = vsel %vm844, %v870, %v871
        %v873 = vrot.slane %v809, 7
        %v874 = vsel %vm844, %v871, %v873
        %v875 = vrot.slane %v811, 7
        %v876 = vrot.slane %v812, 7
        %v877 = vsel %vm844, %v875, %v876
        %v878 = vrot.slane %v813, 7
        %v879 = vsel %vm844, %v876, %v878
        %v880 = vrot.slane %v815, 7
        %v881 = vrot.slane %v816, 7
        %v882 = vsel %vm844, %v880, %v881
        %v883 = vrot.slane %v817, 7
        %v884 = vsel %vm844, %v881, %v883
        %v901 = vld [vmem:[#allocation13] sm:$0xf]
        %v902 = vld [vmem:[#allocation13 + $0x4] sm:$0xf]
        %v903 = vld [vmem:[#allocation13 + $0x8] sm:$0xf]
        %v904 = vld [vmem:[#allocation13 + $0xc] sm:$0xf]
        %v905 = vpack.c.bf16 %v849, %v847
        %v906 = vpack.c.bf16 %v854, %v852
        %v907 = vpack.c.bf16 %v859, %v857
        %v908 = vpack.c.bf16 %v864, %v862
        %v909 = vpack.c.bf16 %v869, %v867
        %v910 = vpack.c.bf16 %v874, %v872
        %v911 = vpack.c.bf16 %v879, %v877
        %v912 = vpack.c.bf16 %v884, %v882
        %v917 = vunpack.c.l.b16 %v901
        %v918 = vunpack.c.l.b16 %v902
        %v919 = vunpack.c.l.b16 %v903
        %v920 = vunpack.c.l.b16 %v904
        %v921 = vpack.c.b16 %v918, %v917
        %v922 = vpack.c.b16 %v920, %v919
        %v926 = vsel %vm616, %v905, 0
        %v929 = vsel %vm616, %v906, 0
        %v932 = vsel %vm616, %v907, 0
        %v935 = vsel %vm616, %v908, 0
        %v938 = vsel %vm616, %v909, 0
        %v941 = vsel %vm616, %v910, 0
        %v944 = vsel %vm616, %v911, 0
        %v947 = vsel %vm616, %v912, 0
        %949 = vmatprep.subr.bf16.mxu0 0
        %950 = vmatpush1.bf16.msra.mxu0 0
        %951 = vmatprep.subr.bf16.mxu0 0
        %952 = vmatpush1.bf16.msra.mxu0 0
        %953 = vmatprep.subr.bf16.mxu0 0
        %954 = vmatpush1.bf16.msra.mxu0 0
        %955 = vmatprep.subr.bf16.mxu0 0
        %956 = vmatpush1.bf16.msra.mxu0 0
        %957 = vmatprep.subr.bf16.mxu0 0
        %958 = vmatpush1.bf16.msra.mxu0 0
        %959 = vmatprep.subr.bf16.mxu0 0
        %960 = vmatpush1.bf16.msra.mxu0 0
        %961 = vmatprep.subr.bf16.mxu0 0
        %962 = vmatpush1.bf16.msra.mxu0 %v922
        %963 = vmatprep.subr.bf16.mxu0 0
        %964 = vmatpush1.bf16.msra.mxu0 %v921
        %965 = vmatprep.subr.bf16.mxu0 0
        %966 = vmatpush2.bf16.msra.mxu0 0
        %967 = vmatprep.subr.bf16.mxu0 0
        %968 = vmatpush2.bf16.msra.mxu0 0
        %969 = vmatprep.subr.bf16.mxu0 0
        %970 = vmatpush2.bf16.msra.mxu0 0
        %971 = vmatprep.subr.bf16.mxu0 0
        %972 = vmatpush2.bf16.msra.mxu0 0
        %973 = vmatprep.subr.bf16.mxu0 0
        %974 = vmatpush2.bf16.msra.mxu0 0
        %975 = vmatprep.subr.bf16.mxu0 0
        %976 = vmatpush2.bf16.msra.mxu0 0
        %977 = vmatprep.subr.bf16.mxu0 0
        %978 = vmatpush2.bf16.msra.mxu0 0
        %979 = vmatprep.subr.bf16.mxu0 0
        %980 = vmatpush2.bf16.msra.mxu0 0
        %981 = vmatprep.mubr.bf16.mxu0 0
        %982 = vmatmul.mubr.bf16.gmra.mxu0 %v926
        %v983 = vpop.f32.mrf.mxu0
        %v984 = vadd.f32 0.0, %v983
        %v985 = vpop.f32.mrf.mxu0
        %v986 = vpop.f32.mrf.mxu0
        %v987 = vadd.f32 0.0, %v986
        %v988 = vpop.f32.mrf.mxu0
        %989 = vmatprep.mubr.bf16.mxu0 0
        %990 = vmatmul.mubr.bf16.gmra.mxu0 %v929
        %v991 = vpop.f32.mrf.mxu0
        %v992 = vadd.f32 0.0, %v991
        %v993 = vpop.f32.mrf.mxu0
        %v994 = vpop.f32.mrf.mxu0
        %v995 = vadd.f32 0.0, %v994
        %v996 = vpop.f32.mrf.mxu0
        %997 = vmatprep.mubr.bf16.mxu0 0
        %998 = vmatmul.mubr.bf16.gmra.mxu0 %v932
        %v999 = vpop.f32.mrf.mxu0
        %v1000 = vadd.f32 0.0, %v999
        %v1001 = vpop.f32.mrf.mxu0
        %v1002 = vpop.f32.mrf.mxu0
        %v1003 = vadd.f32 0.0, %v1002
        %v1004 = vpop.f32.mrf.mxu0
        %1005 = vmatprep.mubr.bf16.mxu0 0
        %1006 = vmatmul.mubr.bf16.gmra.mxu0 %v935
        %v1007 = vpop.f32.mrf.mxu0
        %v1008 = vadd.f32 0.0, %v1007
        %v1009 = vpop.f32.mrf.mxu0
        %v1010 = vpop.f32.mrf.mxu0
        %v1011 = vadd.f32 0.0, %v1010
        %v1012 = vpop.f32.mrf.mxu0
        %1013 = vmatprep.mubr.bf16.mxu0 0
        %1014 = vmatmul.mubr.bf16.gmra.mxu0 %v938
        %v1015 = vpop.f32.mrf.mxu0
        %v1016 = vadd.f32 0.0, %v1015
        %v1017 = vpop.f32.mrf.mxu0
        %v1018 = vpop.f32.mrf.mxu0
        %v1019 = vadd.f32 0.0, %v1018
        %v1020 = vpop.f32.mrf.mxu0
        %1021 = vmatprep.mubr.bf16.mxu0 0
        %1022 = vmatmul.mubr.bf16.gmra.mxu0 %v941
        %v1023 = vpop.f32.mrf.mxu0
        %v1024 = vadd.f32 0.0, %v1023
        %v1025 = vpop.f32.mrf.mxu0
        %v1026 = vpop.f32.mrf.mxu0
        %v1027 = vadd.f32 0.0, %v1026
        %v1028 = vpop.f32.mrf.mxu0
        %1029 = vmatprep.mubr.bf16.mxu0 0
        %1030 = vmatmul.mubr.bf16.gmra.mxu0 %v944
        %v1031 = vpop.f32.mrf.mxu0
        %v1032 = vadd.f32 0.0, %v1031
        %v1033 = vpop.f32.mrf.mxu0
        %v1034 = vpop.f32.mrf.mxu0
        %v1035 = vadd.f32 0.0, %v1034
        %v1036 = vpop.f32.mrf.mxu0
        %1037 = vmatprep.mubr.bf16.mxu0 0
        %1038 = vmatmul.mubr.bf16.gmra.mxu0 %v947
        %v1039 = vpop.f32.mrf.mxu0
        %v1040 = vadd.f32 0.0, %v1039
        %v1041 = vpop.f32.mrf.mxu0
        %v1042 = vpop.f32.mrf.mxu0
        %v1043 = vadd.f32 0.0, %v1042
        %v1044 = vpop.f32.mrf.mxu0
        %1045 = vdwg.mxu0
        %v1047 = vlaneseq
        %v1048 = vshrl.u32 %v1047, 7
        %v1049 = vsub.s32 0, %v1048
        %v1050 = vrot.slane %v819, %v1049
        %v1052 = vadd.f32 %v1050, %v984
        %v1053 = vadd.f32 %v1050, %v987
        %v1054 = vadd.f32 %v1050, %v992
        %v1055 = vadd.f32 %v1050, %v995
        %v1056 = vadd.f32 %v1050, %v1000
        %v1057 = vadd.f32 %v1050, %v1003
        %v1058 = vadd.f32 %v1050, %v1008
        %v1059 = vadd.f32 %v1050, %v1011
        %v1060 = vadd.f32 %v1050, %v1016
        %v1061 = vadd.f32 %v1050, %v1019
        %v1062 = vadd.f32 %v1050, %v1024
        %v1063 = vadd.f32 %v1050, %v1027
        %v1064 = vadd.f32 %v1050, %v1032
        %v1065 = vadd.f32 %v1050, %v1035
        %v1066 = vadd.f32 %v1050, %v1040
        %v1067 = vadd.f32 %v1050, %v1043
        %s1068 = scalar_lea.vmem [#allocation13], 16
        %v1069 = vld [vmem:[%s1068] sm:$0xf]
        %v1070 = vld [vmem:[%s1068 + $0x4] sm:$0xf]
        %v1071 = vld [vmem:[%s1068 + $0x8] sm:$0xf]
        %v1072 = vld [vmem:[%s1068 + $0xc] sm:$0xf]
        %v1073 = vpack.c.bf16 %v789, %v788
        %v1074 = vpack.c.bf16 %v793, %v792
        %v1075 = vpack.c.bf16 %v797, %v796
        %v1076 = vpack.c.bf16 %v801, %v800
        %v1077 = vpack.c.bf16 %v805, %v804
        %v1078 = vpack.c.bf16 %v809, %v808
        %v1079 = vpack.c.bf16 %v813, %v812
        %v1080 = vpack.c.bf16 %v817, %v816
        %v1085 = vunpack.c.l.b16 %v1069
        %v1086 = vunpack.c.l.b16 %v1070
        %v1087 = vunpack.c.l.b16 %v1071
        %v1088 = vunpack.c.l.b16 %v1072
        %v1089 = vpack.c.b16 %v1086, %v1085
        %v1090 = vpack.c.b16 %v1088, %v1087
        %v1094 = vsel %vm616, %v1073, 0
        %v1097 = vsel %vm616, %v1074, 0
        %v1100 = vsel %vm616, %v1075, 0
        %v1103 = vsel %vm616, %v1076, 0
        %v1106 = vsel %vm616, %v1077, 0
        %v1109 = vsel %vm616, %v1078, 0
        %v1112 = vsel %vm616, %v1079, 0
        %v1115 = vsel %vm616, %v1080, 0
        %1117 = vmatprep.subr.bf16.mxu0 0
        %1118 = vmatpush1.bf16.msra.mxu0 0
        %1119 = vmatprep.subr.bf16.mxu0 0
        %1120 = vmatpush1.bf16.msra.mxu0 0
        %1121 = vmatprep.subr.bf16.mxu0 0
        %1122 = vmatpush1.bf16.msra.mxu0 0
        %1123 = vmatprep.subr.bf16.mxu0 0
        %1124 = vmatpush1.bf16.msra.mxu0 0
        %1125 = vmatprep.subr.bf16.mxu0 0
        %1126 = vmatpush1.bf16.msra.mxu0 0
        %1127 = vmatprep.subr.bf16.mxu0 0
        %1128 = vmatpush1.bf16.msra.mxu0 0
        %1129 = vmatprep.subr.bf16.mxu0 0
        %1130 = vmatpush1.bf16.msra.mxu0 %v1090
        %1131 = vmatprep.subr.bf16.mxu0 0
        %1132 = vmatpush1.bf16.msra.mxu0 %v1089
        %1133 = vmatprep.subr.bf16.mxu0 0
        %1134 = vmatpush2.bf16.msra.mxu0 0
        %1135 = vmatprep.subr.bf16.mxu0 0
        %1136 = vmatpush2.bf16.msra.mxu0 0
        %1137 = vmatprep.subr.bf16.mxu0 0
        %1138 = vmatpush2.bf16.msra.mxu0 0
        %1139 = vmatprep.subr.bf16.mxu0 0
        %1140 = vmatpush2.bf16.msra.mxu0 0
        %1141 = vmatprep.subr.bf16.mxu0 0
        %1142 = vmatpush2.bf16.msra.mxu0 0
        %1143 = vmatprep.subr.bf16.mxu0 0
        %1144 = vmatpush2.bf16.msra.mxu0 0
        %1145 = vmatprep.subr.bf16.mxu0 0
        %1146 = vmatpush2.bf16.msra.mxu0 0
        %1147 = vmatprep.subr.bf16.mxu0 0
        %1148 = vmatpush2.bf16.msra.mxu0 0
        %1149 = vmatprep.mubr.bf16.mxu0 0
        %1150 = vmatmul.mubr.bf16.gmra.mxu0 %v1094
        %v1151 = vpop.f32.mrf.mxu0
        %v1152 = vadd.f32 0.0, %v1151
        %v1153 = vpop.f32.mrf.mxu0
        %v1154 = vpop.f32.mrf.mxu0
        %v1155 = vadd.f32 0.0, %v1154
        %v1156 = vpop.f32.mrf.mxu0
        %1157 = vmatprep.mubr.bf16.mxu0 0
        %1158 = vmatmul.mubr.bf16.gmra.mxu0 %v1097
        %v1159 = vpop.f32.mrf.mxu0
        %v1160 = vadd.f32 0.0, %v1159
        %v1161 = vpop.f32.mrf.mxu0
        %v1162 = vpop.f32.mrf.mxu0
        %v1163 = vadd.f32 0.0, %v1162
        %v1164 = vpop.f32.mrf.mxu0
        %1165 = vmatprep.mubr.bf16.mxu0 0
        %1166 = vmatmul.mubr.bf16.gmra.mxu0 %v1100
        %v1167 = vpop.f32.mrf.mxu0
        %v1168 = vadd.f32 0.0, %v1167
        %v1169 = vpop.f32.mrf.mxu0
        %v1170 = vpop.f32.mrf.mxu0
        %v1171 = vadd.f32 0.0, %v1170
        %v1172 = vpop.f32.mrf.mxu0
        %1173 = vmatprep.mubr.bf16.mxu0 0
        %1174 = vmatmul.mubr.bf16.gmra.mxu0 %v1103
        %v1175 = vpop.f32.mrf.mxu0
        %v1176 = vadd.f32 0.0, %v1175
        %v1177 = vpop.f32.mrf.mxu0
        %v1178 = vpop.f32.mrf.mxu0
        %v1179 = vadd.f32 0.0, %v1178
        %v1180 = vpop.f32.mrf.mxu0
        %1181 = vmatprep.mubr.bf16.mxu0 0
        %1182 = vmatmul.mubr.bf16.gmra.mxu0 %v1106
        %v1183 = vpop.f32.mrf.mxu0
        %v1184 = vadd.f32 0.0, %v1183
        %v1185 = vpop.f32.mrf.mxu0
        %v1186 = vpop.f32.mrf.mxu0
        %v1187 = vadd.f32 0.0, %v1186
        %v1188 = vpop.f32.mrf.mxu0
        %1189 = vmatprep.mubr.bf16.mxu0 0
        %1190 = vmatmul.mubr.bf16.gmra.mxu0 %v1109
        %v1191 = vpop.f32.mrf.mxu0
        %v1192 = vadd.f32 0.0, %v1191
        %v1193 = vpop.f32.mrf.mxu0
        %v1194 = vpop.f32.mrf.mxu0
        %v1195 = vadd.f32 0.0, %v1194
        %v1196 = vpop.f32.mrf.mxu0
        %1197 = vmatprep.mubr.bf16.mxu0 0
        %1198 = vmatmul.mubr.bf16.gmra.mxu0 %v1112
        %v1199 = vpop.f32.mrf.mxu0
        %v1200 = vadd.f32 0.0, %v1199
        %v1201 = vpop.f32.mrf.mxu0
        %v1202 = vpop.f32.mrf.mxu0
        %v1203 = vadd.f32 0.0, %v1202
        %v1204 = vpop.f32.mrf.mxu0
        %1205 = vmatprep.mubr.bf16.mxu0 0
        %1206 = vmatmul.mubr.bf16.gmra.mxu0 %v1115
        %v1207 = vpop.f32.mrf.mxu0
        %v1208 = vadd.f32 0.0, %v1207
        %v1209 = vpop.f32.mrf.mxu0
        %v1210 = vpop.f32.mrf.mxu0
        %v1211 = vadd.f32 0.0, %v1210
        %v1212 = vpop.f32.mrf.mxu0
        %1213 = vdwg.mxu0
        %v1214 = vadd.f32 %v1052, %v1152
        %v1215 = vadd.f32 %v1053, %v1155
        %v1216 = vadd.f32 %v1054, %v1160
        %v1217 = vadd.f32 %v1055, %v1163
        %v1218 = vadd.f32 %v1056, %v1168
        %v1219 = vadd.f32 %v1057, %v1171
        %v1220 = vadd.f32 %v1058, %v1176
        %v1221 = vadd.f32 %v1059, %v1179
        %v1222 = vadd.f32 %v1060, %v1184
        %v1223 = vadd.f32 %v1061, %v1187
        %v1224 = vadd.f32 %v1062, %v1192
        %v1225 = vadd.f32 %v1063, %v1195
        %v1226 = vadd.f32 %v1064, %v1200
        %v1227 = vadd.f32 %v1065, %v1203
        %v1228 = vadd.f32 %v1066, %v1208
        %v1229 = vadd.f32 %v1067, %v1211
        %vm1238 = vcmask 1046528
        %v1239 = vrot.slane %v788, 1
        %v1240 = vrot.slane %v789, 1
        %v1241 = vsel %vm1238, %v1239, %v1240
        %v1242 = vrot.slane %v790, 1
        %v1243 = vsel %vm1238, %v1240, %v1242
        %v1244 = vrot.slane %v792, 1
        %v1245 = vrot.slane %v793, 1
        %v1246 = vsel %vm1238, %v1244, %v1245
        %v1247 = vrot.slane %v794, 1
        %v1248 = vsel %vm1238, %v1245, %v1247
        %v1249 = vrot.slane %v796, 1
        %v1250 = vrot.slane %v797, 1
        %v1251 = vsel %vm1238, %v1249, %v1250
        %v1252 = vrot.slane %v798, 1
        %v1253 = vsel %vm1238, %v1250, %v1252
        %v1254 = vrot.slane %v800, 1
        %v1255 = vrot.slane %v801, 1
        %v1256 = vsel %vm1238, %v1254, %v1255
        %v1257 = vrot.slane %v802, 1
        %v1258 = vsel %vm1238, %v1255, %v1257
        %v1259 = vrot.slane %v804, 1
        %v1260 = vrot.slane %v805, 1
        %v1261 = vsel %vm1238, %v1259, %v1260
        %v1262 = vrot.slane %v806, 1
        %v1263 = vsel %vm1238, %v1260, %v1262
        %v1264 = vrot.slane %v808, 1
        %v1265 = vrot.slane %v809, 1
        %v1266 = vsel %vm1238, %v1264, %v1265
        %v1267 = vrot.slane %v810, 1
        %v1268 = vsel %vm1238, %v1265, %v1267
        %v1269 = vrot.slane %v812, 1
        %v1270 = vrot.slane %v813, 1
        %v1271 = vsel %vm1238, %v1269, %v1270
        %v1272 = vrot.slane %v814, 1
        %v1273 = vsel %vm1238, %v1270, %v1272
        %v1274 = vrot.slane %v816, 1
        %v1275 = vrot.slane %v817, 1
        %v1276 = vsel %vm1238, %v1274, %v1275
        %v1277 = vrot.slane %v818, 1
        %v1278 = vsel %vm1238, %v1275, %v1277
        %s1295 = scalar_lea.vmem [#allocation13], 32
        %v1296 = vld [vmem:[%s1295] sm:$0xf]
        %v1297 = vld [vmem:[%s1295 + $0x4] sm:$0xf]
        %v1298 = vld [vmem:[%s1295 + $0x8] sm:$0xf]
        %v1299 = vld [vmem:[%s1295 + $0xc] sm:$0xf]
        %v1300 = vpack.c.bf16 %v1243, %v1241
        %v1301 = vpack.c.bf16 %v1248, %v1246
        %v1302 = vpack.c.bf16 %v1253, %v1251
        %v1303 = vpack.c.bf16 %v1258, %v1256
        %v1304 = vpack.c.bf16 %v1263, %v1261
        %v1305 = vpack.c.bf16 %v1268, %v1266
        %v1306 = vpack.c.bf16 %v1273, %v1271
        %v1307 = vpack.c.bf16 %v1278, %v1276
        %v1312 = vunpack.c.l.b16 %v1296
        %v1313 = vunpack.c.l.b16 %v1297
        %v1314 = vunpack.c.l.b16 %v1298
        %v1315 = vunpack.c.l.b16 %v1299
        %v1316 = vpack.c.b16 %v1313, %v1312
        %v1317 = vpack.c.b16 %v1315, %v1314
        %v1321 = vsel %vm616, %v1300, 0
        %v1324 = vsel %vm616, %v1301, 0
        %v1327 = vsel %vm616, %v1302, 0
        %v1330 = vsel %vm616, %v1303, 0
        %v1333 = vsel %vm616, %v1304, 0
        %v1336 = vsel %vm616, %v1305, 0
        %v1339 = vsel %vm616, %v1306, 0
        %v1342 = vsel %vm616, %v1307, 0
        %1344 = vmatprep.subr.bf16.mxu0 0
        %1345 = vmatpush1.bf16.msra.mxu0 0
        %1346 = vmatprep.subr.bf16.mxu0 0
        %1347 = vmatpush1.bf16.msra.mxu0 0
        %1348 = vmatprep.subr.bf16.mxu0 0
        %1349 = vmatpush1.bf16.msra.mxu0 0
        %1350 = vmatprep.subr.bf16.mxu0 0
        %1351 = vmatpush1.bf16.msra.mxu0 0
        %1352 = vmatprep.subr.bf16.mxu0 0
        %1353 = vmatpush1.bf16.msra.mxu0 0
        %1354 = vmatprep.subr.bf16.mxu0 0
        %1355 = vmatpush1.bf16.msra.mxu0 0
        %1356 = vmatprep.subr.bf16.mxu0 0
        %1357 = vmatpush1.bf16.msra.mxu0 %v1317
        %1358 = vmatprep.subr.bf16.mxu0 0
        %1359 = vmatpush1.bf16.msra.mxu0 %v1316
        %1360 = vmatprep.subr.bf16.mxu0 0
        %1361 = vmatpush2.bf16.msra.mxu0 0
        %1362 = vmatprep.subr.bf16.mxu0 0
        %1363 = vmatpush2.bf16.msra.mxu0 0
        %1364 = vmatprep.subr.bf16.mxu0 0
        %1365 = vmatpush2.bf16.msra.mxu0 0
        %1366 = vmatprep.subr.bf16.mxu0 0
        %1367 = vmatpush2.bf16.msra.mxu0 0
        %1368 = vmatprep.subr.bf16.mxu0 0
        %1369 = vmatpush2.bf16.msra.mxu0 0
        %1370 = vmatprep.subr.bf16.mxu0 0
        %1371 = vmatpush2.bf16.msra.mxu0 0
        %1372 = vmatprep.subr.bf16.mxu0 0
        %1373 = vmatpush2.bf16.msra.mxu0 0
        %1374 = vmatprep.subr.bf16.mxu0 0
        %1375 = vmatpush2.bf16.msra.mxu0 0
        %1376 = vmatprep.mubr.bf16.mxu0 0
        %1377 = vmatmul.mubr.bf16.gmra.mxu0 %v1321
        %v1378 = vpop.f32.mrf.mxu0
        %v1379 = vadd.f32 0.0, %v1378
        %v1380 = vpop.f32.mrf.mxu0
        %v1381 = vpop.f32.mrf.mxu0
        %v1382 = vadd.f32 0.0, %v1381
        %v1383 = vpop.f32.mrf.mxu0
        %1384 = vmatprep.mubr.bf16.mxu0 0
        %1385 = vmatmul.mubr.bf16.gmra.mxu0 %v1324
        %v1386 = vpop.f32.mrf.mxu0
        %v1387 = vadd.f32 0.0, %v1386
        %v1388 = vpop.f32.mrf.mxu0
        %v1389 = vpop.f32.mrf.mxu0
        %v1390 = vadd.f32 0.0, %v1389
        %v1391 = vpop.f32.mrf.mxu0
        %1392 = vmatprep.mubr.bf16.mxu0 0
        %1393 = vmatmul.mubr.bf16.gmra.mxu0 %v1327
        %v1394 = vpop.f32.mrf.mxu0
        %v1395 = vadd.f32 0.0, %v1394
        %v1396 = vpop.f32.mrf.mxu0
        %v1397 = vpop.f32.mrf.mxu0
        %v1398 = vadd.f32 0.0, %v1397
        %v1399 = vpop.f32.mrf.mxu0
        %1400 = vmatprep.mubr.bf16.mxu0 0
        %1401 = vmatmul.mubr.bf16.gmra.mxu0 %v1330
        %v1402 = vpop.f32.mrf.mxu0
        %v1403 = vadd.f32 0.0, %v1402
        %v1404 = vpop.f32.mrf.mxu0
        %v1405 = vpop.f32.mrf.mxu0
        %v1406 = vadd.f32 0.0, %v1405
        %v1407 = vpop.f32.mrf.mxu0
        %1408 = vmatprep.mubr.bf16.mxu0 0
        %1409 = vmatmul.mubr.bf16.gmra.mxu0 %v1333
        %v1410 = vpop.f32.mrf.mxu0
        %v1411 = vadd.f32 0.0, %v1410
        %v1412 = vpop.f32.mrf.mxu0
        %v1413 = vpop.f32.mrf.mxu0
        %v1414 = vadd.f32 0.0, %v1413
        %v1415 = vpop.f32.mrf.mxu0
        %1416 = vmatprep.mubr.bf16.mxu0 0
        %1417 = vmatmul.mubr.bf16.gmra.mxu0 %v1336
        %v1418 = vpop.f32.mrf.mxu0
        %v1419 = vadd.f32 0.0, %v1418
        %v1420 = vpop.f32.mrf.mxu0
        %v1421 = vpop.f32.mrf.mxu0
        %v1422 = vadd.f32 0.0, %v1421
        %v1423 = vpop.f32.mrf.mxu0
        %1424 = vmatprep.mubr.bf16.mxu0 0
        %1425 = vmatmul.mubr.bf16.gmra.mxu0 %v1339
        %v1426 = vpop.f32.mrf.mxu0
        %v1427 = vadd.f32 0.0, %v1426
        %v1428 = vpop.f32.mrf.mxu0
        %v1429 = vpop.f32.mrf.mxu0
        %v1430 = vadd.f32 0.0, %v1429
        %v1431 = vpop.f32.mrf.mxu0
        %1432 = vmatprep.mubr.bf16.mxu0 0
        %1433 = vmatmul.mubr.bf16.gmra.mxu0 %v1342
        %v1434 = vpop.f32.mrf.mxu0
        %v1435 = vadd.f32 0.0, %v1434
        %v1436 = vpop.f32.mrf.mxu0
        %v1437 = vpop.f32.mrf.mxu0
        %v1438 = vadd.f32 0.0, %v1437
        %v1439 = vpop.f32.mrf.mxu0
        %1440 = vdwg.mxu0
        %v1441 = vadd.f32 %v1214, %v1379
        %v1442 = vadd.f32 %v1215, %v1382
        %v1443 = vadd.f32 %v1216, %v1387
        %v1444 = vadd.f32 %v1217, %v1390
        %v1445 = vadd.f32 %v1218, %v1395
        %v1446 = vadd.f32 %v1219, %v1398
        %v1447 = vadd.f32 %v1220, %v1403
        %v1448 = vadd.f32 %v1221, %v1406
        %v1449 = vadd.f32 %v1222, %v1411
        %v1450 = vadd.f32 %v1223, %v1414
        %v1451 = vadd.f32 %v1224, %v1419
        %v1452 = vadd.f32 %v1225, %v1422
        %v1453 = vadd.f32 %v1226, %v1427
        %v1454 = vadd.f32 %v1227, %v1430
        %v1455 = vadd.f32 %v1228, %v1435
        %v1456 = vadd.f32 %v1229, %v1438
        %v1457 = vxor.u32 %v1441, 2147483648
        %v1458 = vxor.u32 %v1442, 2147483648
        %v1459 = vxor.u32 %v1443, 2147483648
        %v1460 = vxor.u32 %v1444, 2147483648
        %v1461 = vxor.u32 %v1445, 2147483648
        %v1462 = vxor.u32 %v1446, 2147483648
        %v1463 = vxor.u32 %v1447, 2147483648
        %v1464 = vxor.u32 %v1448, 2147483648
        %v1465 = vxor.u32 %v1449, 2147483648
        %v1466 = vxor.u32 %v1450, 2147483648
        %v1467 = vxor.u32 %v1451, 2147483648
        %v1468 = vxor.u32 %v1452, 2147483648
        %v1469 = vxor.u32 %v1453, 2147483648
        %v1470 = vxor.u32 %v1454, 2147483648
        %v1471 = vxor.u32 %v1455, 2147483648
        %v1472 = vxor.u32 %v1456, 2147483648
        %v1473 = vmul.f32 %v1457, 1.442695
        %v1474 = vpow.pop %v1473
        %v1475 = vmul.f32 %v1458, 1.442695
        %v1476 = vpow.pop %v1475
        %v1477 = vmul.f32 %v1459, 1.442695
        %v1478 = vpow.pop %v1477
        %v1479 = vmul.f32 %v1460, 1.442695
        %v1480 = vpow.pop %v1479
        %v1481 = vmul.f32 %v1461, 1.442695
        %v1482 = vpow.pop %v1481
        %v1483 = vmul.f32 %v1462, 1.442695
        %v1484 = vpow.pop %v1483
        %v1485 = vmul.f32 %v1463, 1.442695
        %v1486 = vpow.pop %v1485
        %v1487 = vmul.f32 %v1464, 1.442695
        %v1488 = vpow.pop %v1487
        %v1489 = vmul.f32 %v1465, 1.442695
        %v1490 = vpow.pop %v1489
        %v1491 = vmul.f32 %v1466, 1.442695
        %v1492 = vpow.pop %v1491
        %v1493 = vmul.f32 %v1467, 1.442695
        %v1494 = vpow.pop %v1493
        %v1495 = vmul.f32 %v1468, 1.442695
        %v1496 = vpow.pop %v1495
        %v1497 = vmul.f32 %v1469, 1.442695
        %v1498 = vpow.pop %v1497
        %v1499 = vmul.f32 %v1470, 1.442695
        %v1500 = vpow.pop %v1499
        %v1501 = vmul.f32 %v1471, 1.442695
        %v1502 = vpow.pop %v1501
        %v1503 = vmul.f32 %v1472, 1.442695
        %v1504 = vpow.pop %v1503
        %v1505 = vadd.f32 %v1474, 1.0
        %v1506 = vadd.f32 %v1476, 1.0
        %v1507 = vadd.f32 %v1478, 1.0
        %v1508 = vadd.f32 %v1480, 1.0
        %v1509 = vadd.f32 %v1482, 1.0
        %v1510 = vadd.f32 %v1484, 1.0
        %v1511 = vadd.f32 %v1486, 1.0
        %v1512 = vadd.f32 %v1488, 1.0
        %v1513 = vadd.f32 %v1490, 1.0
        %v1514 = vadd.f32 %v1492, 1.0
        %v1515 = vadd.f32 %v1494, 1.0
        %v1516 = vadd.f32 %v1496, 1.0
        %v1517 = vadd.f32 %v1498, 1.0
        %v1518 = vadd.f32 %v1500, 1.0
        %v1519 = vadd.f32 %v1502, 1.0
        %v1520 = vadd.f32 %v1504, 1.0
        %v1521 = vrcp.pop %v1505
        %v1522 = vmul.f32 1.0, %v1521
        %v1523 = vrcp.pop %v1506
        %v1524 = vmul.f32 1.0, %v1523
        %v1525 = vrcp.pop %v1507
        %v1526 = vmul.f32 1.0, %v1525
        %v1527 = vrcp.pop %v1508
        %v1528 = vmul.f32 1.0, %v1527
        %v1529 = vrcp.pop %v1509
        %v1530 = vmul.f32 1.0, %v1529
        %v1531 = vrcp.pop %v1510
        %v1532 = vmul.f32 1.0, %v1531
        %v1533 = vrcp.pop %v1511
        %v1534 = vmul.f32 1.0, %v1533
        %v1535 = vrcp.pop %v1512
        %v1536 = vmul.f32 1.0, %v1535
        %v1537 = vrcp.pop %v1513
        %v1538 = vmul.f32 1.0, %v1537
        %v1539 = vrcp.pop %v1514
        %v1540 = vmul.f32 1.0, %v1539
        %v1541 = vrcp.pop %v1515
        %v1542 = vmul.f32 1.0, %v1541
        %v1543 = vrcp.pop %v1516
        %v1544 = vmul.f32 1.0, %v1543
        %v1545 = vrcp.pop %v1517
        %v1546 = vmul.f32 1.0, %v1545
        %v1547 = vrcp.pop %v1518
        %v1548 = vmul.f32 1.0, %v1547
        %v1549 = vrcp.pop %v1519
        %v1550 = vmul.f32 1.0, %v1549
        %v1551 = vrcp.pop %v1520
        %v1552 = vmul.f32 1.0, %v1551
        %1569 = vrot.lane.b32.xlu0 %v1522, 96
        %v1570 = vpop.permute.xlu0 %1569
        %1571 = vrot.lane.b32.xlu0 %v1524, 96
        %v1572 = vpop.permute.xlu0 %1571
        %1573 = vrot.lane.b32.xlu0 %v1526, 96
        %v1574 = vpop.permute.xlu0 %1573
        %1575 = vrot.lane.b32.xlu0 %v1528, 96
        %v1576 = vpop.permute.xlu0 %1575
        %1577 = vrot.lane.b32.xlu0 %v1530, 96
        %v1578 = vpop.permute.xlu0 %1577
        %1579 = vrot.lane.b32.xlu0 %v1532, 96
        %v1580 = vpop.permute.xlu0 %1579
        %1581 = vrot.lane.b32.xlu0 %v1534, 96
        %v1582 = vpop.permute.xlu0 %1581
        %1583 = vrot.lane.b32.xlu0 %v1536, 96
        %v1584 = vpop.permute.xlu0 %1583
        %1585 = vrot.lane.b32.xlu0 %v1538, 96
        %v1586 = vpop.permute.xlu0 %1585
        %1587 = vrot.lane.b32.xlu0 %v1540, 96
        %v1588 = vpop.permute.xlu0 %1587
        %1589 = vrot.lane.b32.xlu0 %v1542, 96
        %v1590 = vpop.permute.xlu0 %1589
        %1591 = vrot.lane.b32.xlu0 %v1544, 96
        %v1592 = vpop.permute.xlu0 %1591
        %1593 = vrot.lane.b32.xlu0 %v1546, 96
        %v1594 = vpop.permute.xlu0 %1593
        %1595 = vrot.lane.b32.xlu0 %v1548, 96
        %v1596 = vpop.permute.xlu0 %1595
        %1597 = vrot.lane.b32.xlu0 %v1550, 96
        %v1598 = vpop.permute.xlu0 %1597
        %1599 = vrot.lane.b32.xlu0 %v1552, 96
        %v1600 = vpop.permute.xlu0 %1599
        %v1617 = vmul.f32 %v1441, %v1570
        %v1618 = vmul.f32 %v1442, %v1572
        %v1619 = vmul.f32 %v1443, %v1574
        %v1620 = vmul.f32 %v1444, %v1576
        %v1621 = vmul.f32 %v1445, %v1578
        %v1622 = vmul.f32 %v1446, %v1580
        %v1623 = vmul.f32 %v1447, %v1582
        %v1624 = vmul.f32 %v1448, %v1584
        %v1625 = vmul.f32 %v1449, %v1586
        %v1626 = vmul.f32 %v1450, %v1588
        %v1627 = vmul.f32 %v1451, %v1590
        %v1628 = vmul.f32 %v1452, %v1592
        %v1629 = vmul.f32 %v1453, %v1594
        %v1630 = vmul.f32 %v1454, %v1596
        %v1631 = vmul.f32 %v1455, %v1598
        %v1632 = vmul.f32 %v1456, %v1600
        %v1633 = vadd.f32 %v1617, %v676
        %v1634 = vadd.f32 %v1618, %v679
        %v1635 = vadd.f32 %v1619, %v684
        %v1636 = vadd.f32 %v1620, %v687
        %v1637 = vadd.f32 %v1621, %v692
        %v1638 = vadd.f32 %v1622, %v695
        %v1639 = vadd.f32 %v1623, %v700
        %v1640 = vadd.f32 %v1624, %v703
        %v1641 = vadd.f32 %v1625, %v708
        %v1642 = vadd.f32 %v1626, %v711
        %v1643 = vadd.f32 %v1627, %v716
        %v1644 = vadd.f32 %v1628, %v719
        %v1645 = vadd.f32 %v1629, %v724
        %v1646 = vadd.f32 %v1630, %v727
        %v1647 = vadd.f32 %v1631, %v732
        %v1648 = vadd.f32 %v1632, %v735
        %v1649 = vmul.f32 %v1633, 0.70710677
        %v1650 = vmul.f32 %v1634, 0.70710677
        %v1651 = vmul.f32 %v1635, 0.70710677
        %v1652 = vmul.f32 %v1636, 0.70710677
        %v1653 = vmul.f32 %v1637, 0.70710677
        %v1654 = vmul.f32 %v1638, 0.70710677
        %v1655 = vmul.f32 %v1639, 0.70710677
        %v1656 = vmul.f32 %v1640, 0.70710677
        %v1657 = vmul.f32 %v1641, 0.70710677
        %v1658 = vmul.f32 %v1642, 0.70710677
        %v1659 = vmul.f32 %v1643, 0.70710677
        %v1660 = vmul.f32 %v1644, 0.70710677
        %v1661 = vmul.f32 %v1645, 0.70710677
        %v1662 = vmul.f32 %v1646, 0.70710677
        %v1663 = vmul.f32 %v1647, 0.70710677
        %v1664 = vmul.f32 %v1648, 0.70710677
        %1665 = vst.msk [vmem:[#allocation2 + $0x8] sm:$0xff] %vm616, %v1649
        %1666 = vst.msk [vmem:[#allocation2 + $0x10] sm:$0xff] %vm616, %v1650
        %1667 = vst.msk [vmem:[#allocation2 + $0x28] sm:$0xff] %vm616, %v1651
        %1668 = vst.msk [vmem:[#allocation2 + $0x30] sm:$0xff] %vm616, %v1652
        %1669 = vst.msk [vmem:[#allocation2 + $0x48] sm:$0xff] %vm616, %v1653
        %1670 = vst.msk [vmem:[#allocation2 + $0x50] sm:$0xff] %vm616, %v1654
        %1671 = vst.msk [vmem:[#allocation2 + $0x68] sm:$0xff] %vm616, %v1655
        %1672 = vst.msk [vmem:[#allocation2 + $0x70] sm:$0xff] %vm616, %v1656
        %1673 = vst.msk [vmem:[#allocation2 + $0x88] sm:$0xff] %vm616, %v1657
        %1674 = vst.msk [vmem:[#allocation2 + $0x90] sm:$0xff] %vm616, %v1658
        %1675 = vst.msk [vmem:[#allocation2 + $0xa8] sm:$0xff] %vm616, %v1659
        %1676 = vst.msk [vmem:[#allocation2 + $0xb0] sm:$0xff] %vm616, %v1660
        %1677 = vst.msk [vmem:[#allocation2 + $0xc8] sm:$0xff] %vm616, %v1661
        %1678 = vst.msk [vmem:[#allocation2 + $0xd0] sm:$0xff] %vm616, %v1662
        %1679 = vst.msk [vmem:[#allocation2 + $0xe8] sm:$0xff] %vm616, %v1663
        %1680 = vst.msk [vmem:[#allocation2 + $0xf0] sm:$0xff] %vm616, %v1664
        %v1681 = vld [vmem:[#allocation2] sm:$0xff]
        %v1682 = vld [vmem:[#allocation2 + $0x8] sm:$0xff]
        %v1683 = vld [vmem:[#allocation2 + $0x10] sm:$0xff]
        %v1684 = vld [vmem:[#allocation2 + $0x18] sm:$0x3]
        %v1685 = vld [vmem:[#allocation2 + $0x20] sm:$0xff]
        %v1686 = vld [vmem:[#allocation2 + $0x28] sm:$0xff]
        %v1687 = vld [vmem:[#allocation2 + $0x30] sm:$0xff]
        %v1688 = vld [vmem:[#allocation2 + $0x38] sm:$0x3]
        %v1689 = vld [vmem:[#allocation2 + $0x40] sm:$0xff]
        %v1690 = vld [vmem:[#allocation2 + $0x48] sm:$0xff]
        %v1691 = vld [vmem:[#allocation2 + $0x50] sm:$0xff]
        %v1692 = vld [vmem:[#allocation2 + $0x58] sm:$0x3]
        %v1693 = vld [vmem:[#allocation2 + $0x60] sm:$0xff]
        %v1694 = vld [vmem:[#allocation2 + $0x68] sm:$0xff]
        %v1695 = vld [vmem:[#allocation2 + $0x70] sm:$0xff]
        %v1696 = vld [vmem:[#allocation2 + $0x78] sm:$0x3]
        %v1697 = vld [vmem:[#allocation2 + $0x80] sm:$0xff]
        %v1698 = vld [vmem:[#allocation2 + $0x88] sm:$0xff]
        %v1699 = vld [vmem:[#allocation2 + $0x90] sm:$0xff]
        %v1700 = vld [vmem:[#allocation2 + $0x98] sm:$0x3]
        %v1701 = vld [vmem:[#allocation2 + $0xa0] sm:$0xff]
        %v1702 = vld [vmem:[#allocation2 + $0xa8] sm:$0xff]
        %v1703 = vld [vmem:[#allocation2 + $0xb0] sm:$0xff]
        %v1704 = vld [vmem:[#allocation2 + $0xb8] sm:$0x3]
        %v1705 = vld [vmem:[#allocation2 + $0xc0] sm:$0xff]
        %v1706 = vld [vmem:[#allocation2 + $0xc8] sm:$0xff]
        %v1707 = vld [vmem:[#allocation2 + $0xd0] sm:$0xff]
        %v1708 = vld [vmem:[#allocation2 + $0xd8] sm:$0x3]
        %v1709 = vld [vmem:[#allocation2 + $0xe0] sm:$0xff]
        %v1710 = vld [vmem:[#allocation2 + $0xe8] sm:$0xff]
        %v1711 = vld [vmem:[#allocation2 + $0xf0] sm:$0xff]
        %v1712 = vld [vmem:[#allocation2 + $0xf8] sm:$0x3]
        %s1713 = scalar_lea.vmem %s7, 1
        %v1714 = vld [vmem:[%s1713] sm:$0x1]
        %v1739 = vrot.slane %v1681, 7
        %v1740 = vrot.slane %v1682, 7
        %v1741 = vsel %vm844, %v1739, %v1740
        %v1742 = vrot.slane %v1683, 7
        %v1743 = vsel %vm844, %v1740, %v1742
        %v1744 = vrot.slane %v1685, 7
        %v1745 = vrot.slane %v1686, 7
        %v1746 = vsel %vm844, %v1744, %v1745
        %v1747 = vrot.slane %v1687, 7
        %v1748 = vsel %vm844, %v1745, %v1747
        %v1749 = vrot.slane %v1689, 7
        %v1750 = vrot.slane %v1690, 7
        %v1751 = vsel %vm844, %v1749, %v1750
        %v1752 = vrot.slane %v1691, 7
        %v1753 = vsel %vm844, %v1750, %v1752
        %v1754 = vrot.slane %v1693, 7
        %v1755 = vrot.slane %v1694, 7
        %v1756 = vsel %vm844, %v1754, %v1755
        %v1757 = vrot.slane %v1695, 7
        %v1758 = vsel %vm844, %v1755, %v1757
        %v1759 = vrot.slane %v1697, 7
        %v1760 = vrot.slane %v1698, 7
        %v1761 = vsel %vm844, %v1759, %v1760
        %v1762 = vrot.slane %v1699, 7
        %v1763 = vsel %vm844, %v1760, %v1762
        %v1764 = vrot.slane %v1701, 7
        %v1765 = vrot.slane %v1702, 7
        %v1766 = vsel %vm844, %v1764, %v1765
        %v1767 = vrot.slane %v1703, 7
        %v1768 = vsel %vm844, %v1765, %v1767
        %v1769 = vrot.slane %v1705, 7
        %v1770 = vrot.slane %v1706, 7
        %v1771 = vsel %vm844, %v1769, %v1770
        %v1772 = vrot.slane %v1707, 7
        %v1773 = vsel %vm844, %v1770, %v1772
        %v1774 = vrot.slane %v1709, 7
        %v1775 = vrot.slane %v1710, 7
        %v1776 = vsel %vm844, %v1774, %v1775
        %v1777 = vrot.slane %v1711, 7
        %v1778 = vsel %vm844, %v1775, %v1777
        %s1795 = scalar_lea.vmem [#allocation13], 48
        %v1796 = vld [vmem:[%s1795] sm:$0xf]
        %v1797 = vld [vmem:[%s1795 + $0x4] sm:$0xf]
        %v1798 = vld [vmem:[%s1795 + $0x8] sm:$0xf]
        %v1799 = vld [vmem:[%s1795 + $0xc] sm:$0xf]
        %v1800 = vpack.c.bf16 %v1743, %v1741
        %v1801 = vpack.c.bf16 %v1748, %v1746
        %v1802 = vpack.c.bf16 %v1753, %v1751
        %v1803 = vpack.c.bf16 %v1758, %v1756
        %v1804 = vpack.c.bf16 %v1763, %v1761
        %v1805 = vpack.c.bf16 %v1768, %v1766
        %v1806 = vpack.c.bf16 %v1773, %v1771
        %v1807 = vpack.c.bf16 %v1778, %v1776
        %v1812 = vunpack.c.l.b16 %v1796
        %v1813 = vunpack.c.l.b16 %v1797
        %v1814 = vunpack.c.l.b16 %v1798
        %v1815 = vunpack.c.l.b16 %v1799
        %v1816 = vpack.c.b16 %v1813, %v1812
        %v1817 = vpack.c.b16 %v1815, %v1814
        %v1821 = vsel %vm616, %v1800, 0
        %v1824 = vsel %vm616, %v1801, 0
        %v1827 = vsel %vm616, %v1802, 0
        %v1830 = vsel %vm616, %v1803, 0
        %v1833 = vsel %vm616, %v1804, 0
        %v1836 = vsel %vm616, %v1805, 0
        %v1839 = vsel %vm616, %v1806, 0
        %v1842 = vsel %vm616, %v1807, 0
        %1844 = vmatprep.subr.bf16.mxu0 0
        %1845 = vmatpush1.bf16.msra.mxu0 0
        %1846 = vmatprep.subr.bf16.mxu0 0
        %1847 = vmatpush1.bf16.msra.mxu0 0
        %1848 = vmatprep.subr.bf16.mxu0 0
        %1849 = vmatpush1.bf16.msra.mxu0 0
        %1850 = vmatprep.subr.bf16.mxu0 0
        %1851 = vmatpush1.bf16.msra.mxu0 0
        %1852 = vmatprep.subr.bf16.mxu0 0
        %1853 = vmatpush1.bf16.msra.mxu0 0
        %1854 = vmatprep.subr.bf16.mxu0 0
        %1855 = vmatpush1.bf16.msra.mxu0 0
        %1856 = vmatprep.subr.bf16.mxu0 0
        %1857 = vmatpush1.bf16.msra.mxu0 %v1817
        %1858 = vmatprep.subr.bf16.mxu0 0
        %1859 = vmatpush1.bf16.msra.mxu0 %v1816
        %1860 = vmatprep.subr.bf16.mxu0 0
        %1861 = vmatpush2.bf16.msra.mxu0 0
        %1862 = vmatprep.subr.bf16.mxu0 0
        %1863 = vmatpush2.bf16.msra.mxu0 0
        %1864 = vmatprep.subr.bf16.mxu0 0
        %1865 = vmatpush2.bf16.msra.mxu0 0
        %1866 = vmatprep.subr.bf16.mxu0 0
        %1867 = vmatpush2.bf16.msra.mxu0 0
        %1868 = vmatprep.subr.bf16.mxu0 0
        %1869 = vmatpush2.bf16.msra.mxu0 0
        %1870 = vmatprep.subr.bf16.mxu0 0
        %1871 = vmatpush2.bf16.msra.mxu0 0
        %1872 = vmatprep.subr.bf16.mxu0 0
        %1873 = vmatpush2.bf16.msra.mxu0 0
        %1874 = vmatprep.subr.bf16.mxu0 0
        %1875 = vmatpush2.bf16.msra.mxu0 0
        %1876 = vmatprep.mubr.bf16.mxu0 0
        %1877 = vmatmul.mubr.bf16.gmra.mxu0 %v1821
        %v1878 = vpop.f32.mrf.mxu0
        %v1879 = vadd.f32 0.0, %v1878
        %v1880 = vpop.f32.mrf.mxu0
        %v1881 = vpop.f32.mrf.mxu0
        %v1882 = vadd.f32 0.0, %v1881
        %v1883 = vpop.f32.mrf.mxu0
        %1884 = vmatprep.mubr.bf16.mxu0 0
        %1885 = vmatmul.mubr.bf16.gmra.mxu0 %v1824
        %v1886 = vpop.f32.mrf.mxu0
        %v1887 = vadd.f32 0.0, %v1886
        %v1888 = vpop.f32.mrf.mxu0
        %v1889 = vpop.f32.mrf.mxu0
        %v1890 = vadd.f32 0.0, %v1889
        %v1891 = vpop.f32.mrf.mxu0
        %1892 = vmatprep.mubr.bf16.mxu0 0
        %1893 = vmatmul.mubr.bf16.gmra.mxu0 %v1827
        %v1894 = vpop.f32.mrf.mxu0
        %v1895 = vadd.f32 0.0, %v1894
        %v1896 = vpop.f32.mrf.mxu0
        %v1897 = vpop.f32.mrf.mxu0
        %v1898 = vadd.f32 0.0, %v1897
        %v1899 = vpop.f32.mrf.mxu0
        %1900 = vmatprep.mubr.bf16.mxu0 0
        %1901 = vmatmul.mubr.bf16.gmra.mxu0 %v1830
        %v1902 = vpop.f32.mrf.mxu0
        %v1903 = vadd.f32 0.0, %v1902
        %v1904 = vpop.f32.mrf.mxu0
        %v1905 = vpop.f32.mrf.mxu0
        %v1906 = vadd.f32 0.0, %v1905
        %v1907 = vpop.f32.mrf.mxu0
        %1908 = vmatprep.mubr.bf16.mxu0 0
        %1909 = vmatmul.mubr.bf16.gmra.mxu0 %v1833
        %v1910 = vpop.f32.mrf.mxu0
        %v1911 = vadd.f32 0.0, %v1910
        %v1912 = vpop.f32.mrf.mxu0
        %v1913 = vpop.f32.mrf.mxu0
        %v1914 = vadd.f32 0.0, %v1913
        %v1915 = vpop.f32.mrf.mxu0
        %1916 = vmatprep.mubr.bf16.mxu0 0
        %1917 = vmatmul.mubr.bf16.gmra.mxu0 %v1836
        %v1918 = vpop.f32.mrf.mxu0
        %v1919 = vadd.f32 0.0, %v1918
        %v1920 = vpop.f32.mrf.mxu0
        %v1921 = vpop.f32.mrf.mxu0
        %v1922 = vadd.f32 0.0, %v1921
        %v1923 = vpop.f32.mrf.mxu0
        %1924 = vmatprep.mubr.bf16.mxu0 0
        %1925 = vmatmul.mubr.bf16.gmra.mxu0 %v1839
        %v1926 = vpop.f32.mrf.mxu0
        %v1927 = vadd.f32 0.0, %v1926
        %v1928 = vpop.f32.mrf.mxu0
        %v1929 = vpop.f32.mrf.mxu0
        %v1930 = vadd.f32 0.0, %v1929
        %v1931 = vpop.f32.mrf.mxu0
        %1932 = vmatprep.mubr.bf16.mxu0 0
        %1933 = vmatmul.mubr.bf16.gmra.mxu0 %v1842
        %v1934 = vpop.f32.mrf.mxu0
        %v1935 = vadd.f32 0.0, %v1934
        %v1936 = vpop.f32.mrf.mxu0
        %v1937 = vpop.f32.mrf.mxu0
        %v1938 = vadd.f32 0.0, %v1937
        %v1939 = vpop.f32.mrf.mxu0
        %1940 = vdwg.mxu0
        %v1942 = vlaneseq
        %v1943 = vshrl.u32 %v1942, 7
        %v1944 = vsub.s32 0, %v1943
        %v1945 = vrot.slane %v1714, %v1944
        %v1947 = vadd.f32 %v1945, %v1879
        %v1948 = vadd.f32 %v1945, %v1882
        %v1949 = vadd.f32 %v1945, %v1887
        %v1950 = vadd.f32 %v1945, %v1890
        %v1951 = vadd.f32 %v1945, %v1895
        %v1952 = vadd.f32 %v1945, %v1898
        %v1953 = vadd.f32 %v1945, %v1903
        %v1954 = vadd.f32 %v1945, %v1906
        %v1955 = vadd.f32 %v1945, %v1911
        %v1956 = vadd.f32 %v1945, %v1914
        %v1957 = vadd.f32 %v1945, %v1919
        %v1958 = vadd.f32 %v1945, %v1922
        %v1959 = vadd.f32 %v1945, %v1927
        %v1960 = vadd.f32 %v1945, %v1930
        %v1961 = vadd.f32 %v1945, %v1935
        %v1962 = vadd.f32 %v1945, %v1938
        %s1963 = scalar_lea.vmem [#allocation13], 64
        %v1964 = vld [vmem:[%s1963] sm:$0xf]
        %v1965 = vld [vmem:[%s1963 + $0x4] sm:$0xf]
        %v1966 = vld [vmem:[%s1963 + $0x8] sm:$0xf]
        %v1967 = vld [vmem:[%s1963 + $0xc] sm:$0xf]
        %v1968 = vpack.c.bf16 %v1683, %v1682
        %v1969 = vpack.c.bf16 %v1687, %v1686
        %v1970 = vpack.c.bf16 %v1691, %v1690
        %v1971 = vpack.c.bf16 %v1695, %v1694
        %v1972 = vpack.c.bf16 %v1699, %v1698
        %v1973 = vpack.c.bf16 %v1703, %v1702
        %v1974 = vpack.c.bf16 %v1707, %v1706
        %v1975 = vpack.c.bf16 %v1711, %v1710
        %v1980 = vunpack.c.l.b16 %v1964
        %v1981 = vunpack.c.l.b16 %v1965
        %v1982 = vunpack.c.l.b16 %v1966
        %v1983 = vunpack.c.l.b16 %v1967
        %v1984 = vpack.c.b16 %v1981, %v1980
        %v1985 = vpack.c.b16 %v1983, %v1982
        %v1989 = vsel %vm616, %v1968, 0
        %v1992 = vsel %vm616, %v1969, 0
        %v1995 = vsel %vm616, %v1970, 0
        %v1998 = vsel %vm616, %v1971, 0
        %v2001 = vsel %vm616, %v1972, 0
        %v2004 = vsel %vm616, %v1973, 0
        %v2007 = vsel %vm616, %v1974, 0
        %v2010 = vsel %vm616, %v1975, 0
        %2012 = vmatprep.subr.bf16.mxu0 0
        %2013 = vmatpush1.bf16.msra.mxu0 0
        %2014 = vmatprep.subr.bf16.mxu0 0
        %2015 = vmatpush1.bf16.msra.mxu0 0
        %2016 = vmatprep.subr.bf16.mxu0 0
        %2017 = vmatpush1.bf16.msra.mxu0 0
        %2018 = vmatprep.subr.bf16.mxu0 0
        %2019 = vmatpush1.bf16.msra.mxu0 0
        %2020 = vmatprep.subr.bf16.mxu0 0
        %2021 = vmatpush1.bf16.msra.mxu0 0
        %2022 = vmatprep.subr.bf16.mxu0 0
        %2023 = vmatpush1.bf16.msra.mxu0 0
        %2024 = vmatprep.subr.bf16.mxu0 0
        %2025 = vmatpush1.bf16.msra.mxu0 %v1985
        %2026 = vmatprep.subr.bf16.mxu0 0
        %2027 = vmatpush1.bf16.msra.mxu0 %v1984
        %2028 = vmatprep.subr.bf16.mxu0 0
        %2029 = vmatpush2.bf16.msra.mxu0 0
        %2030 = vmatprep.subr.bf16.mxu0 0
        %2031 = vmatpush2.bf16.msra.mxu0 0
        %2032 = vmatprep.subr.bf16.mxu0 0
        %2033 = vmatpush2.bf16.msra.mxu0 0
        %2034 = vmatprep.subr.bf16.mxu0 0
        %2035 = vmatpush2.bf16.msra.mxu0 0
        %2036 = vmatprep.subr.bf16.mxu0 0
        %2037 = vmatpush2.bf16.msra.mxu0 0
        %2038 = vmatprep.subr.bf16.mxu0 0
        %2039 = vmatpush2.bf16.msra.mxu0 0
        %2040 = vmatprep.subr.bf16.mxu0 0
        %2041 = vmatpush2.bf16.msra.mxu0 0
        %2042 = vmatprep.subr.bf16.mxu0 0
        %2043 = vmatpush2.bf16.msra.mxu0 0
        %2044 = vmatprep.mubr.bf16.mxu0 0
        %2045 = vmatmul.mubr.bf16.gmra.mxu0 %v1989
        %v2046 = vpop.f32.mrf.mxu0
        %v2047 = vadd.f32 0.0, %v2046
        %v2048 = vpop.f32.mrf.mxu0
        %v2049 = vpop.f32.mrf.mxu0
        %v2050 = vadd.f32 0.0, %v2049
        %v2051 = vpop.f32.mrf.mxu0
        %2052 = vmatprep.mubr.bf16.mxu0 0
        %2053 = vmatmul.mubr.bf16.gmra.mxu0 %v1992
        %v2054 = vpop.f32.mrf.mxu0
        %v2055 = vadd.f32 0.0, %v2054
        %v2056 = vpop.f32.mrf.mxu0
        %v2057 = vpop.f32.mrf.mxu0
        %v2058 = vadd.f32 0.0, %v2057
        %v2059 = vpop.f32.mrf.mxu0
        %2060 = vmatprep.mubr.bf16.mxu0 0
        %2061 = vmatmul.mubr.bf16.gmra.mxu0 %v1995
        %v2062 = vpop.f32.mrf.mxu0
        %v2063 = vadd.f32 0.0, %v2062
        %v2064 = vpop.f32.mrf.mxu0
        %v2065 = vpop.f32.mrf.mxu0
        %v2066 = vadd.f32 0.0, %v2065
        %v2067 = vpop.f32.mrf.mxu0
        %2068 = vmatprep.mubr.bf16.mxu0 0
        %2069 = vmatmul.mubr.bf16.gmra.mxu0 %v1998
        %v2070 = vpop.f32.mrf.mxu0
        %v2071 = vadd.f32 0.0, %v2070
        %v2072 = vpop.f32.mrf.mxu0
        %v2073 = vpop.f32.mrf.mxu0
        %v2074 = vadd.f32 0.0, %v2073
        %v2075 = vpop.f32.mrf.mxu0
        %2076 = vmatprep.mubr.bf16.mxu0 0
        %2077 = vmatmul.mubr.bf16.gmra.mxu0 %v2001
        %v2078 = vpop.f32.mrf.mxu0
        %v2079 = vadd.f32 0.0, %v2078
        %v2080 = vpop.f32.mrf.mxu0
        %v2081 = vpop.f32.mrf.mxu0
        %v2082 = vadd.f32 0.0, %v2081
        %v2083 = vpop.f32.mrf.mxu0
        %2084 = vmatprep.mubr.bf16.mxu0 0
        %2085 = vmatmul.mubr.bf16.gmra.mxu0 %v2004
        %v2086 = vpop.f32.mrf.mxu0
        %v2087 = vadd.f32 0.0, %v2086
        %v2088 = vpop.f32.mrf.mxu0
        %v2089 = vpop.f32.mrf.mxu0
        %v2090 = vadd.f32 0.0, %v2089
        %v2091 = vpop.f32.mrf.mxu0
        %2092 = vmatprep.mubr.bf16.mxu0 0
        %2093 = vmatmul.mubr.bf16.gmra.mxu0 %v2007
        %v2094 = vpop.f32.mrf.mxu0
        %v2095 = vadd.f32 0.0, %v2094
        %v2096 = vpop.f32.mrf.mxu0
        %v2097 = vpop.f32.mrf.mxu0
        %v2098 = vadd.f32 0.0, %v2097
        %v2099 = vpop.f32.mrf.mxu0
        %2100 = vmatprep.mubr.bf16.mxu0 0
        %2101 = vmatmul.mubr.bf16.gmra.mxu0 %v2010
        %v2102 = vpop.f32.mrf.mxu0
        %v2103 = vadd.f32 0.0, %v2102
        %v2104 = vpop.f32.mrf.mxu0
        %v2105 = vpop.f32.mrf.mxu0
        %v2106 = vadd.f32 0.0, %v2105
        %v2107 = vpop.f32.mrf.mxu0
        %2108 = vdwg.mxu0
        %v2109 = vadd.f32 %v1947, %v2047
        %v2110 = vadd.f32 %v1948, %v2050
        %v2111 = vadd.f32 %v1949, %v2055
        %v2112 = vadd.f32 %v1950, %v2058
        %v2113 = vadd.f32 %v1951, %v2063
        %v2114 = vadd.f32 %v1952, %v2066
        %v2115 = vadd.f32 %v1953, %v2071
        %v2116 = vadd.f32 %v1954, %v2074
        %v2117 = vadd.f32 %v1955, %v2079
        %v2118 = vadd.f32 %v1956, %v2082
        %v2119 = vadd.f32 %v1957, %v2087
        %v2120 = vadd.f32 %v1958, %v2090
        %v2121 = vadd.f32 %v1959, %v2095
        %v2122 = vadd.f32 %v1960, %v2098
        %v2123 = vadd.f32 %v1961, %v2103
        %v2124 = vadd.f32 %v1962, %v2106
        %v2133 = vrot.slane %v1682, 1
        %v2134 = vrot.slane %v1683, 1
        %v2135 = vsel %vm1238, %v2133, %v2134
        %v2136 = vrot.slane %v1684, 1
        %v2137 = vsel %vm1238, %v2134, %v2136
        %v2138 = vrot.slane %v1686, 1
        %v2139 = vrot.slane %v1687, 1
        %v2140 = vsel %vm1238, %v2138, %v2139
        %v2141 = vrot.slane %v1688, 1
        %v2142 = vsel %vm1238, %v2139, %v2141
        %v2143 = vrot.slane %v1690, 1
        %v2144 = vrot.slane %v1691, 1
        %v2145 = vsel %vm1238, %v2143, %v2144
        %v2146 = vrot.slane %v1692, 1
        %v2147 = vsel %vm1238, %v2144, %v2146
        %v2148 = vrot.slane %v1694, 1
        %v2149 = vrot.slane %v1695, 1
        %v2150 = vsel %vm1238, %v2148, %v2149
        %v2151 = vrot.slane %v1696, 1
        %v2152 = vsel %vm1238, %v2149, %v2151
        %v2153 = vrot.slane %v1698, 1
        %v2154 = vrot.slane %v1699, 1
        %v2155 = vsel %vm1238, %v2153, %v2154
        %v2156 = vrot.slane %v1700, 1
        %v2157 = vsel %vm1238, %v2154, %v2156
        %v2158 = vrot.slane %v1702, 1
        %v2159 = vrot.slane %v1703, 1
        %v2160 = vsel %vm1238, %v2158, %v2159
        %v2161 = vrot.slane %v1704, 1
        %v2162 = vsel %vm1238, %v2159, %v2161
        %v2163 = vrot.slane %v1706, 1
        %v2164 = vrot.slane %v1707, 1
        %v2165 = vsel %vm1238, %v2163, %v2164
        %v2166 = vrot.slane %v1708, 1
        %v2167 = vsel %vm1238, %v2164, %v2166
        %v2168 = vrot.slane %v1710, 1
        %v2169 = vrot.slane %v1711, 1
        %v2170 = vsel %vm1238, %v2168, %v2169
        %v2171 = vrot.slane %v1712, 1
        %v2172 = vsel %vm1238, %v2169, %v2171
        %s2189 = scalar_lea.vmem [#allocation13], 80
        %v2190 = vld [vmem:[%s2189] sm:$0xf]
        %v2191 = vld [vmem:[%s2189 + $0x4] sm:$0xf]
        %v2192 = vld [vmem:[%s2189 + $0x8] sm:$0xf]
        %v2193 = vld [vmem:[%s2189 + $0xc] sm:$0xf]
        %v2194 = vpack.c.bf16 %v2137, %v2135
        %v2195 = vpack.c.bf16 %v2142, %v2140
        %v2196 = vpack.c.bf16 %v2147, %v2145
        %v2197 = vpack.c.bf16 %v2152, %v2150
        %v2198 = vpack.c.bf16 %v2157, %v2155
        %v2199 = vpack.c.bf16 %v2162, %v2160
        %v2200 = vpack.c.bf16 %v2167, %v2165
        %v2201 = vpack.c.bf16 %v2172, %v2170
        %v2206 = vunpack.c.l.b16 %v2190
        %v2207 = vunpack.c.l.b16 %v2191
        %v2208 = vunpack.c.l.b16 %v2192
        %v2209 = vunpack.c.l.b16 %v2193
        %v2210 = vpack.c.b16 %v2207, %v2206
        %v2211 = vpack.c.b16 %v2209, %v2208
        %v2215 = vsel %vm616, %v2194, 0
        %v2218 = vsel %vm616, %v2195, 0
        %v2221 = vsel %vm616, %v2196, 0
        %v2224 = vsel %vm616, %v2197, 0
        %v2227 = vsel %vm616, %v2198, 0
        %v2230 = vsel %vm616, %v2199, 0
        %v2233 = vsel %vm616, %v2200, 0
        %v2236 = vsel %vm616, %v2201, 0
        %2238 = vmatprep.subr.bf16.mxu0 0
        %2239 = vmatpush1.bf16.msra.mxu0 0
        %2240 = vmatprep.subr.bf16.mxu0 0
        %2241 = vmatpush1.bf16.msra.mxu0 0
        %2242 = vmatprep.subr.bf16.mxu0 0
        %2243 = vmatpush1.bf16.msra.mxu0 0
        %2244 = vmatprep.subr.bf16.mxu0 0
        %2245 = vmatpush1.bf16.msra.mxu0 0
        %2246 = vmatprep.subr.bf16.mxu0 0
        %2247 = vmatpush1.bf16.msra.mxu0 0
        %2248 = vmatprep.subr.bf16.mxu0 0
        %2249 = vmatpush1.bf16.msra.mxu0 0
        %2250 = vmatprep.subr.bf16.mxu0 0
        %2251 = vmatpush1.bf16.msra.mxu0 %v2211
        %2252 = vmatprep.subr.bf16.mxu0 0
        %2253 = vmatpush1.bf16.msra.mxu0 %v2210
        %2254 = vmatprep.subr.bf16.mxu0 0
        %2255 = vmatpush2.bf16.msra.mxu0 0
        %2256 = vmatprep.subr.bf16.mxu0 0
        %2257 = vmatpush2.bf16.msra.mxu0 0
        %2258 = vmatprep.subr.bf16.mxu0 0
        %2259 = vmatpush2.bf16.msra.mxu0 0
        %2260 = vmatprep.subr.bf16.mxu0 0
        %2261 = vmatpush2.bf16.msra.mxu0 0
        %2262 = vmatprep.subr.bf16.mxu0 0
        %2263 = vmatpush2.bf16.msra.mxu0 0
        %2264 = vmatprep.subr.bf16.mxu0 0
        %2265 = vmatpush2.bf16.msra.mxu0 0
        %2266 = vmatprep.subr.bf16.mxu0 0
        %2267 = vmatpush2.bf16.msra.mxu0 0
        %2268 = vmatprep.subr.bf16.mxu0 0
        %2269 = vmatpush2.bf16.msra.mxu0 0
        %2270 = vmatprep.mubr.bf16.mxu0 0
        %2271 = vmatmul.mubr.bf16.gmra.mxu0 %v2215
        %v2272 = vpop.f32.mrf.mxu0
        %v2273 = vadd.f32 0.0, %v2272
        %v2274 = vpop.f32.mrf.mxu0
        %v2275 = vpop.f32.mrf.mxu0
        %v2276 = vadd.f32 0.0, %v2275
        %v2277 = vpop.f32.mrf.mxu0
        %2278 = vmatprep.mubr.bf16.mxu0 0
        %2279 = vmatmul.mubr.bf16.gmra.mxu0 %v2218
        %v2280 = vpop.f32.mrf.mxu0
        %v2281 = vadd.f32 0.0, %v2280
        %v2282 = vpop.f32.mrf.mxu0
        %v2283 = vpop.f32.mrf.mxu0
        %v2284 = vadd.f32 0.0, %v2283
        %v2285 = vpop.f32.mrf.mxu0
        %2286 = vmatprep.mubr.bf16.mxu0 0
        %2287 = vmatmul.mubr.bf16.gmra.mxu0 %v2221
        %v2288 = vpop.f32.mrf.mxu0
        %v2289 = vadd.f32 0.0, %v2288
        %v2290 = vpop.f32.mrf.mxu0
        %v2291 = vpop.f32.mrf.mxu0
        %v2292 = vadd.f32 0.0, %v2291
        %v2293 = vpop.f32.mrf.mxu0
        %2294 = vmatprep.mubr.bf16.mxu0 0
        %2295 = vmatmul.mubr.bf16.gmra.mxu0 %v2224
        %v2296 = vpop.f32.mrf.mxu0
        %v2297 = vadd.f32 0.0, %v2296
        %v2298 = vpop.f32.mrf.mxu0
        %v2299 = vpop.f32.mrf.mxu0
        %v2300 = vadd.f32 0.0, %v2299
        %v2301 = vpop.f32.mrf.mxu0
        %2302 = vmatprep.mubr.bf16.mxu0 0
        %2303 = vmatmul.mubr.bf16.gmra.mxu0 %v2227
        %v2304 = vpop.f32.mrf.mxu0
        %v2305 = vadd.f32 0.0, %v2304
        %v2306 = vpop.f32.mrf.mxu0
        %v2307 = vpop.f32.mrf.mxu0
        %v2308 = vadd.f32 0.0, %v2307
        %v2309 = vpop.f32.mrf.mxu0
        %2310 = vmatprep.mubr.bf16.mxu0 0
        %2311 = vmatmul.mubr.bf16.gmra.mxu0 %v2230
        %v2312 = vpop.f32.mrf.mxu0
        %v2313 = vadd.f32 0.0, %v2312
        %v2314 = vpop.f32.mrf.mxu0
        %v2315 = vpop.f32.mrf.mxu0
        %v2316 = vadd.f32 0.0, %v2315
        %v2317 = vpop.f32.mrf.mxu0
        %2318 = vmatprep.mubr.bf16.mxu0 0
        %2319 = vmatmul.mubr.bf16.gmra.mxu0 %v2233
        %v2320 = vpop.f32.mrf.mxu0
        %v2321 = vadd.f32 0.0, %v2320
        %v2322 = vpop.f32.mrf.mxu0
        %v2323 = vpop.f32.mrf.mxu0
        %v2324 = vadd.f32 0.0, %v2323
        %v2325 = vpop.f32.mrf.mxu0
        %2326 = vmatprep.mubr.bf16.mxu0 0
        %2327 = vmatmul.mubr.bf16.gmra.mxu0 %v2236
        %v2328 = vpop.f32.mrf.mxu0
        %v2329 = vadd.f32 0.0, %v2328
        %v2330 = vpop.f32.mrf.mxu0
        %v2331 = vpop.f32.mrf.mxu0
        %v2332 = vadd.f32 0.0, %v2331
        %v2333 = vpop.f32.mrf.mxu0
        %2334 = vdwg.mxu0
        %v2335 = vadd.f32 %v2109, %v2273
        %v2336 = vadd.f32 %v2110, %v2276
        %v2337 = vadd.f32 %v2111, %v2281
        %v2338 = vadd.f32 %v2112, %v2284
        %v2339 = vadd.f32 %v2113, %v2289
        %v2340 = vadd.f32 %v2114, %v2292
        %v2341 = vadd.f32 %v2115, %v2297
        %v2342 = vadd.f32 %v2116, %v2300
        %v2343 = vadd.f32 %v2117, %v2305
        %v2344 = vadd.f32 %v2118, %v2308
        %v2345 = vadd.f32 %v2119, %v2313
        %v2346 = vadd.f32 %v2120, %v2316
        %v2347 = vadd.f32 %v2121, %v2321
        %v2348 = vadd.f32 %v2122, %v2324
        %v2349 = vadd.f32 %v2123, %v2329
        %v2350 = vadd.f32 %v2124, %v2332
        %v2351 = vxor.u32 %v2335, 2147483648
        %v2352 = vxor.u32 %v2336, 2147483648
        %v2353 = vxor.u32 %v2337, 2147483648
        %v2354 = vxor.u32 %v2338, 2147483648
        %v2355 = vxor.u32 %v2339, 2147483648
        %v2356 = vxor.u32 %v2340, 2147483648
        %v2357 = vxor.u32 %v2341, 2147483648
        %v2358 = vxor.u32 %v2342, 2147483648
        %v2359 = vxor.u32 %v2343, 2147483648
        %v2360 = vxor.u32 %v2344, 2147483648
        %v2361 = vxor.u32 %v2345, 2147483648
        %v2362 = vxor.u32 %v2346, 2147483648
        %v2363 = vxor.u32 %v2347, 2147483648
        %v2364 = vxor.u32 %v2348, 2147483648
        %v2365 = vxor.u32 %v2349, 2147483648
        %v2366 = vxor.u32 %v2350, 2147483648
        %v2367 = vmul.f32 %v2351, 1.442695
        %v2368 = vpow.pop %v2367
        %v2369 = vmul.f32 %v2352, 1.442695
        %v2370 = vpow.pop %v2369
        %v2371 = vmul.f32 %v2353, 1.442695
        %v2372 = vpow.pop %v2371
        %v2373 = vmul.f32 %v2354, 1.442695
        %v2374 = vpow.pop %v2373
        %v2375 = vmul.f32 %v2355, 1.442695
        %v2376 = vpow.pop %v2375
        %v2377 = vmul.f32 %v2356, 1.442695
        %v2378 = vpow.pop %v2377
        %v2379 = vmul.f32 %v2357, 1.442695
        %v2380 = vpow.pop %v2379
        %v2381 = vmul.f32 %v2358, 1.442695
        %v2382 = vpow.pop %v2381
        %v2383 = vmul.f32 %v2359, 1.442695
        %v2384 = vpow.pop %v2383
        %v2385 = vmul.f32 %v2360, 1.442695
        %v2386 = vpow.pop %v2385
        %v2387 = vmul.f32 %v2361, 1.442695
        %v2388 = vpow.pop %v2387
        %v2389 = vmul.f32 %v2362, 1.442695
        %v2390 = vpow.pop %v2389
        %v2391 = vmul.f32 %v2363, 1.442695
        %v2392 = vpow.pop %v2391
        %v2393 = vmul.f32 %v2364, 1.442695
        %v2394 = vpow.pop %v2393
        %v2395 = vmul.f32 %v2365, 1.442695
        %v2396 = vpow.pop %v2395
        %v2397 = vmul.f32 %v2366, 1.442695
        %v2398 = vpow.pop %v2397
        %v2399 = vadd.f32 %v2368, 1.0
        %v2400 = vadd.f32 %v2370, 1.0
        %v2401 = vadd.f32 %v2372, 1.0
        %v2402 = vadd.f32 %v2374, 1.0
        %v2403 = vadd.f32 %v2376, 1.0
        %v2404 = vadd.f32 %v2378, 1.0
        %v2405 = vadd.f32 %v2380, 1.0
        %v2406 = vadd.f32 %v2382, 1.0
        %v2407 = vadd.f32 %v2384, 1.0
        %v2408 = vadd.f32 %v2386, 1.0
        %v2409 = vadd.f32 %v2388, 1.0
        %v2410 = vadd.f32 %v2390, 1.0
        %v2411 = vadd.f32 %v2392, 1.0
        %v2412 = vadd.f32 %v2394, 1.0
        %v2413 = vadd.f32 %v2396, 1.0
        %v2414 = vadd.f32 %v2398, 1.0
        %v2415 = vrcp.pop %v2399
        %v2416 = vmul.f32 1.0, %v2415
        %v2417 = vrcp.pop %v2400
        %v2418 = vmul.f32 1.0, %v2417
        %v2419 = vrcp.pop %v2401
        %v2420 = vmul.f32 1.0, %v2419
        %v2421 = vrcp.pop %v2402
        %v2422 = vmul.f32 1.0, %v2421
        %v2423 = vrcp.pop %v2403
        %v2424 = vmul.f32 1.0, %v2423
        %v2425 = vrcp.pop %v2404
        %v2426 = vmul.f32 1.0, %v2425
        %v2427 = vrcp.pop %v2405
        %v2428 = vmul.f32 1.0, %v2427
        %v2429 = vrcp.pop %v2406
        %v2430 = vmul.f32 1.0, %v2429
        %v2431 = vrcp.pop %v2407
        %v2432 = vmul.f32 1.0, %v2431
        %v2433 = vrcp.pop %v2408
        %v2434 = vmul.f32 1.0, %v2433
        %v2435 = vrcp.pop %v2409
        %v2436 = vmul.f32 1.0, %v2435
        %v2437 = vrcp.pop %v2410
        %v2438 = vmul.f32 1.0, %v2437
        %v2439 = vrcp.pop %v2411
        %v2440 = vmul.f32 1.0, %v2439
        %v2441 = vrcp.pop %v2412
        %v2442 = vmul.f32 1.0, %v2441
        %v2443 = vrcp.pop %v2413
        %v2444 = vmul.f32 1.0, %v2443
        %v2445 = vrcp.pop %v2414
        %v2446 = vmul.f32 1.0, %v2445
        %2463 = vrot.lane.b32.xlu0 %v2416, 96
        %v2464 = vpop.permute.xlu0 %2463
        %2465 = vrot.lane.b32.xlu0 %v2418, 96
        %v2466 = vpop.permute.xlu0 %2465
        %2467 = vrot.lane.b32.xlu0 %v2420, 96
        %v2468 = vpop.permute.xlu0 %2467
        %2469 = vrot.lane.b32.xlu0 %v2422, 96
        %v2470 = vpop.permute.xlu0 %2469
        %2471 = vrot.lane.b32.xlu0 %v2424, 96
        %v2472 = vpop.permute.xlu0 %2471
        %2473 = vrot.lane.b32.xlu0 %v2426, 96
        %v2474 = vpop.permute.xlu0 %2473
        %2475 = vrot.lane.b32.xlu0 %v2428, 96
        %v2476 = vpop.permute.xlu0 %2475
        %2477 = vrot.lane.b32.xlu0 %v2430, 96
        %v2478 = vpop.permute.xlu0 %2477
        %2479 = vrot.lane.b32.xlu0 %v2432, 96
        %v2480 = vpop.permute.xlu0 %2479
        %2481 = vrot.lane.b32.xlu0 %v2434, 96
        %v2482 = vpop.permute.xlu0 %2481
        %2483 = vrot.lane.b32.xlu0 %v2436, 96
        %v2484 = vpop.permute.xlu0 %2483
        %2485 = vrot.lane.b32.xlu0 %v2438, 96
        %v2486 = vpop.permute.xlu0 %2485
        %2487 = vrot.lane.b32.xlu0 %v2440, 96
        %v2488 = vpop.permute.xlu0 %2487
        %2489 = vrot.lane.b32.xlu0 %v2442, 96
        %v2490 = vpop.permute.xlu0 %2489
        %2491 = vrot.lane.b32.xlu0 %v2444, 96
        %v2492 = vpop.permute.xlu0 %2491
        %2493 = vrot.lane.b32.xlu0 %v2446, 96
        %v2494 = vpop.permute.xlu0 %2493
        %v2511 = vmul.f32 %v2335, %v2464
        %v2512 = vmul.f32 %v2336, %v2466
        %v2513 = vmul.f32 %v2337, %v2468
        %v2514 = vmul.f32 %v2338, %v2470
        %v2515 = vmul.f32 %v2339, %v2472
        %v2516 = vmul.f32 %v2340, %v2474
        %v2517 = vmul.f32 %v2341, %v2476
        %v2518 = vmul.f32 %v2342, %v2478
        %v2519 = vmul.f32 %v2343, %v2480
        %v2520 = vmul.f32 %v2344, %v2482
        %v2521 = vmul.f32 %v2345, %v2484
        %v2522 = vmul.f32 %v2346, %v2486
        %v2523 = vmul.f32 %v2347, %v2488
        %v2524 = vmul.f32 %v2348, %v2490
        %v2525 = vmul.f32 %v2349, %v2492
        %v2526 = vmul.f32 %v2350, %v2494
        %v2527 = vadd.f32 %v2511, %v1649
        %v2528 = vadd.f32 %v2512, %v1650
        %v2529 = vadd.f32 %v2513, %v1651
        %v2530 = vadd.f32 %v2514, %v1652
        %v2531 = vadd.f32 %v2515, %v1653
        %v2532 = vadd.f32 %v2516, %v1654
        %v2533 = vadd.f32 %v2517, %v1655
        %v2534 = vadd.f32 %v2518, %v1656
        %v2535 = vadd.f32 %v2519, %v1657
        %v2536 = vadd.f32 %v2520, %v1658
        %v2537 = vadd.f32 %v2521, %v1659
        %v2538 = vadd.f32 %v2522, %v1660
        %v2539 = vadd.f32 %v2523, %v1661
        %v2540 = vadd.f32 %v2524, %v1662
        %v2541 = vadd.f32 %v2525, %v1663
        %v2542 = vadd.f32 %v2526, %v1664
        %v2543 = vmul.f32 %v2527, 0.70710677
        %v2544 = vmul.f32 %v2528, 0.70710677
        %v2545 = vmul.f32 %v2529, 0.70710677
        %v2546 = vmul.f32 %v2530, 0.70710677
        %v2547 = vmul.f32 %v2531, 0.70710677
        %v2548 = vmul.f32 %v2532, 0.70710677
        %v2549 = vmul.f32 %v2533, 0.70710677
        %v2550 = vmul.f32 %v2534, 0.70710677
        %v2551 = vmul.f32 %v2535, 0.70710677
        %v2552 = vmul.f32 %v2536, 0.70710677
        %v2553 = vmul.f32 %v2537, 0.70710677
        %v2554 = vmul.f32 %v2538, 0.70710677
        %v2555 = vmul.f32 %v2539, 0.70710677
        %v2556 = vmul.f32 %v2540, 0.70710677
        %v2557 = vmul.f32 %v2541, 0.70710677
        %v2558 = vmul.f32 %v2542, 0.70710677
        %v2559 = vld [vmem:[#allocation10] sm:$0xf]
        %v2560 = vld [vmem:[#allocation10 + $0x4] sm:$0xf]
        %v2561 = vld [vmem:[#allocation10 + $0x8] sm:$0xf]
        %v2562 = vld [vmem:[#allocation10 + $0xc] sm:$0xf]
        %v2563 = vpack.c.bf16 %v2544, %v2543
        %v2564 = vpack.c.bf16 %v2546, %v2545
        %v2565 = vpack.c.bf16 %v2548, %v2547
        %v2566 = vpack.c.bf16 %v2550, %v2549
        %v2567 = vpack.c.bf16 %v2552, %v2551
        %v2568 = vpack.c.bf16 %v2554, %v2553
        %v2569 = vpack.c.bf16 %v2556, %v2555
        %v2570 = vpack.c.bf16 %v2558, %v2557
        %v2571 = vld [vmem:[#allocation12] sm:$0x1]
        %v2573 = vlaneseq
        %v2574 = vshrl.u32 %v2573, 7
        %v2575 = vsub.s32 0, %v2574
        %v2576 = vrot.slane %v2571, %v2575
        %v2582 = vunpack.c.l.b16 %v2559
        %v2583 = vunpack.c.l.b16 %v2560
        %v2584 = vunpack.c.l.b16 %v2561
        %v2585 = vunpack.c.l.b16 %v2562
        %v2586 = vpack.c.b16 %v2583, %v2582
        %v2587 = vpack.c.b16 %v2585, %v2584
        %v2591 = vsel %vm616, %v2563, 0
        %v2594 = vsel %vm616, %v2564, 0
        %v2597 = vsel %vm616, %v2565, 0
        %v2600 = vsel %vm616, %v2566, 0
        %v2603 = vsel %vm616, %v2567, 0
        %v2606 = vsel %vm616, %v2568, 0
        %v2609 = vsel %vm616, %v2569, 0
        %v2612 = vsel %vm616, %v2570, 0
        %2614 = vmatprep.subr.bf16.mxu0 0
        %2615 = vmatpush1.bf16.msra.mxu0 0
        %2616 = vmatprep.subr.bf16.mxu0 0
        %2617 = vmatpush1.bf16.msra.mxu0 0
        %2618 = vmatprep.subr.bf16.mxu0 0
        %2619 = vmatpush1.bf16.msra.mxu0 0
        %2620 = vmatprep.subr.bf16.mxu0 0
        %2621 = vmatpush1.bf16.msra.mxu0 0
        %2622 = vmatprep.subr.bf16.mxu0 0
        %2623 = vmatpush1.bf16.msra.mxu0 0
        %2624 = vmatprep.subr.bf16.mxu0 0
        %2625 = vmatpush1.bf16.msra.mxu0 0
        %2626 = vmatprep.subr.bf16.mxu0 0
        %2627 = vmatpush1.bf16.msra.mxu0 %v2587
        %2628 = vmatprep.subr.bf16.mxu0 0
        %2629 = vmatpush1.bf16.msra.mxu0 %v2586
        %2630 = vmatprep.subr.bf16.mxu0 0
        %2631 = vmatpush2.bf16.msra.mxu0 0
        %2632 = vmatprep.subr.bf16.mxu0 0
        %2633 = vmatpush2.bf16.msra.mxu0 0
        %2634 = vmatprep.subr.bf16.mxu0 0
        %2635 = vmatpush2.bf16.msra.mxu0 0
        %2636 = vmatprep.subr.bf16.mxu0 0
        %2637 = vmatpush2.bf16.msra.mxu0 0
        %2638 = vmatprep.subr.bf16.mxu0 0
        %2639 = vmatpush2.bf16.msra.mxu0 0
        %2640 = vmatprep.subr.bf16.mxu0 0
        %2641 = vmatpush2.bf16.msra.mxu0 0
        %2642 = vmatprep.subr.bf16.mxu0 0
        %2643 = vmatpush2.bf16.msra.mxu0 0
        %2644 = vmatprep.subr.bf16.mxu0 0
        %2645 = vmatpush2.bf16.msra.mxu0 0
        %2646 = vmatprep.mubr.bf16.mxu0 0
        %2647 = vmatmul.mubr.bf16.gmra.mxu0 %v2591
        %v2648 = vpop.f32.mrf.mxu0
        %v2649 = vadd.f32 %v2576, %v2648
        %v2650 = vpop.f32.mrf.mxu0
        %v2651 = vpop.f32.mrf.mxu0
        %v2652 = vadd.f32 %v2576, %v2651
        %v2653 = vpop.f32.mrf.mxu0
        %2654 = vmatprep.mubr.bf16.mxu0 0
        %2655 = vmatmul.mubr.bf16.gmra.mxu0 %v2594
        %v2656 = vpop.f32.mrf.mxu0
        %v2657 = vadd.f32 %v2576, %v2656
        %v2658 = vpop.f32.mrf.mxu0
        %v2659 = vpop.f32.mrf.mxu0
        %v2660 = vadd.f32 %v2576, %v2659
        %v2661 = vpop.f32.mrf.mxu0
        %2662 = vmatprep.mubr.bf16.mxu0 0
        %2663 = vmatmul.mubr.bf16.gmra.mxu0 %v2597
        %v2664 = vpop.f32.mrf.mxu0
        %v2665 = vadd.f32 %v2576, %v2664
        %v2666 = vpop.f32.mrf.mxu0
        %v2667 = vpop.f32.mrf.mxu0
        %v2668 = vadd.f32 %v2576, %v2667
        %v2669 = vpop.f32.mrf.mxu0
        %2670 = vmatprep.mubr.bf16.mxu0 0
        %2671 = vmatmul.mubr.bf16.gmra.mxu0 %v2600
        %v2672 = vpop.f32.mrf.mxu0
        %v2673 = vadd.f32 %v2576, %v2672
        %v2674 = vpop.f32.mrf.mxu0
        %v2675 = vpop.f32.mrf.mxu0
        %v2676 = vadd.f32 %v2576, %v2675
        %v2677 = vpop.f32.mrf.mxu0
        %2678 = vmatprep.mubr.bf16.mxu0 0
        %2679 = vmatmul.mubr.bf16.gmra.mxu0 %v2603
        %v2680 = vpop.f32.mrf.mxu0
        %v2681 = vadd.f32 %v2576, %v2680
        %v2682 = vpop.f32.mrf.mxu0
        %v2683 = vpop.f32.mrf.mxu0
        %v2684 = vadd.f32 %v2576, %v2683
        %v2685 = vpop.f32.mrf.mxu0
        %2686 = vmatprep.mubr.bf16.mxu0 0
        %2687 = vmatmul.mubr.bf16.gmra.mxu0 %v2606
        %v2688 = vpop.f32.mrf.mxu0
        %v2689 = vadd.f32 %v2576, %v2688
        %v2690 = vpop.f32.mrf.mxu0
        %v2691 = vpop.f32.mrf.mxu0
        %v2692 = vadd.f32 %v2576, %v2691
        %v2693 = vpop.f32.mrf.mxu0
        %2694 = vmatprep.mubr.bf16.mxu0 0
        %2695 = vmatmul.mubr.bf16.gmra.mxu0 %v2609
        %v2696 = vpop.f32.mrf.mxu0
        %v2697 = vadd.f32 %v2576, %v2696
        %v2698 = vpop.f32.mrf.mxu0
        %v2699 = vpop.f32.mrf.mxu0
        %v2700 = vadd.f32 %v2576, %v2699
        %v2701 = vpop.f32.mrf.mxu0
        %2702 = vmatprep.mubr.bf16.mxu0 0
        %2703 = vmatmul.mubr.bf16.gmra.mxu0 %v2612
        %v2704 = vpop.f32.mrf.mxu0
        %v2705 = vadd.f32 %v2576, %v2704
        %v2706 = vpop.f32.mrf.mxu0
        %v2707 = vpop.f32.mrf.mxu0
        %v2708 = vadd.f32 %v2576, %v2707
        %v2709 = vpop.f32.mrf.mxu0
        %2710 = vdwg.mxu0
        %v2711 = vadd.f32 %v2649, %v569
        %v2712 = vadd.f32 %v2652, %v570
        %v2713 = vadd.f32 %v2657, %v571
        %v2714 = vadd.f32 %v2660, %v572
        %v2715 = vadd.f32 %v2665, %v573
        %v2716 = vadd.f32 %v2668, %v574
        %v2717 = vadd.f32 %v2673, %v575
        %v2718 = vadd.f32 %v2676, %v576
        %v2719 = vadd.f32 %v2681, %v577
        %v2720 = vadd.f32 %v2684, %v578
        %v2721 = vadd.f32 %v2689, %v579
        %v2722 = vadd.f32 %v2692, %v580
        %v2723 = vadd.f32 %v2697, %v581
        %v2724 = vadd.f32 %v2700, %v582
        %v2725 = vadd.f32 %v2705, %v583
        %v2726 = vadd.f32 %v2708, %v584
        %v2727 = vmul.f32 %v2711, 0.70710677
        %v2728 = vmul.f32 %v2712, 0.70710677
        %v2729 = vmul.f32 %v2713, 0.70710677
        %v2730 = vmul.f32 %v2714, 0.70710677
        %v2731 = vmul.f32 %v2715, 0.70710677
        %v2732 = vmul.f32 %v2716, 0.70710677
        %v2733 = vmul.f32 %v2717, 0.70710677
        %v2734 = vmul.f32 %v2718, 0.70710677
        %v2735 = vmul.f32 %v2719, 0.70710677
        %v2736 = vmul.f32 %v2720, 0.70710677
        %v2737 = vmul.f32 %v2721, 0.70710677
        %v2738 = vmul.f32 %v2722, 0.70710677
        %v2739 = vmul.f32 %v2723, 0.70710677
        %v2740 = vmul.f32 %v2724, 0.70710677
        %v2741 = vmul.f32 %v2725, 0.70710677
        %v2742 = vmul.f32 %v2726, 0.70710677
        %v2743 = vsel %vm616, %v2727, 0.0
        %v2744 = vsel %vm616, %v2728, 0.0
        %v2745 = vadd.f32 %v2743, %v2744
        %v2746 = vrot.slane %v2745, 4
        %v2747 = vadd.f32 %v2745, %v2746
        %v2748 = vrot.slane %v2747, 2
        %v2749 = vadd.f32 %v2747, %v2748
        %v2750 = vrot.slane %v2749, 1
        %v2751 = vadd.f32 %v2749, %v2750
        %v2752 = vsel %vm616, %v2729, 0.0
        %v2753 = vsel %vm616, %v2730, 0.0
        %v2754 = vadd.f32 %v2752, %v2753
        %v2755 = vrot.slane %v2754, 4
        %v2756 = vadd.f32 %v2754, %v2755
        %v2757 = vrot.slane %v2756, 2
        %v2758 = vadd.f32 %v2756, %v2757
        %v2759 = vrot.slane %v2758, 1
        %v2760 = vadd.f32 %v2758, %v2759
        %v2761 = vsel %vm616, %v2731, 0.0
        %v2762 = vsel %vm616, %v2732, 0.0
        %v2763 = vadd.f32 %v2761, %v2762
        %v2764 = vrot.slane %v2763, 4
        %v2765 = vadd.f32 %v2763, %v2764
        %v2766 = vrot.slane %v2765, 2
        %v2767 = vadd.f32 %v2765, %v2766
        %v2768 = vrot.slane %v2767, 1
        %v2769 = vadd.f32 %v2767, %v2768
        %v2770 = vsel %vm616, %v2733, 0.0
        %v2771 = vsel %vm616, %v2734, 0.0
        %v2772 = vadd.f32 %v2770, %v2771
        %v2773 = vrot.slane %v2772, 4
        %v2774 = vadd.f32 %v2772, %v2773
        %v2775 = vrot.slane %v2774, 2
        %v2776 = vadd.f32 %v2774, %v2775
        %v2777 = vrot.slane %v2776, 1
        %v2778 = vadd.f32 %v2776, %v2777
        %v2779 = vsel %vm616, %v2735, 0.0
        %v2780 = vsel %vm616, %v2736, 0.0
        %v2781 = vadd.f32 %v2779, %v2780
        %v2782 = vrot.slane %v2781, 4
        %v2783 = vadd.f32 %v2781, %v2782
        %v2784 = vrot.slane %v2783, 2
        %v2785 = vadd.f32 %v2783, %v2784
        %v2786 = vrot.slane %v2785, 1
        %v2787 = vadd.f32 %v2785, %v2786
        %v2788 = vsel %vm616, %v2737, 0.0
        %v2789 = vsel %vm616, %v2738, 0.0
        %v2790 = vadd.f32 %v2788, %v2789
        %v2791 = vrot.slane %v2790, 4
        %v2792 = vadd.f32 %v2790, %v2791
        %v2793 = vrot.slane %v2792, 2
        %v2794 = vadd.f32 %v2792, %v2793
        %v2795 = vrot.slane %v2794, 1
        %v2796 = vadd.f32 %v2794, %v2795
        %v2797 = vsel %vm616, %v2739, 0.0
        %v2798 = vsel %vm616, %v2740, 0.0
        %v2799 = vadd.f32 %v2797, %v2798
        %v2800 = vrot.slane %v2799, 4
        %v2801 = vadd.f32 %v2799, %v2800
        %v2802 = vrot.slane %v2801, 2
        %v2803 = vadd.f32 %v2801, %v2802
        %v2804 = vrot.slane %v2803, 1
        %v2805 = vadd.f32 %v2803, %v2804
        %v2806 = vsel %vm616, %v2741, 0.0
        %v2807 = vsel %vm616, %v2742, 0.0
        %v2808 = vadd.f32 %v2806, %v2807
        %v2809 = vrot.slane %v2808, 4
        %v2810 = vadd.f32 %v2808, %v2809
        %v2811 = vrot.slane %v2810, 2
        %v2812 = vadd.f32 %v2810, %v2811
        %v2813 = vrot.slane %v2812, 1
        %v2814 = vadd.f32 %v2812, %v2813
        %v2815 = vrcp.pop 16.0
        %v2816 = vmul.f32 %v2751, %v2815
        %v2817 = vmul.f32 %v2760, %v2815
        %v2818 = vmul.f32 %v2769, %v2815
        %v2819 = vmul.f32 %v2778, %v2815
        %v2820 = vmul.f32 %v2787, %v2815
        %v2821 = vmul.f32 %v2796, %v2815
        %v2822 = vmul.f32 %v2805, %v2815
        %v2823 = vmul.f32 %v2814, %v2815
        %v2824 = vld [vmem:[#allocation15] sm:$0xf]
        %v2825 = vld [vmem:[#allocation15 + $0x4] sm:$0xf]
        %v2826 = vld [vmem:[#allocation15 + $0x8] sm:$0xf]
        %v2827 = vld [vmem:[#allocation15 + $0xc] sm:$0xf]
        %v2828 = vpack.c.bf16 %v2816, %v2816
        %v2829 = vpack.c.bf16 %v2817, %v2817
        %v2830 = vpack.c.bf16 %v2818, %v2818
        %v2831 = vpack.c.bf16 %v2819, %v2819
        %v2832 = vpack.c.bf16 %v2820, %v2820
        %v2833 = vpack.c.bf16 %v2821, %v2821
        %v2834 = vpack.c.bf16 %v2822, %v2822
        %v2835 = vpack.c.bf16 %v2823, %v2823
        %v2836 = vld [vmem:[%s9] sm:$0x1]
        %v2838 = vlaneseq
        %v2839 = vshrl.u32 %v2838, 7
        %v2840 = vsub.s32 0, %v2839
        %v2841 = vrot.slane %v2836, %v2840
        %v2851 = vunpack.c.l.b16 %v2828
        %v2852 = vunpack.c.l.b16 %v2829
        %v2853 = vunpack.c.l.b16 %v2830
        %v2854 = vunpack.c.l.b16 %v2831
        %v2855 = vunpack.c.l.b16 %v2832
        %v2856 = vunpack.c.l.b16 %v2833
        %v2857 = vunpack.c.l.b16 %v2834
        %v2858 = vunpack.c.l.b16 %v2835
        %vm2859 = vcmask 1041409
        %v2860 = vsel %vm2859, %v2852, %v2851
        %vm2861 = vcmask 1042434
        %v2862 = vsel %vm2861, %v2853, %v2860
        %vm2863 = vcmask 1043459
        %v2864 = vsel %vm2863, %v2854, %v2862
        %vm2865 = vcmask 1044484
        %v2866 = vsel %vm2865, %v2855, %v2864
        %vm2867 = vcmask 1045509
        %v2868 = vsel %vm2867, %v2856, %v2866
        %vm2869 = vcmask 1046534
        %v2870 = vsel %vm2869, %v2857, %v2868
        %vm2871 = vcmask 1047559
        %v2872 = vsel %vm2871, %v2858, %v2870
        %v2873 = vpack.c.b16 %v2872, %v2872
        %v2878 = vunpack.c.l.b16 %v2824
        %v2879 = vunpack.c.l.b16 %v2825
        %v2880 = vunpack.c.l.b16 %v2826
        %v2881 = vunpack.c.l.b16 %v2827
        %v2882 = vpack.c.b16 %v2879, %v2878
        %v2883 = vpack.c.b16 %v2881, %v2880
        %v2887 = vsel %vm616, %v2873, 0
        %2889 = vmatprep.subr.bf16.mxu0 0
        %2890 = vmatpush1.bf16.msra.mxu0 0
        %2891 = vmatprep.subr.bf16.mxu0 0
        %2892 = vmatpush1.bf16.msra.mxu0 0
        %2893 = vmatprep.subr.bf16.mxu0 0
        %2894 = vmatpush1.bf16.msra.mxu0 0
        %2895 = vmatprep.subr.bf16.mxu0 0
        %2896 = vmatpush1.bf16.msra.mxu0 0
        %2897 = vmatprep.subr.bf16.mxu0 0
        %2898 = vmatpush1.bf16.msra.mxu0 0
        %2899 = vmatprep.subr.bf16.mxu0 0
        %2900 = vmatpush1.bf16.msra.mxu0 0
        %2901 = vmatprep.subr.bf16.mxu0 0
        %2902 = vmatpush1.bf16.msra.mxu0 %v2883
        %2903 = vmatprep.subr.bf16.mxu0 0
        %2904 = vmatpush1.bf16.msra.mxu0 %v2882
        %2905 = vmatprep.subr.bf16.mxu0 0
        %2906 = vmatpush2.bf16.msra.mxu0 0
        %2907 = vmatprep.subr.bf16.mxu0 0
        %2908 = vmatpush2.bf16.msra.mxu0 0
        %2909 = vmatprep.subr.bf16.mxu0 0
        %2910 = vmatpush2.bf16.msra.mxu0 0
        %2911 = vmatprep.subr.bf16.mxu0 0
        %2912 = vmatpush2.bf16.msra.mxu0 0
        %2913 = vmatprep.subr.bf16.mxu0 0
        %2914 = vmatpush2.bf16.msra.mxu0 0
        %2915 = vmatprep.subr.bf16.mxu0 0
        %2916 = vmatpush2.bf16.msra.mxu0 0
        %2917 = vmatprep.subr.bf16.mxu0 0
        %2918 = vmatpush2.bf16.msra.mxu0 0
        %2919 = vmatprep.subr.bf16.mxu0 0
        %2920 = vmatpush2.bf16.msra.mxu0 0
        %2921 = vmatprep.mubr.bf16.mxu0 0
        %2922 = vmatmul.mubr.bf16.gmra.mxu0 %v2887
        %v2923 = vpop.f32.mrf.mxu0
        %v2924 = vadd.f32 %v2841, %v2923
        %v2925 = vpop.f32.mrf.mxu0
        %v2926 = vpop.f32.mrf.mxu0
        %v2927 = vpop.f32.mrf.mxu0
        %2928 = vdwg.mxu0
        %v2930 = vcombine.high %v2924, %v2924
        %v2932 = vunpack.c.l.s4 1966171168
        %v2933 = vunpack.c.0.s8 %v2932
        %v2934 = vlaneseq
        %v2935 = vshrl.u32 %v2934, 7
        %v2936 = vsub.s32 %v2933, %v2935
        %v2937 = vrot.slane %v2924, %v2936
        %v2939 = vunpack.c.l.s4 1966171168
        %v2940 = vunpack.c.0.s8 %v2939
        %v2941 = vlaneseq
        %v2942 = vshrl.u32 %v2941, 7
        %v2943 = vsub.s32 %v2940, %v2942
        %v2944 = vrot.slane %v2930, %v2943
        %v2945 = vcombine.high %v2937, %v2937
        %v2946 = vcombine.high %v2944, %v2944
        %v2948 = vunpack.c.l.s4 1966171168
        %v2949 = vunpack.c.0.s8 %v2948
        %v2950 = vlaneseq
        %v2951 = vshrl.u32 %v2950, 7
        %v2952 = vsub.s32 %v2949, %v2951
        %v2953 = vrot.slane %v2937, %v2952
        %v2955 = vunpack.c.l.s4 1966171168
        %v2956 = vunpack.c.0.s8 %v2955
        %v2957 = vlaneseq
        %v2958 = vshrl.u32 %v2957, 7
        %v2959 = vsub.s32 %v2956, %v2958
        %v2960 = vrot.slane %v2944, %v2959
        %v2962 = vunpack.c.l.s4 1966171168
        %v2963 = vunpack.c.0.s8 %v2962
        %v2964 = vlaneseq
        %v2965 = vshrl.u32 %v2964, 7
        %v2966 = vsub.s32 %v2963, %v2965
        %v2967 = vrot.slane %v2945, %v2966
        %v2969 = vunpack.c.l.s4 1966171168
        %v2970 = vunpack.c.0.s8 %v2969
        %v2971 = vlaneseq
        %v2972 = vshrl.u32 %v2971, 7
        %v2973 = vsub.s32 %v2970, %v2972
        %v2974 = vrot.slane %v2946, %v2973
        %v2975 = vcombine.high %v2953, %v2953
        %v2976 = vcombine.high %v2960, %v2960
        %v2977 = vcombine.high %v2967, %v2967
        %v2978 = vcombine.high %v2974, %v2974
        %2987 = vst [vmem:[%s548] sm:$0x1] %v2953
        %2988 = vst [vmem:[%s548 + $0x1] sm:$0x1] %v2967
        %2989 = vst [vmem:[%s548 + $0x2] sm:$0x1] %v2975
        %2990 = vst [vmem:[%s548 + $0x3] sm:$0x1] %v2977
        %2991 = vst [vmem:[%s548 + $0x4] sm:$0x1] %v2960
        %2992 = vst [vmem:[%s548 + $0x5] sm:$0x1] %v2974
        %2993 = vst [vmem:[%s548 + $0x6] sm:$0x1] %v2976
        %2994 = vst [vmem:[%s548 + $0x7] sm:$0x1] %v2978
        %v2995 = vld [vmem:[%s487] sm:$0xff]
        %v2996 = vld [vmem:[%s487 + $0x8] sm:$0xff]
        %v2997 = vld [vmem:[%s487 + $0x10] sm:$0xff]
        %v2998 = vld [vmem:[%s487 + $0x18] sm:$0xff]
        %v2999 = vld [vmem:[%s487 + $0x20] sm:$0xff]
        %v3000 = vld [vmem:[%s487 + $0x28] sm:$0xff]
        %v3001 = vld [vmem:[%s487 + $0x30] sm:$0xff]
        %v3002 = vld [vmem:[%s487 + $0x38] sm:$0xff]
        %s3003 = scalar_lea.vmem [#allocation9], 16
        %v3004 = vld [vmem:[%s3003] sm:$0xf]
        %v3005 = vld [vmem:[%s3003 + $0x4] sm:$0xf]
        %v3006 = vld [vmem:[%s3003 + $0x8] sm:$0xf]
        %v3007 = vld [vmem:[%s3003 + $0xc] sm:$0xf]
        %v3008 = vpack.c.bf16 %v2996, %v2995
        %v3009 = vpack.c.bf16 %v2998, %v2997
        %v3010 = vpack.c.bf16 %v3000, %v2999
        %v3011 = vpack.c.bf16 %v3002, %v3001
        %s3012 = scalar_lea.vmem %s3, 1
        %v3013 = vld [vmem:[%s3012] sm:$0x1]
        %v3015 = vlaneseq
        %v3016 = vshrl.u32 %v3015, 7
        %v3017 = vsub.s32 0, %v3016
        %v3018 = vrot.slane %v3013, %v3017
        %v3024 = vunpack.c.l.b16 %v3004
        %v3025 = vunpack.c.l.b16 %v3005
        %v3026 = vunpack.c.l.b16 %v3006
        %v3027 = vunpack.c.l.b16 %v3007
        %v3028 = vpack.c.b16 %v3025, %v3024
        %v3029 = vpack.c.b16 %v3027, %v3026
        %v3033 = vsel %vm616, %v3008, 0
        %v3036 = vsel %vm616, %v3009, 0
        %v3039 = vsel %vm616, %v3010, 0
        %v3042 = vsel %vm616, %v3011, 0
        %3044 = vmatprep.subr.bf16.mxu0 0
        %3045 = vmatpush1.bf16.msra.mxu0 0
        %3046 = vmatprep.subr.bf16.mxu0 0
        %3047 = vmatpush1.bf16.msra.mxu0 0
        %3048 = vmatprep.subr.bf16.mxu0 0
        %3049 = vmatpush1.bf16.msra.mxu0 0
        %3050 = vmatprep.subr.bf16.mxu0 0
        %3051 = vmatpush1.bf16.msra.mxu0 0
        %3052 = vmatprep.subr.bf16.mxu0 0
        %3053 = vmatpush1.bf16.msra.mxu0 0
        %3054 = vmatprep.subr.bf16.mxu0 0
        %3055 = vmatpush1.bf16.msra.mxu0 0
        %3056 = vmatprep.subr.bf16.mxu0 0
        %3057 = vmatpush1.bf16.msra.mxu0 %v3029
        %3058 = vmatprep.subr.bf16.mxu0 0
        %3059 = vmatpush1.bf16.msra.mxu0 %v3028
        %3060 = vmatprep.subr.bf16.mxu0 0
        %3061 = vmatpush2.bf16.msra.mxu0 0
        %3062 = vmatprep.subr.bf16.mxu0 0
        %3063 = vmatpush2.bf16.msra.mxu0 0
        %3064 = vmatprep.subr.bf16.mxu0 0
        %3065 = vmatpush2.bf16.msra.mxu0 0
        %3066 = vmatprep.subr.bf16.mxu0 0
        %3067 = vmatpush2.bf16.msra.mxu0 0
        %3068 = vmatprep.subr.bf16.mxu0 0
        %3069 = vmatpush2.bf16.msra.mxu0 0
        %3070 = vmatprep.subr.bf16.mxu0 0
        %3071 = vmatpush2.bf16.msra.mxu0 0
        %3072 = vmatprep.subr.bf16.mxu0 0
        %3073 = vmatpush2.bf16.msra.mxu0 0
        %3074 = vmatprep.subr.bf16.mxu0 0
        %3075 = vmatpush2.bf16.msra.mxu0 0
        %3076 = vmatprep.mubr.bf16.mxu0 0
        %3077 = vmatmul.mubr.bf16.gmra.mxu0 %v3033
        %v3078 = vpop.f32.mrf.mxu0
        %v3079 = vadd.f32 %v3018, %v3078
        %v3080 = vpop.f32.mrf.mxu0
        %v3081 = vpop.f32.mrf.mxu0
        %v3082 = vadd.f32 %v3018, %v3081
        %v3083 = vpop.f32.mrf.mxu0
        %3084 = vmatprep.mubr.bf16.mxu0 0
        %3085 = vmatmul.mubr.bf16.gmra.mxu0 %v3036
        %v3086 = vpop.f32.mrf.mxu0
        %v3087 = vadd.f32 %v3018, %v3086
        %v3088 = vpop.f32.mrf.mxu0
        %v3089 = vpop.f32.mrf.mxu0
        %v3090 = vadd.f32 %v3018, %v3089
        %v3091 = vpop.f32.mrf.mxu0
        %3092 = vmatprep.mubr.bf16.mxu0 0
        %3093 = vmatmul.mubr.bf16.gmra.mxu0 %v3039
        %v3094 = vpop.f32.mrf.mxu0
        %v3095 = vadd.f32 %v3018, %v3094
        %v3096 = vpop.f32.mrf.mxu0
        %v3097 = vpop.f32.mrf.mxu0
        %v3098 = vadd.f32 %v3018, %v3097
        %v3099 = vpop.f32.mrf.mxu0
        %3100 = vmatprep.mubr.bf16.mxu0 0
        %3101 = vmatmul.mubr.bf16.gmra.mxu0 %v3042
        %v3102 = vpop.f32.mrf.mxu0
        %v3103 = vadd.f32 %v3018, %v3102
        %v3104 = vpop.f32.mrf.mxu0
        %v3105 = vpop.f32.mrf.mxu0
        %v3106 = vadd.f32 %v3018, %v3105
        %v3107 = vpop.f32.mrf.mxu0
        %3108 = vdwg.mxu0
        %3109 = vst.msk [vmem:[#allocation3] sm:$0xff] %vm616, 0.0
        %3110 = vst.msk [vmem:[#allocation3 + $0x8] sm:$0xff] %vm616, 0.0
        %3111 = vst.msk [vmem:[#allocation3 + $0x10] sm:$0xff] %vm616, 0.0
        %3112 = vst.msk [vmem:[#allocation3 + $0x18] sm:$0xff] %vm616, 0.0
        %3113 = vst.msk [vmem:[#allocation3 + $0x20] sm:$0xff] %vm616, 0.0
        %3114 = vst.msk [vmem:[#allocation3 + $0x28] sm:$0xff] %vm616, 0.0
        %3115 = vst.msk [vmem:[#allocation3 + $0x30] sm:$0xff] %vm616, 0.0
        %3116 = vst.msk [vmem:[#allocation3 + $0x38] sm:$0xff] %vm616, 0.0
        %3117 = vst.msk [vmem:[#allocation3 + $0x40] sm:$0xff] %vm616, 0.0
        %3118 = vst.msk [vmem:[#allocation3 + $0x48] sm:$0xff] %vm616, 0.0
        %3119 = vst.msk [vmem:[#allocation3 + $0x50] sm:$0xff] %vm616, 0.0
        %3120 = vst.msk [vmem:[#allocation3 + $0x58] sm:$0xff] %vm616, 0.0
        %3121 = vst.msk [vmem:[#allocation3 + $0x60] sm:$0xff] %vm616, 0.0
        %3122 = vst.msk [vmem:[#allocation3 + $0x68] sm:$0xff] %vm616, 0.0
        %3123 = vst.msk [vmem:[#allocation3 + $0x70] sm:$0xff] %vm616, 0.0
        %3124 = vst.msk [vmem:[#allocation3 + $0x78] sm:$0xff] %vm616, 0.0
        %3125 = vst.msk [vmem:[#allocation3 + $0x8] sm:$0xff] %vm616, %v3079
        %3126 = vst.msk [vmem:[#allocation3 + $0x18] sm:$0xff] %vm616, %v3082
        %3127 = vst.msk [vmem:[#allocation3 + $0x28] sm:$0xff] %vm616, %v3087
        %3128 = vst.msk [vmem:[#allocation3 + $0x38] sm:$0xff] %vm616, %v3090
        %3129 = vst.msk [vmem:[#allocation3 + $0x48] sm:$0xff] %vm616, %v3095
        %3130 = vst.msk [vmem:[#allocation3 + $0x58] sm:$0xff] %vm616, %v3098
        %3131 = vst.msk [vmem:[#allocation3 + $0x68] sm:$0xff] %vm616, %v3103
        %3132 = vst.msk [vmem:[#allocation3 + $0x78] sm:$0xff] %vm616, %v3106
        %v3133 = vld [vmem:[#allocation3] sm:$0xff]
        %v3134 = vld [vmem:[#allocation3 + $0x8] sm:$0xff]
        %v3135 = vld [vmem:[#allocation3 + $0x10] sm:$0xff]
        %v3136 = vld [vmem:[#allocation3 + $0x18] sm:$0xff]
        %v3137 = vld [vmem:[#allocation3 + $0x20] sm:$0xff]
        %v3138 = vld [vmem:[#allocation3 + $0x28] sm:$0xff]
        %v3139 = vld [vmem:[#allocation3 + $0x30] sm:$0xff]
        %v3140 = vld [vmem:[#allocation3 + $0x38] sm:$0xff]
        %v3141 = vld [vmem:[#allocation3 + $0x40] sm:$0xff]
        %v3142 = vld [vmem:[#allocation3 + $0x48] sm:$0xff]
        %v3143 = vld [vmem:[#allocation3 + $0x50] sm:$0xff]
        %v3144 = vld [vmem:[#allocation3 + $0x58] sm:$0xff]
        %v3145 = vld [vmem:[#allocation3 + $0x60] sm:$0xff]
        %v3146 = vld [vmem:[#allocation3 + $0x68] sm:$0xff]
        %v3147 = vld [vmem:[#allocation3 + $0x70] sm:$0xff]
        %v3148 = vld [vmem:[#allocation3 + $0x78] sm:$0xff]
        %s3149 = scalar_lea.vmem %s7, 2
        %v3150 = vld [vmem:[%s3149] sm:$0x1]
        %vm3167 = vcmask 1041408
        %v3168 = vrot.slane %v3133, 6
        %v3169 = vrot.slane %v3134, 6
        %v3170 = vsel %vm3167, %v3168, %v3169
        %v3171 = vrot.slane %v3135, 6
        %v3172 = vrot.slane %v3136, 6
        %v3173 = vsel %vm3167, %v3171, %v3172
        %v3174 = vrot.slane %v3137, 6
        %v3175 = vrot.slane %v3138, 6
        %v3176 = vsel %vm3167, %v3174, %v3175
        %v3177 = vrot.slane %v3139, 6
        %v3178 = vrot.slane %v3140, 6
        %v3179 = vsel %vm3167, %v3177, %v3178
        %v3180 = vrot.slane %v3141, 6
        %v3181 = vrot.slane %v3142, 6
        %v3182 = vsel %vm3167, %v3180, %v3181
        %v3183 = vrot.slane %v3143, 6
        %v3184 = vrot.slane %v3144, 6
        %v3185 = vsel %vm3167, %v3183, %v3184
        %v3186 = vrot.slane %v3145, 6
        %v3187 = vrot.slane %v3146, 6
        %v3188 = vsel %vm3167, %v3186, %v3187
        %v3189 = vrot.slane %v3147, 6
        %v3190 = vrot.slane %v3148, 6
        %v3191 = vsel %vm3167, %v3189, %v3190
        %s3200 = scalar_lea.vmem [#allocation13], 96
        %v3201 = vld [vmem:[%s3200] sm:$0xf]
        %v3202 = vld [vmem:[%s3200 + $0x4] sm:$0xf]
        %v3203 = vld [vmem:[%s3200 + $0x8] sm:$0xf]
        %v3204 = vld [vmem:[%s3200 + $0xc] sm:$0xf]
        %v3205 = vpack.c.bf16 %v3173, %v3170
        %v3206 = vpack.c.bf16 %v3179, %v3176
        %v3207 = vpack.c.bf16 %v3185, %v3182
        %v3208 = vpack.c.bf16 %v3191, %v3188
        %v3213 = vunpack.c.l.b16 %v3201
        %v3214 = vunpack.c.l.b16 %v3202
        %v3215 = vunpack.c.l.b16 %v3203
        %v3216 = vunpack.c.l.b16 %v3204
        %v3217 = vpack.c.b16 %v3214, %v3213
        %v3218 = vpack.c.b16 %v3216, %v3215
        %v3222 = vsel %vm616, %v3205, 0
        %v3225 = vsel %vm616, %v3206, 0
        %v3228 = vsel %vm616, %v3207, 0
        %v3231 = vsel %vm616, %v3208, 0
        %3233 = vmatprep.subr.bf16.mxu0 0
        %3234 = vmatpush1.bf16.msra.mxu0 0
        %3235 = vmatprep.subr.bf16.mxu0 0
        %3236 = vmatpush1.bf16.msra.mxu0 0
        %3237 = vmatprep.subr.bf16.mxu0 0
        %3238 = vmatpush1.bf16.msra.mxu0 0
        %3239 = vmatprep.subr.bf16.mxu0 0
        %3240 = vmatpush1.bf16.msra.mxu0 0
        %3241 = vmatprep.subr.bf16.mxu0 0
        %3242 = vmatpush1.bf16.msra.mxu0 0
        %3243 = vmatprep.subr.bf16.mxu0 0
        %3244 = vmatpush1.bf16.msra.mxu0 0
        %3245 = vmatprep.subr.bf16.mxu0 0
        %3246 = vmatpush1.bf16.msra.mxu0 %v3218
        %3247 = vmatprep.subr.bf16.mxu0 0
        %3248 = vmatpush1.bf16.msra.mxu0 %v3217
        %3249 = vmatprep.subr.bf16.mxu0 0
        %3250 = vmatpush2.bf16.msra.mxu0 0
        %3251 = vmatprep.subr.bf16.mxu0 0
        %3252 = vmatpush2.bf16.msra.mxu0 0
        %3253 = vmatprep.subr.bf16.mxu0 0
        %3254 = vmatpush2.bf16.msra.mxu0 0
        %3255 = vmatprep.subr.bf16.mxu0 0
        %3256 = vmatpush2.bf16.msra.mxu0 0
        %3257 = vmatprep.subr.bf16.mxu0 0
        %3258 = vmatpush2.bf16.msra.mxu0 0
        %3259 = vmatprep.subr.bf16.mxu0 0
        %3260 = vmatpush2.bf16.msra.mxu0 0
        %3261 = vmatprep.subr.bf16.mxu0 0
        %3262 = vmatpush2.bf16.msra.mxu0 0
        %3263 = vmatprep.subr.bf16.mxu0 0
        %3264 = vmatpush2.bf16.msra.mxu0 0
        %3265 = vmatprep.mubr.bf16.mxu0 0
        %3266 = vmatmul.mubr.bf16.gmra.mxu0 %v3222
        %v3267 = vpop.f32.mrf.mxu0
        %v3268 = vadd.f32 0.0, %v3267
        %v3269 = vpop.f32.mrf.mxu0
        %v3270 = vpop.f32.mrf.mxu0
        %v3271 = vadd.f32 0.0, %v3270
        %v3272 = vpop.f32.mrf.mxu0
        %3273 = vmatprep.mubr.bf16.mxu0 0
        %3274 = vmatmul.mubr.bf16.gmra.mxu0 %v3225
        %v3275 = vpop.f32.mrf.mxu0
        %v3276 = vadd.f32 0.0, %v3275
        %v3277 = vpop.f32.mrf.mxu0
        %v3278 = vpop.f32.mrf.mxu0
        %v3279 = vadd.f32 0.0, %v3278
        %v3280 = vpop.f32.mrf.mxu0
        %3281 = vmatprep.mubr.bf16.mxu0 0
        %3282 = vmatmul.mubr.bf16.gmra.mxu0 %v3228
        %v3283 = vpop.f32.mrf.mxu0
        %v3284 = vadd.f32 0.0, %v3283
        %v3285 = vpop.f32.mrf.mxu0
        %v3286 = vpop.f32.mrf.mxu0
        %v3287 = vadd.f32 0.0, %v3286
        %v3288 = vpop.f32.mrf.mxu0
        %3289 = vmatprep.mubr.bf16.mxu0 0
        %3290 = vmatmul.mubr.bf16.gmra.mxu0 %v3231
        %v3291 = vpop.f32.mrf.mxu0
        %v3292 = vadd.f32 0.0, %v3291
        %v3293 = vpop.f32.mrf.mxu0
        %v3294 = vpop.f32.mrf.mxu0
        %v3295 = vadd.f32 0.0, %v3294
        %v3296 = vpop.f32.mrf.mxu0
        %3297 = vdwg.mxu0
        %v3299 = vlaneseq
        %v3300 = vshrl.u32 %v3299, 7
        %v3301 = vsub.s32 0, %v3300
        %v3302 = vrot.slane %v3150, %v3301
        %v3304 = vadd.f32 %v3302, %v3268
        %v3305 = vadd.f32 %v3302, %v3271
        %v3306 = vadd.f32 %v3302, %v3276
        %v3307 = vadd.f32 %v3302, %v3279
        %v3308 = vadd.f32 %v3302, %v3284
        %v3309 = vadd.f32 %v3302, %v3287
        %v3310 = vadd.f32 %v3302, %v3292
        %v3311 = vadd.f32 %v3302, %v3295
        %v3312 = vrot.slane %v3133, 7
        %v3313 = vrot.slane %v3134, 7
        %v3314 = vsel %vm844, %v3312, %v3313
        %v3315 = vrot.slane %v3135, 7
        %v3316 = vrot.slane %v3136, 7
        %v3317 = vsel %vm844, %v3315, %v3316
        %v3318 = vrot.slane %v3137, 7
        %v3319 = vrot.slane %v3138, 7
        %v3320 = vsel %vm844, %v3318, %v3319
        %v3321 = vrot.slane %v3139, 7
        %v3322 = vrot.slane %v3140, 7
        %v3323 = vsel %vm844, %v3321, %v3322
        %v3324 = vrot.slane %v3141, 7
        %v3325 = vrot.slane %v3142, 7
        %v3326 = vsel %vm844, %v3324, %v3325
        %v3327 = vrot.slane %v3143, 7
        %v3328 = vrot.slane %v3144, 7
        %v3329 = vsel %vm844, %v3327, %v3328
        %v3330 = vrot.slane %v3145, 7
        %v3331 = vrot.slane %v3146, 7
        %v3332 = vsel %vm844, %v3330, %v3331
        %v3333 = vrot.slane %v3147, 7
        %v3334 = vrot.slane %v3148, 7
        %v3335 = vsel %vm844, %v3333, %v3334
        %s3344 = scalar_lea.vmem [#allocation13], 112
        %v3345 = vld [vmem:[%s3344] sm:$0xf]
        %v3346 = vld [vmem:[%s3344 + $0x4] sm:$0xf]
        %v3347 = vld [vmem:[%s3344 + $0x8] sm:$0xf]
        %v3348 = vld [vmem:[%s3344 + $0xc] sm:$0xf]
        %v3349 = vpack.c.bf16 %v3317, %v3314
        %v3350 = vpack.c.bf16 %v3323, %v3320
        %v3351 = vpack.c.bf16 %v3329, %v3326
        %v3352 = vpack.c.bf16 %v3335, %v3332
        %v3357 = vunpack.c.l.b16 %v3345
        %v3358 = vunpack.c.l.b16 %v3346
        %v3359 = vunpack.c.l.b16 %v3347
        %v3360 = vunpack.c.l.b16 %v3348
        %v3361 = vpack.c.b16 %v3358, %v3357
        %v3362 = vpack.c.b16 %v3360, %v3359
        %v3366 = vsel %vm616, %v3349, 0
        %v3369 = vsel %vm616, %v3350, 0
        %v3372 = vsel %vm616, %v3351, 0
        %v3375 = vsel %vm616, %v3352, 0
        %3377 = vmatprep.subr.bf16.mxu0 0
        %3378 = vmatpush1.bf16.msra.mxu0 0
        %3379 = vmatprep.subr.bf16.mxu0 0
        %3380 = vmatpush1.bf16.msra.mxu0 0
        %3381 = vmatprep.subr.bf16.mxu0 0
        %3382 = vmatpush1.bf16.msra.mxu0 0
        %3383 = vmatprep.subr.bf16.mxu0 0
        %3384 = vmatpush1.bf16.msra.mxu0 0
        %3385 = vmatprep.subr.bf16.mxu0 0
        %3386 = vmatpush1.bf16.msra.mxu0 0
        %3387 = vmatprep.subr.bf16.mxu0 0
        %3388 = vmatpush1.bf16.msra.mxu0 0
        %3389 = vmatprep.subr.bf16.mxu0 0
        %3390 = vmatpush1.bf16.msra.mxu0 %v3362
        %3391 = vmatprep.subr.bf16.mxu0 0
        %3392 = vmatpush1.bf16.msra.mxu0 %v3361
        %3393 = vmatprep.subr.bf16.mxu0 0
        %3394 = vmatpush2.bf16.msra.mxu0 0
        %3395 = vmatprep.subr.bf16.mxu0 0
        %3396 = vmatpush2.bf16.msra.mxu0 0
        %3397 = vmatprep.subr.bf16.mxu0 0
        %3398 = vmatpush2.bf16.msra.mxu0 0
        %3399 = vmatprep.subr.bf16.mxu0 0
        %3400 = vmatpush2.bf16.msra.mxu0 0
        %3401 = vmatprep.subr.bf16.mxu0 0
        %3402 = vmatpush2.bf16.msra.mxu0 0
        %3403 = vmatprep.subr.bf16.mxu0 0
        %3404 = vmatpush2.bf16.msra.mxu0 0
        %3405 = vmatprep.subr.bf16.mxu0 0
        %3406 = vmatpush2.bf16.msra.mxu0 0
        %3407 = vmatprep.subr.bf16.mxu0 0
        %3408 = vmatpush2.bf16.msra.mxu0 0
        %3409 = vmatprep.mubr.bf16.mxu0 0
        %3410 = vmatmul.mubr.bf16.gmra.mxu0 %v3366
        %v3411 = vpop.f32.mrf.mxu0
        %v3412 = vadd.f32 0.0, %v3411
        %v3413 = vpop.f32.mrf.mxu0
        %v3414 = vpop.f32.mrf.mxu0
        %v3415 = vadd.f32 0.0, %v3414
        %v3416 = vpop.f32.mrf.mxu0
        %3417 = vmatprep.mubr.bf16.mxu0 0
        %3418 = vmatmul.mubr.bf16.gmra.mxu0 %v3369
        %v3419 = vpop.f32.mrf.mxu0
        %v3420 = vadd.f32 0.0, %v3419
        %v3421 = vpop.f32.mrf.mxu0
        %v3422 = vpop.f32.mrf.mxu0
        %v3423 = vadd.f32 0.0, %v3422
        %v3424 = vpop.f32.mrf.mxu0
        %3425 = vmatprep.mubr.bf16.mxu0 0
        %3426 = vmatmul.mubr.bf16.gmra.mxu0 %v3372
        %v3427 = vpop.f32.mrf.mxu0
        %v3428 = vadd.f32 0.0, %v3427
        %v3429 = vpop.f32.mrf.mxu0
        %v3430 = vpop.f32.mrf.mxu0
        %v3431 = vadd.f32 0.0, %v3430
        %v3432 = vpop.f32.mrf.mxu0
        %3433 = vmatprep.mubr.bf16.mxu0 0
        %3434 = vmatmul.mubr.bf16.gmra.mxu0 %v3375
        %v3435 = vpop.f32.mrf.mxu0
        %v3436 = vadd.f32 0.0, %v3435
        %v3437 = vpop.f32.mrf.mxu0
        %v3438 = vpop.f32.mrf.mxu0
        %v3439 = vadd.f32 0.0, %v3438
        %v3440 = vpop.f32.mrf.mxu0
        %3441 = vdwg.mxu0
        %v3442 = vadd.f32 %v3304, %v3412
        %v3443 = vadd.f32 %v3305, %v3415
        %v3444 = vadd.f32 %v3306, %v3420
        %v3445 = vadd.f32 %v3307, %v3423
        %v3446 = vadd.f32 %v3308, %v3428
        %v3447 = vadd.f32 %v3309, %v3431
        %v3448 = vadd.f32 %v3310, %v3436
        %v3449 = vadd.f32 %v3311, %v3439
        %s3450 = scalar_lea.vmem [#allocation13], 128
        %v3451 = vld [vmem:[%s3450] sm:$0xf]
        %v3452 = vld [vmem:[%s3450 + $0x4] sm:$0xf]
        %v3453 = vld [vmem:[%s3450 + $0x8] sm:$0xf]
        %v3454 = vld [vmem:[%s3450 + $0xc] sm:$0xf]
        %v3455 = vpack.c.bf16 %v3136, %v3134
        %v3456 = vpack.c.bf16 %v3140, %v3138
        %v3457 = vpack.c.bf16 %v3144, %v3142
        %v3458 = vpack.c.bf16 %v3148, %v3146
        %v3463 = vunpack.c.l.b16 %v3451
        %v3464 = vunpack.c.l.b16 %v3452
        %v3465 = vunpack.c.l.b16 %v3453
        %v3466 = vunpack.c.l.b16 %v3454
        %v3467 = vpack.c.b16 %v3464, %v3463
        %v3468 = vpack.c.b16 %v3466, %v3465
        %v3472 = vsel %vm616, %v3455, 0
        %v3475 = vsel %vm616, %v3456, 0
        %v3478 = vsel %vm616, %v3457, 0
        %v3481 = vsel %vm616, %v3458, 0
        %3483 = vmatprep.subr.bf16.mxu0 0
        %3484 = vmatpush1.bf16.msra.mxu0 0
        %3485 = vmatprep.subr.bf16.mxu0 0
        %3486 = vmatpush1.bf16.msra.mxu0 0
        %3487 = vmatprep.subr.bf16.mxu0 0
        %3488 = vmatpush1.bf16.msra.mxu0 0
        %3489 = vmatprep.subr.bf16.mxu0 0
        %3490 = vmatpush1.bf16.msra.mxu0 0
        %3491 = vmatprep.subr.bf16.mxu0 0
        %3492 = vmatpush1.bf16.msra.mxu0 0
        %3493 = vmatprep.subr.bf16.mxu0 0
        %3494 = vmatpush1.bf16.msra.mxu0 0
        %3495 = vmatprep.subr.bf16.mxu0 0
        %3496 = vmatpush1.bf16.msra.mxu0 %v3468
        %3497 = vmatprep.subr.bf16.mxu0 0
        %3498 = vmatpush1.bf16.msra.mxu0 %v3467
        %3499 = vmatprep.subr.bf16.mxu0 0
        %3500 = vmatpush2.bf16.msra.mxu0 0
        %3501 = vmatprep.subr.bf16.mxu0 0
        %3502 = vmatpush2.bf16.msra.mxu0 0
        %3503 = vmatprep.subr.bf16.mxu0 0
        %3504 = vmatpush2.bf16.msra.mxu0 0
        %3505 = vmatprep.subr.bf16.mxu0 0
        %3506 = vmatpush2.bf16.msra.mxu0 0
        %3507 = vmatprep.subr.bf16.mxu0 0
        %3508 = vmatpush2.bf16.msra.mxu0 0
        %3509 = vmatprep.subr.bf16.mxu0 0
        %3510 = vmatpush2.bf16.msra.mxu0 0
        %3511 = vmatprep.subr.bf16.mxu0 0
        %3512 = vmatpush2.bf16.msra.mxu0 0
        %3513 = vmatprep.subr.bf16.mxu0 0
        %3514 = vmatpush2.bf16.msra.mxu0 0
        %3515 = vmatprep.mubr.bf16.mxu0 0
        %3516 = vmatmul.mubr.bf16.gmra.mxu0 %v3472
        %v3517 = vpop.f32.mrf.mxu0
        %v3518 = vadd.f32 0.0, %v3517
        %v3519 = vpop.f32.mrf.mxu0
        %v3520 = vpop.f32.mrf.mxu0
        %v3521 = vadd.f32 0.0, %v3520
        %v3522 = vpop.f32.mrf.mxu0
        %3523 = vmatprep.mubr.bf16.mxu0 0
        %3524 = vmatmul.mubr.bf16.gmra.mxu0 %v3475
        %v3525 = vpop.f32.mrf.mxu0
        %v3526 = vadd.f32 0.0, %v3525
        %v3527 = vpop.f32.mrf.mxu0
        %v3528 = vpop.f32.mrf.mxu0
        %v3529 = vadd.f32 0.0, %v3528
        %v3530 = vpop.f32.mrf.mxu0
        %3531 = vmatprep.mubr.bf16.mxu0 0
        %3532 = vmatmul.mubr.bf16.gmra.mxu0 %v3478
        %v3533 = vpop.f32.mrf.mxu0
        %v3534 = vadd.f32 0.0, %v3533
        %v3535 = vpop.f32.mrf.mxu0
        %v3536 = vpop.f32.mrf.mxu0
        %v3537 = vadd.f32 0.0, %v3536
        %v3538 = vpop.f32.mrf.mxu0
        %3539 = vmatprep.mubr.bf16.mxu0 0
        %3540 = vmatmul.mubr.bf16.gmra.mxu0 %v3481
        %v3541 = vpop.f32.mrf.mxu0
        %v3542 = vadd.f32 0.0, %v3541
        %v3543 = vpop.f32.mrf.mxu0
        %v3544 = vpop.f32.mrf.mxu0
        %v3545 = vadd.f32 0.0, %v3544
        %v3546 = vpop.f32.mrf.mxu0
        %3547 = vdwg.mxu0
        %v3548 = vadd.f32 %v3442, %v3518
        %v3549 = vadd.f32 %v3443, %v3521
        %v3550 = vadd.f32 %v3444, %v3526
        %v3551 = vadd.f32 %v3445, %v3529
        %v3552 = vadd.f32 %v3446, %v3534
        %v3553 = vadd.f32 %v3447, %v3537
        %v3554 = vadd.f32 %v3448, %v3542
        %v3555 = vadd.f32 %v3449, %v3545
        %v3556 = vxor.u32 %v3548, 2147483648
        %v3557 = vxor.u32 %v3549, 2147483648
        %v3558 = vxor.u32 %v3550, 2147483648
        %v3559 = vxor.u32 %v3551, 2147483648
        %v3560 = vxor.u32 %v3552, 2147483648
        %v3561 = vxor.u32 %v3553, 2147483648
        %v3562 = vxor.u32 %v3554, 2147483648
        %v3563 = vxor.u32 %v3555, 2147483648
        %v3564 = vmul.f32 %v3556, 1.442695
        %v3565 = vpow.pop %v3564
        %v3566 = vmul.f32 %v3557, 1.442695
        %v3567 = vpow.pop %v3566
        %v3568 = vmul.f32 %v3558, 1.442695
        %v3569 = vpow.pop %v3568
        %v3570 = vmul.f32 %v3559, 1.442695
        %v3571 = vpow.pop %v3570
        %v3572 = vmul.f32 %v3560, 1.442695
        %v3573 = vpow.pop %v3572
        %v3574 = vmul.f32 %v3561, 1.442695
        %v3575 = vpow.pop %v3574
        %v3576 = vmul.f32 %v3562, 1.442695
        %v3577 = vpow.pop %v3576
        %v3578 = vmul.f32 %v3563, 1.442695
        %v3579 = vpow.pop %v3578
        %v3580 = vadd.f32 %v3565, 1.0
        %v3581 = vadd.f32 %v3567, 1.0
        %v3582 = vadd.f32 %v3569, 1.0
        %v3583 = vadd.f32 %v3571, 1.0
        %v3584 = vadd.f32 %v3573, 1.0
        %v3585 = vadd.f32 %v3575, 1.0
        %v3586 = vadd.f32 %v3577, 1.0
        %v3587 = vadd.f32 %v3579, 1.0
        %v3588 = vrcp.pop %v3580
        %v3589 = vmul.f32 1.0, %v3588
        %v3590 = vrcp.pop %v3581
        %v3591 = vmul.f32 1.0, %v3590
        %v3592 = vrcp.pop %v3582
        %v3593 = vmul.f32 1.0, %v3592
        %v3594 = vrcp.pop %v3583
        %v3595 = vmul.f32 1.0, %v3594
        %v3596 = vrcp.pop %v3584
        %v3597 = vmul.f32 1.0, %v3596
        %v3598 = vrcp.pop %v3585
        %v3599 = vmul.f32 1.0, %v3598
        %v3600 = vrcp.pop %v3586
        %v3601 = vmul.f32 1.0, %v3600
        %v3602 = vrcp.pop %v3587
        %v3603 = vmul.f32 1.0, %v3602
        %3612 = vrot.lane.b32.xlu0 %v3589, 96
        %v3613 = vpop.permute.xlu0 %3612
        %3614 = vrot.lane.b32.xlu0 %v3591, 96
        %v3615 = vpop.permute.xlu0 %3614
        %3616 = vrot.lane.b32.xlu0 %v3593, 96
        %v3617 = vpop.permute.xlu0 %3616
        %3618 = vrot.lane.b32.xlu0 %v3595, 96
        %v3619 = vpop.permute.xlu0 %3618
        %3620 = vrot.lane.b32.xlu0 %v3597, 96
        %v3621 = vpop.permute.xlu0 %3620
        %3622 = vrot.lane.b32.xlu0 %v3599, 96
        %v3623 = vpop.permute.xlu0 %3622
        %3624 = vrot.lane.b32.xlu0 %v3601, 96
        %v3625 = vpop.permute.xlu0 %3624
        %3626 = vrot.lane.b32.xlu0 %v3603, 96
        %v3627 = vpop.permute.xlu0 %3626
        %v3636 = vmul.f32 %v3548, %v3613
        %v3637 = vmul.f32 %v3549, %v3615
        %v3638 = vmul.f32 %v3550, %v3617
        %v3639 = vmul.f32 %v3551, %v3619
        %v3640 = vmul.f32 %v3552, %v3621
        %v3641 = vmul.f32 %v3553, %v3623
        %v3642 = vmul.f32 %v3554, %v3625
        %v3643 = vmul.f32 %v3555, %v3627
        %s3644 = scalar_lea.vmem [#allocation10], 32
        %v3645 = vld [vmem:[%s3644] sm:$0xf]
        %v3646 = vld [vmem:[%s3644 + $0x4] sm:$0xf]
        %v3647 = vld [vmem:[%s3644 + $0x8] sm:$0xf]
        %v3648 = vld [vmem:[%s3644 + $0xc] sm:$0xf]
        %v3649 = vpack.c.bf16 %v3637, %v3636
        %v3650 = vpack.c.bf16 %v3639, %v3638
        %v3651 = vpack.c.bf16 %v3641, %v3640
        %v3652 = vpack.c.bf16 %v3643, %v3642
        %s3653 = scalar_lea.vmem [#allocation12], 2
        %v3654 = vld [vmem:[%s3653] sm:$0x1]
        %v3656 = vlaneseq
        %v3657 = vshrl.u32 %v3656, 7
        %v3658 = vsub.s32 0, %v3657
        %v3659 = vrot.slane %v3654, %v3658
        %v3665 = vunpack.c.l.b16 %v3645
        %v3666 = vunpack.c.l.b16 %v3646
        %v3667 = vunpack.c.l.b16 %v3647
        %v3668 = vunpack.c.l.b16 %v3648
        %v3669 = vpack.c.b16 %v3666, %v3665
        %v3670 = vpack.c.b16 %v3668, %v3667
        %v3674 = vsel %vm616, %v3649, 0
        %v3677 = vsel %vm616, %v3650, 0
        %v3680 = vsel %vm616, %v3651, 0
        %v3683 = vsel %vm616, %v3652, 0
        %3685 = vmatprep.subr.bf16.mxu0 0
        %3686 = vmatpush1.bf16.msra.mxu0 0
        %3687 = vmatprep.subr.bf16.mxu0 0
        %3688 = vmatpush1.bf16.msra.mxu0 0
        %3689 = vmatprep.subr.bf16.mxu0 0
        %3690 = vmatpush1.bf16.msra.mxu0 0
        %3691 = vmatprep.subr.bf16.mxu0 0
        %3692 = vmatpush1.bf16.msra.mxu0 0
        %3693 = vmatprep.subr.bf16.mxu0 0
        %3694 = vmatpush1.bf16.msra.mxu0 0
        %3695 = vmatprep.subr.bf16.mxu0 0
        %3696 = vmatpush1.bf16.msra.mxu0 0
        %3697 = vmatprep.subr.bf16.mxu0 0
        %3698 = vmatpush1.bf16.msra.mxu0 %v3670
        %3699 = vmatprep.subr.bf16.mxu0 0
        %3700 = vmatpush1.bf16.msra.mxu0 %v3669
        %3701 = vmatprep.subr.bf16.mxu0 0
        %3702 = vmatpush2.bf16.msra.mxu0 0
        %3703 = vmatprep.subr.bf16.mxu0 0
        %3704 = vmatpush2.bf16.msra.mxu0 0
        %3705 = vmatprep.subr.bf16.mxu0 0
        %3706 = vmatpush2.bf16.msra.mxu0 0
        %3707 = vmatprep.subr.bf16.mxu0 0
        %3708 = vmatpush2.bf16.msra.mxu0 0
        %3709 = vmatprep.subr.bf16.mxu0 0
        %3710 = vmatpush2.bf16.msra.mxu0 0
        %3711 = vmatprep.subr.bf16.mxu0 0
        %3712 = vmatpush2.bf16.msra.mxu0 0
        %3713 = vmatprep.subr.bf16.mxu0 0
        %3714 = vmatpush2.bf16.msra.mxu0 0
        %3715 = vmatprep.subr.bf16.mxu0 0
        %3716 = vmatpush2.bf16.msra.mxu0 0
        %3717 = vmatprep.mubr.bf16.mxu0 0
        %3718 = vmatmul.mubr.bf16.gmra.mxu0 %v3674
        %v3719 = vpop.f32.mrf.mxu0
        %v3720 = vadd.f32 %v3659, %v3719
        %v3721 = vpop.f32.mrf.mxu0
        %v3722 = vpop.f32.mrf.mxu0
        %v3723 = vadd.f32 %v3659, %v3722
        %v3724 = vpop.f32.mrf.mxu0
        %3725 = vmatprep.mubr.bf16.mxu0 0
        %3726 = vmatmul.mubr.bf16.gmra.mxu0 %v3677
        %v3727 = vpop.f32.mrf.mxu0
        %v3728 = vadd.f32 %v3659, %v3727
        %v3729 = vpop.f32.mrf.mxu0
        %v3730 = vpop.f32.mrf.mxu0
        %v3731 = vadd.f32 %v3659, %v3730
        %v3732 = vpop.f32.mrf.mxu0
        %3733 = vmatprep.mubr.bf16.mxu0 0
        %3734 = vmatmul.mubr.bf16.gmra.mxu0 %v3680
        %v3735 = vpop.f32.mrf.mxu0
        %v3736 = vadd.f32 %v3659, %v3735
        %v3737 = vpop.f32.mrf.mxu0
        %v3738 = vpop.f32.mrf.mxu0
        %v3739 = vadd.f32 %v3659, %v3738
        %v3740 = vpop.f32.mrf.mxu0
        %3741 = vmatprep.mubr.bf16.mxu0 0
        %3742 = vmatmul.mubr.bf16.gmra.mxu0 %v3683
        %v3743 = vpop.f32.mrf.mxu0
        %v3744 = vadd.f32 %v3659, %v3743
        %v3745 = vpop.f32.mrf.mxu0
        %v3746 = vpop.f32.mrf.mxu0
        %v3747 = vadd.f32 %v3659, %v3746
        %v3748 = vpop.f32.mrf.mxu0
        %3749 = vdwg.mxu0
        %v3750 = vadd.f32 %v3720, %v2995
        %v3751 = vadd.f32 %v3723, %v2996
        %v3752 = vadd.f32 %v3728, %v2997
        %v3753 = vadd.f32 %v3731, %v2998
        %v3754 = vadd.f32 %v3736, %v2999
        %v3755 = vadd.f32 %v3739, %v3000
        %v3756 = vadd.f32 %v3744, %v3001
        %v3757 = vadd.f32 %v3747, %v3002
        %v3758 = vmul.f32 %v3750, 0.70710677
        %v3759 = vmul.f32 %v3751, 0.70710677
        %v3760 = vmul.f32 %v3752, 0.70710677
        %v3761 = vmul.f32 %v3753, 0.70710677
        %v3762 = vmul.f32 %v3754, 0.70710677
        %v3763 = vmul.f32 %v3755, 0.70710677
        %v3764 = vmul.f32 %v3756, 0.70710677
        %v3765 = vmul.f32 %v3757, 0.70710677
        %v3767 = vsel %vm616, %v3758, 0
        %v3770 = vsel %vm616, %v2649, 0
        %v3773 = vsel %vm616, %v2652, 0
        %3775 = vmatprep.subr.mxu0 0.0
        %3776 = vmatpush1.xpose.msra.mxu0 0.0
        %3777 = vmatprep.subr.mxu0 0.0
        %3778 = vmatpush1.xpose.msra.mxu0 0.0
        %3779 = vmatprep.subr.mxu0 0.0
        %3780 = vmatpush1.xpose.msra.mxu0 0.0
        %3781 = vmatprep.subr.mxu0 0.0
        %3782 = vmatpush1.xpose.msra.mxu0 0.0
        %3783 = vmatprep.subr.mxu0 0.0
        %3784 = vmatpush1.xpose.msra.mxu0 0.0
        %3785 = vmatprep.subr.mxu0 0.0
        %3786 = vmatpush1.xpose.msra.mxu0 0.0
        %3787 = vmatprep.subr.mxu0 0.0
        %3788 = vmatpush1.xpose.msra.mxu0 0.0
        %3789 = vmatprep.subr.mxu0 0.0
        %3790 = vmatpush1.xpose.msra.mxu0 0.0
        %3791 = vmatprep.subr.mxu0 0.0
        %3792 = vmatpush1.xpose.msra.mxu0 0.0
        %3793 = vmatprep.subr.mxu0 0.0
        %3794 = vmatpush1.xpose.msra.mxu0 0.0
        %3795 = vmatprep.subr.mxu0 0.0
        %3796 = vmatpush1.xpose.msra.mxu0 0.0
        %3797 = vmatprep.subr.mxu0 0.0
        %3798 = vmatpush1.xpose.msra.mxu0 0.0
        %3799 = vmatprep.subr.mxu0 0.0
        %3800 = vmatpush1.xpose.msra.mxu0 0.0
        %3801 = vmatprep.subr.mxu0 0.0
        %3802 = vmatpush1.xpose.msra.mxu0 0.0
        %3803 = vmatprep.subr.mxu0 0.0
        %3804 = vmatpush1.xpose.msra.mxu0 %v3773
        %3805 = vmatprep.subr.mxu0 0.0
        %3806 = vmatpush1.xpose.msra.mxu0 %v3770
        %3807 = vmatprep.subr.mxu0 0.0
        %3808 = vmatpush2.xpose.msra.mxu0 0.0
        %3809 = vmatprep.subr.mxu0 0.0
        %3810 = vmatpush2.xpose.msra.mxu0 0.0
        %3811 = vmatprep.subr.mxu0 0.0
        %3812 = vmatpush2.xpose.msra.mxu0 0.0
        %3813 = vmatprep.subr.mxu0 0.0
        %3814 = vmatpush2.xpose.msra.mxu0 0.0
        %3815 = vmatprep.subr.mxu0 0.0
        %3816 = vmatpush2.xpose.msra.mxu0 0.0
        %3817 = vmatprep.subr.mxu0 0.0
        %3818 = vmatpush2.xpose.msra.mxu0 0.0
        %3819 = vmatprep.subr.mxu0 0.0
        %3820 = vmatpush2.xpose.msra.mxu0 0.0
        %3821 = vmatprep.subr.mxu0 0.0
        %3822 = vmatpush2.xpose.msra.mxu0 0.0
        %3823 = vmatprep.subr.mxu0 0.0
        %3824 = vmatpush2.xpose.msra.mxu0 0.0
        %3825 = vmatprep.subr.mxu0 0.0
        %3826 = vmatpush2.xpose.msra.mxu0 0.0
        %3827 = vmatprep.subr.mxu0 0.0
        %3828 = vmatpush2.xpose.msra.mxu0 0.0
        %3829 = vmatprep.subr.mxu0 0.0
        %3830 = vmatpush2.xpose.msra.mxu0 0.0
        %3831 = vmatprep.subr.mxu0 0.0
        %3832 = vmatpush2.xpose.msra.mxu0 0.0
        %3833 = vmatprep.subr.mxu0 0.0
        %3834 = vmatpush2.xpose.msra.mxu0 0.0
        %3835 = vmatprep.subr.mxu0 0.0
        %3836 = vmatpush2.xpose.msra.mxu0 0.0
        %3837 = vmatprep.subr.mxu0 0.0
        %3838 = vmatpush2.xpose.msra.mxu0 0.0
        %3839 = vmatprep.mubr.f32.mxu0 0.0
        %3840 = vmatmul.mubr.f32.gmra.mxu0 %v3767
        %v3841 = vpop.f32.mrf.mxu0
        %v3842 = vadd.f32 0.0, %v3841
        %v3843 = vpop.f32.mrf.mxu0
        %3844 = vdwg.mxu0
        %v3846 = vsel %vm616, %v3759, 0
        %v3849 = vsel %vm616, %v2657, 0
        %v3852 = vsel %vm616, %v2660, 0
        %3854 = vmatprep.subr.mxu0 0.0
        %3855 = vmatpush1.xpose.msra.mxu0 0.0
        %3856 = vmatprep.subr.mxu0 0.0
        %3857 = vmatpush1.xpose.msra.mxu0 0.0
        %3858 = vmatprep.subr.mxu0 0.0
        %3859 = vmatpush1.xpose.msra.mxu0 0.0
        %3860 = vmatprep.subr.mxu0 0.0
        %3861 = vmatpush1.xpose.msra.mxu0 0.0
        %3862 = vmatprep.subr.mxu0 0.0
        %3863 = vmatpush1.xpose.msra.mxu0 0.0
        %3864 = vmatprep.subr.mxu0 0.0
        %3865 = vmatpush1.xpose.msra.mxu0 0.0
        %3866 = vmatprep.subr.mxu0 0.0
        %3867 = vmatpush1.xpose.msra.mxu0 0.0
        %3868 = vmatprep.subr.mxu0 0.0
        %3869 = vmatpush1.xpose.msra.mxu0 0.0
        %3870 = vmatprep.subr.mxu0 0.0
        %3871 = vmatpush1.xpose.msra.mxu0 0.0
        %3872 = vmatprep.subr.mxu0 0.0
        %3873 = vmatpush1.xpose.msra.mxu0 0.0
        %3874 = vmatprep.subr.mxu0 0.0
        %3875 = vmatpush1.xpose.msra.mxu0 0.0
        %3876 = vmatprep.subr.mxu0 0.0
        %3877 = vmatpush1.xpose.msra.mxu0 0.0
        %3878 = vmatprep.subr.mxu0 0.0
        %3879 = vmatpush1.xpose.msra.mxu0 0.0
        %3880 = vmatprep.subr.mxu0 0.0
        %3881 = vmatpush1.xpose.msra.mxu0 0.0
        %3882 = vmatprep.subr.mxu0 0.0
        %3883 = vmatpush1.xpose.msra.mxu0 %v3852
        %3884 = vmatprep.subr.mxu0 0.0
        %3885 = vmatpush1.xpose.msra.mxu0 %v3849
        %3886 = vmatprep.subr.mxu0 0.0
        %3887 = vmatpush2.xpose.msra.mxu0 0.0
        %3888 = vmatprep.subr.mxu0 0.0
        %3889 = vmatpush2.xpose.msra.mxu0 0.0
        %3890 = vmatprep.subr.mxu0 0.0
        %3891 = vmatpush2.xpose.msra.mxu0 0.0
        %3892 = vmatprep.subr.mxu0 0.0
        %3893 = vmatpush2.xpose.msra.mxu0 0.0
        %3894 = vmatprep.subr.mxu0 0.0
        %3895 = vmatpush2.xpose.msra.mxu0 0.0
        %3896 = vmatprep.subr.mxu0 0.0
        %3897 = vmatpush2.xpose.msra.mxu0 0.0
        %3898 = vmatprep.subr.mxu0 0.0
        %3899 = vmatpush2.xpose.msra.mxu0 0.0
        %3900 = vmatprep.subr.mxu0 0.0
        %3901 = vmatpush2.xpose.msra.mxu0 0.0
        %3902 = vmatprep.subr.mxu0 0.0
        %3903 = vmatpush2.xpose.msra.mxu0 0.0
        %3904 = vmatprep.subr.mxu0 0.0
        %3905 = vmatpush2.xpose.msra.mxu0 0.0
        %3906 = vmatprep.subr.mxu0 0.0
        %3907 = vmatpush2.xpose.msra.mxu0 0.0
        %3908 = vmatprep.subr.mxu0 0.0
        %3909 = vmatpush2.xpose.msra.mxu0 0.0
        %3910 = vmatprep.subr.mxu0 0.0
        %3911 = vmatpush2.xpose.msra.mxu0 0.0
        %3912 = vmatprep.subr.mxu0 0.0
        %3913 = vmatpush2.xpose.msra.mxu0 0.0
        %3914 = vmatprep.subr.mxu0 0.0
        %3915 = vmatpush2.xpose.msra.mxu0 0.0
        %3916 = vmatprep.subr.mxu0 0.0
        %3917 = vmatpush2.xpose.msra.mxu0 0.0
        %3918 = vmatprep.mubr.f32.mxu0 0.0
        %3919 = vmatmul.mubr.f32.gmra.mxu0 %v3846
        %v3920 = vpop.f32.mrf.mxu0
        %v3921 = vadd.f32 0.0, %v3920
        %v3922 = vpop.f32.mrf.mxu0
        %3923 = vdwg.mxu0
        %v3925 = vsel %vm616, %v3760, 0
        %v3928 = vsel %vm616, %v2665, 0
        %v3931 = vsel %vm616, %v2668, 0
        %3933 = vmatprep.subr.mxu0 0.0
        %3934 = vmatpush1.xpose.msra.mxu0 0.0
        %3935 = vmatprep.subr.mxu0 0.0
        %3936 = vmatpush1.xpose.msra.mxu0 0.0
        %3937 = vmatprep.subr.mxu0 0.0
        %3938 = vmatpush1.xpose.msra.mxu0 0.0
        %3939 = vmatprep.subr.mxu0 0.0
        %3940 = vmatpush1.xpose.msra.mxu0 0.0
        %3941 = vmatprep.subr.mxu0 0.0
        %3942 = vmatpush1.xpose.msra.mxu0 0.0
        %3943 = vmatprep.subr.mxu0 0.0
        %3944 = vmatpush1.xpose.msra.mxu0 0.0
        %3945 = vmatprep.subr.mxu0 0.0
        %3946 = vmatpush1.xpose.msra.mxu0 0.0
        %3947 = vmatprep.subr.mxu0 0.0
        %3948 = vmatpush1.xpose.msra.mxu0 0.0
        %3949 = vmatprep.subr.mxu0 0.0
        %3950 = vmatpush1.xpose.msra.mxu0 0.0
        %3951 = vmatprep.subr.mxu0 0.0
        %3952 = vmatpush1.xpose.msra.mxu0 0.0
        %3953 = vmatprep.subr.mxu0 0.0
        %3954 = vmatpush1.xpose.msra.mxu0 0.0
        %3955 = vmatprep.subr.mxu0 0.0
        %3956 = vmatpush1.xpose.msra.mxu0 0.0
        %3957 = vmatprep.subr.mxu0 0.0
        %3958 = vmatpush1.xpose.msra.mxu0 0.0
        %3959 = vmatprep.subr.mxu0 0.0
        %3960 = vmatpush1.xpose.msra.mxu0 0.0
        %3961 = vmatprep.subr.mxu0 0.0
        %3962 = vmatpush1.xpose.msra.mxu0 %v3931
        %3963 = vmatprep.subr.mxu0 0.0
        %3964 = vmatpush1.xpose.msra.mxu0 %v3928
        %3965 = vmatprep.subr.mxu0 0.0
        %3966 = vmatpush2.xpose.msra.mxu0 0.0
        %3967 = vmatprep.subr.mxu0 0.0
        %3968 = vmatpush2.xpose.msra.mxu0 0.0
        %3969 = vmatprep.subr.mxu0 0.0
        %3970 = vmatpush2.xpose.msra.mxu0 0.0
        %3971 = vmatprep.subr.mxu0 0.0
        %3972 = vmatpush2.xpose.msra.mxu0 0.0
        %3973 = vmatprep.subr.mxu0 0.0
        %3974 = vmatpush2.xpose.msra.mxu0 0.0
        %3975 = vmatprep.subr.mxu0 0.0
        %3976 = vmatpush2.xpose.msra.mxu0 0.0
        %3977 = vmatprep.subr.mxu0 0.0
        %3978 = vmatpush2.xpose.msra.mxu0 0.0
        %3979 = vmatprep.subr.mxu0 0.0
        %3980 = vmatpush2.xpose.msra.mxu0 0.0
        %3981 = vmatprep.subr.mxu0 0.0
        %3982 = vmatpush2.xpose.msra.mxu0 0.0
        %3983 = vmatprep.subr.mxu0 0.0
        %3984 = vmatpush2.xpose.msra.mxu0 0.0
        %3985 = vmatprep.subr.mxu0 0.0
        %3986 = vmatpush2.xpose.msra.mxu0 0.0
        %3987 = vmatprep.subr.mxu0 0.0
        %3988 = vmatpush2.xpose.msra.mxu0 0.0
        %3989 = vmatprep.subr.mxu0 0.0
        %3990 = vmatpush2.xpose.msra.mxu0 0.0
        %3991 = vmatprep.subr.mxu0 0.0
        %3992 = vmatpush2.xpose.msra.mxu0 0.0
        %3993 = vmatprep.subr.mxu0 0.0
        %3994 = vmatpush2.xpose.msra.mxu0 0.0
        %3995 = vmatprep.subr.mxu0 0.0
        %3996 = vmatpush2.xpose.msra.mxu0 0.0
        %3997 = vmatprep.mubr.f32.mxu0 0.0
        %3998 = vmatmul.mubr.f32.gmra.mxu0 %v3925
        %v3999 = vpop.f32.mrf.mxu0
        %v4000 = vadd.f32 0.0, %v3999
        %v4001 = vpop.f32.mrf.mxu0
        %4002 = vdwg.mxu0
        %v4004 = vsel %vm616, %v3761, 0
        %v4007 = vsel %vm616, %v2673, 0
        %v4010 = vsel %vm616, %v2676, 0
        %4012 = vmatprep.subr.mxu0 0.0
        %4013 = vmatpush1.xpose.msra.mxu0 0.0
        %4014 = vmatprep.subr.mxu0 0.0
        %4015 = vmatpush1.xpose.msra.mxu0 0.0
        %4016 = vmatprep.subr.mxu0 0.0
        %4017 = vmatpush1.xpose.msra.mxu0 0.0
        %4018 = vmatprep.subr.mxu0 0.0
        %4019 = vmatpush1.xpose.msra.mxu0 0.0
        %4020 = vmatprep.subr.mxu0 0.0
        %4021 = vmatpush1.xpose.msra.mxu0 0.0
        %4022 = vmatprep.subr.mxu0 0.0
        %4023 = vmatpush1.xpose.msra.mxu0 0.0
        %4024 = vmatprep.subr.mxu0 0.0
        %4025 = vmatpush1.xpose.msra.mxu0 0.0
        %4026 = vmatprep.subr.mxu0 0.0
        %4027 = vmatpush1.xpose.msra.mxu0 0.0
        %4028 = vmatprep.subr.mxu0 0.0
        %4029 = vmatpush1.xpose.msra.mxu0 0.0
        %4030 = vmatprep.subr.mxu0 0.0
        %4031 = vmatpush1.xpose.msra.mxu0 0.0
        %4032 = vmatprep.subr.mxu0 0.0
        %4033 = vmatpush1.xpose.msra.mxu0 0.0
        %4034 = vmatprep.subr.mxu0 0.0
        %4035 = vmatpush1.xpose.msra.mxu0 0.0
        %4036 = vmatprep.subr.mxu0 0.0
        %4037 = vmatpush1.xpose.msra.mxu0 0.0
        %4038 = vmatprep.subr.mxu0 0.0
        %4039 = vmatpush1.xpose.msra.mxu0 0.0
        %4040 = vmatprep.subr.mxu0 0.0
        %4041 = vmatpush1.xpose.msra.mxu0 %v4010
        %4042 = vmatprep.subr.mxu0 0.0
        %4043 = vmatpush1.xpose.msra.mxu0 %v4007
        %4044 = vmatprep.subr.mxu0 0.0
        %4045 = vmatpush2.xpose.msra.mxu0 0.0
        %4046 = vmatprep.subr.mxu0 0.0
        %4047 = vmatpush2.xpose.msra.mxu0 0.0
        %4048 = vmatprep.subr.mxu0 0.0
        %4049 = vmatpush2.xpose.msra.mxu0 0.0
        %4050 = vmatprep.subr.mxu0 0.0
        %4051 = vmatpush2.xpose.msra.mxu0 0.0
        %4052 = vmatprep.subr.mxu0 0.0
        %4053 = vmatpush2.xpose.msra.mxu0 0.0
        %4054 = vmatprep.subr.mxu0 0.0
        %4055 = vmatpush2.xpose.msra.mxu0 0.0
        %4056 = vmatprep.subr.mxu0 0.0
        %4057 = vmatpush2.xpose.msra.mxu0 0.0
        %4058 = vmatprep.subr.mxu0 0.0
        %4059 = vmatpush2.xpose.msra.mxu0 0.0
        %4060 = vmatprep.subr.mxu0 0.0
        %4061 = vmatpush2.xpose.msra.mxu0 0.0
        %4062 = vmatprep.subr.mxu0 0.0
        %4063 = vmatpush2.xpose.msra.mxu0 0.0
        %4064 = vmatprep.subr.mxu0 0.0
        %4065 = vmatpush2.xpose.msra.mxu0 0.0
        %4066 = vmatprep.subr.mxu0 0.0
        %4067 = vmatpush2.xpose.msra.mxu0 0.0
        %4068 = vmatprep.subr.mxu0 0.0
        %4069 = vmatpush2.xpose.msra.mxu0 0.0
        %4070 = vmatprep.subr.mxu0 0.0
        %4071 = vmatpush2.xpose.msra.mxu0 0.0
        %4072 = vmatprep.subr.mxu0 0.0
        %4073 = vmatpush2.xpose.msra.mxu0 0.0
        %4074 = vmatprep.subr.mxu0 0.0
        %4075 = vmatpush2.xpose.msra.mxu0 0.0
        %4076 = vmatprep.mubr.f32.mxu0 0.0
        %4077 = vmatmul.mubr.f32.gmra.mxu0 %v4004
        %v4078 = vpop.f32.mrf.mxu0
        %v4079 = vadd.f32 0.0, %v4078
        %v4080 = vpop.f32.mrf.mxu0
        %4081 = vdwg.mxu0
        %v4083 = vsel %vm616, %v3762, 0
        %v4086 = vsel %vm616, %v2681, 0
        %v4089 = vsel %vm616, %v2684, 0
        %4091 = vmatprep.subr.mxu0 0.0
        %4092 = vmatpush1.xpose.msra.mxu0 0.0
        %4093 = vmatprep.subr.mxu0 0.0
        %4094 = vmatpush1.xpose.msra.mxu0 0.0
        %4095 = vmatprep.subr.mxu0 0.0
        %4096 = vmatpush1.xpose.msra.mxu0 0.0
        %4097 = vmatprep.subr.mxu0 0.0
        %4098 = vmatpush1.xpose.msra.mxu0 0.0
        %4099 = vmatprep.subr.mxu0 0.0
        %4100 = vmatpush1.xpose.msra.mxu0 0.0
        %4101 = vmatprep.subr.mxu0 0.0
        %4102 = vmatpush1.xpose.msra.mxu0 0.0
        %4103 = vmatprep.subr.mxu0 0.0
        %4104 = vmatpush1.xpose.msra.mxu0 0.0
        %4105 = vmatprep.subr.mxu0 0.0
        %4106 = vmatpush1.xpose.msra.mxu0 0.0
        %4107 = vmatprep.subr.mxu0 0.0
        %4108 = vmatpush1.xpose.msra.mxu0 0.0
        %4109 = vmatprep.subr.mxu0 0.0
        %4110 = vmatpush1.xpose.msra.mxu0 0.0
        %4111 = vmatprep.subr.mxu0 0.0
        %4112 = vmatpush1.xpose.msra.mxu0 0.0
        %4113 = vmatprep.subr.mxu0 0.0
        %4114 = vmatpush1.xpose.msra.mxu0 0.0
        %4115 = vmatprep.subr.mxu0 0.0
        %4116 = vmatpush1.xpose.msra.mxu0 0.0
        %4117 = vmatprep.subr.mxu0 0.0
        %4118 = vmatpush1.xpose.msra.mxu0 0.0
        %4119 = vmatprep.subr.mxu0 0.0
        %4120 = vmatpush1.xpose.msra.mxu0 %v4089
        %4121 = vmatprep.subr.mxu0 0.0
        %4122 = vmatpush1.xpose.msra.mxu0 %v4086
        %4123 = vmatprep.subr.mxu0 0.0
        %4124 = vmatpush2.xpose.msra.mxu0 0.0
        %4125 = vmatprep.subr.mxu0 0.0
        %4126 = vmatpush2.xpose.msra.mxu0 0.0
        %4127 = vmatprep.subr.mxu0 0.0
        %4128 = vmatpush2.xpose.msra.mxu0 0.0
        %4129 = vmatprep.subr.mxu0 0.0
        %4130 = vmatpush2.xpose.msra.mxu0 0.0
        %4131 = vmatprep.subr.mxu0 0.0
        %4132 = vmatpush2.xpose.msra.mxu0 0.0
        %4133 = vmatprep.subr.mxu0 0.0
        %4134 = vmatpush2.xpose.msra.mxu0 0.0
        %4135 = vmatprep.subr.mxu0 0.0
        %4136 = vmatpush2.xpose.msra.mxu0 0.0
        %4137 = vmatprep.subr.mxu0 0.0
        %4138 = vmatpush2.xpose.msra.mxu0 0.0
        %4139 = vmatprep.subr.mxu0 0.0
        %4140 = vmatpush2.xpose.msra.mxu0 0.0
        %4141 = vmatprep.subr.mxu0 0.0
        %4142 = vmatpush2.xpose.msra.mxu0 0.0
        %4143 = vmatprep.subr.mxu0 0.0
        %4144 = vmatpush2.xpose.msra.mxu0 0.0
        %4145 = vmatprep.subr.mxu0 0.0
        %4146 = vmatpush2.xpose.msra.mxu0 0.0
        %4147 = vmatprep.subr.mxu0 0.0
        %4148 = vmatpush2.xpose.msra.mxu0 0.0
        %4149 = vmatprep.subr.mxu0 0.0
        %4150 = vmatpush2.xpose.msra.mxu0 0.0
        %4151 = vmatprep.subr.mxu0 0.0
        %4152 = vmatpush2.xpose.msra.mxu0 0.0
        %4153 = vmatprep.subr.mxu0 0.0
        %4154 = vmatpush2.xpose.msra.mxu0 0.0
        %4155 = vmatprep.mubr.f32.mxu0 0.0
        %4156 = vmatmul.mubr.f32.gmra.mxu0 %v4083
        %v4157 = vpop.f32.mrf.mxu0
        %v4158 = vadd.f32 0.0, %v4157
        %v4159 = vpop.f32.mrf.mxu0
        %4160 = vdwg.mxu0
        %v4162 = vsel %vm616, %v3763, 0
        %v4165 = vsel %vm616, %v2689, 0
        %v4168 = vsel %vm616, %v2692, 0
        %4170 = vmatprep.subr.mxu0 0.0
        %4171 = vmatpush1.xpose.msra.mxu0 0.0
        %4172 = vmatprep.subr.mxu0 0.0
        %4173 = vmatpush1.xpose.msra.mxu0 0.0
        %4174 = vmatprep.subr.mxu0 0.0
        %4175 = vmatpush1.xpose.msra.mxu0 0.0
        %4176 = vmatprep.subr.mxu0 0.0
        %4177 = vmatpush1.xpose.msra.mxu0 0.0
        %4178 = vmatprep.subr.mxu0 0.0
        %4179 = vmatpush1.xpose.msra.mxu0 0.0
        %4180 = vmatprep.subr.mxu0 0.0
        %4181 = vmatpush1.xpose.msra.mxu0 0.0
        %4182 = vmatprep.subr.mxu0 0.0
        %4183 = vmatpush1.xpose.msra.mxu0 0.0
        %4184 = vmatprep.subr.mxu0 0.0
        %4185 = vmatpush1.xpose.msra.mxu0 0.0
        %4186 = vmatprep.subr.mxu0 0.0
        %4187 = vmatpush1.xpose.msra.mxu0 0.0
        %4188 = vmatprep.subr.mxu0 0.0
        %4189 = vmatpush1.xpose.msra.mxu0 0.0
        %4190 = vmatprep.subr.mxu0 0.0
        %4191 = vmatpush1.xpose.msra.mxu0 0.0
        %4192 = vmatprep.subr.mxu0 0.0
        %4193 = vmatpush1.xpose.msra.mxu0 0.0
        %4194 = vmatprep.subr.mxu0 0.0
        %4195 = vmatpush1.xpose.msra.mxu0 0.0
        %4196 = vmatprep.subr.mxu0 0.0
        %4197 = vmatpush1.xpose.msra.mxu0 0.0
        %4198 = vmatprep.subr.mxu0 0.0
        %4199 = vmatpush1.xpose.msra.mxu0 %v4168
        %4200 = vmatprep.subr.mxu0 0.0
        %4201 = vmatpush1.xpose.msra.mxu0 %v4165
        %4202 = vmatprep.subr.mxu0 0.0
        %4203 = vmatpush2.xpose.msra.mxu0 0.0
        %4204 = vmatprep.subr.mxu0 0.0
        %4205 = vmatpush2.xpose.msra.mxu0 0.0
        %4206 = vmatprep.subr.mxu0 0.0
        %4207 = vmatpush2.xpose.msra.mxu0 0.0
        %4208 = vmatprep.subr.mxu0 0.0
        %4209 = vmatpush2.xpose.msra.mxu0 0.0
        %4210 = vmatprep.subr.mxu0 0.0
        %4211 = vmatpush2.xpose.msra.mxu0 0.0
        %4212 = vmatprep.subr.mxu0 0.0
        %4213 = vmatpush2.xpose.msra.mxu0 0.0
        %4214 = vmatprep.subr.mxu0 0.0
        %4215 = vmatpush2.xpose.msra.mxu0 0.0
        %4216 = vmatprep.subr.mxu0 0.0
        %4217 = vmatpush2.xpose.msra.mxu0 0.0
        %4218 = vmatprep.subr.mxu0 0.0
        %4219 = vmatpush2.xpose.msra.mxu0 0.0
        %4220 = vmatprep.subr.mxu0 0.0
        %4221 = vmatpush2.xpose.msra.mxu0 0.0
        %4222 = vmatprep.subr.mxu0 0.0
        %4223 = vmatpush2.xpose.msra.mxu0 0.0
        %4224 = vmatprep.subr.mxu0 0.0
        %4225 = vmatpush2.xpose.msra.mxu0 0.0
        %4226 = vmatprep.subr.mxu0 0.0
        %4227 = vmatpush2.xpose.msra.mxu0 0.0
        %4228 = vmatprep.subr.mxu0 0.0
        %4229 = vmatpush2.xpose.msra.mxu0 0.0
        %4230 = vmatprep.subr.mxu0 0.0
        %4231 = vmatpush2.xpose.msra.mxu0 0.0
        %4232 = vmatprep.subr.mxu0 0.0
        %4233 = vmatpush2.xpose.msra.mxu0 0.0
        %4234 = vmatprep.mubr.f32.mxu0 0.0
        %4235 = vmatmul.mubr.f32.gmra.mxu0 %v4162
        %v4236 = vpop.f32.mrf.mxu0
        %v4237 = vadd.f32 0.0, %v4236
        %v4238 = vpop.f32.mrf.mxu0
        %4239 = vdwg.mxu0
        %v4241 = vsel %vm616, %v3764, 0
        %v4244 = vsel %vm616, %v2697, 0
        %v4247 = vsel %vm616, %v2700, 0
        %4249 = vmatprep.subr.mxu0 0.0
        %4250 = vmatpush1.xpose.msra.mxu0 0.0
        %4251 = vmatprep.subr.mxu0 0.0
        %4252 = vmatpush1.xpose.msra.mxu0 0.0
        %4253 = vmatprep.subr.mxu0 0.0
        %4254 = vmatpush1.xpose.msra.mxu0 0.0
        %4255 = vmatprep.subr.mxu0 0.0
        %4256 = vmatpush1.xpose.msra.mxu0 0.0
        %4257 = vmatprep.subr.mxu0 0.0
        %4258 = vmatpush1.xpose.msra.mxu0 0.0
        %4259 = vmatprep.subr.mxu0 0.0
        %4260 = vmatpush1.xpose.msra.mxu0 0.0
        %4261 = vmatprep.subr.mxu0 0.0
        %4262 = vmatpush1.xpose.msra.mxu0 0.0
        %4263 = vmatprep.subr.mxu0 0.0
        %4264 = vmatpush1.xpose.msra.mxu0 0.0
        %4265 = vmatprep.subr.mxu0 0.0
        %4266 = vmatpush1.xpose.msra.mxu0 0.0
        %4267 = vmatprep.subr.mxu0 0.0
        %4268 = vmatpush1.xpose.msra.mxu0 0.0
        %4269 = vmatprep.subr.mxu0 0.0
        %4270 = vmatpush1.xpose.msra.mxu0 0.0
        %4271 = vmatprep.subr.mxu0 0.0
        %4272 = vmatpush1.xpose.msra.mxu0 0.0
        %4273 = vmatprep.subr.mxu0 0.0
        %4274 = vmatpush1.xpose.msra.mxu0 0.0
        %4275 = vmatprep.subr.mxu0 0.0
        %4276 = vmatpush1.xpose.msra.mxu0 0.0
        %4277 = vmatprep.subr.mxu0 0.0
        %4278 = vmatpush1.xpose.msra.mxu0 %v4247
        %4279 = vmatprep.subr.mxu0 0.0
        %4280 = vmatpush1.xpose.msra.mxu0 %v4244
        %4281 = vmatprep.subr.mxu0 0.0
        %4282 = vmatpush2.xpose.msra.mxu0 0.0
        %4283 = vmatprep.subr.mxu0 0.0
        %4284 = vmatpush2.xpose.msra.mxu0 0.0
        %4285 = vmatprep.subr.mxu0 0.0
        %4286 = vmatpush2.xpose.msra.mxu0 0.0
        %4287 = vmatprep.subr.mxu0 0.0
        %4288 = vmatpush2.xpose.msra.mxu0 0.0
        %4289 = vmatprep.subr.mxu0 0.0
        %4290 = vmatpush2.xpose.msra.mxu0 0.0
        %4291 = vmatprep.subr.mxu0 0.0
        %4292 = vmatpush2.xpose.msra.mxu0 0.0
        %4293 = vmatprep.subr.mxu0 0.0
        %4294 = vmatpush2.xpose.msra.mxu0 0.0
        %4295 = vmatprep.subr.mxu0 0.0
        %4296 = vmatpush2.xpose.msra.mxu0 0.0
        %4297 = vmatprep.subr.mxu0 0.0
        %4298 = vmatpush2.xpose.msra.mxu0 0.0
        %4299 = vmatprep.subr.mxu0 0.0
        %4300 = vmatpush2.xpose.msra.mxu0 0.0
        %4301 = vmatprep.subr.mxu0 0.0
        %4302 = vmatpush2.xpose.msra.mxu0 0.0
        %4303 = vmatprep.subr.mxu0 0.0
        %4304 = vmatpush2.xpose.msra.mxu0 0.0
        %4305 = vmatprep.subr.mxu0 0.0
        %4306 = vmatpush2.xpose.msra.mxu0 0.0
        %4307 = vmatprep.subr.mxu0 0.0
        %4308 = vmatpush2.xpose.msra.mxu0 0.0
        %4309 = vmatprep.subr.mxu0 0.0
        %4310 = vmatpush2.xpose.msra.mxu0 0.0
        %4311 = vmatprep.subr.mxu0 0.0
        %4312 = vmatpush2.xpose.msra.mxu0 0.0
        %4313 = vmatprep.mubr.f32.mxu0 0.0
        %4314 = vmatmul.mubr.f32.gmra.mxu0 %v4241
        %v4315 = vpop.f32.mrf.mxu0
        %v4316 = vadd.f32 0.0, %v4315
        %v4317 = vpop.f32.mrf.mxu0
        %4318 = vdwg.mxu0
        %v4320 = vsel %vm616, %v3765, 0
        %v4323 = vsel %vm616, %v2705, 0
        %v4326 = vsel %vm616, %v2708, 0
        %4328 = vmatprep.subr.mxu0 0.0
        %4329 = vmatpush1.xpose.msra.mxu0 0.0
        %4330 = vmatprep.subr.mxu0 0.0
        %4331 = vmatpush1.xpose.msra.mxu0 0.0
        %4332 = vmatprep.subr.mxu0 0.0
        %4333 = vmatpush1.xpose.msra.mxu0 0.0
        %4334 = vmatprep.subr.mxu0 0.0
        %4335 = vmatpush1.xpose.msra.mxu0 0.0
        %4336 = vmatprep.subr.mxu0 0.0
        %4337 = vmatpush1.xpose.msra.mxu0 0.0
        %4338 = vmatprep.subr.mxu0 0.0
        %4339 = vmatpush1.xpose.msra.mxu0 0.0
        %4340 = vmatprep.subr.mxu0 0.0
        %4341 = vmatpush1.xpose.msra.mxu0 0.0
        %4342 = vmatprep.subr.mxu0 0.0
        %4343 = vmatpush1.xpose.msra.mxu0 0.0
        %4344 = vmatprep.subr.mxu0 0.0
        %4345 = vmatpush1.xpose.msra.mxu0 0.0
        %4346 = vmatprep.subr.mxu0 0.0
        %4347 = vmatpush1.xpose.msra.mxu0 0.0
        %4348 = vmatprep.subr.mxu0 0.0
        %4349 = vmatpush1.xpose.msra.mxu0 0.0
        %4350 = vmatprep.subr.mxu0 0.0
        %4351 = vmatpush1.xpose.msra.mxu0 0.0
        %4352 = vmatprep.subr.mxu0 0.0
        %4353 = vmatpush1.xpose.msra.mxu0 0.0
        %4354 = vmatprep.subr.mxu0 0.0
        %4355 = vmatpush1.xpose.msra.mxu0 0.0
        %4356 = vmatprep.subr.mxu0 0.0
        %4357 = vmatpush1.xpose.msra.mxu0 %v4326
        %4358 = vmatprep.subr.mxu0 0.0
        %4359 = vmatpush1.xpose.msra.mxu0 %v4323
        %4360 = vmatprep.subr.mxu0 0.0
        %4361 = vmatpush2.xpose.msra.mxu0 0.0
        %4362 = vmatprep.subr.mxu0 0.0
        %4363 = vmatpush2.xpose.msra.mxu0 0.0
        %4364 = vmatprep.subr.mxu0 0.0
        %4365 = vmatpush2.xpose.msra.mxu0 0.0
        %4366 = vmatprep.subr.mxu0 0.0
        %4367 = vmatpush2.xpose.msra.mxu0 0.0
        %4368 = vmatprep.subr.mxu0 0.0
        %4369 = vmatpush2.xpose.msra.mxu0 0.0
        %4370 = vmatprep.subr.mxu0 0.0
        %4371 = vmatpush2.xpose.msra.mxu0 0.0
        %4372 = vmatprep.subr.mxu0 0.0
        %4373 = vmatpush2.xpose.msra.mxu0 0.0
        %4374 = vmatprep.subr.mxu0 0.0
        %4375 = vmatpush2.xpose.msra.mxu0 0.0
        %4376 = vmatprep.subr.mxu0 0.0
        %4377 = vmatpush2.xpose.msra.mxu0 0.0
        %4378 = vmatprep.subr.mxu0 0.0
        %4379 = vmatpush2.xpose.msra.mxu0 0.0
        %4380 = vmatprep.subr.mxu0 0.0
        %4381 = vmatpush2.xpose.msra.mxu0 0.0
        %4382 = vmatprep.subr.mxu0 0.0
        %4383 = vmatpush2.xpose.msra.mxu0 0.0
        %4384 = vmatprep.subr.mxu0 0.0
        %4385 = vmatpush2.xpose.msra.mxu0 0.0
        %4386 = vmatprep.subr.mxu0 0.0
        %4387 = vmatpush2.xpose.msra.mxu0 0.0
        %4388 = vmatprep.subr.mxu0 0.0
        %4389 = vmatpush2.xpose.msra.mxu0 0.0
        %4390 = vmatprep.subr.mxu0 0.0
        %4391 = vmatpush2.xpose.msra.mxu0 0.0
        %4392 = vmatprep.mubr.f32.mxu0 0.0
        %4393 = vmatmul.mubr.f32.gmra.mxu0 %v4320
        %v4394 = vpop.f32.mrf.mxu0
        %v4395 = vadd.f32 0.0, %v4394
        %v4396 = vpop.f32.mrf.mxu0
        %4397 = vdwg.mxu0
        %vm4398 = vcmask 130048
        %v4399 = vsel %vm4398, %v3842, -inf
        %4400 = vmax.xlane.f32.xlu0 %v4399
        %v4401 = vpop.xlane.xlu0 %4400
        %v4402 = vsel %vm4398, %v3921, -inf
        %4403 = vmax.xlane.f32.xlu0 %v4402
        %v4404 = vpop.xlane.xlu0 %4403
        %v4405 = vsel %vm4398, %v4000, -inf
        %4406 = vmax.xlane.f32.xlu0 %v4405
        %v4407 = vpop.xlane.xlu0 %4406
        %v4408 = vsel %vm4398, %v4079, -inf
        %4409 = vmax.xlane.f32.xlu0 %v4408
        %v4410 = vpop.xlane.xlu0 %4409
        %v4411 = vsel %vm4398, %v4158, -inf
        %4412 = vmax.xlane.f32.xlu0 %v4411
        %v4413 = vpop.xlane.xlu0 %4412
        %v4414 = vsel %vm4398, %v4237, -inf
        %4415 = vmax.xlane.f32.xlu0 %v4414
        %v4416 = vpop.xlane.xlu0 %4415
        %v4417 = vsel %vm4398, %v4316, -inf
        %4418 = vmax.xlane.f32.xlu0 %v4417
        %v4419 = vpop.xlane.xlu0 %4418
        %v4420 = vsel %vm4398, %v4395, -inf
        %4421 = vmax.xlane.f32.xlu0 %v4420
        %v4422 = vpop.xlane.xlu0 %4421
        %v4423 = vsub.f32 %v3842, %v4401
        %v4424 = vsub.f32 %v3921, %v4404
        %v4425 = vsub.f32 %v4000, %v4407
        %v4426 = vsub.f32 %v4079, %v4410
        %v4427 = vsub.f32 %v4158, %v4413
        %v4428 = vsub.f32 %v4237, %v4416
        %v4429 = vsub.f32 %v4316, %v4419
        %v4430 = vsub.f32 %v4395, %v4422
        %v4431 = vmul.f32 %v4423, 1.442695
        %v4432 = vpow.pop %v4431
        %v4433 = vmul.f32 %v4424, 1.442695
        %v4434 = vpow.pop %v4433
        %v4435 = vmul.f32 %v4425, 1.442695
        %v4436 = vpow.pop %v4435
        %v4437 = vmul.f32 %v4426, 1.442695
        %v4438 = vpow.pop %v4437
        %v4439 = vmul.f32 %v4427, 1.442695
        %v4440 = vpow.pop %v4439
        %v4441 = vmul.f32 %v4428, 1.442695
        %v4442 = vpow.pop %v4441
        %v4443 = vmul.f32 %v4429, 1.442695
        %v4444 = vpow.pop %v4443
        %v4445 = vmul.f32 %v4430, 1.442695
        %v4446 = vpow.pop %v4445
        %v4447 = vsel %vm4398, %v4432, 0.0
        %4448 = vadd.xlane.f32.xlu0 %v4447
        %v4449 = vpop.xlane.xlu0 %4448
        %v4450 = vsel %vm4398, %v4434, 0.0
        %4451 = vadd.xlane.f32.xlu0 %v4450
        %v4452 = vpop.xlane.xlu0 %4451
        %v4453 = vsel %vm4398, %v4436, 0.0
        %4454 = vadd.xlane.f32.xlu0 %v4453
        %v4455 = vpop.xlane.xlu0 %4454
        %v4456 = vsel %vm4398, %v4438, 0.0
        %4457 = vadd.xlane.f32.xlu0 %v4456
        %v4458 = vpop.xlane.xlu0 %4457
        %v4459 = vsel %vm4398, %v4440, 0.0
        %4460 = vadd.xlane.f32.xlu0 %v4459
        %v4461 = vpop.xlane.xlu0 %4460
        %v4462 = vsel %vm4398, %v4442, 0.0
        %4463 = vadd.xlane.f32.xlu0 %v4462
        %v4464 = vpop.xlane.xlu0 %4463
        %v4465 = vsel %vm4398, %v4444, 0.0
        %4466 = vadd.xlane.f32.xlu0 %v4465
        %v4467 = vpop.xlane.xlu0 %4466
        %v4468 = vsel %vm4398, %v4446, 0.0
        %4469 = vadd.xlane.f32.xlu0 %v4468
        %v4470 = vpop.xlane.xlu0 %4469
        %v4471 = vrcp.pop %v4449
        %v4472 = vrcp.pop %v4452
        %v4473 = vrcp.pop %v4455
        %v4474 = vrcp.pop %v4458
        %v4475 = vrcp.pop %v4461
        %v4476 = vrcp.pop %v4464
        %v4477 = vrcp.pop %v4467
        %v4478 = vrcp.pop %v4470
        %v4479 = vmul.f32 %v4432, %v4471
        %v4480 = vmul.f32 %v4434, %v4472
        %v4481 = vmul.f32 %v4436, %v4473
        %v4482 = vmul.f32 %v4438, %v4474
        %v4483 = vmul.f32 %v4440, %v4475
        %v4484 = vmul.f32 %v4442, %v4476
        %v4485 = vmul.f32 %v4444, %v4477
        %v4486 = vmul.f32 %v4446, %v4478
        %v4487 = vpack.c.bf16 %v4479, %v4479
        %v4488 = vpack.c.bf16 %v4480, %v4480
        %v4489 = vpack.c.bf16 %v4481, %v4481
        %v4490 = vpack.c.bf16 %v4482, %v4482
        %v4491 = vpack.c.bf16 %v4483, %v4483
        %v4492 = vpack.c.bf16 %v4484, %v4484
        %v4493 = vpack.c.bf16 %v4485, %v4485
        %v4494 = vpack.c.bf16 %v4486, %v4486
        %v4495 = vpack.c.bf16 %v2728, %v2727
        %v4496 = vpack.c.bf16 %v2730, %v2729
        %v4497 = vpack.c.bf16 %v2732, %v2731
        %v4498 = vpack.c.bf16 %v2734, %v2733
        %v4499 = vpack.c.bf16 %v2736, %v2735
        %v4500 = vpack.c.bf16 %v2738, %v2737
        %v4501 = vpack.c.bf16 %v2740, %v2739
        %v4502 = vpack.c.bf16 %v2742, %v2741
        %v4504 = vsel %vm4398, %v4487, 0
        %4506 = vmatprep.subr.bf16.mxu0 0
        %4507 = vmatpush1.bf16.msra.mxu0 0
        %4508 = vmatprep.subr.bf16.mxu0 0
        %4509 = vmatpush1.bf16.msra.mxu0 0
        %4510 = vmatprep.subr.bf16.mxu0 0
        %4511 = vmatpush1.bf16.msra.mxu0 0
        %4512 = vmatprep.subr.bf16.mxu0 0
        %4513 = vmatpush1.bf16.msra.mxu0 0
        %4514 = vmatprep.subr.bf16.mxu0 0
        %4515 = vmatpush1.bf16.msra.mxu0 0
        %4516 = vmatprep.subr.bf16.mxu0 0
        %4517 = vmatpush1.bf16.msra.mxu0 0
        %4518 = vmatprep.subr.bf16.mxu0 0
        %4519 = vmatpush1.bf16.msra.mxu0 0
        %4520 = vmatprep.subr.bf16.mxu0 0
        %4521 = vmatpush1.bf16.msra.mxu0 %v4495
        %4522 = vmatprep.subr.bf16.mxu0 0
        %4523 = vmatpush2.bf16.msra.mxu0 0
        %4524 = vmatprep.subr.bf16.mxu0 0
        %4525 = vmatpush2.bf16.msra.mxu0 0
        %4526 = vmatprep.subr.bf16.mxu0 0
        %4527 = vmatpush2.bf16.msra.mxu0 0
        %4528 = vmatprep.subr.bf16.mxu0 0
        %4529 = vmatpush2.bf16.msra.mxu0 0
        %4530 = vmatprep.subr.bf16.mxu0 0
        %4531 = vmatpush2.bf16.msra.mxu0 0
        %4532 = vmatprep.subr.bf16.mxu0 0
        %4533 = vmatpush2.bf16.msra.mxu0 0
        %4534 = vmatprep.subr.bf16.mxu0 0
        %4535 = vmatpush2.bf16.msra.mxu0 0
        %4536 = vmatprep.subr.bf16.mxu0 0
        %4537 = vmatpush2.bf16.msra.mxu0 0
        %4538 = vmatprep.mubr.bf16.mxu0 0
        %4539 = vmatmul.mubr.bf16.gmra.mxu0 %v4504
        %v4540 = vpop.f32.mrf.mxu0
        %v4541 = vadd.f32 0.0, %v4540
        %v4542 = vpop.f32.mrf.mxu0
        %v4543 = vpop.f32.mrf.mxu0
        %v4544 = vpop.f32.mrf.mxu0
        %4545 = vdwg.mxu0
        %v4547 = vsel %vm4398, %v4488, 0
        %4549 = vmatprep.subr.bf16.mxu0 0
        %4550 = vmatpush1.bf16.msra.mxu0 0
        %4551 = vmatprep.subr.bf16.mxu0 0
        %4552 = vmatpush1.bf16.msra.mxu0 0
        %4553 = vmatprep.subr.bf16.mxu0 0
        %4554 = vmatpush1.bf16.msra.mxu0 0
        %4555 = vmatprep.subr.bf16.mxu0 0
        %4556 = vmatpush1.bf16.msra.mxu0 0
        %4557 = vmatprep.subr.bf16.mxu0 0
        %4558 = vmatpush1.bf16.msra.mxu0 0
        %4559 = vmatprep.subr.bf16.mxu0 0
        %4560 = vmatpush1.bf16.msra.mxu0 0
        %4561 = vmatprep.subr.bf16.mxu0 0
        %4562 = vmatpush1.bf16.msra.mxu0 0
        %4563 = vmatprep.subr.bf16.mxu0 0
        %4564 = vmatpush1.bf16.msra.mxu0 %v4496
        %4565 = vmatprep.subr.bf16.mxu0 0
        %4566 = vmatpush2.bf16.msra.mxu0 0
        %4567 = vmatprep.subr.bf16.mxu0 0
        %4568 = vmatpush2.bf16.msra.mxu0 0
        %4569 = vmatprep.subr.bf16.mxu0 0
        %4570 = vmatpush2.bf16.msra.mxu0 0
        %4571 = vmatprep.subr.bf16.mxu0 0
        %4572 = vmatpush2.bf16.msra.mxu0 0
        %4573 = vmatprep.subr.bf16.mxu0 0
        %4574 = vmatpush2.bf16.msra.mxu0 0
        %4575 = vmatprep.subr.bf16.mxu0 0
        %4576 = vmatpush2.bf16.msra.mxu0 0
        %4577 = vmatprep.subr.bf16.mxu0 0
        %4578 = vmatpush2.bf16.msra.mxu0 0
        %4579 = vmatprep.subr.bf16.mxu0 0
        %4580 = vmatpush2.bf16.msra.mxu0 0
        %4581 = vmatprep.mubr.bf16.mxu0 0
        %4582 = vmatmul.mubr.bf16.gmra.mxu0 %v4547
        %v4583 = vpop.f32.mrf.mxu0
        %v4584 = vadd.f32 0.0, %v4583
        %v4585 = vpop.f32.mrf.mxu0
        %v4586 = vpop.f32.mrf.mxu0
        %v4587 = vpop.f32.mrf.mxu0
        %4588 = vdwg.mxu0
        %v4590 = vsel %vm4398, %v4489, 0
        %4592 = vmatprep.subr.bf16.mxu0 0
        %4593 = vmatpush1.bf16.msra.mxu0 0
        %4594 = vmatprep.subr.bf16.mxu0 0
        %4595 = vmatpush1.bf16.msra.mxu0 0
        %4596 = vmatprep.subr.bf16.mxu0 0
        %4597 = vmatpush1.bf16.msra.mxu0 0
        %4598 = vmatprep.subr.bf16.mxu0 0
        %4599 = vmatpush1.bf16.msra.mxu0 0
        %4600 = vmatprep.subr.bf16.mxu0 0
        %4601 = vmatpush1.bf16.msra.mxu0 0
        %4602 = vmatprep.subr.bf16.mxu0 0
        %4603 = vmatpush1.bf16.msra.mxu0 0
        %4604 = vmatprep.subr.bf16.mxu0 0
        %4605 = vmatpush1.bf16.msra.mxu0 0
        %4606 = vmatprep.subr.bf16.mxu0 0
        %4607 = vmatpush1.bf16.msra.mxu0 %v4497
        %4608 = vmatprep.subr.bf16.mxu0 0
        %4609 = vmatpush2.bf16.msra.mxu0 0
        %4610 = vmatprep.subr.bf16.mxu0 0
        %4611 = vmatpush2.bf16.msra.mxu0 0
        %4612 = vmatprep.subr.bf16.mxu0 0
        %4613 = vmatpush2.bf16.msra.mxu0 0
        %4614 = vmatprep.subr.bf16.mxu0 0
        %4615 = vmatpush2.bf16.msra.mxu0 0
        %4616 = vmatprep.subr.bf16.mxu0 0
        %4617 = vmatpush2.bf16.msra.mxu0 0
        %4618 = vmatprep.subr.bf16.mxu0 0
        %4619 = vmatpush2.bf16.msra.mxu0 0
        %4620 = vmatprep.subr.bf16.mxu0 0
        %4621 = vmatpush2.bf16.msra.mxu0 0
        %4622 = vmatprep.subr.bf16.mxu0 0
        %4623 = vmatpush2.bf16.msra.mxu0 0
        %4624 = vmatprep.mubr.bf16.mxu0 0
        %4625 = vmatmul.mubr.bf16.gmra.mxu0 %v4590
        %v4626 = vpop.f32.mrf.mxu0
        %v4627 = vadd.f32 0.0, %v4626
        %v4628 = vpop.f32.mrf.mxu0
        %v4629 = vpop.f32.mrf.mxu0
        %v4630 = vpop.f32.mrf.mxu0
        %4631 = vdwg.mxu0
        %v4633 = vsel %vm4398, %v4490, 0
        %4635 = vmatprep.subr.bf16.mxu0 0
        %4636 = vmatpush1.bf16.msra.mxu0 0
        %4637 = vmatprep.subr.bf16.mxu0 0
        %4638 = vmatpush1.bf16.msra.mxu0 0
        %4639 = vmatprep.subr.bf16.mxu0 0
        %4640 = vmatpush1.bf16.msra.mxu0 0
        %4641 = vmatprep.subr.bf16.mxu0 0
        %4642 = vmatpush1.bf16.msra.mxu0 0
        %4643 = vmatprep.subr.bf16.mxu0 0
        %4644 = vmatpush1.bf16.msra.mxu0 0
        %4645 = vmatprep.subr.bf16.mxu0 0
        %4646 = vmatpush1.bf16.msra.mxu0 0
        %4647 = vmatprep.subr.bf16.mxu0 0
        %4648 = vmatpush1.bf16.msra.mxu0 0
        %4649 = vmatprep.subr.bf16.mxu0 0
        %4650 = vmatpush1.bf16.msra.mxu0 %v4498
        %4651 = vmatprep.subr.bf16.mxu0 0
        %4652 = vmatpush2.bf16.msra.mxu0 0
        %4653 = vmatprep.subr.bf16.mxu0 0
        %4654 = vmatpush2.bf16.msra.mxu0 0
        %4655 = vmatprep.subr.bf16.mxu0 0
        %4656 = vmatpush2.bf16.msra.mxu0 0
        %4657 = vmatprep.subr.bf16.mxu0 0
        %4658 = vmatpush2.bf16.msra.mxu0 0
        %4659 = vmatprep.subr.bf16.mxu0 0
        %4660 = vmatpush2.bf16.msra.mxu0 0
        %4661 = vmatprep.subr.bf16.mxu0 0
        %4662 = vmatpush2.bf16.msra.mxu0 0
        %4663 = vmatprep.subr.bf16.mxu0 0
        %4664 = vmatpush2.bf16.msra.mxu0 0
        %4665 = vmatprep.subr.bf16.mxu0 0
        %4666 = vmatpush2.bf16.msra.mxu0 0
        %4667 = vmatprep.mubr.bf16.mxu0 0
        %4668 = vmatmul.mubr.bf16.gmra.mxu0 %v4633
        %v4669 = vpop.f32.mrf.mxu0
        %v4670 = vadd.f32 0.0, %v4669
        %v4671 = vpop.f32.mrf.mxu0
        %v4672 = vpop.f32.mrf.mxu0
        %v4673 = vpop.f32.mrf.mxu0
        %4674 = vdwg.mxu0
        %v4676 = vsel %vm4398, %v4491, 0
        %4678 = vmatprep.subr.bf16.mxu0 0
        %4679 = vmatpush1.bf16.msra.mxu0 0
        %4680 = vmatprep.subr.bf16.mxu0 0
        %4681 = vmatpush1.bf16.msra.mxu0 0
        %4682 = vmatprep.subr.bf16.mxu0 0
        %4683 = vmatpush1.bf16.msra.mxu0 0
        %4684 = vmatprep.subr.bf16.mxu0 0
        %4685 = vmatpush1.bf16.msra.mxu0 0
        %4686 = vmatprep.subr.bf16.mxu0 0
        %4687 = vmatpush1.bf16.msra.mxu0 0
        %4688 = vmatprep.subr.bf16.mxu0 0
        %4689 = vmatpush1.bf16.msra.mxu0 0
        %4690 = vmatprep.subr.bf16.mxu0 0
        %4691 = vmatpush1.bf16.msra.mxu0 0
        %4692 = vmatprep.subr.bf16.mxu0 0
        %4693 = vmatpush1.bf16.msra.mxu0 %v4499
        %4694 = vmatprep.subr.bf16.mxu0 0
        %4695 = vmatpush2.bf16.msra.mxu0 0
        %4696 = vmatprep.subr.bf16.mxu0 0
        %4697 = vmatpush2.bf16.msra.mxu0 0
        %4698 = vmatprep.subr.bf16.mxu0 0
        %4699 = vmatpush2.bf16.msra.mxu0 0
        %4700 = vmatprep.subr.bf16.mxu0 0
        %4701 = vmatpush2.bf16.msra.mxu0 0
        %4702 = vmatprep.subr.bf16.mxu0 0
        %4703 = vmatpush2.bf16.msra.mxu0 0
        %4704 = vmatprep.subr.bf16.mxu0 0
        %4705 = vmatpush2.bf16.msra.mxu0 0
        %4706 = vmatprep.subr.bf16.mxu0 0
        %4707 = vmatpush2.bf16.msra.mxu0 0
        %4708 = vmatprep.subr.bf16.mxu0 0
        %4709 = vmatpush2.bf16.msra.mxu0 0
        %4710 = vmatprep.mubr.bf16.mxu0 0
        %4711 = vmatmul.mubr.bf16.gmra.mxu0 %v4676
        %v4712 = vpop.f32.mrf.mxu0
        %v4713 = vadd.f32 0.0, %v4712
        %v4714 = vpop.f32.mrf.mxu0
        %v4715 = vpop.f32.mrf.mxu0
        %v4716 = vpop.f32.mrf.mxu0
        %4717 = vdwg.mxu0
        %v4719 = vsel %vm4398, %v4492, 0
        %4721 = vmatprep.subr.bf16.mxu0 0
        %4722 = vmatpush1.bf16.msra.mxu0 0
        %4723 = vmatprep.subr.bf16.mxu0 0
        %4724 = vmatpush1.bf16.msra.mxu0 0
        %4725 = vmatprep.subr.bf16.mxu0 0
        %4726 = vmatpush1.bf16.msra.mxu0 0
        %4727 = vmatprep.subr.bf16.mxu0 0
        %4728 = vmatpush1.bf16.msra.mxu0 0
        %4729 = vmatprep.subr.bf16.mxu0 0
        %4730 = vmatpush1.bf16.msra.mxu0 0
        %4731 = vmatprep.subr.bf16.mxu0 0
        %4732 = vmatpush1.bf16.msra.mxu0 0
        %4733 = vmatprep.subr.bf16.mxu0 0
        %4734 = vmatpush1.bf16.msra.mxu0 0
        %4735 = vmatprep.subr.bf16.mxu0 0
        %4736 = vmatpush1.bf16.msra.mxu0 %v4500
        %4737 = vmatprep.subr.bf16.mxu0 0
        %4738 = vmatpush2.bf16.msra.mxu0 0
        %4739 = vmatprep.subr.bf16.mxu0 0
        %4740 = vmatpush2.bf16.msra.mxu0 0
        %4741 = vmatprep.subr.bf16.mxu0 0
        %4742 = vmatpush2.bf16.msra.mxu0 0
        %4743 = vmatprep.subr.bf16.mxu0 0
        %4744 = vmatpush2.bf16.msra.mxu0 0
        %4745 = vmatprep.subr.bf16.mxu0 0
        %4746 = vmatpush2.bf16.msra.mxu0 0
        %4747 = vmatprep.subr.bf16.mxu0 0
        %4748 = vmatpush2.bf16.msra.mxu0 0
        %4749 = vmatprep.subr.bf16.mxu0 0
        %4750 = vmatpush2.bf16.msra.mxu0 0
        %4751 = vmatprep.subr.bf16.mxu0 0
        %4752 = vmatpush2.bf16.msra.mxu0 0
        %4753 = vmatprep.mubr.bf16.mxu0 0
        %4754 = vmatmul.mubr.bf16.gmra.mxu0 %v4719
        %v4755 = vpop.f32.mrf.mxu0
        %v4756 = vadd.f32 0.0, %v4755
        %v4757 = vpop.f32.mrf.mxu0
        %v4758 = vpop.f32.mrf.mxu0
        %v4759 = vpop.f32.mrf.mxu0
        %4760 = vdwg.mxu0
        %v4762 = vsel %vm4398, %v4493, 0
        %4764 = vmatprep.subr.bf16.mxu0 0
        %4765 = vmatpush1.bf16.msra.mxu0 0
        %4766 = vmatprep.subr.bf16.mxu0 0
        %4767 = vmatpush1.bf16.msra.mxu0 0
        %4768 = vmatprep.subr.bf16.mxu0 0
        %4769 = vmatpush1.bf16.msra.mxu0 0
        %4770 = vmatprep.subr.bf16.mxu0 0
        %4771 = vmatpush1.bf16.msra.mxu0 0
        %4772 = vmatprep.subr.bf16.mxu0 0
        %4773 = vmatpush1.bf16.msra.mxu0 0
        %4774 = vmatprep.subr.bf16.mxu0 0
        %4775 = vmatpush1.bf16.msra.mxu0 0
        %4776 = vmatprep.subr.bf16.mxu0 0
        %4777 = vmatpush1.bf16.msra.mxu0 0
        %4778 = vmatprep.subr.bf16.mxu0 0
        %4779 = vmatpush1.bf16.msra.mxu0 %v4501
        %4780 = vmatprep.subr.bf16.mxu0 0
        %4781 = vmatpush2.bf16.msra.mxu0 0
        %4782 = vmatprep.subr.bf16.mxu0 0
        %4783 = vmatpush2.bf16.msra.mxu0 0
        %4784 = vmatprep.subr.bf16.mxu0 0
        %4785 = vmatpush2.bf16.msra.mxu0 0
        %4786 = vmatprep.subr.bf16.mxu0 0
        %4787 = vmatpush2.bf16.msra.mxu0 0
        %4788 = vmatprep.subr.bf16.mxu0 0
        %4789 = vmatpush2.bf16.msra.mxu0 0
        %4790 = vmatprep.subr.bf16.mxu0 0
        %4791 = vmatpush2.bf16.msra.mxu0 0
        %4792 = vmatprep.subr.bf16.mxu0 0
        %4793 = vmatpush2.bf16.msra.mxu0 0
        %4794 = vmatprep.subr.bf16.mxu0 0
        %4795 = vmatpush2.bf16.msra.mxu0 0
        %4796 = vmatprep.mubr.bf16.mxu0 0
        %4797 = vmatmul.mubr.bf16.gmra.mxu0 %v4762
        %v4798 = vpop.f32.mrf.mxu0
        %v4799 = vadd.f32 0.0, %v4798
        %v4800 = vpop.f32.mrf.mxu0
        %v4801 = vpop.f32.mrf.mxu0
        %v4802 = vpop.f32.mrf.mxu0
        %4803 = vdwg.mxu0
        %v4805 = vsel %vm4398, %v4494, 0
        %4807 = vmatprep.subr.bf16.mxu0 0
        %4808 = vmatpush1.bf16.msra.mxu0 0
        %4809 = vmatprep.subr.bf16.mxu0 0
        %4810 = vmatpush1.bf16.msra.mxu0 0
        %4811 = vmatprep.subr.bf16.mxu0 0
        %4812 = vmatpush1.bf16.msra.mxu0 0
        %4813 = vmatprep.subr.bf16.mxu0 0
        %4814 = vmatpush1.bf16.msra.mxu0 0
        %4815 = vmatprep.subr.bf16.mxu0 0
        %4816 = vmatpush1.bf16.msra.mxu0 0
        %4817 = vmatprep.subr.bf16.mxu0 0
        %4818 = vmatpush1.bf16.msra.mxu0 0
        %4819 = vmatprep.subr.bf16.mxu0 0
        %4820 = vmatpush1.bf16.msra.mxu0 0
        %4821 = vmatprep.subr.bf16.mxu0 0
        %4822 = vmatpush1.bf16.msra.mxu0 %v4502
        %4823 = vmatprep.subr.bf16.mxu0 0
        %4824 = vmatpush2.bf16.msra.mxu0 0
        %4825 = vmatprep.subr.bf16.mxu0 0
        %4826 = vmatpush2.bf16.msra.mxu0 0
        %4827 = vmatprep.subr.bf16.mxu0 0
        %4828 = vmatpush2.bf16.msra.mxu0 0
        %4829 = vmatprep.subr.bf16.mxu0 0
        %4830 = vmatpush2.bf16.msra.mxu0 0
        %4831 = vmatprep.subr.bf16.mxu0 0
        %4832 = vmatpush2.bf16.msra.mxu0 0
        %4833 = vmatprep.subr.bf16.mxu0 0
        %4834 = vmatpush2.bf16.msra.mxu0 0
        %4835 = vmatprep.subr.bf16.mxu0 0
        %4836 = vmatpush2.bf16.msra.mxu0 0
        %4837 = vmatprep.subr.bf16.mxu0 0
        %4838 = vmatpush2.bf16.msra.mxu0 0
        %4839 = vmatprep.mubr.bf16.mxu0 0
        %4840 = vmatmul.mubr.bf16.gmra.mxu0 %v4805
        %v4841 = vpop.f32.mrf.mxu0
        %v4842 = vadd.f32 0.0, %v4841
        %v4843 = vpop.f32.mrf.mxu0
        %v4844 = vpop.f32.mrf.mxu0
        %v4845 = vpop.f32.mrf.mxu0
        %4846 = vdwg.mxu0
        %s4847 = scalar_lea.vmem [#allocation9], 32
        %v4848 = vld [vmem:[%s4847] sm:$0xf]
        %v4849 = vld [vmem:[%s4847 + $0x4] sm:$0xf]
        %v4850 = vld [vmem:[%s4847 + $0x8] sm:$0xf]
        %v4851 = vld [vmem:[%s4847 + $0xc] sm:$0xf]
        %v4852 = vpack.c.bf16 %v4584, %v4541
        %v4853 = vpack.c.bf16 %v4670, %v4627
        %v4854 = vpack.c.bf16 %v4756, %v4713
        %v4855 = vpack.c.bf16 %v4842, %v4799
        %s4856 = scalar_lea.vmem %s3, 2
        %v4857 = vld [vmem:[%s4856] sm:$0x1]
        %v4859 = vlaneseq
        %v4860 = vshrl.u32 %v4859, 7
        %v4861 = vsub.s32 0, %v4860
        %v4862 = vrot.slane %v4857, %v4861
        %v4868 = vunpack.c.l.b16 %v4848
        %v4869 = vunpack.c.l.b16 %v4849
        %v4870 = vunpack.c.l.b16 %v4850
        %v4871 = vunpack.c.l.b16 %v4851
        %v4872 = vpack.c.b16 %v4869, %v4868
        %v4873 = vpack.c.b16 %v4871, %v4870
        %v4877 = vsel %vm616, %v4852, 0
        %v4880 = vsel %vm616, %v4853, 0
        %v4883 = vsel %vm616, %v4854, 0
        %v4886 = vsel %vm616, %v4855, 0
        %4888 = vmatprep.subr.bf16.mxu0 0
        %4889 = vmatpush1.bf16.msra.mxu0 0
        %4890 = vmatprep.subr.bf16.mxu0 0
        %4891 = vmatpush1.bf16.msra.mxu0 0
        %4892 = vmatprep.subr.bf16.mxu0 0
        %4893 = vmatpush1.bf16.msra.mxu0 0
        %4894 = vmatprep.subr.bf16.mxu0 0
        %4895 = vmatpush1.bf16.msra.mxu0 0
        %4896 = vmatprep.subr.bf16.mxu0 0
        %4897 = vmatpush1.bf16.msra.mxu0 0
        %4898 = vmatprep.subr.bf16.mxu0 0
        %4899 = vmatpush1.bf16.msra.mxu0 0
        %4900 = vmatprep.subr.bf16.mxu0 0
        %4901 = vmatpush1.bf16.msra.mxu0 %v4873
        %4902 = vmatprep.subr.bf16.mxu0 0
        %4903 = vmatpush1.bf16.msra.mxu0 %v4872
        %4904 = vmatprep.subr.bf16.mxu0 0
        %4905 = vmatpush2.bf16.msra.mxu0 0
        %4906 = vmatprep.subr.bf16.mxu0 0
        %4907 = vmatpush2.bf16.msra.mxu0 0
        %4908 = vmatprep.subr.bf16.mxu0 0
        %4909 = vmatpush2.bf16.msra.mxu0 0
        %4910 = vmatprep.subr.bf16.mxu0 0
        %4911 = vmatpush2.bf16.msra.mxu0 0
        %4912 = vmatprep.subr.bf16.mxu0 0
        %4913 = vmatpush2.bf16.msra.mxu0 0
        %4914 = vmatprep.subr.bf16.mxu0 0
        %4915 = vmatpush2.bf16.msra.mxu0 0
        %4916 = vmatprep.subr.bf16.mxu0 0
        %4917 = vmatpush2.bf16.msra.mxu0 0
        %4918 = vmatprep.subr.bf16.mxu0 0
        %4919 = vmatpush2.bf16.msra.mxu0 0
        %4920 = vmatprep.mubr.bf16.mxu0 0
        %4921 = vmatmul.mubr.bf16.gmra.mxu0 %v4877
        %v4922 = vpop.f32.mrf.mxu0
        %v4923 = vadd.f32 %v4862, %v4922
        %v4924 = vpop.f32.mrf.mxu0
        %v4925 = vpop.f32.mrf.mxu0
        %v4926 = vadd.f32 %v4862, %v4925
        %v4927 = vpop.f32.mrf.mxu0
        %4928 = vmatprep.mubr.bf16.mxu0 0
        %4929 = vmatmul.mubr.bf16.gmra.mxu0 %v4880
        %v4930 = vpop.f32.mrf.mxu0
        %v4931 = vadd.f32 %v4862, %v4930
        %v4932 = vpop.f32.mrf.mxu0
        %v4933 = vpop.f32.mrf.mxu0
        %v4934 = vadd.f32 %v4862, %v4933
        %v4935 = vpop.f32.mrf.mxu0
        %4936 = vmatprep.mubr.bf16.mxu0 0
        %4937 = vmatmul.mubr.bf16.gmra.mxu0 %v4883
        %v4938 = vpop.f32.mrf.mxu0
        %v4939 = vadd.f32 %v4862, %v4938
        %v4940 = vpop.f32.mrf.mxu0
        %v4941 = vpop.f32.mrf.mxu0
        %v4942 = vadd.f32 %v4862, %v4941
        %v4943 = vpop.f32.mrf.mxu0
        %4944 = vmatprep.mubr.bf16.mxu0 0
        %4945 = vmatmul.mubr.bf16.gmra.mxu0 %v4886
        %v4946 = vpop.f32.mrf.mxu0
        %v4947 = vadd.f32 %v4862, %v4946
        %v4948 = vpop.f32.mrf.mxu0
        %v4949 = vpop.f32.mrf.mxu0
        %v4950 = vadd.f32 %v4862, %v4949
        %v4951 = vpop.f32.mrf.mxu0
        %4952 = vdwg.mxu0
        %v4953 = vadd.f32 %v3636, %v4923
        %v4954 = vadd.f32 %v3637, %v4926
        %v4955 = vadd.f32 %v3638, %v4931
        %v4956 = vadd.f32 %v3639, %v4934
        %v4957 = vadd.f32 %v3640, %v4939
        %v4958 = vadd.f32 %v3641, %v4942
        %v4959 = vadd.f32 %v3642, %v4947
        %v4960 = vadd.f32 %v3643, %v4950
        %v4961 = vmul.f32 %v4953, 0.70710677
        %v4962 = vmul.f32 %v4954, 0.70710677
        %v4963 = vmul.f32 %v4955, 0.70710677
        %v4964 = vmul.f32 %v4956, 0.70710677
        %v4965 = vmul.f32 %v4957, 0.70710677
        %v4966 = vmul.f32 %v4958, 0.70710677
        %v4967 = vmul.f32 %v4959, 0.70710677
        %v4968 = vmul.f32 %v4960, 0.70710677
        %v4969 = vadd.f32 %v4961, %v3079
        %v4970 = vadd.f32 %v4962, %v3082
        %v4971 = vadd.f32 %v4963, %v3087
        %v4972 = vadd.f32 %v4964, %v3090
        %v4973 = vadd.f32 %v4965, %v3095
        %v4974 = vadd.f32 %v4966, %v3098
        %v4975 = vadd.f32 %v4967, %v3103
        %v4976 = vadd.f32 %v4968, %v3106
        %v4977 = vmul.f32 %v4969, 0.70710677
        %v4978 = vmul.f32 %v4970, 0.70710677
        %v4979 = vmul.f32 %v4971, 0.70710677
        %v4980 = vmul.f32 %v4972, 0.70710677
        %v4981 = vmul.f32 %v4973, 0.70710677
        %v4982 = vmul.f32 %v4974, 0.70710677
        %v4983 = vmul.f32 %v4975, 0.70710677
        %v4984 = vmul.f32 %v4976, 0.70710677
        %4985 = vst.msk [vmem:[#allocation3 + $0x8] sm:$0xff] %vm616, %v4977
        %4986 = vst.msk [vmem:[#allocation3 + $0x18] sm:$0xff] %vm616, %v4978
        %4987 = vst.msk [vmem:[#allocation3 + $0x28] sm:$0xff] %vm616, %v4979
        %4988 = vst.msk [vmem:[#allocation3 + $0x38] sm:$0xff] %vm616, %v4980
        %4989 = vst.msk [vmem:[#allocation3 + $0x48] sm:$0xff] %vm616, %v4981
        %4990 = vst.msk [vmem:[#allocation3 + $0x58] sm:$0xff] %vm616, %v4982
        %4991 = vst.msk [vmem:[#allocation3 + $0x68] sm:$0xff] %vm616, %v4983
        %4992 = vst.msk [vmem:[#allocation3 + $0x78] sm:$0xff] %vm616, %v4984
        %v4993 = vld [vmem:[#allocation3] sm:$0xff]
        %v4994 = vld [vmem:[#allocation3 + $0x8] sm:$0xff]
        %v4995 = vld [vmem:[#allocation3 + $0x10] sm:$0xff]
        %v4996 = vld [vmem:[#allocation3 + $0x18] sm:$0xff]
        %v4997 = vld [vmem:[#allocation3 + $0x20] sm:$0xff]
        %v4998 = vld [vmem:[#allocation3 + $0x28] sm:$0xff]
        %v4999 = vld [vmem:[#allocation3 + $0x30] sm:$0xff]
        %v5000 = vld [vmem:[#allocation3 + $0x38] sm:$0xff]
        %v5001 = vld [vmem:[#allocation3 + $0x40] sm:$0xff]
        %v5002 = vld [vmem:[#allocation3 + $0x48] sm:$0xff]
        %v5003 = vld [vmem:[#allocation3 + $0x50] sm:$0xff]
        %v5004 = vld [vmem:[#allocation3 + $0x58] sm:$0xff]
        %v5005 = vld [vmem:[#allocation3 + $0x60] sm:$0xff]
        %v5006 = vld [vmem:[#allocation3 + $0x68] sm:$0xff]
        %v5007 = vld [vmem:[#allocation3 + $0x70] sm:$0xff]
        %v5008 = vld [vmem:[#allocation3 + $0x78] sm:$0xff]
        %s5009 = scalar_lea.vmem %s7, 3
        %v5010 = vld [vmem:[%s5009] sm:$0x1]
        %v5027 = vrot.slane %v4993, 6
        %v5028 = vrot.slane %v4994, 6
        %v5029 = vsel %vm3167, %v5027, %v5028
        %v5030 = vrot.slane %v4995, 6
        %v5031 = vrot.slane %v4996, 6
        %v5032 = vsel %vm3167, %v5030, %v5031
        %v5033 = vrot.slane %v4997, 6
        %v5034 = vrot.slane %v4998, 6
        %v5035 = vsel %vm3167, %v5033, %v5034
        %v5036 = vrot.slane %v4999, 6
        %v5037 = vrot.slane %v5000, 6
        %v5038 = vsel %vm3167, %v5036, %v5037
        %v5039 = vrot.slane %v5001, 6
        %v5040 = vrot.slane %v5002, 6
        %v5041 = vsel %vm3167, %v5039, %v5040
        %v5042 = vrot.slane %v5003, 6
        %v5043 = vrot.slane %v5004, 6
        %v5044 = vsel %vm3167, %v5042, %v5043
        %v5045 = vrot.slane %v5005, 6
        %v5046 = vrot.slane %v5006, 6
        %v5047 = vsel %vm3167, %v5045, %v5046
        %v5048 = vrot.slane %v5007, 6
        %v5049 = vrot.slane %v5008, 6
        %v5050 = vsel %vm3167, %v5048, %v5049
        %s5059 = scalar_lea.vmem [#allocation13], 144
        %v5060 = vld [vmem:[%s5059] sm:$0xf]
        %v5061 = vld [vmem:[%s5059 + $0x4] sm:$0xf]
        %v5062 = vld [vmem:[%s5059 + $0x8] sm:$0xf]
        %v5063 = vld [vmem:[%s5059 + $0xc] sm:$0xf]
        %v5064 = vpack.c.bf16 %v5032, %v5029
        %v5065 = vpack.c.bf16 %v5038, %v5035
        %v5066 = vpack.c.bf16 %v5044, %v5041
        %v5067 = vpack.c.bf16 %v5050, %v5047
        %v5072 = vunpack.c.l.b16 %v5060
        %v5073 = vunpack.c.l.b16 %v5061
        %v5074 = vunpack.c.l.b16 %v5062
        %v5075 = vunpack.c.l.b16 %v5063
        %v5076 = vpack.c.b16 %v5073, %v5072
        %v5077 = vpack.c.b16 %v5075, %v5074
        %v5081 = vsel %vm616, %v5064, 0
        %v5084 = vsel %vm616, %v5065, 0
        %v5087 = vsel %vm616, %v5066, 0
        %v5090 = vsel %vm616, %v5067, 0
        %5092 = vmatprep.subr.bf16.mxu0 0
        %5093 = vmatpush1.bf16.msra.mxu0 0
        %5094 = vmatprep.subr.bf16.mxu0 0
        %5095 = vmatpush1.bf16.msra.mxu0 0
        %5096 = vmatprep.subr.bf16.mxu0 0
        %5097 = vmatpush1.bf16.msra.mxu0 0
        %5098 = vmatprep.subr.bf16.mxu0 0
        %5099 = vmatpush1.bf16.msra.mxu0 0
        %5100 = vmatprep.subr.bf16.mxu0 0
        %5101 = vmatpush1.bf16.msra.mxu0 0
        %5102 = vmatprep.subr.bf16.mxu0 0
        %5103 = vmatpush1.bf16.msra.mxu0 0
        %5104 = vmatprep.subr.bf16.mxu0 0
        %5105 = vmatpush1.bf16.msra.mxu0 %v5077
        %5106 = vmatprep.subr.bf16.mxu0 0
        %5107 = vmatpush1.bf16.msra.mxu0 %v5076
        %5108 = vmatprep.subr.bf16.mxu0 0
        %5109 = vmatpush2.bf16.msra.mxu0 0
        %5110 = vmatprep.subr.bf16.mxu0 0
        %5111 = vmatpush2.bf16.msra.mxu0 0
        %5112 = vmatprep.subr.bf16.mxu0 0
        %5113 = vmatpush2.bf16.msra.mxu0 0
        %5114 = vmatprep.subr.bf16.mxu0 0
        %5115 = vmatpush2.bf16.msra.mxu0 0
        %5116 = vmatprep.subr.bf16.mxu0 0
        %5117 = vmatpush2.bf16.msra.mxu0 0
        %5118 = vmatprep.subr.bf16.mxu0 0
        %5119 = vmatpush2.bf16.msra.mxu0 0
        %5120 = vmatprep.subr.bf16.mxu0 0
        %5121 = vmatpush2.bf16.msra.mxu0 0
        %5122 = vmatprep.subr.bf16.mxu0 0
        %5123 = vmatpush2.bf16.msra.mxu0 0
        %5124 = vmatprep.mubr.bf16.mxu0 0
        %5125 = vmatmul.mubr.bf16.gmra.mxu0 %v5081
        %v5126 = vpop.f32.mrf.mxu0
        %v5127 = vadd.f32 0.0, %v5126
        %v5128 = vpop.f32.mrf.mxu0
        %v5129 = vpop.f32.mrf.mxu0
        %v5130 = vadd.f32 0.0, %v5129
        %v5131 = vpop.f32.mrf.mxu0
        %5132 = vmatprep.mubr.bf16.mxu0 0
        %5133 = vmatmul.mubr.bf16.gmra.mxu0 %v5084
        %v5134 = vpop.f32.mrf.mxu0
        %v5135 = vadd.f32 0.0, %v5134
        %v5136 = vpop.f32.mrf.mxu0
        %v5137 = vpop.f32.mrf.mxu0
        %v5138 = vadd.f32 0.0, %v5137
        %v5139 = vpop.f32.mrf.mxu0
        %5140 = vmatprep.mubr.bf16.mxu0 0
        %5141 = vmatmul.mubr.bf16.gmra.mxu0 %v5087
        %v5142 = vpop.f32.mrf.mxu0
        %v5143 = vadd.f32 0.0, %v5142
        %v5144 = vpop.f32.mrf.mxu0
        %v5145 = vpop.f32.mrf.mxu0
        %v5146 = vadd.f32 0.0, %v5145
        %v5147 = vpop.f32.mrf.mxu0
        %5148 = vmatprep.mubr.bf16.mxu0 0
        %5149 = vmatmul.mubr.bf16.gmra.mxu0 %v5090
        %v5150 = vpop.f32.mrf.mxu0
        %v5151 = vadd.f32 0.0, %v5150
        %v5152 = vpop.f32.mrf.mxu0
        %v5153 = vpop.f32.mrf.mxu0
        %v5154 = vadd.f32 0.0, %v5153
        %v5155 = vpop.f32.mrf.mxu0
        %5156 = vdwg.mxu0
        %v5158 = vlaneseq
        %v5159 = vshrl.u32 %v5158, 7
        %v5160 = vsub.s32 0, %v5159
        %v5161 = vrot.slane %v5010, %v5160
        %v5163 = vadd.f32 %v5161, %v5127
        %v5164 = vadd.f32 %v5161, %v5130
        %v5165 = vadd.f32 %v5161, %v5135
        %v5166 = vadd.f32 %v5161, %v5138
        %v5167 = vadd.f32 %v5161, %v5143
        %v5168 = vadd.f32 %v5161, %v5146
        %v5169 = vadd.f32 %v5161, %v5151
        %v5170 = vadd.f32 %v5161, %v5154
        %v5171 = vrot.slane %v4993, 7
        %v5172 = vrot.slane %v4994, 7
        %v5173 = vsel %vm844, %v5171, %v5172
        %v5174 = vrot.slane %v4995, 7
        %v5175 = vrot.slane %v4996, 7
        %v5176 = vsel %vm844, %v5174, %v5175
        %v5177 = vrot.slane %v4997, 7
        %v5178 = vrot.slane %v4998, 7
        %v5179 = vsel %vm844, %v5177, %v5178
        %v5180 = vrot.slane %v4999, 7
        %v5181 = vrot.slane %v5000, 7
        %v5182 = vsel %vm844, %v5180, %v5181
        %v5183 = vrot.slane %v5001, 7
        %v5184 = vrot.slane %v5002, 7
        %v5185 = vsel %vm844, %v5183, %v5184
        %v5186 = vrot.slane %v5003, 7
        %v5187 = vrot.slane %v5004, 7
        %v5188 = vsel %vm844, %v5186, %v5187
        %v5189 = vrot.slane %v5005, 7
        %v5190 = vrot.slane %v5006, 7
        %v5191 = vsel %vm844, %v5189, %v5190
        %v5192 = vrot.slane %v5007, 7
        %v5193 = vrot.slane %v5008, 7
        %v5194 = vsel %vm844, %v5192, %v5193
        %s5203 = scalar_lea.vmem [#allocation13], 160
        %v5204 = vld [vmem:[%s5203] sm:$0xf]
        %v5205 = vld [vmem:[%s5203 + $0x4] sm:$0xf]
        %v5206 = vld [vmem:[%s5203 + $0x8] sm:$0xf]
        %v5207 = vld [vmem:[%s5203 + $0xc] sm:$0xf]
        %v5208 = vpack.c.bf16 %v5176, %v5173
        %v5209 = vpack.c.bf16 %v5182, %v5179
        %v5210 = vpack.c.bf16 %v5188, %v5185
        %v5211 = vpack.c.bf16 %v5194, %v5191
        %v5216 = vunpack.c.l.b16 %v5204
        %v5217 = vunpack.c.l.b16 %v5205
        %v5218 = vunpack.c.l.b16 %v5206
        %v5219 = vunpack.c.l.b16 %v5207
        %v5220 = vpack.c.b16 %v5217, %v5216
        %v5221 = vpack.c.b16 %v5219, %v5218
        %v5225 = vsel %vm616, %v5208, 0
        %v5228 = vsel %vm616, %v5209, 0
        %v5231 = vsel %vm616, %v5210, 0
        %v5234 = vsel %vm616, %v5211, 0
        %5236 = vmatprep.subr.bf16.mxu0 0
        %5237 = vmatpush1.bf16.msra.mxu0 0
        %5238 = vmatprep.subr.bf16.mxu0 0
        %5239 = vmatpush1.bf16.msra.mxu0 0
        %5240 = vmatprep.subr.bf16.mxu0 0
        %5241 = vmatpush1.bf16.msra.mxu0 0
        %5242 = vmatprep.subr.bf16.mxu0 0
        %5243 = vmatpush1.bf16.msra.mxu0 0
        %5244 = vmatprep.subr.bf16.mxu0 0
        %5245 = vmatpush1.bf16.msra.mxu0 0
        %5246 = vmatprep.subr.bf16.mxu0 0
        %5247 = vmatpush1.bf16.msra.mxu0 0
        %5248 = vmatprep.subr.bf16.mxu0 0
        %5249 = vmatpush1.bf16.msra.mxu0 %v5221
        %5250 = vmatprep.subr.bf16.mxu0 0
        %5251 = vmatpush1.bf16.msra.mxu0 %v5220
        %5252 = vmatprep.subr.bf16.mxu0 0
        %5253 = vmatpush2.bf16.msra.mxu0 0
        %5254 = vmatprep.subr.bf16.mxu0 0
        %5255 = vmatpush2.bf16.msra.mxu0 0
        %5256 = vmatprep.subr.bf16.mxu0 0
        %5257 = vmatpush2.bf16.msra.mxu0 0
        %5258 = vmatprep.subr.bf16.mxu0 0
        %5259 = vmatpush2.bf16.msra.mxu0 0
        %5260 = vmatprep.subr.bf16.mxu0 0
        %5261 = vmatpush2.bf16.msra.mxu0 0
        %5262 = vmatprep.subr.bf16.mxu0 0
        %5263 = vmatpush2.bf16.msra.mxu0 0
        %5264 = vmatprep.subr.bf16.mxu0 0
        %5265 = vmatpush2.bf16.msra.mxu0 0
        %5266 = vmatprep.subr.bf16.mxu0 0
        %5267 = vmatpush2.bf16.msra.mxu0 0
        %5268 = vmatprep.mubr.bf16.mxu0 0
        %5269 = vmatmul.mubr.bf16.gmra.mxu0 %v5225
        %v5270 = vpop.f32.mrf.mxu0
        %v5271 = vadd.f32 0.0, %v5270
        %v5272 = vpop.f32.mrf.mxu0
        %v5273 = vpop.f32.mrf.mxu0
        %v5274 = vadd.f32 0.0, %v5273
        %v5275 = vpop.f32.mrf.mxu0
        %5276 = vmatprep.mubr.bf16.mxu0 0
        %5277 = vmatmul.mubr.bf16.gmra.mxu0 %v5228
        %v5278 = vpop.f32.mrf.mxu0
        %v5279 = vadd.f32 0.0, %v5278
        %v5280 = vpop.f32.mrf.mxu0
        %v5281 = vpop.f32.mrf.mxu0
        %v5282 = vadd.f32 0.0, %v5281
        %v5283 = vpop.f32.mrf.mxu0
        %5284 = vmatprep.mubr.bf16.mxu0 0
        %5285 = vmatmul.mubr.bf16.gmra.mxu0 %v5231
        %v5286 = vpop.f32.mrf.mxu0
        %v5287 = vadd.f32 0.0, %v5286
        %v5288 = vpop.f32.mrf.mxu0
        %v5289 = vpop.f32.mrf.mxu0
        %v5290 = vadd.f32 0.0, %v5289
        %v5291 = vpop.f32.mrf.mxu0
        %5292 = vmatprep.mubr.bf16.mxu0 0
        %5293 = vmatmul.mubr.bf16.gmra.mxu0 %v5234
        %v5294 = vpop.f32.mrf.mxu0
        %v5295 = vadd.f32 0.0, %v5294
        %v5296 = vpop.f32.mrf.mxu0
        %v5297 = vpop.f32.mrf.mxu0
        %v5298 = vadd.f32 0.0, %v5297
        %v5299 = vpop.f32.mrf.mxu0
        %5300 = vdwg.mxu0
        %v5301 = vadd.f32 %v5163, %v5271
        %v5302 = vadd.f32 %v5164, %v5274
        %v5303 = vadd.f32 %v5165, %v5279
        %v5304 = vadd.f32 %v5166, %v5282
        %v5305 = vadd.f32 %v5167, %v5287
        %v5306 = vadd.f32 %v5168, %v5290
        %v5307 = vadd.f32 %v5169, %v5295
        %v5308 = vadd.f32 %v5170, %v5298
        %s5309 = scalar_lea.vmem [#allocation13], 176
        %v5310 = vld [vmem:[%s5309] sm:$0xf]
        %v5311 = vld [vmem:[%s5309 + $0x4] sm:$0xf]
        %v5312 = vld [vmem:[%s5309 + $0x8] sm:$0xf]
        %v5313 = vld [vmem:[%s5309 + $0xc] sm:$0xf]
        %v5314 = vpack.c.bf16 %v4996, %v4994
        %v5315 = vpack.c.bf16 %v5000, %v4998
        %v5316 = vpack.c.bf16 %v5004, %v5002
        %v5317 = vpack.c.bf16 %v5008, %v5006
        %v5322 = vunpack.c.l.b16 %v5310
        %v5323 = vunpack.c.l.b16 %v5311
        %v5324 = vunpack.c.l.b16 %v5312
        %v5325 = vunpack.c.l.b16 %v5313
        %v5326 = vpack.c.b16 %v5323, %v5322
        %v5327 = vpack.c.b16 %v5325, %v5324
        %v5331 = vsel %vm616, %v5314, 0
        %v5334 = vsel %vm616, %v5315, 0
        %v5337 = vsel %vm616, %v5316, 0
        %v5340 = vsel %vm616, %v5317, 0
        %5342 = vmatprep.subr.bf16.mxu0 0
        %5343 = vmatpush1.bf16.msra.mxu0 0
        %5344 = vmatprep.subr.bf16.mxu0 0
        %5345 = vmatpush1.bf16.msra.mxu0 0
        %5346 = vmatprep.subr.bf16.mxu0 0
        %5347 = vmatpush1.bf16.msra.mxu0 0
        %5348 = vmatprep.subr.bf16.mxu0 0
        %5349 = vmatpush1.bf16.msra.mxu0 0
        %5350 = vmatprep.subr.bf16.mxu0 0
        %5351 = vmatpush1.bf16.msra.mxu0 0
        %5352 = vmatprep.subr.bf16.mxu0 0
        %5353 = vmatpush1.bf16.msra.mxu0 0
        %5354 = vmatprep.subr.bf16.mxu0 0
        %5355 = vmatpush1.bf16.msra.mxu0 %v5327
        %5356 = vmatprep.subr.bf16.mxu0 0
        %5357 = vmatpush1.bf16.msra.mxu0 %v5326
        %5358 = vmatprep.subr.bf16.mxu0 0
        %5359 = vmatpush2.bf16.msra.mxu0 0
        %5360 = vmatprep.subr.bf16.mxu0 0
        %5361 = vmatpush2.bf16.msra.mxu0 0
        %5362 = vmatprep.subr.bf16.mxu0 0
        %5363 = vmatpush2.bf16.msra.mxu0 0
        %5364 = vmatprep.subr.bf16.mxu0 0
        %5365 = vmatpush2.bf16.msra.mxu0 0
        %5366 = vmatprep.subr.bf16.mxu0 0
        %5367 = vmatpush2.bf16.msra.mxu0 0
        %5368 = vmatprep.subr.bf16.mxu0 0
        %5369 = vmatpush2.bf16.msra.mxu0 0
        %5370 = vmatprep.subr.bf16.mxu0 0
        %5371 = vmatpush2.bf16.msra.mxu0 0
        %5372 = vmatprep.subr.bf16.mxu0 0
        %5373 = vmatpush2.bf16.msra.mxu0 0
        %5374 = vmatprep.mubr.bf16.mxu0 0
        %5375 = vmatmul.mubr.bf16.gmra.mxu0 %v5331
        %v5376 = vpop.f32.mrf.mxu0
        %v5377 = vadd.f32 0.0, %v5376
        %v5378 = vpop.f32.mrf.mxu0
        %v5379 = vpop.f32.mrf.mxu0
        %v5380 = vadd.f32 0.0, %v5379
        %v5381 = vpop.f32.mrf.mxu0
        %5382 = vmatprep.mubr.bf16.mxu0 0
        %5383 = vmatmul.mubr.bf16.gmra.mxu0 %v5334
        %v5384 = vpop.f32.mrf.mxu0
        %v5385 = vadd.f32 0.0, %v5384
        %v5386 = vpop.f32.mrf.mxu0
        %v5387 = vpop.f32.mrf.mxu0
        %v5388 = vadd.f32 0.0, %v5387
        %v5389 = vpop.f32.mrf.mxu0
        %5390 = vmatprep.mubr.bf16.mxu0 0
        %5391 = vmatmul.mubr.bf16.gmra.mxu0 %v5337
        %v5392 = vpop.f32.mrf.mxu0
        %v5393 = vadd.f32 0.0, %v5392
        %v5394 = vpop.f32.mrf.mxu0
        %v5395 = vpop.f32.mrf.mxu0
        %v5396 = vadd.f32 0.0, %v5395
        %v5397 = vpop.f32.mrf.mxu0
        %5398 = vmatprep.mubr.bf16.mxu0 0
        %5399 = vmatmul.mubr.bf16.gmra.mxu0 %v5340
        %v5400 = vpop.f32.mrf.mxu0
        %v5401 = vadd.f32 0.0, %v5400
        %v5402 = vpop.f32.mrf.mxu0
        %v5403 = vpop.f32.mrf.mxu0
        %v5404 = vadd.f32 0.0, %v5403
        %v5405 = vpop.f32.mrf.mxu0
        %5406 = vdwg.mxu0
        %v5407 = vadd.f32 %v5301, %v5377
        %v5408 = vadd.f32 %v5302, %v5380
        %v5409 = vadd.f32 %v5303, %v5385
        %v5410 = vadd.f32 %v5304, %v5388
        %v5411 = vadd.f32 %v5305, %v5393
        %v5412 = vadd.f32 %v5306, %v5396
        %v5413 = vadd.f32 %v5307, %v5401
        %v5414 = vadd.f32 %v5308, %v5404
        %v5415 = vxor.u32 %v5407, 2147483648
        %v5416 = vxor.u32 %v5408, 2147483648
        %v5417 = vxor.u32 %v5409, 2147483648
        %v5418 = vxor.u32 %v5410, 2147483648
        %v5419 = vxor.u32 %v5411, 2147483648
        %v5420 = vxor.u32 %v5412, 2147483648
        %v5421 = vxor.u32 %v5413, 2147483648
        %v5422 = vxor.u32 %v5414, 2147483648
        %v5423 = vmul.f32 %v5415, 1.442695
        %v5424 = vpow.pop %v5423
        %v5425 = vmul.f32 %v5416, 1.442695
        %v5426 = vpow.pop %v5425
        %v5427 = vmul.f32 %v5417, 1.442695
        %v5428 = vpow.pop %v5427
        %v5429 = vmul.f32 %v5418, 1.442695
        %v5430 = vpow.pop %v5429
        %v5431 = vmul.f32 %v5419, 1.442695
        %v5432 = vpow.pop %v5431
        %v5433 = vmul.f32 %v5420, 1.442695
        %v5434 = vpow.pop %v5433
        %v5435 = vmul.f32 %v5421, 1.442695
        %v5436 = vpow.pop %v5435
        %v5437 = vmul.f32 %v5422, 1.442695
        %v5438 = vpow.pop %v5437
        %v5439 = vadd.f32 %v5424, 1.0
        %v5440 = vadd.f32 %v5426, 1.0
        %v5441 = vadd.f32 %v5428, 1.0
        %v5442 = vadd.f32 %v5430, 1.0
        %v5443 = vadd.f32 %v5432, 1.0
        %v5444 = vadd.f32 %v5434, 1.0
        %v5445 = vadd.f32 %v5436, 1.0
        %v5446 = vadd.f32 %v5438, 1.0
        %v5447 = vrcp.pop %v5439
        %v5448 = vmul.f32 1.0, %v5447
        %v5449 = vrcp.pop %v5440
        %v5450 = vmul.f32 1.0, %v5449
        %v5451 = vrcp.pop %v5441
        %v5452 = vmul.f32 1.0, %v5451
        %v5453 = vrcp.pop %v5442
        %v5454 = vmul.f32 1.0, %v5453
        %v5455 = vrcp.pop %v5443
        %v5456 = vmul.f32 1.0, %v5455
        %v5457 = vrcp.pop %v5444
        %v5458 = vmul.f32 1.0, %v5457
        %v5459 = vrcp.pop %v5445
        %v5460 = vmul.f32 1.0, %v5459
        %v5461 = vrcp.pop %v5446
        %v5462 = vmul.f32 1.0, %v5461
        %5471 = vrot.lane.b32.xlu0 %v5448, 96
        %v5472 = vpop.permute.xlu0 %5471
        %5473 = vrot.lane.b32.xlu0 %v5450, 96
        %v5474 = vpop.permute.xlu0 %5473
        %5475 = vrot.lane.b32.xlu0 %v5452, 96
        %v5476 = vpop.permute.xlu0 %5475
        %5477 = vrot.lane.b32.xlu0 %v5454, 96
        %v5478 = vpop.permute.xlu0 %5477
        %5479 = vrot.lane.b32.xlu0 %v5456, 96
        %v5480 = vpop.permute.xlu0 %5479
        %5481 = vrot.lane.b32.xlu0 %v5458, 96
        %v5482 = vpop.permute.xlu0 %5481
        %5483 = vrot.lane.b32.xlu0 %v5460, 96
        %v5484 = vpop.permute.xlu0 %5483
        %5485 = vrot.lane.b32.xlu0 %v5462, 96
        %v5486 = vpop.permute.xlu0 %5485
        %v5495 = vmul.f32 %v5407, %v5472
        %v5496 = vmul.f32 %v5408, %v5474
        %v5497 = vmul.f32 %v5409, %v5476
        %v5498 = vmul.f32 %v5410, %v5478
        %v5499 = vmul.f32 %v5411, %v5480
        %v5500 = vmul.f32 %v5412, %v5482
        %v5501 = vmul.f32 %v5413, %v5484
        %v5502 = vmul.f32 %v5414, %v5486
        %v5503 = vld [vmem:[%s3644] sm:$0xf]
        %v5504 = vld [vmem:[%s3644 + $0x4] sm:$0xf]
        %v5505 = vld [vmem:[%s3644 + $0x8] sm:$0xf]
        %v5506 = vld [vmem:[%s3644 + $0xc] sm:$0xf]
        %v5507 = vpack.c.bf16 %v5496, %v5495
        %v5508 = vpack.c.bf16 %v5498, %v5497
        %v5509 = vpack.c.bf16 %v5500, %v5499
        %v5510 = vpack.c.bf16 %v5502, %v5501
        %v5511 = vld [vmem:[%s3653] sm:$0x1]
        %v5513 = vlaneseq
        %v5514 = vshrl.u32 %v5513, 7
        %v5515 = vsub.s32 0, %v5514
        %v5516 = vrot.slane %v5511, %v5515
        %v5522 = vunpack.c.l.b16 %v5503
        %v5523 = vunpack.c.l.b16 %v5504
        %v5524 = vunpack.c.l.b16 %v5505
        %v5525 = vunpack.c.l.b16 %v5506
        %v5526 = vpack.c.b16 %v5523, %v5522
        %v5527 = vpack.c.b16 %v5525, %v5524
        %v5531 = vsel %vm616, %v5507, 0
        %v5534 = vsel %vm616, %v5508, 0
        %v5537 = vsel %vm616, %v5509, 0
        %v5540 = vsel %vm616, %v5510, 0
        %5542 = vmatprep.subr.bf16.mxu0 0
        %5543 = vmatpush1.bf16.msra.mxu0 0
        %5544 = vmatprep.subr.bf16.mxu0 0
        %5545 = vmatpush1.bf16.msra.mxu0 0
        %5546 = vmatprep.subr.bf16.mxu0 0
        %5547 = vmatpush1.bf16.msra.mxu0 0
        %5548 = vmatprep.subr.bf16.mxu0 0
        %5549 = vmatpush1.bf16.msra.mxu0 0
        %5550 = vmatprep.subr.bf16.mxu0 0
        %5551 = vmatpush1.bf16.msra.mxu0 0
        %5552 = vmatprep.subr.bf16.mxu0 0
        %5553 = vmatpush1.bf16.msra.mxu0 0
        %5554 = vmatprep.subr.bf16.mxu0 0
        %5555 = vmatpush1.bf16.msra.mxu0 %v5527
        %5556 = vmatprep.subr.bf16.mxu0 0
        %5557 = vmatpush1.bf16.msra.mxu0 %v5526
        %5558 = vmatprep.subr.bf16.mxu0 0
        %5559 = vmatpush2.bf16.msra.mxu0 0
        %5560 = vmatprep.subr.bf16.mxu0 0
        %5561 = vmatpush2.bf16.msra.mxu0 0
        %5562 = vmatprep.subr.bf16.mxu0 0
        %5563 = vmatpush2.bf16.msra.mxu0 0
        %5564 = vmatprep.subr.bf16.mxu0 0
        %5565 = vmatpush2.bf16.msra.mxu0 0
        %5566 = vmatprep.subr.bf16.mxu0 0
        %5567 = vmatpush2.bf16.msra.mxu0 0
        %5568 = vmatprep.subr.bf16.mxu0 0
        %5569 = vmatpush2.bf16.msra.mxu0 0
        %5570 = vmatprep.subr.bf16.mxu0 0
        %5571 = vmatpush2.bf16.msra.mxu0 0
        %5572 = vmatprep.subr.bf16.mxu0 0
        %5573 = vmatpush2.bf16.msra.mxu0 0
        %5574 = vmatprep.mubr.bf16.mxu0 0
        %5575 = vmatmul.mubr.bf16.gmra.mxu0 %v5531
        %v5576 = vpop.f32.mrf.mxu0
        %v5577 = vadd.f32 %v5516, %v5576
        %v5578 = vpop.f32.mrf.mxu0
        %v5579 = vpop.f32.mrf.mxu0
        %v5580 = vadd.f32 %v5516, %v5579
        %v5581 = vpop.f32.mrf.mxu0
        %5582 = vmatprep.mubr.bf16.mxu0 0
        %5583 = vmatmul.mubr.bf16.gmra.mxu0 %v5534
        %v5584 = vpop.f32.mrf.mxu0
        %v5585 = vadd.f32 %v5516, %v5584
        %v5586 = vpop.f32.mrf.mxu0
        %v5587 = vpop.f32.mrf.mxu0
        %v5588 = vadd.f32 %v5516, %v5587
        %v5589 = vpop.f32.mrf.mxu0
        %5590 = vmatprep.mubr.bf16.mxu0 0
        %5591 = vmatmul.mubr.bf16.gmra.mxu0 %v5537
        %v5592 = vpop.f32.mrf.mxu0
        %v5593 = vadd.f32 %v5516, %v5592
        %v5594 = vpop.f32.mrf.mxu0
        %v5595 = vpop.f32.mrf.mxu0
        %v5596 = vadd.f32 %v5516, %v5595
        %v5597 = vpop.f32.mrf.mxu0
        %5598 = vmatprep.mubr.bf16.mxu0 0
        %5599 = vmatmul.mubr.bf16.gmra.mxu0 %v5540
        %v5600 = vpop.f32.mrf.mxu0
        %v5601 = vadd.f32 %v5516, %v5600
        %v5602 = vpop.f32.mrf.mxu0
        %v5603 = vpop.f32.mrf.mxu0
        %v5604 = vadd.f32 %v5516, %v5603
        %v5605 = vpop.f32.mrf.mxu0
        %5606 = vdwg.mxu0
        %v5607 = vadd.f32 %v5577, %v2995
        %v5608 = vadd.f32 %v5580, %v2996
        %v5609 = vadd.f32 %v5585, %v2997
        %v5610 = vadd.f32 %v5588, %v2998
        %v5611 = vadd.f32 %v5593, %v2999
        %v5612 = vadd.f32 %v5596, %v3000
        %v5613 = vadd.f32 %v5601, %v3001
        %v5614 = vadd.f32 %v5604, %v3002
        %v5615 = vmul.f32 %v5607, 0.70710677
        %v5616 = vmul.f32 %v5608, 0.70710677
        %v5617 = vmul.f32 %v5609, 0.70710677
        %v5618 = vmul.f32 %v5610, 0.70710677
        %v5619 = vmul.f32 %v5611, 0.70710677
        %v5620 = vmul.f32 %v5612, 0.70710677
        %v5621 = vmul.f32 %v5613, 0.70710677
        %v5622 = vmul.f32 %v5614, 0.70710677
        %v5624 = vsel %vm616, %v5615, 0
        %5626 = vmatprep.subr.mxu0 0.0
        %5627 = vmatpush1.xpose.msra.mxu0 0.0
        %5628 = vmatprep.subr.mxu0 0.0
        %5629 = vmatpush1.xpose.msra.mxu0 0.0
        %5630 = vmatprep.subr.mxu0 0.0
        %5631 = vmatpush1.xpose.msra.mxu0 0.0
        %5632 = vmatprep.subr.mxu0 0.0
        %5633 = vmatpush1.xpose.msra.mxu0 0.0
        %5634 = vmatprep.subr.mxu0 0.0
        %5635 = vmatpush1.xpose.msra.mxu0 0.0
        %5636 = vmatprep.subr.mxu0 0.0
        %5637 = vmatpush1.xpose.msra.mxu0 0.0
        %5638 = vmatprep.subr.mxu0 0.0
        %5639 = vmatpush1.xpose.msra.mxu0 0.0
        %5640 = vmatprep.subr.mxu0 0.0
        %5641 = vmatpush1.xpose.msra.mxu0 0.0
        %5642 = vmatprep.subr.mxu0 0.0
        %5643 = vmatpush1.xpose.msra.mxu0 0.0
        %5644 = vmatprep.subr.mxu0 0.0
        %5645 = vmatpush1.xpose.msra.mxu0 0.0
        %5646 = vmatprep.subr.mxu0 0.0
        %5647 = vmatpush1.xpose.msra.mxu0 0.0
        %5648 = vmatprep.subr.mxu0 0.0
        %5649 = vmatpush1.xpose.msra.mxu0 0.0
        %5650 = vmatprep.subr.mxu0 0.0
        %5651 = vmatpush1.xpose.msra.mxu0 0.0
        %5652 = vmatprep.subr.mxu0 0.0
        %5653 = vmatpush1.xpose.msra.mxu0 0.0
        %5654 = vmatprep.subr.mxu0 0.0
        %5655 = vmatpush1.xpose.msra.mxu0 %v3773
        %5656 = vmatprep.subr.mxu0 0.0
        %5657 = vmatpush1.xpose.msra.mxu0 %v3770
        %5658 = vmatprep.subr.mxu0 0.0
        %5659 = vmatpush2.xpose.msra.mxu0 0.0
        %5660 = vmatprep.subr.mxu0 0.0
        %5661 = vmatpush2.xpose.msra.mxu0 0.0
        %5662 = vmatprep.subr.mxu0 0.0
        %5663 = vmatpush2.xpose.msra.mxu0 0.0
        %5664 = vmatprep.subr.mxu0 0.0
        %5665 = vmatpush2.xpose.msra.mxu0 0.0
        %5666 = vmatprep.subr.mxu0 0.0
        %5667 = vmatpush2.xpose.msra.mxu0 0.0
        %5668 = vmatprep.subr.mxu0 0.0
        %5669 = vmatpush2.xpose.msra.mxu0 0.0
        %5670 = vmatprep.subr.mxu0 0.0
        %5671 = vmatpush2.xpose.msra.mxu0 0.0
        %5672 = vmatprep.subr.mxu0 0.0
        %5673 = vmatpush2.xpose.msra.mxu0 0.0
        %5674 = vmatprep.subr.mxu0 0.0
        %5675 = vmatpush2.xpose.msra.mxu0 0.0
        %5676 = vmatprep.subr.mxu0 0.0
        %5677 = vmatpush2.xpose.msra.mxu0 0.0
        %5678 = vmatprep.subr.mxu0 0.0
        %5679 = vmatpush2.xpose.msra.mxu0 0.0
        %5680 = vmatprep.subr.mxu0 0.0
        %5681 = vmatpush2.xpose.msra.mxu0 0.0
        %5682 = vmatprep.subr.mxu0 0.0
        %5683 = vmatpush2.xpose.msra.mxu0 0.0
        %5684 = vmatprep.subr.mxu0 0.0
        %5685 = vmatpush2.xpose.msra.mxu0 0.0
        %5686 = vmatprep.subr.mxu0 0.0
        %5687 = vmatpush2.xpose.msra.mxu0 0.0
        %5688 = vmatprep.subr.mxu0 0.0
        %5689 = vmatpush2.xpose.msra.mxu0 0.0
        %5690 = vmatprep.mubr.f32.mxu0 0.0
        %5691 = vmatmul.mubr.f32.gmra.mxu0 %v5624
        %v5692 = vpop.f32.mrf.mxu0
        %v5693 = vadd.f32 0.0, %v5692
        %v5694 = vpop.f32.mrf.mxu0
        %5695 = vdwg.mxu0
        %v5697 = vsel %vm616, %v5616, 0
        %5699 = vmatprep.subr.mxu0 0.0
        %5700 = vmatpush1.xpose.msra.mxu0 0.0
        %5701 = vmatprep.subr.mxu0 0.0
        %5702 = vmatpush1.xpose.msra.mxu0 0.0
        %5703 = vmatprep.subr.mxu0 0.0
        %5704 = vmatpush1.xpose.msra.mxu0 0.0
        %5705 = vmatprep.subr.mxu0 0.0
        %5706 = vmatpush1.xpose.msra.mxu0 0.0
        %5707 = vmatprep.subr.mxu0 0.0
        %5708 = vmatpush1.xpose.msra.mxu0 0.0
        %5709 = vmatprep.subr.mxu0 0.0
        %5710 = vmatpush1.xpose.msra.mxu0 0.0
        %5711 = vmatprep.subr.mxu0 0.0
        %5712 = vmatpush1.xpose.msra.mxu0 0.0
        %5713 = vmatprep.subr.mxu0 0.0
        %5714 = vmatpush1.xpose.msra.mxu0 0.0
        %5715 = vmatprep.subr.mxu0 0.0
        %5716 = vmatpush1.xpose.msra.mxu0 0.0
        %5717 = vmatprep.subr.mxu0 0.0
        %5718 = vmatpush1.xpose.msra.mxu0 0.0
        %5719 = vmatprep.subr.mxu0 0.0
        %5720 = vmatpush1.xpose.msra.mxu0 0.0
        %5721 = vmatprep.subr.mxu0 0.0
        %5722 = vmatpush1.xpose.msra.mxu0 0.0
        %5723 = vmatprep.subr.mxu0 0.0
        %5724 = vmatpush1.xpose.msra.mxu0 0.0
        %5725 = vmatprep.subr.mxu0 0.0
        %5726 = vmatpush1.xpose.msra.mxu0 0.0
        %5727 = vmatprep.subr.mxu0 0.0
        %5728 = vmatpush1.xpose.msra.mxu0 %v3852
        %5729 = vmatprep.subr.mxu0 0.0
        %5730 = vmatpush1.xpose.msra.mxu0 %v3849
        %5731 = vmatprep.subr.mxu0 0.0
        %5732 = vmatpush2.xpose.msra.mxu0 0.0
        %5733 = vmatprep.subr.mxu0 0.0
        %5734 = vmatpush2.xpose.msra.mxu0 0.0
        %5735 = vmatprep.subr.mxu0 0.0
        %5736 = vmatpush2.xpose.msra.mxu0 0.0
        %5737 = vmatprep.subr.mxu0 0.0
        %5738 = vmatpush2.xpose.msra.mxu0 0.0
        %5739 = vmatprep.subr.mxu0 0.0
        %5740 = vmatpush2.xpose.msra.mxu0 0.0
        %5741 = vmatprep.subr.mxu0 0.0
        %5742 = vmatpush2.xpose.msra.mxu0 0.0
        %5743 = vmatprep.subr.mxu0 0.0
        %5744 = vmatpush2.xpose.msra.mxu0 0.0
        %5745 = vmatprep.subr.mxu0 0.0
        %5746 = vmatpush2.xpose.msra.mxu0 0.0
        %5747 = vmatprep.subr.mxu0 0.0
        %5748 = vmatpush2.xpose.msra.mxu0 0.0
        %5749 = vmatprep.subr.mxu0 0.0
        %5750 = vmatpush2.xpose.msra.mxu0 0.0
        %5751 = vmatprep.subr.mxu0 0.0
        %5752 = vmatpush2.xpose.msra.mxu0 0.0
        %5753 = vmatprep.subr.mxu0 0.0
        %5754 = vmatpush2.xpose.msra.mxu0 0.0
        %5755 = vmatprep.subr.mxu0 0.0
        %5756 = vmatpush2.xpose.msra.mxu0 0.0
        %5757 = vmatprep.subr.mxu0 0.0
        %5758 = vmatpush2.xpose.msra.mxu0 0.0
        %5759 = vmatprep.subr.mxu0 0.0
        %5760 = vmatpush2.xpose.msra.mxu0 0.0
        %5761 = vmatprep.subr.mxu0 0.0
        %5762 = vmatpush2.xpose.msra.mxu0 0.0
        %5763 = vmatprep.mubr.f32.mxu0 0.0
        %5764 = vmatmul.mubr.f32.gmra.mxu0 %v5697
        %v5765 = vpop.f32.mrf.mxu0
        %v5766 = vadd.f32 0.0, %v5765
        %v5767 = vpop.f32.mrf.mxu0
        %5768 = vdwg.mxu0
        %v5770 = vsel %vm616, %v5617, 0
        %5772 = vmatprep.subr.mxu0 0.0
        %5773 = vmatpush1.xpose.msra.mxu0 0.0
        %5774 = vmatprep.subr.mxu0 0.0
        %5775 = vmatpush1.xpose.msra.mxu0 0.0
        %5776 = vmatprep.subr.mxu0 0.0
        %5777 = vmatpush1.xpose.msra.mxu0 0.0
        %5778 = vmatprep.subr.mxu0 0.0
        %5779 = vmatpush1.xpose.msra.mxu0 0.0
        %5780 = vmatprep.subr.mxu0 0.0
        %5781 = vmatpush1.xpose.msra.mxu0 0.0
        %5782 = vmatprep.subr.mxu0 0.0
        %5783 = vmatpush1.xpose.msra.mxu0 0.0
        %5784 = vmatprep.subr.mxu0 0.0
        %5785 = vmatpush1.xpose.msra.mxu0 0.0
        %5786 = vmatprep.subr.mxu0 0.0
        %5787 = vmatpush1.xpose.msra.mxu0 0.0
        %5788 = vmatprep.subr.mxu0 0.0
        %5789 = vmatpush1.xpose.msra.mxu0 0.0
        %5790 = vmatprep.subr.mxu0 0.0
        %5791 = vmatpush1.xpose.msra.mxu0 0.0
        %5792 = vmatprep.subr.mxu0 0.0
        %5793 = vmatpush1.xpose.msra.mxu0 0.0
        %5794 = vmatprep.subr.mxu0 0.0
        %5795 = vmatpush1.xpose.msra.mxu0 0.0
        %5796 = vmatprep.subr.mxu0 0.0
        %5797 = vmatpush1.xpose.msra.mxu0 0.0
        %5798 = vmatprep.subr.mxu0 0.0
        %5799 = vmatpush1.xpose.msra.mxu0 0.0
        %5800 = vmatprep.subr.mxu0 0.0
        %5801 = vmatpush1.xpose.msra.mxu0 %v3931
        %5802 = vmatprep.subr.mxu0 0.0
        %5803 = vmatpush1.xpose.msra.mxu0 %v3928
        %5804 = vmatprep.subr.mxu0 0.0
        %5805 = vmatpush2.xpose.msra.mxu0 0.0
        %5806 = vmatprep.subr.mxu0 0.0
        %5807 = vmatpush2.xpose.msra.mxu0 0.0
        %5808 = vmatprep.subr.mxu0 0.0
        %5809 = vmatpush2.xpose.msra.mxu0 0.0
        %5810 = vmatprep.subr.mxu0 0.0
        %5811 = vmatpush2.xpose.msra.mxu0 0.0
        %5812 = vmatprep.subr.mxu0 0.0
        %5813 = vmatpush2.xpose.msra.mxu0 0.0
        %5814 = vmatprep.subr.mxu0 0.0
        %5815 = vmatpush2.xpose.msra.mxu0 0.0
        %5816 = vmatprep.subr.mxu0 0.0
        %5817 = vmatpush2.xpose.msra.mxu0 0.0
        %5818 = vmatprep.subr.mxu0 0.0
        %5819 = vmatpush2.xpose.msra.mxu0 0.0
        %5820 = vmatprep.subr.mxu0 0.0
        %5821 = vmatpush2.xpose.msra.mxu0 0.0
        %5822 = vmatprep.subr.mxu0 0.0
        %5823 = vmatpush2.xpose.msra.mxu0 0.0
        %5824 = vmatprep.subr.mxu0 0.0
        %5825 = vmatpush2.xpose.msra.mxu0 0.0
        %5826 = vmatprep.subr.mxu0 0.0
        %5827 = vmatpush2.xpose.msra.mxu0 0.0
        %5828 = vmatprep.subr.mxu0 0.0
        %5829 = vmatpush2.xpose.msra.mxu0 0.0
        %5830 = vmatprep.subr.mxu0 0.0
        %5831 = vmatpush2.xpose.msra.mxu0 0.0
        %5832 = vmatprep.subr.mxu0 0.0
        %5833 = vmatpush2.xpose.msra.mxu0 0.0
        %5834 = vmatprep.subr.mxu0 0.0
        %5835 = vmatpush2.xpose.msra.mxu0 0.0
        %5836 = vmatprep.mubr.f32.mxu0 0.0
        %5837 = vmatmul.mubr.f32.gmra.mxu0 %v5770
        %v5838 = vpop.f32.mrf.mxu0
        %v5839 = vadd.f32 0.0, %v5838
        %v5840 = vpop.f32.mrf.mxu0
        %5841 = vdwg.mxu0
        %v5843 = vsel %vm616, %v5618, 0
        %5845 = vmatprep.subr.mxu0 0.0
        %5846 = vmatpush1.xpose.msra.mxu0 0.0
        %5847 = vmatprep.subr.mxu0 0.0
        %5848 = vmatpush1.xpose.msra.mxu0 0.0
        %5849 = vmatprep.subr.mxu0 0.0
        %5850 = vmatpush1.xpose.msra.mxu0 0.0
        %5851 = vmatprep.subr.mxu0 0.0
        %5852 = vmatpush1.xpose.msra.mxu0 0.0
        %5853 = vmatprep.subr.mxu0 0.0
        %5854 = vmatpush1.xpose.msra.mxu0 0.0
        %5855 = vmatprep.subr.mxu0 0.0
        %5856 = vmatpush1.xpose.msra.mxu0 0.0
        %5857 = vmatprep.subr.mxu0 0.0
        %5858 = vmatpush1.xpose.msra.mxu0 0.0
        %5859 = vmatprep.subr.mxu0 0.0
        %5860 = vmatpush1.xpose.msra.mxu0 0.0
        %5861 = vmatprep.subr.mxu0 0.0
        %5862 = vmatpush1.xpose.msra.mxu0 0.0
        %5863 = vmatprep.subr.mxu0 0.0
        %5864 = vmatpush1.xpose.msra.mxu0 0.0
        %5865 = vmatprep.subr.mxu0 0.0
        %5866 = vmatpush1.xpose.msra.mxu0 0.0
        %5867 = vmatprep.subr.mxu0 0.0
        %5868 = vmatpush1.xpose.msra.mxu0 0.0
        %5869 = vmatprep.subr.mxu0 0.0
        %5870 = vmatpush1.xpose.msra.mxu0 0.0
        %5871 = vmatprep.subr.mxu0 0.0
        %5872 = vmatpush1.xpose.msra.mxu0 0.0
        %5873 = vmatprep.subr.mxu0 0.0
        %5874 = vmatpush1.xpose.msra.mxu0 %v4010
        %5875 = vmatprep.subr.mxu0 0.0
        %5876 = vmatpush1.xpose.msra.mxu0 %v4007
        %5877 = vmatprep.subr.mxu0 0.0
        %5878 = vmatpush2.xpose.msra.mxu0 0.0
        %5879 = vmatprep.subr.mxu0 0.0
        %5880 = vmatpush2.xpose.msra.mxu0 0.0
        %5881 = vmatprep.subr.mxu0 0.0
        %5882 = vmatpush2.xpose.msra.mxu0 0.0
        %5883 = vmatprep.subr.mxu0 0.0
        %5884 = vmatpush2.xpose.msra.mxu0 0.0
        %5885 = vmatprep.subr.mxu0 0.0
        %5886 = vmatpush2.xpose.msra.mxu0 0.0
        %5887 = vmatprep.subr.mxu0 0.0
        %5888 = vmatpush2.xpose.msra.mxu0 0.0
        %5889 = vmatprep.subr.mxu0 0.0
        %5890 = vmatpush2.xpose.msra.mxu0 0.0
        %5891 = vmatprep.subr.mxu0 0.0
        %5892 = vmatpush2.xpose.msra.mxu0 0.0
        %5893 = vmatprep.subr.mxu0 0.0
        %5894 = vmatpush2.xpose.msra.mxu0 0.0
        %5895 = vmatprep.subr.mxu0 0.0
        %5896 = vmatpush2.xpose.msra.mxu0 0.0
        %5897 = vmatprep.subr.mxu0 0.0
        %5898 = vmatpush2.xpose.msra.mxu0 0.0
        %5899 = vmatprep.subr.mxu0 0.0
        %5900 = vmatpush2.xpose.msra.mxu0 0.0
        %5901 = vmatprep.subr.mxu0 0.0
        %5902 = vmatpush2.xpose.msra.mxu0 0.0
        %5903 = vmatprep.subr.mxu0 0.0
        %5904 = vmatpush2.xpose.msra.mxu0 0.0
        %5905 = vmatprep.subr.mxu0 0.0
        %5906 = vmatpush2.xpose.msra.mxu0 0.0
        %5907 = vmatprep.subr.mxu0 0.0
        %5908 = vmatpush2.xpose.msra.mxu0 0.0
        %5909 = vmatprep.mubr.f32.mxu0 0.0
        %5910 = vmatmul.mubr.f32.gmra.mxu0 %v5843
        %v5911 = vpop.f32.mrf.mxu0
        %v5912 = vadd.f32 0.0, %v5911
        %v5913 = vpop.f32.mrf.mxu0
        %5914 = vdwg.mxu0
        %v5916 = vsel %vm616, %v5619, 0
        %5918 = vmatprep.subr.mxu0 0.0
        %5919 = vmatpush1.xpose.msra.mxu0 0.0
        %5920 = vmatprep.subr.mxu0 0.0
        %5921 = vmatpush1.xpose.msra.mxu0 0.0
        %5922 = vmatprep.subr.mxu0 0.0
        %5923 = vmatpush1.xpose.msra.mxu0 0.0
        %5924 = vmatprep.subr.mxu0 0.0
        %5925 = vmatpush1.xpose.msra.mxu0 0.0
        %5926 = vmatprep.subr.mxu0 0.0
        %5927 = vmatpush1.xpose.msra.mxu0 0.0
        %5928 = vmatprep.subr.mxu0 0.0
        %5929 = vmatpush1.xpose.msra.mxu0 0.0
        %5930 = vmatprep.subr.mxu0 0.0
        %5931 = vmatpush1.xpose.msra.mxu0 0.0
        %5932 = vmatprep.subr.mxu0 0.0
        %5933 = vmatpush1.xpose.msra.mxu0 0.0
        %5934 = vmatprep.subr.mxu0 0.0
        %5935 = vmatpush1.xpose.msra.mxu0 0.0
        %5936 = vmatprep.subr.mxu0 0.0
        %5937 = vmatpush1.xpose.msra.mxu0 0.0
        %5938 = vmatprep.subr.mxu0 0.0
        %5939 = vmatpush1.xpose.msra.mxu0 0.0
        %5940 = vmatprep.subr.mxu0 0.0
        %5941 = vmatpush1.xpose.msra.mxu0 0.0
        %5942 = vmatprep.subr.mxu0 0.0
        %5943 = vmatpush1.xpose.msra.mxu0 0.0
        %5944 = vmatprep.subr.mxu0 0.0
        %5945 = vmatpush1.xpose.msra.mxu0 0.0
        %5946 = vmatprep.subr.mxu0 0.0
        %5947 = vmatpush1.xpose.msra.mxu0 %v4089
        %5948 = vmatprep.subr.mxu0 0.0
        %5949 = vmatpush1.xpose.msra.mxu0 %v4086
        %5950 = vmatprep.subr.mxu0 0.0
        %5951 = vmatpush2.xpose.msra.mxu0 0.0
        %5952 = vmatprep.subr.mxu0 0.0
        %5953 = vmatpush2.xpose.msra.mxu0 0.0
        %5954 = vmatprep.subr.mxu0 0.0
        %5955 = vmatpush2.xpose.msra.mxu0 0.0
        %5956 = vmatprep.subr.mxu0 0.0
        %5957 = vmatpush2.xpose.msra.mxu0 0.0
        %5958 = vmatprep.subr.mxu0 0.0
        %5959 = vmatpush2.xpose.msra.mxu0 0.0
        %5960 = vmatprep.subr.mxu0 0.0
        %5961 = vmatpush2.xpose.msra.mxu0 0.0
        %5962 = vmatprep.subr.mxu0 0.0
        %5963 = vmatpush2.xpose.msra.mxu0 0.0
        %5964 = vmatprep.subr.mxu0 0.0
        %5965 = vmatpush2.xpose.msra.mxu0 0.0
        %5966 = vmatprep.subr.mxu0 0.0
        %5967 = vmatpush2.xpose.msra.mxu0 0.0
        %5968 = vmatprep.subr.mxu0 0.0
        %5969 = vmatpush2.xpose.msra.mxu0 0.0
        %5970 = vmatprep.subr.mxu0 0.0
        %5971 = vmatpush2.xpose.msra.mxu0 0.0
        %5972 = vmatprep.subr.mxu0 0.0
        %5973 = vmatpush2.xpose.msra.mxu0 0.0
        %5974 = vmatprep.subr.mxu0 0.0
        %5975 = vmatpush2.xpose.msra.mxu0 0.0
        %5976 = vmatprep.subr.mxu0 0.0
        %5977 = vmatpush2.xpose.msra.mxu0 0.0
        %5978 = vmatprep.subr.mxu0 0.0
        %5979 = vmatpush2.xpose.msra.mxu0 0.0
        %5980 = vmatprep.subr.mxu0 0.0
        %5981 = vmatpush2.xpose.msra.mxu0 0.0
        %5982 = vmatprep.mubr.f32.mxu0 0.0
        %5983 = vmatmul.mubr.f32.gmra.mxu0 %v5916
        %v5984 = vpop.f32.mrf.mxu0
        %v5985 = vadd.f32 0.0, %v5984
        %v5986 = vpop.f32.mrf.mxu0
        %5987 = vdwg.mxu0
        %v5989 = vsel %vm616, %v5620, 0
        %5991 = vmatprep.subr.mxu0 0.0
        %5992 = vmatpush1.xpose.msra.mxu0 0.0
        %5993 = vmatprep.subr.mxu0 0.0
        %5994 = vmatpush1.xpose.msra.mxu0 0.0
        %5995 = vmatprep.subr.mxu0 0.0
        %5996 = vmatpush1.xpose.msra.mxu0 0.0
        %5997 = vmatprep.subr.mxu0 0.0
        %5998 = vmatpush1.xpose.msra.mxu0 0.0
        %5999 = vmatprep.subr.mxu0 0.0
        %6000 = vmatpush1.xpose.msra.mxu0 0.0
        %6001 = vmatprep.subr.mxu0 0.0
        %6002 = vmatpush1.xpose.msra.mxu0 0.0
        %6003 = vmatprep.subr.mxu0 0.0
        %6004 = vmatpush1.xpose.msra.mxu0 0.0
        %6005 = vmatprep.subr.mxu0 0.0
        %6006 = vmatpush1.xpose.msra.mxu0 0.0
        %6007 = vmatprep.subr.mxu0 0.0
        %6008 = vmatpush1.xpose.msra.mxu0 0.0
        %6009 = vmatprep.subr.mxu0 0.0
        %6010 = vmatpush1.xpose.msra.mxu0 0.0
        %6011 = vmatprep.subr.mxu0 0.0
        %6012 = vmatpush1.xpose.msra.mxu0 0.0
        %6013 = vmatprep.subr.mxu0 0.0
        %6014 = vmatpush1.xpose.msra.mxu0 0.0
        %6015 = vmatprep.subr.mxu0 0.0
        %6016 = vmatpush1.xpose.msra.mxu0 0.0
        %6017 = vmatprep.subr.mxu0 0.0
        %6018 = vmatpush1.xpose.msra.mxu0 0.0
        %6019 = vmatprep.subr.mxu0 0.0
        %6020 = vmatpush1.xpose.msra.mxu0 %v4168
        %6021 = vmatprep.subr.mxu0 0.0
        %6022 = vmatpush1.xpose.msra.mxu0 %v4165
        %6023 = vmatprep.subr.mxu0 0.0
        %6024 = vmatpush2.xpose.msra.mxu0 0.0
        %6025 = vmatprep.subr.mxu0 0.0
        %6026 = vmatpush2.xpose.msra.mxu0 0.0
        %6027 = vmatprep.subr.mxu0 0.0
        %6028 = vmatpush2.xpose.msra.mxu0 0.0
        %6029 = vmatprep.subr.mxu0 0.0
        %6030 = vmatpush2.xpose.msra.mxu0 0.0
        %6031 = vmatprep.subr.mxu0 0.0
        %6032 = vmatpush2.xpose.msra.mxu0 0.0
        %6033 = vmatprep.subr.mxu0 0.0
        %6034 = vmatpush2.xpose.msra.mxu0 0.0
        %6035 = vmatprep.subr.mxu0 0.0
        %6036 = vmatpush2.xpose.msra.mxu0 0.0
        %6037 = vmatprep.subr.mxu0 0.0
        %6038 = vmatpush2.xpose.msra.mxu0 0.0
        %6039 = vmatprep.subr.mxu0 0.0
        %6040 = vmatpush2.xpose.msra.mxu0 0.0
        %6041 = vmatprep.subr.mxu0 0.0
        %6042 = vmatpush2.xpose.msra.mxu0 0.0
        %6043 = vmatprep.subr.mxu0 0.0
        %6044 = vmatpush2.xpose.msra.mxu0 0.0
        %6045 = vmatprep.subr.mxu0 0.0
        %6046 = vmatpush2.xpose.msra.mxu0 0.0
        %6047 = vmatprep.subr.mxu0 0.0
        %6048 = vmatpush2.xpose.msra.mxu0 0.0
        %6049 = vmatprep.subr.mxu0 0.0
        %6050 = vmatpush2.xpose.msra.mxu0 0.0
        %6051 = vmatprep.subr.mxu0 0.0
        %6052 = vmatpush2.xpose.msra.mxu0 0.0
        %6053 = vmatprep.subr.mxu0 0.0
        %6054 = vmatpush2.xpose.msra.mxu0 0.0
        %6055 = vmatprep.mubr.f32.mxu0 0.0
        %6056 = vmatmul.mubr.f32.gmra.mxu0 %v5989
        %v6057 = vpop.f32.mrf.mxu0
        %v6058 = vadd.f32 0.0, %v6057
        %v6059 = vpop.f32.mrf.mxu0
        %6060 = vdwg.mxu0
        %v6062 = vsel %vm616, %v5621, 0
        %6064 = vmatprep.subr.mxu0 0.0
        %6065 = vmatpush1.xpose.msra.mxu0 0.0
        %6066 = vmatprep.subr.mxu0 0.0
        %6067 = vmatpush1.xpose.msra.mxu0 0.0
        %6068 = vmatprep.subr.mxu0 0.0
        %6069 = vmatpush1.xpose.msra.mxu0 0.0
        %6070 = vmatprep.subr.mxu0 0.0
        %6071 = vmatpush1.xpose.msra.mxu0 0.0
        %6072 = vmatprep.subr.mxu0 0.0
        %6073 = vmatpush1.xpose.msra.mxu0 0.0
        %6074 = vmatprep.subr.mxu0 0.0
        %6075 = vmatpush1.xpose.msra.mxu0 0.0
        %6076 = vmatprep.subr.mxu0 0.0
        %6077 = vmatpush1.xpose.msra.mxu0 0.0
        %6078 = vmatprep.subr.mxu0 0.0
        %6079 = vmatpush1.xpose.msra.mxu0 0.0
        %6080 = vmatprep.subr.mxu0 0.0
        %6081 = vmatpush1.xpose.msra.mxu0 0.0
        %6082 = vmatprep.subr.mxu0 0.0
        %6083 = vmatpush1.xpose.msra.mxu0 0.0
        %6084 = vmatprep.subr.mxu0 0.0
        %6085 = vmatpush1.xpose.msra.mxu0 0.0
        %6086 = vmatprep.subr.mxu0 0.0
        %6087 = vmatpush1.xpose.msra.mxu0 0.0
        %6088 = vmatprep.subr.mxu0 0.0
        %6089 = vmatpush1.xpose.msra.mxu0 0.0
        %6090 = vmatprep.subr.mxu0 0.0
        %6091 = vmatpush1.xpose.msra.mxu0 0.0
        %6092 = vmatprep.subr.mxu0 0.0
        %6093 = vmatpush1.xpose.msra.mxu0 %v4247
        %6094 = vmatprep.subr.mxu0 0.0
        %6095 = vmatpush1.xpose.msra.mxu0 %v4244
        %6096 = vmatprep.subr.mxu0 0.0
        %6097 = vmatpush2.xpose.msra.mxu0 0.0
        %6098 = vmatprep.subr.mxu0 0.0
        %6099 = vmatpush2.xpose.msra.mxu0 0.0
        %6100 = vmatprep.subr.mxu0 0.0
        %6101 = vmatpush2.xpose.msra.mxu0 0.0
        %6102 = vmatprep.subr.mxu0 0.0
        %6103 = vmatpush2.xpose.msra.mxu0 0.0
        %6104 = vmatprep.subr.mxu0 0.0
        %6105 = vmatpush2.xpose.msra.mxu0 0.0
        %6106 = vmatprep.subr.mxu0 0.0
        %6107 = vmatpush2.xpose.msra.mxu0 0.0
        %6108 = vmatprep.subr.mxu0 0.0
        %6109 = vmatpush2.xpose.msra.mxu0 0.0
        %6110 = vmatprep.subr.mxu0 0.0
        %6111 = vmatpush2.xpose.msra.mxu0 0.0
        %6112 = vmatprep.subr.mxu0 0.0
        %6113 = vmatpush2.xpose.msra.mxu0 0.0
        %6114 = vmatprep.subr.mxu0 0.0
        %6115 = vmatpush2.xpose.msra.mxu0 0.0
        %6116 = vmatprep.subr.mxu0 0.0
        %6117 = vmatpush2.xpose.msra.mxu0 0.0
        %6118 = vmatprep.subr.mxu0 0.0
        %6119 = vmatpush2.xpose.msra.mxu0 0.0
        %6120 = vmatprep.subr.mxu0 0.0
        %6121 = vmatpush2.xpose.msra.mxu0 0.0
        %6122 = vmatprep.subr.mxu0 0.0
        %6123 = vmatpush2.xpose.msra.mxu0 0.0
        %6124 = vmatprep.subr.mxu0 0.0
        %6125 = vmatpush2.xpose.msra.mxu0 0.0
        %6126 = vmatprep.subr.mxu0 0.0
        %6127 = vmatpush2.xpose.msra.mxu0 0.0
        %6128 = vmatprep.mubr.f32.mxu0 0.0
        %6129 = vmatmul.mubr.f32.gmra.mxu0 %v6062
        %v6130 = vpop.f32.mrf.mxu0
        %v6131 = vadd.f32 0.0, %v6130
        %v6132 = vpop.f32.mrf.mxu0
        %6133 = vdwg.mxu0
        %v6135 = vsel %vm616, %v5622, 0
        %6137 = vmatprep.subr.mxu0 0.0
        %6138 = vmatpush1.xpose.msra.mxu0 0.0
        %6139 = vmatprep.subr.mxu0 0.0
        %6140 = vmatpush1.xpose.msra.mxu0 0.0
        %6141 = vmatprep.subr.mxu0 0.0
        %6142 = vmatpush1.xpose.msra.mxu0 0.0
        %6143 = vmatprep.subr.mxu0 0.0
        %6144 = vmatpush1.xpose.msra.mxu0 0.0
        %6145 = vmatprep.subr.mxu0 0.0
        %6146 = vmatpush1.xpose.msra.mxu0 0.0
        %6147 = vmatprep.subr.mxu0 0.0
        %6148 = vmatpush1.xpose.msra.mxu0 0.0
        %6149 = vmatprep.subr.mxu0 0.0
        %6150 = vmatpush1.xpose.msra.mxu0 0.0
        %6151 = vmatprep.subr.mxu0 0.0
        %6152 = vmatpush1.xpose.msra.mxu0 0.0
        %6153 = vmatprep.subr.mxu0 0.0
        %6154 = vmatpush1.xpose.msra.mxu0 0.0
        %6155 = vmatprep.subr.mxu0 0.0
        %6156 = vmatpush1.xpose.msra.mxu0 0.0
        %6157 = vmatprep.subr.mxu0 0.0
        %6158 = vmatpush1.xpose.msra.mxu0 0.0
        %6159 = vmatprep.subr.mxu0 0.0
        %6160 = vmatpush1.xpose.msra.mxu0 0.0
        %6161 = vmatprep.subr.mxu0 0.0
        %6162 = vmatpush1.xpose.msra.mxu0 0.0
        %6163 = vmatprep.subr.mxu0 0.0
        %6164 = vmatpush1.xpose.msra.mxu0 0.0
        %6165 = vmatprep.subr.mxu0 0.0
        %6166 = vmatpush1.xpose.msra.mxu0 %v4326
        %6167 = vmatprep.subr.mxu0 0.0
        %6168 = vmatpush1.xpose.msra.mxu0 %v4323
        %6169 = vmatprep.subr.mxu0 0.0
        %6170 = vmatpush2.xpose.msra.mxu0 0.0
        %6171 = vmatprep.subr.mxu0 0.0
        %6172 = vmatpush2.xpose.msra.mxu0 0.0
        %6173 = vmatprep.subr.mxu0 0.0
        %6174 = vmatpush2.xpose.msra.mxu0 0.0
        %6175 = vmatprep.subr.mxu0 0.0
        %6176 = vmatpush2.xpose.msra.mxu0 0.0
        %6177 = vmatprep.subr.mxu0 0.0
        %6178 = vmatpush2.xpose.msra.mxu0 0.0
        %6179 = vmatprep.subr.mxu0 0.0
        %6180 = vmatpush2.xpose.msra.mxu0 0.0
        %6181 = vmatprep.subr.mxu0 0.0
        %6182 = vmatpush2.xpose.msra.mxu0 0.0
        %6183 = vmatprep.subr.mxu0 0.0
        %6184 = vmatpush2.xpose.msra.mxu0 0.0
        %6185 = vmatprep.subr.mxu0 0.0
        %6186 = vmatpush2.xpose.msra.mxu0 0.0
        %6187 = vmatprep.subr.mxu0 0.0
        %6188 = vmatpush2.xpose.msra.mxu0 0.0
        %6189 = vmatprep.subr.mxu0 0.0
        %6190 = vmatpush2.xpose.msra.mxu0 0.0
        %6191 = vmatprep.subr.mxu0 0.0
        %6192 = vmatpush2.xpose.msra.mxu0 0.0
        %6193 = vmatprep.subr.mxu0 0.0
        %6194 = vmatpush2.xpose.msra.mxu0 0.0
        %6195 = vmatprep.subr.mxu0 0.0
        %6196 = vmatpush2.xpose.msra.mxu0 0.0
        %6197 = vmatprep.subr.mxu0 0.0
        %6198 = vmatpush2.xpose.msra.mxu0 0.0
        %6199 = vmatprep.subr.mxu0 0.0
        %6200 = vmatpush2.xpose.msra.mxu0 0.0
        %6201 = vmatprep.mubr.f32.mxu0 0.0
        %6202 = vmatmul.mubr.f32.gmra.mxu0 %v6135
        %v6203 = vpop.f32.mrf.mxu0
        %v6204 = vadd.f32 0.0, %v6203
        %v6205 = vpop.f32.mrf.mxu0
        %6206 = vdwg.mxu0
        %v6207 = vsel %vm4398, %v5693, -inf
        %6208 = vmax.xlane.f32.xlu0 %v6207
        %v6209 = vpop.xlane.xlu0 %6208
        %v6210 = vsel %vm4398, %v5766, -inf
        %6211 = vmax.xlane.f32.xlu0 %v6210
        %v6212 = vpop.xlane.xlu0 %6211
        %v6213 = vsel %vm4398, %v5839, -inf
        %6214 = vmax.xlane.f32.xlu0 %v6213
        %v6215 = vpop.xlane.xlu0 %6214
        %v6216 = vsel %vm4398, %v5912, -inf
        %6217 = vmax.xlane.f32.xlu0 %v6216
        %v6218 = vpop.xlane.xlu0 %6217
        %v6219 = vsel %vm4398, %v5985, -inf
        %6220 = vmax.xlane.f32.xlu0 %v6219
        %v6221 = vpop.xlane.xlu0 %6220
        %v6222 = vsel %vm4398, %v6058, -inf
        %6223 = vmax.xlane.f32.xlu0 %v6222
        %v6224 = vpop.xlane.xlu0 %6223
        %v6225 = vsel %vm4398, %v6131, -inf
        %6226 = vmax.xlane.f32.xlu0 %v6225
        %v6227 = vpop.xlane.xlu0 %6226
        %v6228 = vsel %vm4398, %v6204, -inf
        %6229 = vmax.xlane.f32.xlu0 %v6228
        %v6230 = vpop.xlane.xlu0 %6229
        %v6231 = vsub.f32 %v5693, %v6209
        %v6232 = vsub.f32 %v5766, %v6212
        %v6233 = vsub.f32 %v5839, %v6215
        %v6234 = vsub.f32 %v5912, %v6218
        %v6235 = vsub.f32 %v5985, %v6221
        %v6236 = vsub.f32 %v6058, %v6224
        %v6237 = vsub.f32 %v6131, %v6227
        %v6238 = vsub.f32 %v6204, %v6230
        %v6239 = vmul.f32 %v6231, 1.442695
        %v6240 = vpow.pop %v6239
        %v6241 = vmul.f32 %v6232, 1.442695
        %v6242 = vpow.pop %v6241
        %v6243 = vmul.f32 %v6233, 1.442695
        %v6244 = vpow.pop %v6243
        %v6245 = vmul.f32 %v6234, 1.442695
        %v6246 = vpow.pop %v6245
        %v6247 = vmul.f32 %v6235, 1.442695
        %v6248 = vpow.pop %v6247
        %v6249 = vmul.f32 %v6236, 1.442695
        %v6250 = vpow.pop %v6249
        %v6251 = vmul.f32 %v6237, 1.442695
        %v6252 = vpow.pop %v6251
        %v6253 = vmul.f32 %v6238, 1.442695
        %v6254 = vpow.pop %v6253
        %v6255 = vsel %vm4398, %v6240, 0.0
        %6256 = vadd.xlane.f32.xlu0 %v6255
        %v6257 = vpop.xlane.xlu0 %6256
        %v6258 = vsel %vm4398, %v6242, 0.0
        %6259 = vadd.xlane.f32.xlu0 %v6258
        %v6260 = vpop.xlane.xlu0 %6259
        %v6261 = vsel %vm4398, %v6244, 0.0
        %6262 = vadd.xlane.f32.xlu0 %v6261
        %v6263 = vpop.xlane.xlu0 %6262
        %v6264 = vsel %vm4398, %v6246, 0.0
        %6265 = vadd.xlane.f32.xlu0 %v6264
        %v6266 = vpop.xlane.xlu0 %6265
        %v6267 = vsel %vm4398, %v6248, 0.0
        %6268 = vadd.xlane.f32.xlu0 %v6267
        %v6269 = vpop.xlane.xlu0 %6268
        %v6270 = vsel %vm4398, %v6250, 0.0
        %6271 = vadd.xlane.f32.xlu0 %v6270
        %v6272 = vpop.xlane.xlu0 %6271
        %v6273 = vsel %vm4398, %v6252, 0.0
        %6274 = vadd.xlane.f32.xlu0 %v6273
        %v6275 = vpop.xlane.xlu0 %6274
        %v6276 = vsel %vm4398, %v6254, 0.0
        %6277 = vadd.xlane.f32.xlu0 %v6276
        %v6278 = vpop.xlane.xlu0 %6277
        %v6279 = vrcp.pop %v6257
        %v6280 = vrcp.pop %v6260
        %v6281 = vrcp.pop %v6263
        %v6282 = vrcp.pop %v6266
        %v6283 = vrcp.pop %v6269
        %v6284 = vrcp.pop %v6272
        %v6285 = vrcp.pop %v6275
        %v6286 = vrcp.pop %v6278
        %v6287 = vmul.f32 %v6240, %v6279
        %v6288 = vmul.f32 %v6242, %v6280
        %v6289 = vmul.f32 %v6244, %v6281
        %v6290 = vmul.f32 %v6246, %v6282
        %v6291 = vmul.f32 %v6248, %v6283
        %v6292 = vmul.f32 %v6250, %v6284
        %v6293 = vmul.f32 %v6252, %v6285
        %v6294 = vmul.f32 %v6254, %v6286
        %v6295 = vpack.c.bf16 %v6287, %v6287
        %v6296 = vpack.c.bf16 %v6288, %v6288
        %v6297 = vpack.c.bf16 %v6289, %v6289
        %v6298 = vpack.c.bf16 %v6290, %v6290
        %v6299 = vpack.c.bf16 %v6291, %v6291
        %v6300 = vpack.c.bf16 %v6292, %v6292
        %v6301 = vpack.c.bf16 %v6293, %v6293
        %v6302 = vpack.c.bf16 %v6294, %v6294
        %v6304 = vsel %vm4398, %v6295, 0
        %6306 = vmatprep.subr.bf16.mxu0 0
        %6307 = vmatpush1.bf16.msra.mxu0 0
        %6308 = vmatprep.subr.bf16.mxu0 0
        %6309 = vmatpush1.bf16.msra.mxu0 0
        %6310 = vmatprep.subr.bf16.mxu0 0
        %6311 = vmatpush1.bf16.msra.mxu0 0
        %6312 = vmatprep.subr.bf16.mxu0 0
        %6313 = vmatpush1.bf16.msra.mxu0 0
        %6314 = vmatprep.subr.bf16.mxu0 0
        %6315 = vmatpush1.bf16.msra.mxu0 0
        %6316 = vmatprep.subr.bf16.mxu0 0
        %6317 = vmatpush1.bf16.msra.mxu0 0
        %6318 = vmatprep.subr.bf16.mxu0 0
        %6319 = vmatpush1.bf16.msra.mxu0 0
        %6320 = vmatprep.subr.bf16.mxu0 0
        %6321 = vmatpush1.bf16.msra.mxu0 %v4495
        %6322 = vmatprep.subr.bf16.mxu0 0
        %6323 = vmatpush2.bf16.msra.mxu0 0
        %6324 = vmatprep.subr.bf16.mxu0 0
        %6325 = vmatpush2.bf16.msra.mxu0 0
        %6326 = vmatprep.subr.bf16.mxu0 0
        %6327 = vmatpush2.bf16.msra.mxu0 0
        %6328 = vmatprep.subr.bf16.mxu0 0
        %6329 = vmatpush2.bf16.msra.mxu0 0
        %6330 = vmatprep.subr.bf16.mxu0 0
        %6331 = vmatpush2.bf16.msra.mxu0 0
        %6332 = vmatprep.subr.bf16.mxu0 0
        %6333 = vmatpush2.bf16.msra.mxu0 0
        %6334 = vmatprep.subr.bf16.mxu0 0
        %6335 = vmatpush2.bf16.msra.mxu0 0
        %6336 = vmatprep.subr.bf16.mxu0 0
        %6337 = vmatpush2.bf16.msra.mxu0 0
        %6338 = vmatprep.mubr.bf16.mxu0 0
        %6339 = vmatmul.mubr.bf16.gmra.mxu0 %v6304
        %v6340 = vpop.f32.mrf.mxu0
        %v6341 = vadd.f32 0.0, %v6340
        %v6342 = vpop.f32.mrf.mxu0
        %v6343 = vpop.f32.mrf.mxu0
        %v6344 = vpop.f32.mrf.mxu0
        %6345 = vdwg.mxu0
        %v6347 = vsel %vm4398, %v6296, 0
        %6349 = vmatprep.subr.bf16.mxu0 0
        %6350 = vmatpush1.bf16.msra.mxu0 0
        %6351 = vmatprep.subr.bf16.mxu0 0
        %6352 = vmatpush1.bf16.msra.mxu0 0
        %6353 = vmatprep.subr.bf16.mxu0 0
        %6354 = vmatpush1.bf16.msra.mxu0 0
        %6355 = vmatprep.subr.bf16.mxu0 0
        %6356 = vmatpush1.bf16.msra.mxu0 0
        %6357 = vmatprep.subr.bf16.mxu0 0
        %6358 = vmatpush1.bf16.msra.mxu0 0
        %6359 = vmatprep.subr.bf16.mxu0 0
        %6360 = vmatpush1.bf16.msra.mxu0 0
        %6361 = vmatprep.subr.bf16.mxu0 0
        %6362 = vmatpush1.bf16.msra.mxu0 0
        %6363 = vmatprep.subr.bf16.mxu0 0
        %6364 = vmatpush1.bf16.msra.mxu0 %v4496
        %6365 = vmatprep.subr.bf16.mxu0 0
        %6366 = vmatpush2.bf16.msra.mxu0 0
        %6367 = vmatprep.subr.bf16.mxu0 0
        %6368 = vmatpush2.bf16.msra.mxu0 0
        %6369 = vmatprep.subr.bf16.mxu0 0
        %6370 = vmatpush2.bf16.msra.mxu0 0
        %6371 = vmatprep.subr.bf16.mxu0 0
        %6372 = vmatpush2.bf16.msra.mxu0 0
        %6373 = vmatprep.subr.bf16.mxu0 0
        %6374 = vmatpush2.bf16.msra.mxu0 0
        %6375 = vmatprep.subr.bf16.mxu0 0
        %6376 = vmatpush2.bf16.msra.mxu0 0
        %6377 = vmatprep.subr.bf16.mxu0 0
        %6378 = vmatpush2.bf16.msra.mxu0 0
        %6379 = vmatprep.subr.bf16.mxu0 0
        %6380 = vmatpush2.bf16.msra.mxu0 0
        %6381 = vmatprep.mubr.bf16.mxu0 0
        %6382 = vmatmul.mubr.bf16.gmra.mxu0 %v6347
        %v6383 = vpop.f32.mrf.mxu0
        %v6384 = vadd.f32 0.0, %v6383
        %v6385 = vpop.f32.mrf.mxu0
        %v6386 = vpop.f32.mrf.mxu0
        %v6387 = vpop.f32.mrf.mxu0
        %6388 = vdwg.mxu0
        %v6390 = vsel %vm4398, %v6297, 0
        %6392 = vmatprep.subr.bf16.mxu0 0
        %6393 = vmatpush1.bf16.msra.mxu0 0
        %6394 = vmatprep.subr.bf16.mxu0 0
        %6395 = vmatpush1.bf16.msra.mxu0 0
        %6396 = vmatprep.subr.bf16.mxu0 0
        %6397 = vmatpush1.bf16.msra.mxu0 0
        %6398 = vmatprep.subr.bf16.mxu0 0
        %6399 = vmatpush1.bf16.msra.mxu0 0
        %6400 = vmatprep.subr.bf16.mxu0 0
        %6401 = vmatpush1.bf16.msra.mxu0 0
        %6402 = vmatprep.subr.bf16.mxu0 0
        %6403 = vmatpush1.bf16.msra.mxu0 0
        %6404 = vmatprep.subr.bf16.mxu0 0
        %6405 = vmatpush1.bf16.msra.mxu0 0
        %6406 = vmatprep.subr.bf16.mxu0 0
        %6407 = vmatpush1.bf16.msra.mxu0 %v4497
        %6408 = vmatprep.subr.bf16.mxu0 0
        %6409 = vmatpush2.bf16.msra.mxu0 0
        %6410 = vmatprep.subr.bf16.mxu0 0
        %6411 = vmatpush2.bf16.msra.mxu0 0
        %6412 = vmatprep.subr.bf16.mxu0 0
        %6413 = vmatpush2.bf16.msra.mxu0 0
        %6414 = vmatprep.subr.bf16.mxu0 0
        %6415 = vmatpush2.bf16.msra.mxu0 0
        %6416 = vmatprep.subr.bf16.mxu0 0
        %6417 = vmatpush2.bf16.msra.mxu0 0
        %6418 = vmatprep.subr.bf16.mxu0 0
        %6419 = vmatpush2.bf16.msra.mxu0 0
        %6420 = vmatprep.subr.bf16.mxu0 0
        %6421 = vmatpush2.bf16.msra.mxu0 0
        %6422 = vmatprep.subr.bf16.mxu0 0
        %6423 = vmatpush2.bf16.msra.mxu0 0
        %6424 = vmatprep.mubr.bf16.mxu0 0
        %6425 = vmatmul.mubr.bf16.gmra.mxu0 %v6390
        %v6426 = vpop.f32.mrf.mxu0
        %v6427 = vadd.f32 0.0, %v6426
        %v6428 = vpop.f32.mrf.mxu0
        %v6429 = vpop.f32.mrf.mxu0
        %v6430 = vpop.f32.mrf.mxu0
        %6431 = vdwg.mxu0
        %v6433 = vsel %vm4398, %v6298, 0
        %6435 = vmatprep.subr.bf16.mxu0 0
        %6436 = vmatpush1.bf16.msra.mxu0 0
        %6437 = vmatprep.subr.bf16.mxu0 0
        %6438 = vmatpush1.bf16.msra.mxu0 0
        %6439 = vmatprep.subr.bf16.mxu0 0
        %6440 = vmatpush1.bf16.msra.mxu0 0
        %6441 = vmatprep.subr.bf16.mxu0 0
        %6442 = vmatpush1.bf16.msra.mxu0 0
        %6443 = vmatprep.subr.bf16.mxu0 0
        %6444 = vmatpush1.bf16.msra.mxu0 0
        %6445 = vmatprep.subr.bf16.mxu0 0
        %6446 = vmatpush1.bf16.msra.mxu0 0
        %6447 = vmatprep.subr.bf16.mxu0 0
        %6448 = vmatpush1.bf16.msra.mxu0 0
        %6449 = vmatprep.subr.bf16.mxu0 0
        %6450 = vmatpush1.bf16.msra.mxu0 %v4498
        %6451 = vmatprep.subr.bf16.mxu0 0
        %6452 = vmatpush2.bf16.msra.mxu0 0
        %6453 = vmatprep.subr.bf16.mxu0 0
        %6454 = vmatpush2.bf16.msra.mxu0 0
        %6455 = vmatprep.subr.bf16.mxu0 0
        %6456 = vmatpush2.bf16.msra.mxu0 0
        %6457 = vmatprep.subr.bf16.mxu0 0
        %6458 = vmatpush2.bf16.msra.mxu0 0
        %6459 = vmatprep.subr.bf16.mxu0 0
        %6460 = vmatpush2.bf16.msra.mxu0 0
        %6461 = vmatprep.subr.bf16.mxu0 0
        %6462 = vmatpush2.bf16.msra.mxu0 0
        %6463 = vmatprep.subr.bf16.mxu0 0
        %6464 = vmatpush2.bf16.msra.mxu0 0
        %6465 = vmatprep.subr.bf16.mxu0 0
        %6466 = vmatpush2.bf16.msra.mxu0 0
        %6467 = vmatprep.mubr.bf16.mxu0 0
        %6468 = vmatmul.mubr.bf16.gmra.mxu0 %v6433
        %v6469 = vpop.f32.mrf.mxu0
        %v6470 = vadd.f32 0.0, %v6469
        %v6471 = vpop.f32.mrf.mxu0
        %v6472 = vpop.f32.mrf.mxu0
        %v6473 = vpop.f32.mrf.mxu0
        %6474 = vdwg.mxu0
        %v6476 = vsel %vm4398, %v6299, 0
        %6478 = vmatprep.subr.bf16.mxu0 0
        %6479 = vmatpush1.bf16.msra.mxu0 0
        %6480 = vmatprep.subr.bf16.mxu0 0
        %6481 = vmatpush1.bf16.msra.mxu0 0
        %6482 = vmatprep.subr.bf16.mxu0 0
        %6483 = vmatpush1.bf16.msra.mxu0 0
        %6484 = vmatprep.subr.bf16.mxu0 0
        %6485 = vmatpush1.bf16.msra.mxu0 0
        %6486 = vmatprep.subr.bf16.mxu0 0
        %6487 = vmatpush1.bf16.msra.mxu0 0
        %6488 = vmatprep.subr.bf16.mxu0 0
        %6489 = vmatpush1.bf16.msra.mxu0 0
        %6490 = vmatprep.subr.bf16.mxu0 0
        %6491 = vmatpush1.bf16.msra.mxu0 0
        %6492 = vmatprep.subr.bf16.mxu0 0
        %6493 = vmatpush1.bf16.msra.mxu0 %v4499
        %6494 = vmatprep.subr.bf16.mxu0 0
        %6495 = vmatpush2.bf16.msra.mxu0 0
        %6496 = vmatprep.subr.bf16.mxu0 0
        %6497 = vmatpush2.bf16.msra.mxu0 0
        %6498 = vmatprep.subr.bf16.mxu0 0
        %6499 = vmatpush2.bf16.msra.mxu0 0
        %6500 = vmatprep.subr.bf16.mxu0 0
        %6501 = vmatpush2.bf16.msra.mxu0 0
        %6502 = vmatprep.subr.bf16.mxu0 0
        %6503 = vmatpush2.bf16.msra.mxu0 0
        %6504 = vmatprep.subr.bf16.mxu0 0
        %6505 = vmatpush2.bf16.msra.mxu0 0
        %6506 = vmatprep.subr.bf16.mxu0 0
        %6507 = vmatpush2.bf16.msra.mxu0 0
        %6508 = vmatprep.subr.bf16.mxu0 0
        %6509 = vmatpush2.bf16.msra.mxu0 0
        %6510 = vmatprep.mubr.bf16.mxu0 0
        %6511 = vmatmul.mubr.bf16.gmra.mxu0 %v6476
        %v6512 = vpop.f32.mrf.mxu0
        %v6513 = vadd.f32 0.0, %v6512
        %v6514 = vpop.f32.mrf.mxu0
        %v6515 = vpop.f32.mrf.mxu0
        %v6516 = vpop.f32.mrf.mxu0
        %6517 = vdwg.mxu0
        %v6519 = vsel %vm4398, %v6300, 0
        %6521 = vmatprep.subr.bf16.mxu0 0
        %6522 = vmatpush1.bf16.msra.mxu0 0
        %6523 = vmatprep.subr.bf16.mxu0 0
        %6524 = vmatpush1.bf16.msra.mxu0 0
        %6525 = vmatprep.subr.bf16.mxu0 0
        %6526 = vmatpush1.bf16.msra.mxu0 0
        %6527 = vmatprep.subr.bf16.mxu0 0
        %6528 = vmatpush1.bf16.msra.mxu0 0
        %6529 = vmatprep.subr.bf16.mxu0 0
        %6530 = vmatpush1.bf16.msra.mxu0 0
        %6531 = vmatprep.subr.bf16.mxu0 0
        %6532 = vmatpush1.bf16.msra.mxu0 0
        %6533 = vmatprep.subr.bf16.mxu0 0
        %6534 = vmatpush1.bf16.msra.mxu0 0
        %6535 = vmatprep.subr.bf16.mxu0 0
        %6536 = vmatpush1.bf16.msra.mxu0 %v4500
        %6537 = vmatprep.subr.bf16.mxu0 0
        %6538 = vmatpush2.bf16.msra.mxu0 0
        %6539 = vmatprep.subr.bf16.mxu0 0
        %6540 = vmatpush2.bf16.msra.mxu0 0
        %6541 = vmatprep.subr.bf16.mxu0 0
        %6542 = vmatpush2.bf16.msra.mxu0 0
        %6543 = vmatprep.subr.bf16.mxu0 0
        %6544 = vmatpush2.bf16.msra.mxu0 0
        %6545 = vmatprep.subr.bf16.mxu0 0
        %6546 = vmatpush2.bf16.msra.mxu0 0
        %6547 = vmatprep.subr.bf16.mxu0 0
        %6548 = vmatpush2.bf16.msra.mxu0 0
        %6549 = vmatprep.subr.bf16.mxu0 0
        %6550 = vmatpush2.bf16.msra.mxu0 0
        %6551 = vmatprep.subr.bf16.mxu0 0
        %6552 = vmatpush2.bf16.msra.mxu0 0
        %6553 = vmatprep.mubr.bf16.mxu0 0
        %6554 = vmatmul.mubr.bf16.gmra.mxu0 %v6519
        %v6555 = vpop.f32.mrf.mxu0
        %v6556 = vadd.f32 0.0, %v6555
        %v6557 = vpop.f32.mrf.mxu0
        %v6558 = vpop.f32.mrf.mxu0
        %v6559 = vpop.f32.mrf.mxu0
        %6560 = vdwg.mxu0
        %v6562 = vsel %vm4398, %v6301, 0
        %6564 = vmatprep.subr.bf16.mxu0 0
        %6565 = vmatpush1.bf16.msra.mxu0 0
        %6566 = vmatprep.subr.bf16.mxu0 0
        %6567 = vmatpush1.bf16.msra.mxu0 0
        %6568 = vmatprep.subr.bf16.mxu0 0
        %6569 = vmatpush1.bf16.msra.mxu0 0
        %6570 = vmatprep.subr.bf16.mxu0 0
        %6571 = vmatpush1.bf16.msra.mxu0 0
        %6572 = vmatprep.subr.bf16.mxu0 0
        %6573 = vmatpush1.bf16.msra.mxu0 0
        %6574 = vmatprep.subr.bf16.mxu0 0
        %6575 = vmatpush1.bf16.msra.mxu0 0
        %6576 = vmatprep.subr.bf16.mxu0 0
        %6577 = vmatpush1.bf16.msra.mxu0 0
        %6578 = vmatprep.subr.bf16.mxu0 0
        %6579 = vmatpush1.bf16.msra.mxu0 %v4501
        %6580 = vmatprep.subr.bf16.mxu0 0
        %6581 = vmatpush2.bf16.msra.mxu0 0
        %6582 = vmatprep.subr.bf16.mxu0 0
        %6583 = vmatpush2.bf16.msra.mxu0 0
        %6584 = vmatprep.subr.bf16.mxu0 0
        %6585 = vmatpush2.bf16.msra.mxu0 0
        %6586 = vmatprep.subr.bf16.mxu0 0
        %6587 = vmatpush2.bf16.msra.mxu0 0
        %6588 = vmatprep.subr.bf16.mxu0 0
        %6589 = vmatpush2.bf16.msra.mxu0 0
        %6590 = vmatprep.subr.bf16.mxu0 0
        %6591 = vmatpush2.bf16.msra.mxu0 0
        %6592 = vmatprep.subr.bf16.mxu0 0
        %6593 = vmatpush2.bf16.msra.mxu0 0
        %6594 = vmatprep.subr.bf16.mxu0 0
        %6595 = vmatpush2.bf16.msra.mxu0 0
        %6596 = vmatprep.mubr.bf16.mxu0 0
        %6597 = vmatmul.mubr.bf16.gmra.mxu0 %v6562
        %v6598 = vpop.f32.mrf.mxu0
        %v6599 = vadd.f32 0.0, %v6598
        %v6600 = vpop.f32.mrf.mxu0
        %v6601 = vpop.f32.mrf.mxu0
        %v6602 = vpop.f32.mrf.mxu0
        %6603 = vdwg.mxu0
        %v6605 = vsel %vm4398, %v6302, 0
        %6607 = vmatprep.subr.bf16.mxu0 0
        %6608 = vmatpush1.bf16.msra.mxu0 0
        %6609 = vmatprep.subr.bf16.mxu0 0
        %6610 = vmatpush1.bf16.msra.mxu0 0
        %6611 = vmatprep.subr.bf16.mxu0 0
        %6612 = vmatpush1.bf16.msra.mxu0 0
        %6613 = vmatprep.subr.bf16.mxu0 0
        %6614 = vmatpush1.bf16.msra.mxu0 0
        %6615 = vmatprep.subr.bf16.mxu0 0
        %6616 = vmatpush1.bf16.msra.mxu0 0
        %6617 = vmatprep.subr.bf16.mxu0 0
        %6618 = vmatpush1.bf16.msra.mxu0 0
        %6619 = vmatprep.subr.bf16.mxu0 0
        %6620 = vmatpush1.bf16.msra.mxu0 0
        %6621 = vmatprep.subr.bf16.mxu0 0
        %6622 = vmatpush1.bf16.msra.mxu0 %v4502
        %6623 = vmatprep.subr.bf16.mxu0 0
        %6624 = vmatpush2.bf16.msra.mxu0 0
        %6625 = vmatprep.subr.bf16.mxu0 0
        %6626 = vmatpush2.bf16.msra.mxu0 0
        %6627 = vmatprep.subr.bf16.mxu0 0
        %6628 = vmatpush2.bf16.msra.mxu0 0
        %6629 = vmatprep.subr.bf16.mxu0 0
        %6630 = vmatpush2.bf16.msra.mxu0 0
        %6631 = vmatprep.subr.bf16.mxu0 0
        %6632 = vmatpush2.bf16.msra.mxu0 0
        %6633 = vmatprep.subr.bf16.mxu0 0
        %6634 = vmatpush2.bf16.msra.mxu0 0
        %6635 = vmatprep.subr.bf16.mxu0 0
        %6636 = vmatpush2.bf16.msra.mxu0 0
        %6637 = vmatprep.subr.bf16.mxu0 0
        %6638 = vmatpush2.bf16.msra.mxu0 0
        %6639 = vmatprep.mubr.bf16.mxu0 0
        %6640 = vmatmul.mubr.bf16.gmra.mxu0 %v6605
        %v6641 = vpop.f32.mrf.mxu0
        %v6642 = vadd.f32 0.0, %v6641
        %v6643 = vpop.f32.mrf.mxu0
        %v6644 = vpop.f32.mrf.mxu0
        %v6645 = vpop.f32.mrf.mxu0
        %6646 = vdwg.mxu0
        %v6647 = vld [vmem:[%s4847] sm:$0xf]
        %v6648 = vld [vmem:[%s4847 + $0x4] sm:$0xf]
        %v6649 = vld [vmem:[%s4847 + $0x8] sm:$0xf]
        %v6650 = vld [vmem:[%s4847 + $0xc] sm:$0xf]
        %v6651 = vpack.c.bf16 %v6384, %v6341
        %v6652 = vpack.c.bf16 %v6470, %v6427
        %v6653 = vpack.c.bf16 %v6556, %v6513
        %v6654 = vpack.c.bf16 %v6642, %v6599
        %v6655 = vld [vmem:[%s4856] sm:$0x1]
        %v6657 = vlaneseq
        %v6658 = vshrl.u32 %v6657, 7
        %v6659 = vsub.s32 0, %v6658
        %v6660 = vrot.slane %v6655, %v6659
        %v6666 = vunpack.c.l.b16 %v6647
        %v6667 = vunpack.c.l.b16 %v6648
        %v6668 = vunpack.c.l.b16 %v6649
        %v6669 = vunpack.c.l.b16 %v6650
        %v6670 = vpack.c.b16 %v6667, %v6666
        %v6671 = vpack.c.b16 %v6669, %v6668
        %v6675 = vsel %vm616, %v6651, 0
        %v6678 = vsel %vm616, %v6652, 0
        %v6681 = vsel %vm616, %v6653, 0
        %v6684 = vsel %vm616, %v6654, 0
        %6686 = vmatprep.subr.bf16.mxu0 0
        %6687 = vmatpush1.bf16.msra.mxu0 0
        %6688 = vmatprep.subr.bf16.mxu0 0
        %6689 = vmatpush1.bf16.msra.mxu0 0
        %6690 = vmatprep.subr.bf16.mxu0 0
        %6691 = vmatpush1.bf16.msra.mxu0 0
        %6692 = vmatprep.subr.bf16.mxu0 0
        %6693 = vmatpush1.bf16.msra.mxu0 0
        %6694 = vmatprep.subr.bf16.mxu0 0
        %6695 = vmatpush1.bf16.msra.mxu0 0
        %6696 = vmatprep.subr.bf16.mxu0 0
        %6697 = vmatpush1.bf16.msra.mxu0 0
        %6698 = vmatprep.subr.bf16.mxu0 0
        %6699 = vmatpush1.bf16.msra.mxu0 %v6671
        %6700 = vmatprep.subr.bf16.mxu0 0
        %6701 = vmatpush1.bf16.msra.mxu0 %v6670
        %6702 = vmatprep.subr.bf16.mxu0 0
        %6703 = vmatpush2.bf16.msra.mxu0 0
        %6704 = vmatprep.subr.bf16.mxu0 0
        %6705 = vmatpush2.bf16.msra.mxu0 0
        %6706 = vmatprep.subr.bf16.mxu0 0
        %6707 = vmatpush2.bf16.msra.mxu0 0
        %6708 = vmatprep.subr.bf16.mxu0 0
        %6709 = vmatpush2.bf16.msra.mxu0 0
        %6710 = vmatprep.subr.bf16.mxu0 0
        %6711 = vmatpush2.bf16.msra.mxu0 0
        %6712 = vmatprep.subr.bf16.mxu0 0
        %6713 = vmatpush2.bf16.msra.mxu0 0
        %6714 = vmatprep.subr.bf16.mxu0 0
        %6715 = vmatpush2.bf16.msra.mxu0 0
        %6716 = vmatprep.subr.bf16.mxu0 0
        %6717 = vmatpush2.bf16.msra.mxu0 0
        %6718 = vmatprep.mubr.bf16.mxu0 0
        %6719 = vmatmul.mubr.bf16.gmra.mxu0 %v6675
        %v6720 = vpop.f32.mrf.mxu0
        %v6721 = vadd.f32 %v6660, %v6720
        %v6722 = vpop.f32.mrf.mxu0
        %v6723 = vpop.f32.mrf.mxu0
        %v6724 = vadd.f32 %v6660, %v6723
        %v6725 = vpop.f32.mrf.mxu0
        %6726 = vmatprep.mubr.bf16.mxu0 0
        %6727 = vmatmul.mubr.bf16.gmra.mxu0 %v6678
        %v6728 = vpop.f32.mrf.mxu0
        %v6729 = vadd.f32 %v6660, %v6728
        %v6730 = vpop.f32.mrf.mxu0
        %v6731 = vpop.f32.mrf.mxu0
        %v6732 = vadd.f32 %v6660, %v6731
        %v6733 = vpop.f32.mrf.mxu0
        %6734 = vmatprep.mubr.bf16.mxu0 0
        %6735 = vmatmul.mubr.bf16.gmra.mxu0 %v6681
        %v6736 = vpop.f32.mrf.mxu0
        %v6737 = vadd.f32 %v6660, %v6736
        %v6738 = vpop.f32.mrf.mxu0
        %v6739 = vpop.f32.mrf.mxu0
        %v6740 = vadd.f32 %v6660, %v6739
        %v6741 = vpop.f32.mrf.mxu0
        %6742 = vmatprep.mubr.bf16.mxu0 0
        %6743 = vmatmul.mubr.bf16.gmra.mxu0 %v6684
        %v6744 = vpop.f32.mrf.mxu0
        %v6745 = vadd.f32 %v6660, %v6744
        %v6746 = vpop.f32.mrf.mxu0
        %v6747 = vpop.f32.mrf.mxu0
        %v6748 = vadd.f32 %v6660, %v6747
        %v6749 = vpop.f32.mrf.mxu0
        %6750 = vdwg.mxu0
        %v6751 = vadd.f32 %v5495, %v6721
        %v6752 = vadd.f32 %v5496, %v6724
        %v6753 = vadd.f32 %v5497, %v6729
        %v6754 = vadd.f32 %v5498, %v6732
        %v6755 = vadd.f32 %v5499, %v6737
        %v6756 = vadd.f32 %v5500, %v6740
        %v6757 = vadd.f32 %v5501, %v6745
        %v6758 = vadd.f32 %v5502, %v6748
        %v6759 = vmul.f32 %v6751, 0.70710677
        %v6760 = vmul.f32 %v6752, 0.70710677
        %v6761 = vmul.f32 %v6753, 0.70710677
        %v6762 = vmul.f32 %v6754, 0.70710677
        %v6763 = vmul.f32 %v6755, 0.70710677
        %v6764 = vmul.f32 %v6756, 0.70710677
        %v6765 = vmul.f32 %v6757, 0.70710677
        %v6766 = vmul.f32 %v6758, 0.70710677
        %v6767 = vadd.f32 %v6759, %v4977
        %v6768 = vadd.f32 %v6760, %v4978
        %v6769 = vadd.f32 %v6761, %v4979
        %v6770 = vadd.f32 %v6762, %v4980
        %v6771 = vadd.f32 %v6763, %v4981
        %v6772 = vadd.f32 %v6764, %v4982
        %v6773 = vadd.f32 %v6765, %v4983
        %v6774 = vadd.f32 %v6766, %v4984
        %v6775 = vmul.f32 %v6767, 0.70710677
        %v6776 = vmul.f32 %v6768, 0.70710677
        %v6777 = vmul.f32 %v6769, 0.70710677
        %v6778 = vmul.f32 %v6770, 0.70710677
        %v6779 = vmul.f32 %v6771, 0.70710677
        %v6780 = vmul.f32 %v6772, 0.70710677
        %v6781 = vmul.f32 %v6773, 0.70710677
        %v6782 = vmul.f32 %v6774, 0.70710677
        %s6783 = scalar_lea.vmem [#allocation10], 16
        %v6784 = vld [vmem:[%s6783] sm:$0xf]
        %v6785 = vld [vmem:[%s6783 + $0x4] sm:$0xf]
        %v6786 = vld [vmem:[%s6783 + $0x8] sm:$0xf]
        %v6787 = vld [vmem:[%s6783 + $0xc] sm:$0xf]
        %v6788 = vpack.c.bf16 %v6776, %v6775
        %v6789 = vpack.c.bf16 %v6778, %v6777
        %v6790 = vpack.c.bf16 %v6780, %v6779
        %v6791 = vpack.c.bf16 %v6782, %v6781
        %s6792 = scalar_lea.vmem [#allocation12], 1
        %v6793 = vld [vmem:[%s6792] sm:$0x1]
        %v6795 = vlaneseq
        %v6796 = vshrl.u32 %v6795, 7
        %v6797 = vsub.s32 0, %v6796
        %v6798 = vrot.slane %v6793, %v6797
        %v6804 = vunpack.c.l.b16 %v6784
        %v6805 = vunpack.c.l.b16 %v6785
        %v6806 = vunpack.c.l.b16 %v6786
        %v6807 = vunpack.c.l.b16 %v6787
        %v6808 = vpack.c.b16 %v6805, %v6804
        %v6809 = vpack.c.b16 %v6807, %v6806
        %v6813 = vsel %vm616, %v6788, 0
        %v6816 = vsel %vm616, %v6789, 0
        %v6819 = vsel %vm616, %v6790, 0
        %v6822 = vsel %vm616, %v6791, 0
        %6824 = vmatprep.subr.bf16.mxu0 0
        %6825 = vmatpush1.bf16.msra.mxu0 0
        %6826 = vmatprep.subr.bf16.mxu0 0
        %6827 = vmatpush1.bf16.msra.mxu0 0
        %6828 = vmatprep.subr.bf16.mxu0 0
        %6829 = vmatpush1.bf16.msra.mxu0 0
        %6830 = vmatprep.subr.bf16.mxu0 0
        %6831 = vmatpush1.bf16.msra.mxu0 0
        %6832 = vmatprep.subr.bf16.mxu0 0
        %6833 = vmatpush1.bf16.msra.mxu0 0
        %6834 = vmatprep.subr.bf16.mxu0 0
        %6835 = vmatpush1.bf16.msra.mxu0 0
        %6836 = vmatprep.subr.bf16.mxu0 0
        %6837 = vmatpush1.bf16.msra.mxu0 %v6809
        %6838 = vmatprep.subr.bf16.mxu0 0
        %6839 = vmatpush1.bf16.msra.mxu0 %v6808
        %6840 = vmatprep.subr.bf16.mxu0 0
        %6841 = vmatpush2.bf16.msra.mxu0 0
        %6842 = vmatprep.subr.bf16.mxu0 0
        %6843 = vmatpush2.bf16.msra.mxu0 0
        %6844 = vmatprep.subr.bf16.mxu0 0
        %6845 = vmatpush2.bf16.msra.mxu0 0
        %6846 = vmatprep.subr.bf16.mxu0 0
        %6847 = vmatpush2.bf16.msra.mxu0 0
        %6848 = vmatprep.subr.bf16.mxu0 0
        %6849 = vmatpush2.bf16.msra.mxu0 0
        %6850 = vmatprep.subr.bf16.mxu0 0
        %6851 = vmatpush2.bf16.msra.mxu0 0
        %6852 = vmatprep.subr.bf16.mxu0 0
        %6853 = vmatpush2.bf16.msra.mxu0 0
        %6854 = vmatprep.subr.bf16.mxu0 0
        %6855 = vmatpush2.bf16.msra.mxu0 0
        %6856 = vmatprep.mubr.bf16.mxu0 0
        %6857 = vmatmul.mubr.bf16.gmra.mxu0 %v6813
        %v6858 = vpop.f32.mrf.mxu0
        %v6859 = vadd.f32 %v6798, %v6858
        %v6860 = vpop.f32.mrf.mxu0
        %v6861 = vpop.f32.mrf.mxu0
        %v6862 = vadd.f32 %v6798, %v6861
        %v6863 = vpop.f32.mrf.mxu0
        %6864 = vmatprep.mubr.bf16.mxu0 0
        %6865 = vmatmul.mubr.bf16.gmra.mxu0 %v6816
        %v6866 = vpop.f32.mrf.mxu0
        %v6867 = vadd.f32 %v6798, %v6866
        %v6868 = vpop.f32.mrf.mxu0
        %v6869 = vpop.f32.mrf.mxu0
        %v6870 = vadd.f32 %v6798, %v6869
        %v6871 = vpop.f32.mrf.mxu0
        %6872 = vmatprep.mubr.bf16.mxu0 0
        %6873 = vmatmul.mubr.bf16.gmra.mxu0 %v6819
        %v6874 = vpop.f32.mrf.mxu0
        %v6875 = vadd.f32 %v6798, %v6874
        %v6876 = vpop.f32.mrf.mxu0
        %v6877 = vpop.f32.mrf.mxu0
        %v6878 = vadd.f32 %v6798, %v6877
        %v6879 = vpop.f32.mrf.mxu0
        %6880 = vmatprep.mubr.bf16.mxu0 0
        %6881 = vmatmul.mubr.bf16.gmra.mxu0 %v6822
        %v6882 = vpop.f32.mrf.mxu0
        %v6883 = vadd.f32 %v6798, %v6882
        %v6884 = vpop.f32.mrf.mxu0
        %v6885 = vpop.f32.mrf.mxu0
        %v6886 = vadd.f32 %v6798, %v6885
        %v6887 = vpop.f32.mrf.mxu0
        %6888 = vdwg.mxu0
        %s6889 = scalar_lea.vmem [#allocation15], 16
        %v6890 = vld [vmem:[%s6889] sm:$0xf]
        %v6891 = vld [vmem:[%s6889 + $0x4] sm:$0xf]
        %v6892 = vld [vmem:[%s6889 + $0x8] sm:$0xf]
        %v6893 = vld [vmem:[%s6889 + $0xc] sm:$0xf]
        %v6894 = vpack.c.bf16 %v6862, %v6859
        %v6895 = vpack.c.bf16 %v6870, %v6867
        %v6896 = vpack.c.bf16 %v6878, %v6875
        %v6897 = vpack.c.bf16 %v6886, %v6883
        %s6898 = scalar_lea.vmem %s9, 1
        %v6899 = vld [vmem:[%s6898] sm:$0x1]
        %v6901 = vlaneseq
        %v6902 = vshrl.u32 %v6901, 7
        %v6903 = vsub.s32 0, %v6902
        %v6904 = vrot.slane %v6899, %v6903
        %v6910 = vunpack.c.l.b16 %v6890
        %v6911 = vunpack.c.l.b16 %v6891
        %v6912 = vunpack.c.l.b16 %v6892
        %v6913 = vunpack.c.l.b16 %v6893
        %v6914 = vpack.c.b16 %v6911, %v6910
        %v6915 = vpack.c.b16 %v6913, %v6912
        %v6919 = vsel %vm616, %v6894, 0
        %v6922 = vsel %vm616, %v6895, 0
        %v6925 = vsel %vm616, %v6896, 0
        %v6928 = vsel %vm616, %v6897, 0
        %6930 = vmatprep.subr.bf16.mxu0 0
        %6931 = vmatpush1.bf16.msra.mxu0 0
        %6932 = vmatprep.subr.bf16.mxu0 0
        %6933 = vmatpush1.bf16.msra.mxu0 0
        %6934 = vmatprep.subr.bf16.mxu0 0
        %6935 = vmatpush1.bf16.msra.mxu0 0
        %6936 = vmatprep.subr.bf16.mxu0 0
        %6937 = vmatpush1.bf16.msra.mxu0 0
        %6938 = vmatprep.subr.bf16.mxu0 0
        %6939 = vmatpush1.bf16.msra.mxu0 0
        %6940 = vmatprep.subr.bf16.mxu0 0
        %6941 = vmatpush1.bf16.msra.mxu0 0
        %6942 = vmatprep.subr.bf16.mxu0 0
        %6943 = vmatpush1.bf16.msra.mxu0 %v6915
        %6944 = vmatprep.subr.bf16.mxu0 0
        %6945 = vmatpush1.bf16.msra.mxu0 %v6914
        %6946 = vmatprep.subr.bf16.mxu0 0
        %6947 = vmatpush2.bf16.msra.mxu0 0
        %6948 = vmatprep.subr.bf16.mxu0 0
        %6949 = vmatpush2.bf16.msra.mxu0 0
        %6950 = vmatprep.subr.bf16.mxu0 0
        %6951 = vmatpush2.bf16.msra.mxu0 0
        %6952 = vmatprep.subr.bf16.mxu0 0
        %6953 = vmatpush2.bf16.msra.mxu0 0
        %6954 = vmatprep.subr.bf16.mxu0 0
        %6955 = vmatpush2.bf16.msra.mxu0 0
        %6956 = vmatprep.subr.bf16.mxu0 0
        %6957 = vmatpush2.bf16.msra.mxu0 0
        %6958 = vmatprep.subr.bf16.mxu0 0
        %6959 = vmatpush2.bf16.msra.mxu0 0
        %6960 = vmatprep.subr.bf16.mxu0 0
        %6961 = vmatpush2.bf16.msra.mxu0 0
        %6962 = vmatprep.mubr.bf16.mxu0 0
        %6963 = vmatmul.mubr.bf16.gmra.mxu0 %v6919
        %v6964 = vpop.f32.mrf.mxu0
        %v6965 = vadd.f32 %v6904, %v6964
        %v6966 = vpop.f32.mrf.mxu0
        %v6967 = vpop.f32.mrf.mxu0
        %v6968 = vadd.f32 %v6904, %v6967
        %v6969 = vpop.f32.mrf.mxu0
        %6970 = vmatprep.mubr.bf16.mxu0 0
        %6971 = vmatmul.mubr.bf16.gmra.mxu0 %v6922
        %v6972 = vpop.f32.mrf.mxu0
        %v6973 = vadd.f32 %v6904, %v6972
        %v6974 = vpop.f32.mrf.mxu0
        %v6975 = vpop.f32.mrf.mxu0
        %v6976 = vadd.f32 %v6904, %v6975
        %v6977 = vpop.f32.mrf.mxu0
        %6978 = vmatprep.mubr.bf16.mxu0 0
        %6979 = vmatmul.mubr.bf16.gmra.mxu0 %v6925
        %v6980 = vpop.f32.mrf.mxu0
        %v6981 = vadd.f32 %v6904, %v6980
        %v6982 = vpop.f32.mrf.mxu0
        %v6983 = vpop.f32.mrf.mxu0
        %v6984 = vadd.f32 %v6904, %v6983
        %v6985 = vpop.f32.mrf.mxu0
        %6986 = vmatprep.mubr.bf16.mxu0 0
        %6987 = vmatmul.mubr.bf16.gmra.mxu0 %v6928
        %v6988 = vpop.f32.mrf.mxu0
        %v6989 = vadd.f32 %v6904, %v6988
        %v6990 = vpop.f32.mrf.mxu0
        %v6991 = vpop.f32.mrf.mxu0
        %v6992 = vadd.f32 %v6904, %v6991
        %v6993 = vpop.f32.mrf.mxu0
        %6994 = vdwg.mxu0
        %6995 = vst [vmem:[%s555] sm:$0xff] %v6965
        %6996 = vst [vmem:[%s555 + $0x8] sm:$0xff] %v6968
        %6997 = vst [vmem:[%s555 + $0x10] sm:$0xff] %v6973
        %6998 = vst [vmem:[%s555 + $0x18] sm:$0xff] %v6976
        %6999 = vst [vmem:[%s555 + $0x20] sm:$0xff] %v6981
        %7000 = vst [vmem:[%s555 + $0x28] sm:$0xff] %v6984
        %7001 = vst [vmem:[%s555 + $0x30] sm:$0xff] %v6989
        %7002 = vst [vmem:[%s555 + $0x38] sm:$0xff] %v6992
        %v7003 = vsel %vm4398, %v6287, 0.0
        %v7004 = vsel %vm4398, %v6288, 0.0
        %v7005 = vsel %vm4398, %v6289, 0.0
        %v7006 = vsel %vm4398, %v6290, 0.0
        %v7007 = vsel %vm4398, %v6291, 0.0
        %v7008 = vsel %vm4398, %v6292, 0.0
        %v7009 = vsel %vm4398, %v6293, 0.0
        %v7010 = vsel %vm4398, %v6294, 0.0
        %7011 = vst [vmem:[%s562] sm:$0xff] %v7003
        %7012 = vst [vmem:[%s562 + $0x8] sm:$0xff] %v7004
        %7013 = vst [vmem:[%s562 + $0x10] sm:$0xff] %v7005
        %7014 = vst [vmem:[%s562 + $0x18] sm:$0xff] %v7006
        %7015 = vst [vmem:[%s562 + $0x20] sm:$0xff] %v7007
        %7016 = vst [vmem:[%s562 + $0x28] sm:$0xff] %v7008
        %7017 = vst [vmem:[%s562 + $0x30] sm:$0xff] %v7009
        %7018 = vst [vmem:[%s562 + $0x38] sm:$0xff] %v7010
        %s7019 = sand.u32 %s266, 1
        %s7020 = scalar_lea.sflag [#allocation6], %s7019
        %s7021 = sand.u32 %s266, 1
        %s7022 = smul.addr %s7021, 8
        %s7023 = scalar_lea.vmem [#allocation16], %s7022
        %s7024 = sand.u32 %s38, 1
        %s7025 = scalar_lea.sflag [#allocation18], %s7024
        %s7026 = sand.u32 %s292, 1
        %s7027 = smul.addr %s7026, 64
        %s7028 = scalar_lea.vmem [#allocation17], %s7027
        %s7029 = sand.u32 %s38, 1
        %s7030 = scalar_lea.sflag [#allocation18], %s7029
        %s7031 = sand.u32 %s318, 1
        %s7032 = smul.addr %s7031, 64
        %s7033 = scalar_lea.vmem [#allocation19], %s7032
        // Predicated region
        $region89: #{tpu_custom_call.1} parent=59 // pred_check
          %p7034 = pneg %p276
        $region90: #{tpu_custom_call.1} parent=59 // pred_check_branch
          %7036 = sbr.rel (%p7034) target = $region92
        $region91: #{tpu_custom_call.1} parent=59 // pred_region
          %s7037 = smul.u32 8, %s38
          %s7039 = ssub.s32 128, 128
          %7040 = vsyncadd %s7020, %s7039
          %s7041 = smul.addr %s7037, 16
          %s7042 = scalar_lea.hbm %s10, %s7041
          %s7043 = sshll.u32 %s7023, 4
          %s7044 = int_to_ptr.vmem [resolvable:$true] %s7043
          %7049 = dma.vmem_to_hbm [thread:$0]  %s7044, 128, %s7042, %s7020, 16, 16, 1
        $region92: #{tpu_custom_call.1} parent=59 // pred_fallthru
          _
        // Predicated region
        $region93: #{tpu_custom_call.1} parent=59 // pred_check
          %p7050 = pneg %p302
        $region94: #{tpu_custom_call.1} parent=59 // pred_check_branch
          %7052 = sbr.rel (%p7050) target = $region96
        $region95: #{tpu_custom_call.1} parent=59 // pred_region
          %s7053 = smul.u32 8, %s38
          %s7055 = ssub.s32 1024, 1024
          %7056 = vsyncadd %s7025, %s7055
          %s7057 = smul.addr %s7053, 128
          %s7058 = scalar_lea.hbm %s11, %s7057
          %s7059 = sshll.u32 %s7028, 4
          %s7060 = int_to_ptr.vmem [resolvable:$true] %s7059
          %7065 = dma.vmem_to_hbm [thread:$0]  %s7060, 1024, %s7058, %s7025, 128, 128, 8
        $region96: #{tpu_custom_call.1} parent=59 // pred_fallthru
          _
        // Predicated region
        $region97: #{tpu_custom_call.1} parent=59 // pred_check
          %p7066 = pneg %p328
        $region98: #{tpu_custom_call.1} parent=59 // pred_check_branch
          %7068 = sbr.rel (%p7066) target = $region100
        $region99: #{tpu_custom_call.1} parent=59 // pred_region
          %s7069 = smul.u32 8, %s38
          %s7071 = ssub.s32 1024, 1024
          %7072 = vsyncadd %s7030, %s7071
          %s7073 = smul.addr %s7069, 128
          %s7074 = scalar_lea.hbm %s12, %s7073
          %s7075 = sshll.u32 %s7033, 4
          %s7076 = int_to_ptr.vmem [resolvable:$true] %s7075
          %7081 = dma.vmem_to_hbm [thread:$0]  %s7076, 1024, %s7074, %s7030, 128, 128, 8
        $region100: #{tpu_custom_call.1} parent=59 // pred_fallthru
          _
      $region60: #{tpu_custom_call.1} parent=5 // pred_fallthru
        _
      %p7082 = scmp.le.s32.totalorder 2, %s33
      // Predicated region
      $region101: #{tpu_custom_call.1} parent=5 // pred_check
        %p7083 = pneg %p7082
      $region102: #{tpu_custom_call.1} parent=5 // pred_check_branch
        %7085 = sbr.rel (%p7083) target = $region104
      $region103: #{tpu_custom_call.1} parent=5 // pred_region
        %s7086 = ssub.s32 %s33, 2
        // Predicated region
        $region105: #{tpu_custom_call.1} parent=103 // pred_check
          %p7087 = pneg %p282
        $region106: #{tpu_custom_call.1} parent=103 // pred_check_branch
          %7089 = sbr.rel (%p7087) target = $region108
        $region107: #{tpu_custom_call.1} parent=103 // pred_region
          %s7090 = sand.u32 %s267, 1
          %s7091 = scalar_lea.sflag [#allocation6], %s7090
          %s7092 = sand.u32 %s267, 1
          %s7093 = smul.addr %s7092, 8
          %s7094 = scalar_lea.vmem [#allocation16], %s7093
          %7095 = dma.done %s7091, 128
        $region108: #{tpu_custom_call.1} parent=103 // pred_fallthru
          _
        // Predicated region
        $region109: #{tpu_custom_call.1} parent=103 // pred_check
          %p7096 = pneg %p308
        $region110: #{tpu_custom_call.1} parent=103 // pred_check_branch
          %7098 = sbr.rel (%p7096) target = $region112
        $region111: #{tpu_custom_call.1} parent=103 // pred_region
          %s7099 = sand.u32 %s39, 1
          %s7100 = scalar_lea.sflag [#allocation18], %s7099
          %s7101 = sand.u32 %s293, 1
          %s7102 = smul.addr %s7101, 64
          %s7103 = scalar_lea.vmem [#allocation17], %s7102
          %7104 = dma.done %s7100, 1024
        $region112: #{tpu_custom_call.1} parent=103 // pred_fallthru
          _
        // Predicated region
        $region113: #{tpu_custom_call.1} parent=103 // pred_check
          %p7105 = pneg %p334
        $region114: #{tpu_custom_call.1} parent=103 // pred_check_branch
          %7107 = sbr.rel (%p7105) target = $region116
        $region115: #{tpu_custom_call.1} parent=103 // pred_region
          %s7108 = sand.u32 %s39, 1
          %s7109 = scalar_lea.sflag [#allocation18], %s7108
          %s7110 = sand.u32 %s319, 1
          %s7111 = smul.addr %s7110, 64
          %s7112 = scalar_lea.vmem [#allocation19], %s7111
          %7113 = dma.done %s7109, 1024
        $region116: #{tpu_custom_call.1} parent=103 // pred_fallthru
          _
      $region104: #{tpu_custom_call.1} parent=5 // pred_fallthru
        _
    $region6: #{tpu_custom_call.1} parent=1 // loop_footer
      %s37 = sadd.s32 1, %s33
    $region7: #{tpu_custom_call.1} parent=1 // loop_footer_branch
      %32 = sbr.rel target = $region3
    $region8: #{tpu_custom_call.1} parent=1 // loop_exit
      _
    %7114 = vsyncpa [#allocation5], 1
    %s7115 = scalar_lea.sflag [#allocation5], 1
    %7116 = vsyncpa %s7115, 1
    %7117 = vsyncpa [#allocation8], 1
    %s7118 = scalar_lea.sflag [#allocation8], 1
    %7119 = vsyncpa %s7118, 1
    %7120 = vsyncpa [#allocation11], 1
    %7121 = vsyncpa [#allocation14], 1
    %7122 = vsyncpa [#allocation6], 1
    %s7123 = scalar_lea.sflag [#allocation6], 1
    %7124 = vsyncpa %s7123, 1
    %7125 = vsyncpa [#allocation18], 1
    %s7126 = scalar_lea.sflag [#allocation18], 1
    %7127 = vsyncpa %s7126, 1

</llo_original>
